<compile_context>
chip_gen: v7x
topology: tpu7x:2x2x1
jax: 0.10.0
libtpu: 0.0.40
codegen_flags: <defaults>
</compile_context>

<pallas_src>
import functools

import jax
import jax.numpy as jnp
from jax.experimental import pallas as pl
from jax.experimental.pallas import tpu as pltpu

# ---- model hyper-parameters (small, consistent with the module) -------------
DIM = 32          # model dim
DEPTH = 2         # number of transformer layers
HEADS = 4
DIM_HEAD = 16
MLP_DIM = 64
INNER = HEADS * DIM_HEAD          # 64
SCALE = DIM_HEAD ** (-0.5)
EPS = 1e-5                        # nn.LayerNorm default
_INV_SQRT2 = 0.7071067811865476


def _layernorm(x, gamma, beta):
    # x: (R, D); gamma/beta: (1, D)
    mean = jnp.mean(x, axis=-1, keepdims=True)
    var = jnp.mean(jnp.square(x - mean), axis=-1, keepdims=True)
    return (x - mean) * jax.lax.rsqrt(var + EPS) * gamma + beta


def _gelu_exact(x):
    # PyTorch nn.GELU default (erf-exact)
    return 0.5 * x * (1.0 + jax.lax.erf(x * jnp.float32(_INV_SQRT2)))


# --------------------- fused full-forward transformer kernel ------------------
def transformer_kernel(batch, seq,
                       x_ref,
                       ln1_g_ref, ln1_b_ref,
                       wq_ref, wk_ref, wv_ref, wo_ref, bo_ref,
                       ln2_g_ref, ln2_b_ref,
                       w1_ref, b1_ref, w2_ref, b2_ref,
                       o_ref):
    bn = batch * seq
    x = x_ref[...].astype(jnp.float32)                       # (B*N, D)

    for l in range(DEPTH):                                   # static layer loop
        # ----------------- PreNorm(Attention) + residual ----------------------
        xn = _layernorm(x, ln1_g_ref[l], ln1_b_ref[l])       # (B*N, D)
        acc = x + bo_ref[l]                                  # residual + out-proj bias
        for h in range(HEADS):                               # static head loop
            idx = l * HEADS + h
            # per-head projections: plain 2-D MXU matmuls (weights pre-split
            # per head in the wrapper -> no lane slicing inside the kernel)
            qh = jnp.dot(xn, wq_ref[idx], preferred_element_type=jnp.float32)
            kh = jnp.dot(xn, wk_ref[idx], preferred_element_type=jnp.float32)
            vh = jnp.dot(xn, wv_ref[idx], preferred_element_type=jnp.float32)
            q3 = qh.reshape(batch, seq, DIM_HEAD)
            k3 = kh.reshape(batch, seq, DIM_HEAD)
            v3 = vh.reshape(batch, seq, DIM_HEAD)
            dots = jnp.einsum('bqd,bkd->bqk', q3, k3,
                              preferred_element_type=jnp.float32) * SCALE
            dots = dots - jnp.max(dots, axis=-1, keepdims=True)   # stable softmax
            p = jnp.exp(dots)
            p = p * pl.reciprocal(jnp.sum(p, axis=-1, keepdims=True), approx=True)
            oh = jnp.einsum('bqk,bkd->bqd', p, v3,
                            preferred_element_type=jnp.float32)   # (B, N, Dh)
            # out-proj for this head, accumulated (== concat over heads @ Wo)
            acc = acc + jnp.dot(oh.reshape(bn, DIM_HEAD), wo_ref[idx],
                                preferred_element_type=jnp.float32)
        x = acc

        # ----------------- PreNorm(FeedForward) + residual --------------------
        xn = _layernorm(x, ln2_g_ref[l], ln2_b_ref[l])
        hdn = jnp.dot(xn, w1_ref[l],
                      preferred_element_type=jnp.float32) + b1_ref[l]
        hdn = _gelu_exact(hdn)
        x = x + jnp.dot(hdn, w2_ref[l],
                        preferred_element_type=jnp.float32) + b2_ref[l]

    o_ref[...] = x.astype(o_ref.dtype)


# ------------------------------ pallas_call glue ------------------------------
@jax.jit
def transformer_forward(x, packed):
    B, N, D = x.shape
    x2d = x.reshape(B * N, D)                               # lane-dense 2-D slab
    kernel = functools.partial(transformer_kernel, B, N)
    vmem = pl.BlockSpec(memory_space=pltpu.MemorySpace.VMEM)
    args = (x2d,
            packed['ln1_g'], packed['ln1_b'],
            packed['wq'], packed['wk'], packed['wv'], packed['wo'], packed['bo'],
            packed['ln2_g'], packed['ln2_b'],
            packed['w1'], packed['b1'], packed['w2'], packed['b2'])
    out2d = pl.pallas_call(
        kernel,
        out_shape=jax.ShapeDtypeStruct((B * N, D), x.dtype),
        in_specs=[vmem] * len(args),
        out_specs=vmem,
    )(*args)
    return out2d.reshape(B, N, D)


# ------------------------------ parameters ------------------------------------
def init_params(key):
    """Deterministic synthetic parameters (shapes dictated by the module __init__)."""
    layers = []
    for _ in range(DEPTH):
        key, k1, k2, k3, k4 = jax.random.split(key, 5)
        attn_p = dict(
            gamma=jnp.ones((DIM,), jnp.float32),             # LayerNorm weight
            beta=jnp.zeros((DIM,), jnp.float32),             # LayerNorm bias
            wqkv=0.05 * jax.random.normal(k1, (DIM, 3 * INNER), jnp.float32),
            wo=0.05 * jax.random.normal(k2, (INNER, DIM), jnp.float32),
            bo=jnp.zeros((DIM,), jnp.float32),
        )
        ff_p = dict(
            gamma=jnp.ones((DIM,), jnp.float32),
            beta=jnp.zeros((DIM,), jnp.float32),
            w1=0.05 * jax.random.normal(k3, (DIM, MLP_DIM), jnp.float32),
            b1=jnp.zeros((MLP_DIM,), jnp.float32),
            w2=0.05 * jax.random.normal(k4, (MLP_DIM, DIM), jnp.float32),
            b2=jnp.zeros((DIM,), jnp.float32),
        )
        layers.append((attn_p, ff_p))
    return layers


def pack_params(layers):
    """Stack per-layer params over depth and pre-split attention weights per head
    (so the kernel never slices the lane dimension)."""
    ln1_g, ln1_b, bo, ln2_g, ln2_b = [], [], [], [], []
    w1, b1, w2, b2 = [], [], [], []
    wq, wk, wv, wo = [], [], [], []
    for attn_p, ff_p in layers:
        ln1_g.append(attn_p['gamma'][None, :])
        ln1_b.append(attn_p['beta'][None, :])
        bo.append(attn_p['bo'][None, :])
        wqkv = attn_p['wqkv']                                # (DIM, 3*INNER)
        q_w = wqkv[:, 0 * INNER:1 * INNER]
        k_w = wqkv[:, 1 * INNER:2 * INNER]
        v_w = wqkv[:, 2 * INNER:3 * INNER]
        for h in range(HEADS):
            sl = slice(h * DIM_HEAD, (h + 1) * DIM_HEAD)
            wq.append(q_w[:, sl])                            # (DIM, DIM_HEAD)
            wk.append(k_w[:, sl])
            wv.append(v_w[:, sl])
            wo.append(attn_p['wo'][sl, :])                   # (DIM_HEAD, DIM)
        ln2_g.append(ff_p['gamma'][None, :])
        ln2_b.append(ff_p['beta'][None, :])
        w1.append(ff_p['w1'])
        b1.append(ff_p['b1'][None, :])
        w2.append(ff_p['w2'])
        b2.append(ff_p['b2'][None, :])
    stk = lambda xs: jnp.stack(xs, axis=0)
    return dict(
        ln1_g=stk(ln1_g), ln1_b=stk(ln1_b),
        wq=stk(wq), wk=stk(wk), wv=stk(wv), wo=stk(wo), bo=stk(bo),
        ln2_g=stk(ln2_g), ln2_b=stk(ln2_b),
        w1=stk(w1), b1=stk(b1), w2=stk(w2), b2=stk(b2),
    )


# --------------------------- pure-JAX reference --------------------------------
def reference_forward(x, layers):
    B, N, _ = x.shape
    for attn_p, ff_p in layers:
        mean = x.mean(-1, keepdims=True)
        var = ((x - mean) ** 2).mean(-1, keepdims=True)
        xn = (x - mean) / jnp.sqrt(var + EPS) * attn_p['gamma'] + attn_p['beta']
        qkv = xn @ attn_p['wqkv']
        q, k, v = jnp.split(qkv, 3, axis=-1)
        rearr = lambda t: t.reshape(B, N, HEADS, DIM_HEAD).transpose(0, 2, 1, 3)
        q, k, v = rearr(q), rearr(k), rearr(v)
        dots = jnp.einsum('bhqd,bhkd->bhqk', q, k) * SCALE
        attn = jax.nn.softmax(dots, axis=-1)
        out = jnp.einsum('bhqk,bhkd->bhqd', attn, v)
        out = out.transpose(0, 2, 1, 3).reshape(B, N, INNER)
        x = out @ attn_p['wo'] + attn_p['bo'] + x

        mean = x.mean(-1, keepdims=True)
        var = ((x - mean) ** 2).mean(-1, keepdims=True)
        xn = (x - mean) / jnp.sqrt(var + EPS) * ff_p['gamma'] + ff_p['beta']
        h = xn @ ff_p['w1'] + ff_p['b1']
        h = 0.5 * h * (1.0 + jax.lax.erf(h * jnp.float32(_INV_SQRT2)))
        x = h @ ff_p['w2'] + ff_p['b2'] + x
    return x


if __name__ == "__main__":
    key = jax.random.PRNGKey(0)
    kx, kp = jax.random.split(key)
    B, N = 2, 8
    x = jax.random.normal(kx, (B, N, DIM), jnp.float32)
    params = init_params(kp)
    packed = pack_params(params)

    y = transformer_forward(x, packed)
    jax.block_until_ready(y)
    assert y.shape == (B, N, DIM)

    # loose sanity check vs. pure-JAX reference (approx reciprocal in softmax)
    y_ref = reference_forward(x, params)
    assert jnp.allclose(y, y_ref, atol=1e-2, rtol=1e-2)

    print("KERNEL_OK")
</pallas_src>

<mosaic_0001>
module attributes {stable_mosaic.version = 11 : i64} {
  func.func @transformer_kernel(%arg0: memref<16x32xf32, #tpu.memory_space<vmem>>, %arg1: memref<2x1x32xf32, #tpu.memory_space<vmem>>, %arg2: memref<2x1x32xf32, #tpu.memory_space<vmem>>, %arg3: memref<8x32x16xf32, #tpu.memory_space<vmem>>, %arg4: memref<8x32x16xf32, #tpu.memory_space<vmem>>, %arg5: memref<8x32x16xf32, #tpu.memory_space<vmem>>, %arg6: memref<8x16x32xf32, #tpu.memory_space<vmem>>, %arg7: memref<2x1x32xf32, #tpu.memory_space<vmem>>, %arg8: memref<2x1x32xf32, #tpu.memory_space<vmem>>, %arg9: memref<2x1x32xf32, #tpu.memory_space<vmem>>, %arg10: memref<2x32x64xf32, #tpu.memory_space<vmem>>, %arg11: memref<2x1x64xf32, #tpu.memory_space<vmem>>, %arg12: memref<2x64x32xf32, #tpu.memory_space<vmem>>, %arg13: memref<2x1x32xf32, #tpu.memory_space<vmem>>, %arg14: memref<16x32xf32, #tpu.memory_space<vmem>>) attributes {dimension_semantics = [], scalar_prefetch = 0 : i64, scratch_operands = 0 : i64, tpu.core_type = #tpu.core_type<tc>} {
    %c0 = arith.constant 0 : index
    %c0_0 = arith.constant 0 : index
    %0 = vector.load %arg0[%c0, %c0_0] : memref<16x32xf32, #tpu.memory_space<vmem>>, vector<16x32xf32>
    %c0_1 = arith.constant 0 : index
    %c0_2 = arith.constant 0 : index
    %c0_3 = arith.constant 0 : index
    %1 = vector.load %arg1[%c0_1, %c0_2, %c0_3] : memref<2x1x32xf32, #tpu.memory_space<vmem>>, vector<1x1x32xf32>
    %2 = vector.shape_cast %1 : vector<1x1x32xf32> to vector<1x32xf32>
    %c0_4 = arith.constant 0 : index
    %c0_5 = arith.constant 0 : index
    %c0_6 = arith.constant 0 : index
    %3 = vector.load %arg2[%c0_4, %c0_5, %c0_6] : memref<2x1x32xf32, #tpu.memory_space<vmem>>, vector<1x1x32xf32>
    %4 = vector.shape_cast %3 : vector<1x1x32xf32> to vector<1x32xf32>
    %cst = arith.constant dense<0.000000e+00> : vector<16xf32>
    %5 = vector.multi_reduction <add>, %0, %cst [1] : vector<16x32xf32> to vector<16xf32>
    %6 = vector.shape_cast %5 : vector<16xf32> to vector<16x1xf32>
    %cst_7 = arith.constant 3.200000e+01 : f32
    %7 = vector.broadcast %cst_7 : f32 to vector<16x1xf32>
    %8 = arith.divf %6, %7 : vector<16x1xf32>
    %9 = vector.broadcast %8 : vector<16x1xf32> to vector<16x32xf32>
    %10 = arith.subf %0, %9 : vector<16x32xf32>
    %11 = arith.mulf %10, %10 : vector<16x32xf32>
    %cst_8 = arith.constant dense<0.000000e+00> : vector<16xf32>
    %12 = vector.multi_reduction <add>, %11, %cst_8 [1] : vector<16x32xf32> to vector<16xf32>
    %13 = vector.shape_cast %12 : vector<16xf32> to vector<16x1xf32>
    %cst_9 = arith.constant 3.200000e+01 : f32
    %14 = vector.broadcast %cst_9 : f32 to vector<16x1xf32>
    %15 = arith.divf %13, %14 : vector<16x1xf32>
    %16 = vector.broadcast %8 : vector<16x1xf32> to vector<16x32xf32>
    %17 = arith.subf %0, %16 : vector<16x32xf32>
    %cst_10 = arith.constant 9.99999974E-6 : f32
    %18 = vector.broadcast %cst_10 : f32 to vector<16x1xf32>
    %19 = arith.addf %15, %18 : vector<16x1xf32>
    %20 = math.rsqrt %19 : vector<16x1xf32>
    %21 = vector.broadcast %20 : vector<16x1xf32> to vector<16x32xf32>
    %22 = arith.mulf %17, %21 : vector<16x32xf32>
    %23 = vector.broadcast %2 : vector<1x32xf32> to vector<16x32xf32>
    %24 = arith.mulf %22, %23 : vector<16x32xf32>
    %25 = vector.broadcast %4 : vector<1x32xf32> to vector<16x32xf32>
    %26 = arith.addf %24, %25 : vector<16x32xf32>
    %c0_11 = arith.constant 0 : index
    %c0_12 = arith.constant 0 : index
    %c0_13 = arith.constant 0 : index
    %27 = vector.load %arg7[%c0_11, %c0_12, %c0_13] : memref<2x1x32xf32, #tpu.memory_space<vmem>>, vector<1x1x32xf32>
    %28 = vector.shape_cast %27 : vector<1x1x32xf32> to vector<1x32xf32>
    %29 = vector.broadcast %28 : vector<1x32xf32> to vector<16x32xf32>
    %30 = arith.addf %0, %29 : vector<16x32xf32>
    %c0_14 = arith.constant 0 : index
    %c0_15 = arith.constant 0 : index
    %c0_16 = arith.constant 0 : index
    %31 = vector.load %arg3[%c0_14, %c0_15, %c0_16] : memref<8x32x16xf32, #tpu.memory_space<vmem>>, vector<1x32x16xf32>
    %32 = vector.shape_cast %31 : vector<1x32x16xf32> to vector<32x16xf32>
    %cst_17 = arith.constant dense<0.000000e+00> : vector<16x16xf32>
    %33 = tpu.matmul %26, %32, %cst_17 {dimension_numbers = #tpu.dot_dimension_numbers<[1], [0], [0], [1], [0, 0, 1, 1], [], []>} : vector<16x32xf32>, vector<32x16xf32>, vector<16x16xf32> -> vector<16x16xf32>
    %c0_18 = arith.constant 0 : index
    %c0_19 = arith.constant 0 : index
    %c0_20 = arith.constant 0 : index
    %34 = vector.load %arg4[%c0_18, %c0_19, %c0_20] : memref<8x32x16xf32, #tpu.memory_space<vmem>>, vector<1x32x16xf32>
    %35 = vector.shape_cast %34 : vector<1x32x16xf32> to vector<32x16xf32>
    %cst_21 = arith.constant dense<0.000000e+00> : vector<16x16xf32>
    %36 = tpu.matmul %26, %35, %cst_21 {dimension_numbers = #tpu.dot_dimension_numbers<[1], [0], [0], [1], [0, 0, 1, 1], [], []>} : vector<16x32xf32>, vector<32x16xf32>, vector<16x16xf32> -> vector<16x16xf32>
    %c0_22 = arith.constant 0 : index
    %c0_23 = arith.constant 0 : index
    %c0_24 = arith.constant 0 : index
    %37 = vector.load %arg5[%c0_22, %c0_23, %c0_24] : memref<8x32x16xf32, #tpu.memory_space<vmem>>, vector<1x32x16xf32>
    %38 = vector.shape_cast %37 : vector<1x32x16xf32> to vector<32x16xf32>
    %cst_25 = arith.constant dense<0.000000e+00> : vector<16x16xf32>
    %39 = tpu.matmul %26, %38, %cst_25 {dimension_numbers = #tpu.dot_dimension_numbers<[1], [0], [0], [1], [0, 0, 1, 1], [], []>} : vector<16x32xf32>, vector<32x16xf32>, vector<16x16xf32> -> vector<16x16xf32>
    %40 = vector.shape_cast %33 : vector<16x16xf32> to vector<2x8x16xf32>
    %41 = vector.shape_cast %36 : vector<16x16xf32> to vector<2x8x16xf32>
    %42 = vector.shape_cast %39 : vector<16x16xf32> to vector<2x8x16xf32>
    "tpu.trace_start"() <{level = 10 : i32, message = "bqd,bkd->bqk"}> : () -> ()
    %cst_26 = arith.constant dense<0.000000e+00> : vector<2x8x8xf32>
    %43 = tpu.matmul %40, %41, %cst_26 {dimension_numbers = #tpu.dot_dimension_numbers<[2], [2], [1], [1], [0, 0, 0, 1, 1, 1], [0], [0]>} : vector<2x8x16xf32>, vector<2x8x16xf32>, vector<2x8x8xf32> -> vector<2x8x8xf32>
    "tpu.trace_stop"() : () -> ()
    %cst_27 = arith.constant 2.500000e-01 : f32
    %44 = vector.broadcast %cst_27 : f32 to vector<2x8x8xf32>
    %45 = arith.mulf %43, %44 : vector<2x8x8xf32>
    %cst_28 = arith.constant dense<0xFF800000> : vector<2x8xf32>
    %46 = vector.multi_reduction <maximumf>, %45, %cst_28 [2] : vector<2x8x8xf32> to vector<2x8xf32>
    %47 = vector.shape_cast %46 : vector<2x8xf32> to vector<2x8x1xf32>
    %48 = vector.broadcast %47 : vector<2x8x1xf32> to vector<2x8x8xf32>
    %49 = arith.subf %45, %48 : vector<2x8x8xf32>
    %50 = math.exp %49 : vector<2x8x8xf32>
    %cst_29 = arith.constant dense<0.000000e+00> : vector<2x8xf32>
    %51 = vector.multi_reduction <add>, %50, %cst_29 [2] : vector<2x8x8xf32> to vector<2x8xf32>
    %52 = vector.shape_cast %51 : vector<2x8xf32> to vector<2x8x1xf32>
    %53 = tpu.reciprocal %52 {approx = true} : vector<2x8x1xf32> -> vector<2x8x1xf32>
    %54 = vector.broadcast %53 : vector<2x8x1xf32> to vector<2x8x8xf32>
    %55 = arith.mulf %50, %54 : vector<2x8x8xf32>
    "tpu.trace_start"() <{level = 10 : i32, message = "bqk,bkd->bqd"}> : () -> ()
    %cst_30 = arith.constant dense<0.000000e+00> : vector<2x8x16xf32>
    %56 = tpu.matmul %55, %42, %cst_30 {dimension_numbers = #tpu.dot_dimension_numbers<[2], [1], [1], [2], [0, 0, 0, 1, 1, 2], [0], [0]>} : vector<2x8x8xf32>, vector<2x8x16xf32>, vector<2x8x16xf32> -> vector<2x8x16xf32>
    "tpu.trace_stop"() : () -> ()
    %57 = vector.shape_cast %56 : vector<2x8x16xf32> to vector<16x16xf32>
    %c0_31 = arith.constant 0 : index
    %c0_32 = arith.constant 0 : index
    %c0_33 = arith.constant 0 : index
    %58 = vector.load %arg6[%c0_31, %c0_32, %c0_33] : memref<8x16x32xf32, #tpu.memory_space<vmem>>, vector<1x16x32xf32>
    %59 = vector.shape_cast %58 : vector<1x16x32xf32> to vector<16x32xf32>
    %cst_34 = arith.constant dense<0.000000e+00> : vector<16x32xf32>
    %60 = tpu.matmul %57, %59, %cst_34 {dimension_numbers = #tpu.dot_dimension_numbers<[1], [0], [0], [1], [0, 0, 1, 1], [], []>} : vector<16x16xf32>, vector<16x32xf32>, vector<16x32xf32> -> vector<16x32xf32>
    %61 = arith.addf %30, %60 : vector<16x32xf32>
    %c1 = arith.constant 1 : index
    %c0_35 = arith.constant 0 : index
    %c0_36 = arith.constant 0 : index
    %62 = vector.load %arg3[%c1, %c0_35, %c0_36] : memref<8x32x16xf32, #tpu.memory_space<vmem>>, vector<1x32x16xf32>
    %63 = vector.shape_cast %62 : vector<1x32x16xf32> to vector<32x16xf32>
    %cst_37 = arith.constant dense<0.000000e+00> : vector<16x16xf32>
    %64 = tpu.matmul %26, %63, %cst_37 {dimension_numbers = #tpu.dot_dimension_numbers<[1], [0], [0], [1], [0, 0, 1, 1], [], []>} : vector<16x32xf32>, vector<32x16xf32>, vector<16x16xf32> -> vector<16x16xf32>
    %c1_38 = arith.constant 1 : index
    %c0_39 = arith.constant 0 : index
    %c0_40 = arith.constant 0 : index
    %65 = vector.load %arg4[%c1_38, %c0_39, %c0_40] : memref<8x32x16xf32, #tpu.memory_space<vmem>>, vector<1x32x16xf32>
    %66 = vector.shape_cast %65 : vector<1x32x16xf32> to vector<32x16xf32>
    %cst_41 = arith.constant dense<0.000000e+00> : vector<16x16xf32>
    %67 = tpu.matmul %26, %66, %cst_41 {dimension_numbers = #tpu.dot_dimension_numbers<[1], [0], [0], [1], [0, 0, 1, 1], [], []>} : vector<16x32xf32>, vector<32x16xf32>, vector<16x16xf32> -> vector<16x16xf32>
    %c1_42 = arith.constant 1 : index
    %c0_43 = arith.constant 0 : index
    %c0_44 = arith.constant 0 : index
    %68 = vector.load %arg5[%c1_42, %c0_43, %c0_44] : memref<8x32x16xf32, #tpu.memory_space<vmem>>, vector<1x32x16xf32>
    %69 = vector.shape_cast %68 : vector<1x32x16xf32> to vector<32x16xf32>
    %cst_45 = arith.constant dense<0.000000e+00> : vector<16x16xf32>
    %70 = tpu.matmul %26, %69, %cst_45 {dimension_numbers = #tpu.dot_dimension_numbers<[1], [0], [0], [1], [0, 0, 1, 1], [], []>} : vector<16x32xf32>, vector<32x16xf32>, vector<16x16xf32> -> vector<16x16xf32>
    %71 = vector.shape_cast %64 : vector<16x16xf32> to vector<2x8x16xf32>
    %72 = vector.shape_cast %67 : vector<16x16xf32> to vector<2x8x16xf32>
    %73 = vector.shape_cast %70 : vector<16x16xf32> to vector<2x8x16xf32>
    "tpu.trace_start"() <{level = 10 : i32, message = "bqd,bkd->bqk"}> : () -> ()
    %cst_46 = arith.constant dense<0.000000e+00> : vector<2x8x8xf32>
    %74 = tpu.matmul %71, %72, %cst_46 {dimension_numbers = #tpu.dot_dimension_numbers<[2], [2], [1], [1], [0, 0, 0, 1, 1, 1], [0], [0]>} : vector<2x8x16xf32>, vector<2x8x16xf32>, vector<2x8x8xf32> -> vector<2x8x8xf32>
    "tpu.trace_stop"() : () -> ()
    %cst_47 = arith.constant 2.500000e-01 : f32
    %75 = vector.broadcast %cst_47 : f32 to vector<2x8x8xf32>
    %76 = arith.mulf %74, %75 : vector<2x8x8xf32>
    %cst_48 = arith.constant dense<0xFF800000> : vector<2x8xf32>
    %77 = vector.multi_reduction <maximumf>, %76, %cst_48 [2] : vector<2x8x8xf32> to vector<2x8xf32>
    %78 = vector.shape_cast %77 : vector<2x8xf32> to vector<2x8x1xf32>
    %79 = vector.broadcast %78 : vector<2x8x1xf32> to vector<2x8x8xf32>
    %80 = arith.subf %76, %79 : vector<2x8x8xf32>
    %81 = math.exp %80 : vector<2x8x8xf32>
    %cst_49 = arith.constant dense<0.000000e+00> : vector<2x8xf32>
    %82 = vector.multi_reduction <add>, %81, %cst_49 [2] : vector<2x8x8xf32> to vector<2x8xf32>
    %83 = vector.shape_cast %82 : vector<2x8xf32> to vector<2x8x1xf32>
    %84 = tpu.reciprocal %83 {approx = true} : vector<2x8x1xf32> -> vector<2x8x1xf32>
    %85 = vector.broadcast %84 : vector<2x8x1xf32> to vector<2x8x8xf32>
    %86 = arith.mulf %81, %85 : vector<2x8x8xf32>
    "tpu.trace_start"() <{level = 10 : i32, message = "bqk,bkd->bqd"}> : () -> ()
    %cst_50 = arith.constant dense<0.000000e+00> : vector<2x8x16xf32>
    %87 = tpu.matmul %86, %73, %cst_50 {dimension_numbers = #tpu.dot_dimension_numbers<[2], [1], [1], [2], [0, 0, 0, 1, 1, 2], [0], [0]>} : vector<2x8x8xf32>, vector<2x8x16xf32>, vector<2x8x16xf32> -> vector<2x8x16xf32>
    "tpu.trace_stop"() : () -> ()
    %88 = vector.shape_cast %87 : vector<2x8x16xf32> to vector<16x16xf32>
    %c1_51 = arith.constant 1 : index
    %c0_52 = arith.constant 0 : index
    %c0_53 = arith.constant 0 : index
    %89 = vector.load %arg6[%c1_51, %c0_52, %c0_53] : memref<8x16x32xf32, #tpu.memory_space<vmem>>, vector<1x16x32xf32>
    %90 = vector.shape_cast %89 : vector<1x16x32xf32> to vector<16x32xf32>
    %cst_54 = arith.constant dense<0.000000e+00> : vector<16x32xf32>
    %91 = tpu.matmul %88, %90, %cst_54 {dimension_numbers = #tpu.dot_dimension_numbers<[1], [0], [0], [1], [0, 0, 1, 1], [], []>} : vector<16x16xf32>, vector<16x32xf32>, vector<16x32xf32> -> vector<16x32xf32>
    %92 = arith.addf %61, %91 : vector<16x32xf32>
    %c2 = arith.constant 2 : index
    %c0_55 = arith.constant 0 : index
    %c0_56 = arith.constant 0 : index
    %93 = vector.load %arg3[%c2, %c0_55, %c0_56] : memref<8x32x16xf32, #tpu.memory_space<vmem>>, vector<1x32x16xf32>
    %94 = vector.shape_cast %93 : vector<1x32x16xf32> to vector<32x16xf32>
    %cst_57 = arith.constant dense<0.000000e+00> : vector<16x16xf32>
    %95 = tpu.matmul %26, %94, %cst_57 {dimension_numbers = #tpu.dot_dimension_numbers<[1], [0], [0], [1], [0, 0, 1, 1], [], []>} : vector<16x32xf32>, vector<32x16xf32>, vector<16x16xf32> -> vector<16x16xf32>
    %c2_58 = arith.constant 2 : index
    %c0_59 = arith.constant 0 : index
    %c0_60 = arith.constant 0 : index
    %96 = vector.load %arg4[%c2_58, %c0_59, %c0_60] : memref<8x32x16xf32, #tpu.memory_space<vmem>>, vector<1x32x16xf32>
    %97 = vector.shape_cast %96 : vector<1x32x16xf32> to vector<32x16xf32>
    %cst_61 = arith.constant dense<0.000000e+00> : vector<16x16xf32>
    %98 = tpu.matmul %26, %97, %cst_61 {dimension_numbers = #tpu.dot_dimension_numbers<[1], [0], [0], [1], [0, 0, 1, 1], [], []>} : vector<16x32xf32>, vector<32x16xf32>, vector<16x16xf32> -> vector<16x16xf32>
    %c2_62 = arith.constant 2 : index
    %c0_63 = arith.constant 0 : index
    %c0_64 = arith.constant 0 : index
    %99 = vector.load %arg5[%c2_62, %c0_63, %c0_64] : memref<8x32x16xf32, #tpu.memory_space<vmem>>, vector<1x32x16xf32>
    %100 = vector.shape_cast %99 : vector<1x32x16xf32> to vector<32x16xf32>
    %cst_65 = arith.constant dense<0.000000e+00> : vector<16x16xf32>
    %101 = tpu.matmul %26, %100, %cst_65 {dimension_numbers = #tpu.dot_dimension_numbers<[1], [0], [0], [1], [0, 0, 1, 1], [], []>} : vector<16x32xf32>, vector<32x16xf32>, vector<16x16xf32> -> vector<16x16xf32>
    %102 = vector.shape_cast %95 : vector<16x16xf32> to vector<2x8x16xf32>
    %103 = vector.shape_cast %98 : vector<16x16xf32> to vector<2x8x16xf32>
    %104 = vector.shape_cast %101 : vector<16x16xf32> to vector<2x8x16xf32>
    "tpu.trace_start"() <{level = 10 : i32, message = "bqd,bkd->bqk"}> : () -> ()
    %cst_66 = arith.constant dense<0.000000e+00> : vector<2x8x8xf32>
    %105 = tpu.matmul %102, %103, %cst_66 {dimension_numbers = #tpu.dot_dimension_numbers<[2], [2], [1], [1], [0, 0, 0, 1, 1, 1], [0], [0]>} : vector<2x8x16xf32>, vector<2x8x16xf32>, vector<2x8x8xf32> -> vector<2x8x8xf32>
    "tpu.trace_stop"() : () -> ()
    %cst_67 = arith.constant 2.500000e-01 : f32
    %106 = vector.broadcast %cst_67 : f32 to vector<2x8x8xf32>
    %107 = arith.mulf %105, %106 : vector<2x8x8xf32>
    %cst_68 = arith.constant dense<0xFF800000> : vector<2x8xf32>
    %108 = vector.multi_reduction <maximumf>, %107, %cst_68 [2] : vector<2x8x8xf32> to vector<2x8xf32>
    %109 = vector.shape_cast %108 : vector<2x8xf32> to vector<2x8x1xf32>
    %110 = vector.broadcast %109 : vector<2x8x1xf32> to vector<2x8x8xf32>
    %111 = arith.subf %107, %110 : vector<2x8x8xf32>
    %112 = math.exp %111 : vector<2x8x8xf32>
    %cst_69 = arith.constant dense<0.000000e+00> : vector<2x8xf32>
    %113 = vector.multi_reduction <add>, %112, %cst_69 [2] : vector<2x8x8xf32> to vector<2x8xf32>
    %114 = vector.shape_cast %113 : vector<2x8xf32> to vector<2x8x1xf32>
    %115 = tpu.reciprocal %114 {approx = true} : vector<2x8x1xf32> -> vector<2x8x1xf32>
    %116 = vector.broadcast %115 : vector<2x8x1xf32> to vector<2x8x8xf32>
    %117 = arith.mulf %112, %116 : vector<2x8x8xf32>
    "tpu.trace_start"() <{level = 10 : i32, message = "bqk,bkd->bqd"}> : () -> ()
    %cst_70 = arith.constant dense<0.000000e+00> : vector<2x8x16xf32>
    %118 = tpu.matmul %117, %104, %cst_70 {dimension_numbers = #tpu.dot_dimension_numbers<[2], [1], [1], [2], [0, 0, 0, 1, 1, 2], [0], [0]>} : vector<2x8x8xf32>, vector<2x8x16xf32>, vector<2x8x16xf32> -> vector<2x8x16xf32>
    "tpu.trace_stop"() : () -> ()
    %119 = vector.shape_cast %118 : vector<2x8x16xf32> to vector<16x16xf32>
    %c2_71 = arith.constant 2 : index
    %c0_72 = arith.constant 0 : index
    %c0_73 = arith.constant 0 : index
    %120 = vector.load %arg6[%c2_71, %c0_72, %c0_73] : memref<8x16x32xf32, #tpu.memory_space<vmem>>, vector<1x16x32xf32>
    %121 = vector.shape_cast %120 : vector<1x16x32xf32> to vector<16x32xf32>
    %cst_74 = arith.constant dense<0.000000e+00> : vector<16x32xf32>
    %122 = tpu.matmul %119, %121, %cst_74 {dimension_numbers = #tpu.dot_dimension_numbers<[1], [0], [0], [1], [0, 0, 1, 1], [], []>} : vector<16x16xf32>, vector<16x32xf32>, vector<16x32xf32> -> vector<16x32xf32>
    %123 = arith.addf %92, %122 : vector<16x32xf32>
    %c3 = arith.constant 3 : index
    %c0_75 = arith.constant 0 : index
    %c0_76 = arith.constant 0 : index
    %124 = vector.load %arg3[%c3, %c0_75, %c0_76] : memref<8x32x16xf32, #tpu.memory_space<vmem>>, vector<1x32x16xf32>
    %125 = vector.shape_cast %124 : vector<1x32x16xf32> to vector<32x16xf32>
    %cst_77 = arith.constant dense<0.000000e+00> : vector<16x16xf32>
    %126 = tpu.matmul %26, %125, %cst_77 {dimension_numbers = #tpu.dot_dimension_numbers<[1], [0], [0], [1], [0, 0, 1, 1], [], []>} : vector<16x32xf32>, vector<32x16xf32>, vector<16x16xf32> -> vector<16x16xf32>
    %c3_78 = arith.constant 3 : index
    %c0_79 = arith.constant 0 : index
    %c0_80 = arith.constant 0 : index
    %127 = vector.load %arg4[%c3_78, %c0_79, %c0_80] : memref<8x32x16xf32, #tpu.memory_space<vmem>>, vector<1x32x16xf32>
    %128 = vector.shape_cast %127 : vector<1x32x16xf32> to vector<32x16xf32>
    %cst_81 = arith.constant dense<0.000000e+00> : vector<16x16xf32>
    %129 = tpu.matmul %26, %128, %cst_81 {dimension_numbers = #tpu.dot_dimension_numbers<[1], [0], [0], [1], [0, 0, 1, 1], [], []>} : vector<16x32xf32>, vector<32x16xf32>, vector<16x16xf32> -> vector<16x16xf32>
    %c3_82 = arith.constant 3 : index
    %c0_83 = arith.constant 0 : index
    %c0_84 = arith.constant 0 : index
    %130 = vector.load %arg5[%c3_82, %c0_83, %c0_84] : memref<8x32x16xf32, #tpu.memory_space<vmem>>, vector<1x32x16xf32>
    %131 = vector.shape_cast %130 : vector<1x32x16xf32> to vector<32x16xf32>
    %cst_85 = arith.constant dense<0.000000e+00> : vector<16x16xf32>
    %132 = tpu.matmul %26, %131, %cst_85 {dimension_numbers = #tpu.dot_dimension_numbers<[1], [0], [0], [1], [0, 0, 1, 1], [], []>} : vector<16x32xf32>, vector<32x16xf32>, vector<16x16xf32> -> vector<16x16xf32>
    %133 = vector.shape_cast %126 : vector<16x16xf32> to vector<2x8x16xf32>
    %134 = vector.shape_cast %129 : vector<16x16xf32> to vector<2x8x16xf32>
    %135 = vector.shape_cast %132 : vector<16x16xf32> to vector<2x8x16xf32>
    "tpu.trace_start"() <{level = 10 : i32, message = "bqd,bkd->bqk"}> : () -> ()
    %cst_86 = arith.constant dense<0.000000e+00> : vector<2x8x8xf32>
    %136 = tpu.matmul %133, %134, %cst_86 {dimension_numbers = #tpu.dot_dimension_numbers<[2], [2], [1], [1], [0, 0, 0, 1, 1, 1], [0], [0]>} : vector<2x8x16xf32>, vector<2x8x16xf32>, vector<2x8x8xf32> -> vector<2x8x8xf32>
    "tpu.trace_stop"() : () -> ()
    %cst_87 = arith.constant 2.500000e-01 : f32
    %137 = vector.broadcast %cst_87 : f32 to vector<2x8x8xf32>
    %138 = arith.mulf %136, %137 : vector<2x8x8xf32>
    %cst_88 = arith.constant dense<0xFF800000> : vector<2x8xf32>
    %139 = vector.multi_reduction <maximumf>, %138, %cst_88 [2] : vector<2x8x8xf32> to vector<2x8xf32>
    %140 = vector.shape_cast %139 : vector<2x8xf32> to vector<2x8x1xf32>
    %141 = vector.broadcast %140 : vector<2x8x1xf32> to vector<2x8x8xf32>
    %142 = arith.subf %138, %141 : vector<2x8x8xf32>
    %143 = math.exp %142 : vector<2x8x8xf32>
    %cst_89 = arith.constant dense<0.000000e+00> : vector<2x8xf32>
    %144 = vector.multi_reduction <add>, %143, %cst_89 [2] : vector<2x8x8xf32> to vector<2x8xf32>
    %145 = vector.shape_cast %144 : vector<2x8xf32> to vector<2x8x1xf32>
    %146 = tpu.reciprocal %145 {approx = true} : vector<2x8x1xf32> -> vector<2x8x1xf32>
    %147 = vector.broadcast %146 : vector<2x8x1xf32> to vector<2x8x8xf32>
    %148 = arith.mulf %143, %147 : vector<2x8x8xf32>
    "tpu.trace_start"() <{level = 10 : i32, message = "bqk,bkd->bqd"}> : () -> ()
    %cst_90 = arith.constant dense<0.000000e+00> : vector<2x8x16xf32>
    %149 = tpu.matmul %148, %135, %cst_90 {dimension_numbers = #tpu.dot_dimension_numbers<[2], [1], [1], [2], [0, 0, 0, 1, 1, 2], [0], [0]>} : vector<2x8x8xf32>, vector<2x8x16xf32>, vector<2x8x16xf32> -> vector<2x8x16xf32>
    "tpu.trace_stop"() : () -> ()
    %150 = vector.shape_cast %149 : vector<2x8x16xf32> to vector<16x16xf32>
    %c3_91 = arith.constant 3 : index
    %c0_92 = arith.constant 0 : index
    %c0_93 = arith.constant 0 : index
    %151 = vector.load %arg6[%c3_91, %c0_92, %c0_93] : memref<8x16x32xf32, #tpu.memory_space<vmem>>, vector<1x16x32xf32>
    %152 = vector.shape_cast %151 : vector<1x16x32xf32> to vector<16x32xf32>
    %cst_94 = arith.constant dense<0.000000e+00> : vector<16x32xf32>
    %153 = tpu.matmul %150, %152, %cst_94 {dimension_numbers = #tpu.dot_dimension_numbers<[1], [0], [0], [1], [0, 0, 1, 1], [], []>} : vector<16x16xf32>, vector<16x32xf32>, vector<16x32xf32> -> vector<16x32xf32>
    %154 = arith.addf %123, %153 : vector<16x32xf32>
    %c0_95 = arith.constant 0 : index
    %c0_96 = arith.constant 0 : index
    %c0_97 = arith.constant 0 : index
    %155 = vector.load %arg8[%c0_95, %c0_96, %c0_97] : memref<2x1x32xf32, #tpu.memory_space<vmem>>, vector<1x1x32xf32>
    %156 = vector.shape_cast %155 : vector<1x1x32xf32> to vector<1x32xf32>
    %c0_98 = arith.constant 0 : index
    %c0_99 = arith.constant 0 : index
    %c0_100 = arith.constant 0 : index
    %157 = vector.load %arg9[%c0_98, %c0_99, %c0_100] : memref<2x1x32xf32, #tpu.memory_space<vmem>>, vector<1x1x32xf32>
    %158 = vector.shape_cast %157 : vector<1x1x32xf32> to vector<1x32xf32>
    %cst_101 = arith.constant dense<0.000000e+00> : vector<16xf32>
    %159 = vector.multi_reduction <add>, %154, %cst_101 [1] : vector<16x32xf32> to vector<16xf32>
    %160 = vector.shape_cast %159 : vector<16xf32> to vector<16x1xf32>
    %cst_102 = arith.constant 3.200000e+01 : f32
    %161 = vector.broadcast %cst_102 : f32 to vector<16x1xf32>
    %162 = arith.divf %160, %161 : vector<16x1xf32>
    %163 = vector.broadcast %162 : vector<16x1xf32> to vector<16x32xf32>
    %164 = arith.subf %154, %163 : vector<16x32xf32>
    %165 = arith.mulf %164, %164 : vector<16x32xf32>
    %cst_103 = arith.constant dense<0.000000e+00> : vector<16xf32>
    %166 = vector.multi_reduction <add>, %165, %cst_103 [1] : vector<16x32xf32> to vector<16xf32>
    %167 = vector.shape_cast %166 : vector<16xf32> to vector<16x1xf32>
    %cst_104 = arith.constant 3.200000e+01 : f32
    %168 = vector.broadcast %cst_104 : f32 to vector<16x1xf32>
    %169 = arith.divf %167, %168 : vector<16x1xf32>
    %170 = vector.broadcast %162 : vector<16x1xf32> to vector<16x32xf32>
    %171 = arith.subf %154, %170 : vector<16x32xf32>
    %cst_105 = arith.constant 9.99999974E-6 : f32
    %172 = vector.broadcast %cst_105 : f32 to vector<16x1xf32>
    %173 = arith.addf %169, %172 : vector<16x1xf32>
    %174 = math.rsqrt %173 : vector<16x1xf32>
    %175 = vector.broadcast %174 : vector<16x1xf32> to vector<16x32xf32>
    %176 = arith.mulf %171, %175 : vector<16x32xf32>
    %177 = vector.broadcast %156 : vector<1x32xf32> to vector<16x32xf32>
    %178 = arith.mulf %176, %177 : vector<16x32xf32>
    %179 = vector.broadcast %158 : vector<1x32xf32> to vector<16x32xf32>
    %180 = arith.addf %178, %179 : vector<16x32xf32>
    %c0_106 = arith.constant 0 : index
    %c0_107 = arith.constant 0 : index
    %c0_108 = arith.constant 0 : index
    %181 = vector.load %arg10[%c0_106, %c0_107, %c0_108] : memref<2x32x64xf32, #tpu.memory_space<vmem>>, vector<1x32x64xf32>
    %182 = vector.shape_cast %181 : vector<1x32x64xf32> to vector<32x64xf32>
    %cst_109 = arith.constant dense<0.000000e+00> : vector<16x64xf32>
    %183 = tpu.matmul %180, %182, %cst_109 {dimension_numbers = #tpu.dot_dimension_numbers<[1], [0], [0], [1], [0, 0, 1, 1], [], []>} : vector<16x32xf32>, vector<32x64xf32>, vector<16x64xf32> -> vector<16x64xf32>
    %c0_110 = arith.constant 0 : index
    %c0_111 = arith.constant 0 : index
    %c0_112 = arith.constant 0 : index
    %184 = vector.load %arg11[%c0_110, %c0_111, %c0_112] : memref<2x1x64xf32, #tpu.memory_space<vmem>>, vector<1x1x64xf32>
    %185 = vector.shape_cast %184 : vector<1x1x64xf32> to vector<1x64xf32>
    %186 = vector.broadcast %185 : vector<1x64xf32> to vector<16x64xf32>
    %187 = arith.addf %183, %186 : vector<16x64xf32>
    %cst_113 = arith.constant 5.000000e-01 : f32
    %188 = vector.broadcast %cst_113 : f32 to vector<16x64xf32>
    %189 = arith.mulf %188, %187 : vector<16x64xf32>
    %cst_114 = arith.constant 0.707106769 : f32
    %190 = vector.broadcast %cst_114 : f32 to vector<16x64xf32>
    %191 = arith.mulf %187, %190 : vector<16x64xf32>
    %192 = math.erf %191 : vector<16x64xf32>
    %cst_115 = arith.constant 1.000000e+00 : f32
    %193 = vector.broadcast %cst_115 : f32 to vector<16x64xf32>
    %194 = arith.addf %193, %192 : vector<16x64xf32>
    %195 = arith.mulf %189, %194 : vector<16x64xf32>
    %c0_116 = arith.constant 0 : index
    %c0_117 = arith.constant 0 : index
    %c0_118 = arith.constant 0 : index
    %196 = vector.load %arg12[%c0_116, %c0_117, %c0_118] : memref<2x64x32xf32, #tpu.memory_space<vmem>>, vector<1x64x32xf32>
    %197 = vector.shape_cast %196 : vector<1x64x32xf32> to vector<64x32xf32>
    %cst_119 = arith.constant dense<0.000000e+00> : vector<16x32xf32>
    %198 = tpu.matmul %195, %197, %cst_119 {dimension_numbers = #tpu.dot_dimension_numbers<[1], [0], [0], [1], [0, 0, 1, 1], [], []>} : vector<16x64xf32>, vector<64x32xf32>, vector<16x32xf32> -> vector<16x32xf32>
    %199 = arith.addf %154, %198 : vector<16x32xf32>
    %c0_120 = arith.constant 0 : index
    %c0_121 = arith.constant 0 : index
    %c0_122 = arith.constant 0 : index
    %200 = vector.load %arg13[%c0_120, %c0_121, %c0_122] : memref<2x1x32xf32, #tpu.memory_space<vmem>>, vector<1x1x32xf32>
    %201 = vector.shape_cast %200 : vector<1x1x32xf32> to vector<1x32xf32>
    %202 = vector.broadcast %201 : vector<1x32xf32> to vector<16x32xf32>
    %203 = arith.addf %199, %202 : vector<16x32xf32>
    %c1_123 = arith.constant 1 : index
    %c0_124 = arith.constant 0 : index
    %c0_125 = arith.constant 0 : index
    %204 = vector.load %arg1[%c1_123, %c0_124, %c0_125] : memref<2x1x32xf32, #tpu.memory_space<vmem>>, vector<1x1x32xf32>
    %205 = vector.shape_cast %204 : vector<1x1x32xf32> to vector<1x32xf32>
    %c1_126 = arith.constant 1 : index
    %c0_127 = arith.constant 0 : index
    %c0_128 = arith.constant 0 : index
    %206 = vector.load %arg2[%c1_126, %c0_127, %c0_128] : memref<2x1x32xf32, #tpu.memory_space<vmem>>, vector<1x1x32xf32>
    %207 = vector.shape_cast %206 : vector<1x1x32xf32> to vector<1x32xf32>
    %cst_129 = arith.constant dense<0.000000e+00> : vector<16xf32>
    %208 = vector.multi_reduction <add>, %203, %cst_129 [1] : vector<16x32xf32> to vector<16xf32>
    %209 = vector.shape_cast %208 : vector<16xf32> to vector<16x1xf32>
    %cst_130 = arith.constant 3.200000e+01 : f32
    %210 = vector.broadcast %cst_130 : f32 to vector<16x1xf32>
    %211 = arith.divf %209, %210 : vector<16x1xf32>
    %212 = vector.broadcast %211 : vector<16x1xf32> to vector<16x32xf32>
    %213 = arith.subf %203, %212 : vector<16x32xf32>
    %214 = arith.mulf %213, %213 : vector<16x32xf32>
    %cst_131 = arith.constant dense<0.000000e+00> : vector<16xf32>
    %215 = vector.multi_reduction <add>, %214, %cst_131 [1] : vector<16x32xf32> to vector<16xf32>
    %216 = vector.shape_cast %215 : vector<16xf32> to vector<16x1xf32>
    %cst_132 = arith.constant 3.200000e+01 : f32
    %217 = vector.broadcast %cst_132 : f32 to vector<16x1xf32>
    %218 = arith.divf %216, %217 : vector<16x1xf32>
    %219 = vector.broadcast %211 : vector<16x1xf32> to vector<16x32xf32>
    %220 = arith.subf %203, %219 : vector<16x32xf32>
    %cst_133 = arith.constant 9.99999974E-6 : f32
    %221 = vector.broadcast %cst_133 : f32 to vector<16x1xf32>
    %222 = arith.addf %218, %221 : vector<16x1xf32>
    %223 = math.rsqrt %222 : vector<16x1xf32>
    %224 = vector.broadcast %223 : vector<16x1xf32> to vector<16x32xf32>
    %225 = arith.mulf %220, %224 : vector<16x32xf32>
    %226 = vector.broadcast %205 : vector<1x32xf32> to vector<16x32xf32>
    %227 = arith.mulf %225, %226 : vector<16x32xf32>
    %228 = vector.broadcast %207 : vector<1x32xf32> to vector<16x32xf32>
    %229 = arith.addf %227, %228 : vector<16x32xf32>
    %c1_134 = arith.constant 1 : index
    %c0_135 = arith.constant 0 : index
    %c0_136 = arith.constant 0 : index
    %230 = vector.load %arg7[%c1_134, %c0_135, %c0_136] : memref<2x1x32xf32, #tpu.memory_space<vmem>>, vector<1x1x32xf32>
    %231 = vector.shape_cast %230 : vector<1x1x32xf32> to vector<1x32xf32>
    %232 = vector.broadcast %231 : vector<1x32xf32> to vector<16x32xf32>
    %233 = arith.addf %203, %232 : vector<16x32xf32>
    %c4 = arith.constant 4 : index
    %c0_137 = arith.constant 0 : index
    %c0_138 = arith.constant 0 : index
    %234 = vector.load %arg3[%c4, %c0_137, %c0_138] : memref<8x32x16xf32, #tpu.memory_space<vmem>>, vector<1x32x16xf32>
    %235 = vector.shape_cast %234 : vector<1x32x16xf32> to vector<32x16xf32>
    %cst_139 = arith.constant dense<0.000000e+00> : vector<16x16xf32>
    %236 = tpu.matmul %229, %235, %cst_139 {dimension_numbers = #tpu.dot_dimension_numbers<[1], [0], [0], [1], [0, 0, 1, 1], [], []>} : vector<16x32xf32>, vector<32x16xf32>, vector<16x16xf32> -> vector<16x16xf32>
    %c4_140 = arith.constant 4 : index
    %c0_141 = arith.constant 0 : index
    %c0_142 = arith.constant 0 : index
    %237 = vector.load %arg4[%c4_140, %c0_141, %c0_142] : memref<8x32x16xf32, #tpu.memory_space<vmem>>, vector<1x32x16xf32>
    %238 = vector.shape_cast %237 : vector<1x32x16xf32> to vector<32x16xf32>
    %cst_143 = arith.constant dense<0.000000e+00> : vector<16x16xf32>
    %239 = tpu.matmul %229, %238, %cst_143 {dimension_numbers = #tpu.dot_dimension_numbers<[1], [0], [0], [1], [0, 0, 1, 1], [], []>} : vector<16x32xf32>, vector<32x16xf32>, vector<16x16xf32> -> vector<16x16xf32>
    %c4_144 = arith.constant 4 : index
    %c0_145 = arith.constant 0 : index
    %c0_146 = arith.constant 0 : index
    %240 = vector.load %arg5[%c4_144, %c0_145, %c0_146] : memref<8x32x16xf32, #tpu.memory_space<vmem>>, vector<1x32x16xf32>
    %241 = vector.shape_cast %240 : vector<1x32x16xf32> to vector<32x16xf32>
    %cst_147 = arith.constant dense<0.000000e+00> : vector<16x16xf32>
    %242 = tpu.matmul %229, %241, %cst_147 {dimension_numbers = #tpu.dot_dimension_numbers<[1], [0], [0], [1], [0, 0, 1, 1], [], []>} : vector<16x32xf32>, vector<32x16xf32>, vector<16x16xf32> -> vector<16x16xf32>
    %243 = vector.shape_cast %236 : vector<16x16xf32> to vector<2x8x16xf32>
    %244 = vector.shape_cast %239 : vector<16x16xf32> to vector<2x8x16xf32>
    %245 = vector.shape_cast %242 : vector<16x16xf32> to vector<2x8x16xf32>
    "tpu.trace_start"() <{level = 10 : i32, message = "bqd,bkd->bqk"}> : () -> ()
    %cst_148 = arith.constant dense<0.000000e+00> : vector<2x8x8xf32>
    %246 = tpu.matmul %243, %244, %cst_148 {dimension_numbers = #tpu.dot_dimension_numbers<[2], [2], [1], [1], [0, 0, 0, 1, 1, 1], [0], [0]>} : vector<2x8x16xf32>, vector<2x8x16xf32>, vector<2x8x8xf32> -> vector<2x8x8xf32>
    "tpu.trace_stop"() : () -> ()
    %cst_149 = arith.constant 2.500000e-01 : f32
    %247 = vector.broadcast %cst_149 : f32 to vector<2x8x8xf32>
    %248 = arith.mulf %246, %247 : vector<2x8x8xf32>
    %cst_150 = arith.constant dense<0xFF800000> : vector<2x8xf32>
    %249 = vector.multi_reduction <maximumf>, %248, %cst_150 [2] : vector<2x8x8xf32> to vector<2x8xf32>
    %250 = vector.shape_cast %249 : vector<2x8xf32> to vector<2x8x1xf32>
    %251 = vector.broadcast %250 : vector<2x8x1xf32> to vector<2x8x8xf32>
    %252 = arith.subf %248, %251 : vector<2x8x8xf32>
    %253 = math.exp %252 : vector<2x8x8xf32>
    %cst_151 = arith.constant dense<0.000000e+00> : vector<2x8xf32>
    %254 = vector.multi_reduction <add>, %253, %cst_151 [2] : vector<2x8x8xf32> to vector<2x8xf32>
    %255 = vector.shape_cast %254 : vector<2x8xf32> to vector<2x8x1xf32>
    %256 = tpu.reciprocal %255 {approx = true} : vector<2x8x1xf32> -> vector<2x8x1xf32>
    %257 = vector.broadcast %256 : vector<2x8x1xf32> to vector<2x8x8xf32>
    %258 = arith.mulf %253, %257 : vector<2x8x8xf32>
    "tpu.trace_start"() <{level = 10 : i32, message = "bqk,bkd->bqd"}> : () -> ()
    %cst_152 = arith.constant dense<0.000000e+00> : vector<2x8x16xf32>
    %259 = tpu.matmul %258, %245, %cst_152 {dimension_numbers = #tpu.dot_dimension_numbers<[2], [1], [1], [2], [0, 0, 0, 1, 1, 2], [0], [0]>} : vector<2x8x8xf32>, vector<2x8x16xf32>, vector<2x8x16xf32> -> vector<2x8x16xf32>
    "tpu.trace_stop"() : () -> ()
    %260 = vector.shape_cast %259 : vector<2x8x16xf32> to vector<16x16xf32>
    %c4_153 = arith.constant 4 : index
    %c0_154 = arith.constant 0 : index
    %c0_155 = arith.constant 0 : index
    %261 = vector.load %arg6[%c4_153, %c0_154, %c0_155] : memref<8x16x32xf32, #tpu.memory_space<vmem>>, vector<1x16x32xf32>
    %262 = vector.shape_cast %261 : vector<1x16x32xf32> to vector<16x32xf32>
    %cst_156 = arith.constant dense<0.000000e+00> : vector<16x32xf32>
    %263 = tpu.matmul %260, %262, %cst_156 {dimension_numbers = #tpu.dot_dimension_numbers<[1], [0], [0], [1], [0, 0, 1, 1], [], []>} : vector<16x16xf32>, vector<16x32xf32>, vector<16x32xf32> -> vector<16x32xf32>
    %264 = arith.addf %233, %263 : vector<16x32xf32>
    %c5 = arith.constant 5 : index
    %c0_157 = arith.constant 0 : index
    %c0_158 = arith.constant 0 : index
    %265 = vector.load %arg3[%c5, %c0_157, %c0_158] : memref<8x32x16xf32, #tpu.memory_space<vmem>>, vector<1x32x16xf32>
    %266 = vector.shape_cast %265 : vector<1x32x16xf32> to vector<32x16xf32>
    %cst_159 = arith.constant dense<0.000000e+00> : vector<16x16xf32>
    %267 = tpu.matmul %229, %266, %cst_159 {dimension_numbers = #tpu.dot_dimension_numbers<[1], [0], [0], [1], [0, 0, 1, 1], [], []>} : vector<16x32xf32>, vector<32x16xf32>, vector<16x16xf32> -> vector<16x16xf32>
    %c5_160 = arith.constant 5 : index
    %c0_161 = arith.constant 0 : index
    %c0_162 = arith.constant 0 : index
    %268 = vector.load %arg4[%c5_160, %c0_161, %c0_162] : memref<8x32x16xf32, #tpu.memory_space<vmem>>, vector<1x32x16xf32>
    %269 = vector.shape_cast %268 : vector<1x32x16xf32> to vector<32x16xf32>
    %cst_163 = arith.constant dense<0.000000e+00> : vector<16x16xf32>
    %270 = tpu.matmul %229, %269, %cst_163 {dimension_numbers = #tpu.dot_dimension_numbers<[1], [0], [0], [1], [0, 0, 1, 1], [], []>} : vector<16x32xf32>, vector<32x16xf32>, vector<16x16xf32> -> vector<16x16xf32>
    %c5_164 = arith.constant 5 : index
    %c0_165 = arith.constant 0 : index
    %c0_166 = arith.constant 0 : index
    %271 = vector.load %arg5[%c5_164, %c0_165, %c0_166] : memref<8x32x16xf32, #tpu.memory_space<vmem>>, vector<1x32x16xf32>
    %272 = vector.shape_cast %271 : vector<1x32x16xf32> to vector<32x16xf32>
    %cst_167 = arith.constant dense<0.000000e+00> : vector<16x16xf32>
    %273 = tpu.matmul %229, %272, %cst_167 {dimension_numbers = #tpu.dot_dimension_numbers<[1], [0], [0], [1], [0, 0, 1, 1], [], []>} : vector<16x32xf32>, vector<32x16xf32>, vector<16x16xf32> -> vector<16x16xf32>
    %274 = vector.shape_cast %267 : vector<16x16xf32> to vector<2x8x16xf32>
    %275 = vector.shape_cast %270 : vector<16x16xf32> to vector<2x8x16xf32>
    %276 = vector.shape_cast %273 : vector<16x16xf32> to vector<2x8x16xf32>
    "tpu.trace_start"() <{level = 10 : i32, message = "bqd,bkd->bqk"}> : () -> ()
    %cst_168 = arith.constant dense<0.000000e+00> : vector<2x8x8xf32>
    %277 = tpu.matmul %274, %275, %cst_168 {dimension_numbers = #tpu.dot_dimension_numbers<[2], [2], [1], [1], [0, 0, 0, 1, 1, 1], [0], [0]>} : vector<2x8x16xf32>, vector<2x8x16xf32>, vector<2x8x8xf32> -> vector<2x8x8xf32>
    "tpu.trace_stop"() : () -> ()
    %cst_169 = arith.constant 2.500000e-01 : f32
    %278 = vector.broadcast %cst_169 : f32 to vector<2x8x8xf32>
    %279 = arith.mulf %277, %278 : vector<2x8x8xf32>
    %cst_170 = arith.constant dense<0xFF800000> : vector<2x8xf32>
    %280 = vector.multi_reduction <maximumf>, %279, %cst_170 [2] : vector<2x8x8xf32> to vector<2x8xf32>
    %281 = vector.shape_cast %280 : vector<2x8xf32> to vector<2x8x1xf32>
    %282 = vector.broadcast %281 : vector<2x8x1xf32> to vector<2x8x8xf32>
    %283 = arith.subf %279, %282 : vector<2x8x8xf32>
    %284 = math.exp %283 : vector<2x8x8xf32>
    %cst_171 = arith.constant dense<0.000000e+00> : vector<2x8xf32>
    %285 = vector.multi_reduction <add>, %284, %cst_171 [2] : vector<2x8x8xf32> to vector<2x8xf32>
    %286 = vector.shape_cast %285 : vector<2x8xf32> to vector<2x8x1xf32>
    %287 = tpu.reciprocal %286 {approx = true} : vector<2x8x1xf32> -> vector<2x8x1xf32>
    %288 = vector.broadcast %287 : vector<2x8x1xf32> to vector<2x8x8xf32>
    %289 = arith.mulf %284, %288 : vector<2x8x8xf32>
    "tpu.trace_start"() <{level = 10 : i32, message = "bqk,bkd->bqd"}> : () -> ()
    %cst_172 = arith.constant dense<0.000000e+00> : vector<2x8x16xf32>
    %290 = tpu.matmul %289, %276, %cst_172 {dimension_numbers = #tpu.dot_dimension_numbers<[2], [1], [1], [2], [0, 0, 0, 1, 1, 2], [0], [0]>} : vector<2x8x8xf32>, vector<2x8x16xf32>, vector<2x8x16xf32> -> vector<2x8x16xf32>
    "tpu.trace_stop"() : () -> ()
    %291 = vector.shape_cast %290 : vector<2x8x16xf32> to vector<16x16xf32>
    %c5_173 = arith.constant 5 : index
    %c0_174 = arith.constant 0 : index
    %c0_175 = arith.constant 0 : index
    %292 = vector.load %arg6[%c5_173, %c0_174, %c0_175] : memref<8x16x32xf32, #tpu.memory_space<vmem>>, vector<1x16x32xf32>
    %293 = vector.shape_cast %292 : vector<1x16x32xf32> to vector<16x32xf32>
    %cst_176 = arith.constant dense<0.000000e+00> : vector<16x32xf32>
    %294 = tpu.matmul %291, %293, %cst_176 {dimension_numbers = #tpu.dot_dimension_numbers<[1], [0], [0], [1], [0, 0, 1, 1], [], []>} : vector<16x16xf32>, vector<16x32xf32>, vector<16x32xf32> -> vector<16x32xf32>
    %295 = arith.addf %264, %294 : vector<16x32xf32>
    %c6 = arith.constant 6 : index
    %c0_177 = arith.constant 0 : index
    %c0_178 = arith.constant 0 : index
    %296 = vector.load %arg3[%c6, %c0_177, %c0_178] : memref<8x32x16xf32, #tpu.memory_space<vmem>>, vector<1x32x16xf32>
    %297 = vector.shape_cast %296 : vector<1x32x16xf32> to vector<32x16xf32>
    %cst_179 = arith.constant dense<0.000000e+00> : vector<16x16xf32>
    %298 = tpu.matmul %229, %297, %cst_179 {dimension_numbers = #tpu.dot_dimension_numbers<[1], [0], [0], [1], [0, 0, 1, 1], [], []>} : vector<16x32xf32>, vector<32x16xf32>, vector<16x16xf32> -> vector<16x16xf32>
    %c6_180 = arith.constant 6 : index
    %c0_181 = arith.constant 0 : index
    %c0_182 = arith.constant 0 : index
    %299 = vector.load %arg4[%c6_180, %c0_181, %c0_182] : memref<8x32x16xf32, #tpu.memory_space<vmem>>, vector<1x32x16xf32>
    %300 = vector.shape_cast %299 : vector<1x32x16xf32> to vector<32x16xf32>
    %cst_183 = arith.constant dense<0.000000e+00> : vector<16x16xf32>
    %301 = tpu.matmul %229, %300, %cst_183 {dimension_numbers = #tpu.dot_dimension_numbers<[1], [0], [0], [1], [0, 0, 1, 1], [], []>} : vector<16x32xf32>, vector<32x16xf32>, vector<16x16xf32> -> vector<16x16xf32>
    %c6_184 = arith.constant 6 : index
    %c0_185 = arith.constant 0 : index
    %c0_186 = arith.constant 0 : index
    %302 = vector.load %arg5[%c6_184, %c0_185, %c0_186] : memref<8x32x16xf32, #tpu.memory_space<vmem>>, vector<1x32x16xf32>
    %303 = vector.shape_cast %302 : vector<1x32x16xf32> to vector<32x16xf32>
    %cst_187 = arith.constant dense<0.000000e+00> : vector<16x16xf32>
    %304 = tpu.matmul %229, %303, %cst_187 {dimension_numbers = #tpu.dot_dimension_numbers<[1], [0], [0], [1], [0, 0, 1, 1], [], []>} : vector<16x32xf32>, vector<32x16xf32>, vector<16x16xf32> -> vector<16x16xf32>
    %305 = vector.shape_cast %298 : vector<16x16xf32> to vector<2x8x16xf32>
    %306 = vector.shape_cast %301 : vector<16x16xf32> to vector<2x8x16xf32>
    %307 = vector.shape_cast %304 : vector<16x16xf32> to vector<2x8x16xf32>
    "tpu.trace_start"() <{level = 10 : i32, message = "bqd,bkd->bqk"}> : () -> ()
    %cst_188 = arith.constant dense<0.000000e+00> : vector<2x8x8xf32>
    %308 = tpu.matmul %305, %306, %cst_188 {dimension_numbers = #tpu.dot_dimension_numbers<[2], [2], [1], [1], [0, 0, 0, 1, 1, 1], [0], [0]>} : vector<2x8x16xf32>, vector<2x8x16xf32>, vector<2x8x8xf32> -> vector<2x8x8xf32>
    "tpu.trace_stop"() : () -> ()
    %cst_189 = arith.constant 2.500000e-01 : f32
    %309 = vector.broadcast %cst_189 : f32 to vector<2x8x8xf32>
    %310 = arith.mulf %308, %309 : vector<2x8x8xf32>
    %cst_190 = arith.constant dense<0xFF800000> : vector<2x8xf32>
    %311 = vector.multi_reduction <maximumf>, %310, %cst_190 [2] : vector<2x8x8xf32> to vector<2x8xf32>
    %312 = vector.shape_cast %311 : vector<2x8xf32> to vector<2x8x1xf32>
    %313 = vector.broadcast %312 : vector<2x8x1xf32> to vector<2x8x8xf32>
    %314 = arith.subf %310, %313 : vector<2x8x8xf32>
    %315 = math.exp %314 : vector<2x8x8xf32>
    %cst_191 = arith.constant dense<0.000000e+00> : vector<2x8xf32>
    %316 = vector.multi_reduction <add>, %315, %cst_191 [2] : vector<2x8x8xf32> to vector<2x8xf32>
    %317 = vector.shape_cast %316 : vector<2x8xf32> to vector<2x8x1xf32>
    %318 = tpu.reciprocal %317 {approx = true} : vector<2x8x1xf32> -> vector<2x8x1xf32>
    %319 = vector.broadcast %318 : vector<2x8x1xf32> to vector<2x8x8xf32>
    %320 = arith.mulf %315, %319 : vector<2x8x8xf32>
    "tpu.trace_start"() <{level = 10 : i32, message = "bqk,bkd->bqd"}> : () -> ()
    %cst_192 = arith.constant dense<0.000000e+00> : vector<2x8x16xf32>
    %321 = tpu.matmul %320, %307, %cst_192 {dimension_numbers = #tpu.dot_dimension_numbers<[2], [1], [1], [2], [0, 0, 0, 1, 1, 2], [0], [0]>} : vector<2x8x8xf32>, vector<2x8x16xf32>, vector<2x8x16xf32> -> vector<2x8x16xf32>
    "tpu.trace_stop"() : () -> ()
    %322 = vector.shape_cast %321 : vector<2x8x16xf32> to vector<16x16xf32>
    %c6_193 = arith.constant 6 : index
    %c0_194 = arith.constant 0 : index
    %c0_195 = arith.constant 0 : index
    %323 = vector.load %arg6[%c6_193, %c0_194, %c0_195] : memref<8x16x32xf32, #tpu.memory_space<vmem>>, vector<1x16x32xf32>
    %324 = vector.shape_cast %323 : vector<1x16x32xf32> to vector<16x32xf32>
    %cst_196 = arith.constant dense<0.000000e+00> : vector<16x32xf32>
    %325 = tpu.matmul %322, %324, %cst_196 {dimension_numbers = #tpu.dot_dimension_numbers<[1], [0], [0], [1], [0, 0, 1, 1], [], []>} : vector<16x16xf32>, vector<16x32xf32>, vector<16x32xf32> -> vector<16x32xf32>
    %326 = arith.addf %295, %325 : vector<16x32xf32>
    %c7 = arith.constant 7 : index
    %c0_197 = arith.constant 0 : index
    %c0_198 = arith.constant 0 : index
    %327 = vector.load %arg3[%c7, %c0_197, %c0_198] : memref<8x32x16xf32, #tpu.memory_space<vmem>>, vector<1x32x16xf32>
    %328 = vector.shape_cast %327 : vector<1x32x16xf32> to vector<32x16xf32>
    %cst_199 = arith.constant dense<0.000000e+00> : vector<16x16xf32>
    %329 = tpu.matmul %229, %328, %cst_199 {dimension_numbers = #tpu.dot_dimension_numbers<[1], [0], [0], [1], [0, 0, 1, 1], [], []>} : vector<16x32xf32>, vector<32x16xf32>, vector<16x16xf32> -> vector<16x16xf32>
    %c7_200 = arith.constant 7 : index
    %c0_201 = arith.constant 0 : index
    %c0_202 = arith.constant 0 : index
    %330 = vector.load %arg4[%c7_200, %c0_201, %c0_202] : memref<8x32x16xf32, #tpu.memory_space<vmem>>, vector<1x32x16xf32>
    %331 = vector.shape_cast %330 : vector<1x32x16xf32> to vector<32x16xf32>
    %cst_203 = arith.constant dense<0.000000e+00> : vector<16x16xf32>
    %332 = tpu.matmul %229, %331, %cst_203 {dimension_numbers = #tpu.dot_dimension_numbers<[1], [0], [0], [1], [0, 0, 1, 1], [], []>} : vector<16x32xf32>, vector<32x16xf32>, vector<16x16xf32> -> vector<16x16xf32>
    %c7_204 = arith.constant 7 : index
    %c0_205 = arith.constant 0 : index
    %c0_206 = arith.constant 0 : index
    %333 = vector.load %arg5[%c7_204, %c0_205, %c0_206] : memref<8x32x16xf32, #tpu.memory_space<vmem>>, vector<1x32x16xf32>
    %334 = vector.shape_cast %333 : vector<1x32x16xf32> to vector<32x16xf32>
    %cst_207 = arith.constant dense<0.000000e+00> : vector<16x16xf32>
    %335 = tpu.matmul %229, %334, %cst_207 {dimension_numbers = #tpu.dot_dimension_numbers<[1], [0], [0], [1], [0, 0, 1, 1], [], []>} : vector<16x32xf32>, vector<32x16xf32>, vector<16x16xf32> -> vector<16x16xf32>
    %336 = vector.shape_cast %329 : vector<16x16xf32> to vector<2x8x16xf32>
    %337 = vector.shape_cast %332 : vector<16x16xf32> to vector<2x8x16xf32>
    %338 = vector.shape_cast %335 : vector<16x16xf32> to vector<2x8x16xf32>
    "tpu.trace_start"() <{level = 10 : i32, message = "bqd,bkd->bqk"}> : () -> ()
    %cst_208 = arith.constant dense<0.000000e+00> : vector<2x8x8xf32>
    %339 = tpu.matmul %336, %337, %cst_208 {dimension_numbers = #tpu.dot_dimension_numbers<[2], [2], [1], [1], [0, 0, 0, 1, 1, 1], [0], [0]>} : vector<2x8x16xf32>, vector<2x8x16xf32>, vector<2x8x8xf32> -> vector<2x8x8xf32>
    "tpu.trace_stop"() : () -> ()
    %cst_209 = arith.constant 2.500000e-01 : f32
    %340 = vector.broadcast %cst_209 : f32 to vector<2x8x8xf32>
    %341 = arith.mulf %339, %340 : vector<2x8x8xf32>
    %cst_210 = arith.constant dense<0xFF800000> : vector<2x8xf32>
    %342 = vector.multi_reduction <maximumf>, %341, %cst_210 [2] : vector<2x8x8xf32> to vector<2x8xf32>
    %343 = vector.shape_cast %342 : vector<2x8xf32> to vector<2x8x1xf32>
    %344 = vector.broadcast %343 : vector<2x8x1xf32> to vector<2x8x8xf32>
    %345 = arith.subf %341, %344 : vector<2x8x8xf32>
    %346 = math.exp %345 : vector<2x8x8xf32>
    %cst_211 = arith.constant dense<0.000000e+00> : vector<2x8xf32>
    %347 = vector.multi_reduction <add>, %346, %cst_211 [2] : vector<2x8x8xf32> to vector<2x8xf32>
    %348 = vector.shape_cast %347 : vector<2x8xf32> to vector<2x8x1xf32>
    %349 = tpu.reciprocal %348 {approx = true} : vector<2x8x1xf32> -> vector<2x8x1xf32>
    %350 = vector.broadcast %349 : vector<2x8x1xf32> to vector<2x8x8xf32>
    %351 = arith.mulf %346, %350 : vector<2x8x8xf32>
    "tpu.trace_start"() <{level = 10 : i32, message = "bqk,bkd->bqd"}> : () -> ()
    %cst_212 = arith.constant dense<0.000000e+00> : vector<2x8x16xf32>
    %352 = tpu.matmul %351, %338, %cst_212 {dimension_numbers = #tpu.dot_dimension_numbers<[2], [1], [1], [2], [0, 0, 0, 1, 1, 2], [0], [0]>} : vector<2x8x8xf32>, vector<2x8x16xf32>, vector<2x8x16xf32> -> vector<2x8x16xf32>
    "tpu.trace_stop"() : () -> ()
    %353 = vector.shape_cast %352 : vector<2x8x16xf32> to vector<16x16xf32>
    %c7_213 = arith.constant 7 : index
    %c0_214 = arith.constant 0 : index
    %c0_215 = arith.constant 0 : index
    %354 = vector.load %arg6[%c7_213, %c0_214, %c0_215] : memref<8x16x32xf32, #tpu.memory_space<vmem>>, vector<1x16x32xf32>
    %355 = vector.shape_cast %354 : vector<1x16x32xf32> to vector<16x32xf32>
    %cst_216 = arith.constant dense<0.000000e+00> : vector<16x32xf32>
    %356 = tpu.matmul %353, %355, %cst_216 {dimension_numbers = #tpu.dot_dimension_numbers<[1], [0], [0], [1], [0, 0, 1, 1], [], []>} : vector<16x16xf32>, vector<16x32xf32>, vector<16x32xf32> -> vector<16x32xf32>
    %357 = arith.addf %326, %356 : vector<16x32xf32>
    %c1_217 = arith.constant 1 : index
    %c0_218 = arith.constant 0 : index
    %c0_219 = arith.constant 0 : index
    %358 = vector.load %arg8[%c1_217, %c0_218, %c0_219] : memref<2x1x32xf32, #tpu.memory_space<vmem>>, vector<1x1x32xf32>
    %359 = vector.shape_cast %358 : vector<1x1x32xf32> to vector<1x32xf32>
    %c1_220 = arith.constant 1 : index
    %c0_221 = arith.constant 0 : index
    %c0_222 = arith.constant 0 : index
    %360 = vector.load %arg9[%c1_220, %c0_221, %c0_222] : memref<2x1x32xf32, #tpu.memory_space<vmem>>, vector<1x1x32xf32>
    %361 = vector.shape_cast %360 : vector<1x1x32xf32> to vector<1x32xf32>
    %cst_223 = arith.constant dense<0.000000e+00> : vector<16xf32>
    %362 = vector.multi_reduction <add>, %357, %cst_223 [1] : vector<16x32xf32> to vector<16xf32>
    %363 = vector.shape_cast %362 : vector<16xf32> to vector<16x1xf32>
    %cst_224 = arith.constant 3.200000e+01 : f32
    %364 = vector.broadcast %cst_224 : f32 to vector<16x1xf32>
    %365 = arith.divf %363, %364 : vector<16x1xf32>
    %366 = vector.broadcast %365 : vector<16x1xf32> to vector<16x32xf32>
    %367 = arith.subf %357, %366 : vector<16x32xf32>
    %368 = arith.mulf %367, %367 : vector<16x32xf32>
    %cst_225 = arith.constant dense<0.000000e+00> : vector<16xf32>
    %369 = vector.multi_reduction <add>, %368, %cst_225 [1] : vector<16x32xf32> to vector<16xf32>
    %370 = vector.shape_cast %369 : vector<16xf32> to vector<16x1xf32>
    %cst_226 = arith.constant 3.200000e+01 : f32
    %371 = vector.broadcast %cst_226 : f32 to vector<16x1xf32>
    %372 = arith.divf %370, %371 : vector<16x1xf32>
    %373 = vector.broadcast %365 : vector<16x1xf32> to vector<16x32xf32>
    %374 = arith.subf %357, %373 : vector<16x32xf32>
    %cst_227 = arith.constant 9.99999974E-6 : f32
    %375 = vector.broadcast %cst_227 : f32 to vector<16x1xf32>
    %376 = arith.addf %372, %375 : vector<16x1xf32>
    %377 = math.rsqrt %376 : vector<16x1xf32>
    %378 = vector.broadcast %377 : vector<16x1xf32> to vector<16x32xf32>
    %379 = arith.mulf %374, %378 : vector<16x32xf32>
    %380 = vector.broadcast %359 : vector<1x32xf32> to vector<16x32xf32>
    %381 = arith.mulf %379, %380 : vector<16x32xf32>
    %382 = vector.broadcast %361 : vector<1x32xf32> to vector<16x32xf32>
    %383 = arith.addf %381, %382 : vector<16x32xf32>
    %c1_228 = arith.constant 1 : index
    %c0_229 = arith.constant 0 : index
    %c0_230 = arith.constant 0 : index
    %384 = vector.load %arg10[%c1_228, %c0_229, %c0_230] : memref<2x32x64xf32, #tpu.memory_space<vmem>>, vector<1x32x64xf32>
    %385 = vector.shape_cast %384 : vector<1x32x64xf32> to vector<32x64xf32>
    %cst_231 = arith.constant dense<0.000000e+00> : vector<16x64xf32>
    %386 = tpu.matmul %383, %385, %cst_231 {dimension_numbers = #tpu.dot_dimension_numbers<[1], [0], [0], [1], [0, 0, 1, 1], [], []>} : vector<16x32xf32>, vector<32x64xf32>, vector<16x64xf32> -> vector<16x64xf32>
    %c1_232 = arith.constant 1 : index
    %c0_233 = arith.constant 0 : index
    %c0_234 = arith.constant 0 : index
    %387 = vector.load %arg11[%c1_232, %c0_233, %c0_234] : memref<2x1x64xf32, #tpu.memory_space<vmem>>, vector<1x1x64xf32>
    %388 = vector.shape_cast %387 : vector<1x1x64xf32> to vector<1x64xf32>
    %389 = vector.broadcast %388 : vector<1x64xf32> to vector<16x64xf32>
    %390 = arith.addf %386, %389 : vector<16x64xf32>
    %cst_235 = arith.constant 5.000000e-01 : f32
    %391 = vector.broadcast %cst_235 : f32 to vector<16x64xf32>
    %392 = arith.mulf %391, %390 : vector<16x64xf32>
    %cst_236 = arith.constant 0.707106769 : f32
    %393 = vector.broadcast %cst_236 : f32 to vector<16x64xf32>
    %394 = arith.mulf %390, %393 : vector<16x64xf32>
    %395 = math.erf %394 : vector<16x64xf32>
    %cst_237 = arith.constant 1.000000e+00 : f32
    %396 = vector.broadcast %cst_237 : f32 to vector<16x64xf32>
    %397 = arith.addf %396, %395 : vector<16x64xf32>
    %398 = arith.mulf %392, %397 : vector<16x64xf32>
    %c1_238 = arith.constant 1 : index
    %c0_239 = arith.constant 0 : index
    %c0_240 = arith.constant 0 : index
    %399 = vector.load %arg12[%c1_238, %c0_239, %c0_240] : memref<2x64x32xf32, #tpu.memory_space<vmem>>, vector<1x64x32xf32>
    %400 = vector.shape_cast %399 : vector<1x64x32xf32> to vector<64x32xf32>
    %cst_241 = arith.constant dense<0.000000e+00> : vector<16x32xf32>
    %401 = tpu.matmul %398, %400, %cst_241 {dimension_numbers = #tpu.dot_dimension_numbers<[1], [0], [0], [1], [0, 0, 1, 1], [], []>} : vector<16x64xf32>, vector<64x32xf32>, vector<16x32xf32> -> vector<16x32xf32>
    %402 = arith.addf %357, %401 : vector<16x32xf32>
    %c1_242 = arith.constant 1 : index
    %c0_243 = arith.constant 0 : index
    %c0_244 = arith.constant 0 : index
    %403 = vector.load %arg13[%c1_242, %c0_243, %c0_244] : memref<2x1x32xf32, #tpu.memory_space<vmem>>, vector<1x1x32xf32>
    %404 = vector.shape_cast %403 : vector<1x1x32xf32> to vector<1x32xf32>
    %405 = vector.broadcast %404 : vector<1x32xf32> to vector<16x32xf32>
    %406 = arith.addf %402, %405 : vector<16x32xf32>
    %c0_245 = arith.constant 0 : index
    %c0_246 = arith.constant 0 : index
    %407 = vector.load %arg14[%c0_245, %c0_246] : memref<16x32xf32, #tpu.memory_space<vmem>>, vector<16x32xf32>
    tpu.vector_store %arg14[%c0_245, %c0_246], %406 {strides = array<i32>} : memref<16x32xf32, #tpu.memory_space<vmem>>, vector<16x32xf32>,
    return
  }
}

</mosaic_0001>

<llo_original>
// kernel: transformer_forward.1
$region0: #{transformer_forward.1}
  #allocation0 [shape = 'u32[]', space=smem, size = 0x4, offset = 0x4, fixed_abs, tag = 'smem constant byte address 0x4 - core index']
  #allocation1 [shape = 'u32[144,128]{1,0:T(1,128)}', space=vmem, size = 0x12000, scoped, tag = 'internal scratch']
  %s0 = inlined_call_operand.vmem [shape: f32[16,32], index: 0, kind: input, shape index: {}]
  %s1 = inlined_call_operand.vmem [shape: f32[2,1,32], index: 1, kind: input, shape index: {}]
  %s2 = inlined_call_operand.vmem [shape: f32[2,1,32], index: 2, kind: input, shape index: {}]
  %s3 = inlined_call_operand.vmem [shape: f32[8,32,16], index: 3, kind: input, shape index: {}]
  %s4 = inlined_call_operand.vmem [shape: f32[8,32,16], index: 4, kind: input, shape index: {}]
  %s5 = inlined_call_operand.vmem [shape: f32[8,32,16], index: 5, kind: input, shape index: {}]
  %s6 = inlined_call_operand.vmem [shape: f32[8,16,32], index: 6, kind: input, shape index: {}]
  %s7 = inlined_call_operand.vmem [shape: f32[2,1,32], index: 7, kind: input, shape index: {}]
  %s8 = inlined_call_operand.vmem [shape: f32[2,1,32], index: 8, kind: input, shape index: {}]
  %s9 = inlined_call_operand.vmem [shape: f32[2,1,32], index: 9, kind: input, shape index: {}]
  %s10 = inlined_call_operand.vmem [shape: f32[2,32,64], index: 10, kind: input, shape index: {}]
  %s11 = inlined_call_operand.vmem [shape: f32[2,1,64], index: 11, kind: input, shape index: {}]
  %s12 = inlined_call_operand.vmem [shape: f32[2,64,32], index: 12, kind: input, shape index: {}]
  %s13 = inlined_call_operand.vmem [shape: f32[2,1,32], index: 13, kind: input, shape index: {}]
  %s14 = inlined_call_operand.hbm [shape: f32[16,32], index: 14, kind: output, shape index: {}]
  %s15 = sld [smem:[#allocation0]]
  $region66: #{transformer_forward.1} parent=0
    _
  %s17 = ssub.s32 1, %s15
  %s18 = scalar_select 0, %s17, %s15
  $region1: #{transformer_forward.1} parent=0
    #allocation2 [shape = 'u8[8192]{0}', space=vmem, size = 0x2000, scoped, tag = 'output window, operand 0, single buffered']
    #allocation3 [shape = 's32[1]{0}', space=sflag, size = 0x4, scoped, tag = 'scoped memory for transformer_forward.1']
    %19 = vsyncpa [#allocation3], 0
    // Predicated region
    $region2: #{transformer_forward.1} parent=1 // pred_check
      _
    $region3: #{transformer_forward.1} parent=1 // pred_check_branch
      %21 = sbr.rel (0) target = $region5
    $region4: #{transformer_forward.1} parent=1 // pred_region
      _
    $region5: #{transformer_forward.1} parent=1 // pred_fallthru
      _
    // Predicated region
    $region6: #{transformer_forward.1} parent=1 // pred_check
      _
    $region7: #{transformer_forward.1} parent=1 // pred_check_branch
      %23 = sbr.rel (0) target = $region9
    $region8: #{transformer_forward.1} parent=1 // pred_region
      _
    $region9: #{transformer_forward.1} parent=1 // pred_fallthru
      _
    // Predicated region
    $region10: #{transformer_forward.1} parent=1 // pred_check
      _
    $region11: #{transformer_forward.1} parent=1 // pred_check_branch
      %25 = sbr.rel (0) target = $region13
    $region12: #{transformer_forward.1} parent=1 // pred_region
      _
    $region13: #{transformer_forward.1} parent=1 // pred_fallthru
      _
    // Predicated region
    $region14: #{transformer_forward.1} parent=1 // pred_check
      _
    $region15: #{transformer_forward.1} parent=1 // pred_check_branch
      %27 = sbr.rel (0) target = $region17
    $region16: #{transformer_forward.1} parent=1 // pred_region
      _
    $region17: #{transformer_forward.1} parent=1 // pred_fallthru
      _
    // Predicated region
    $region18: #{transformer_forward.1} parent=1 // pred_check
      _
    $region19: #{transformer_forward.1} parent=1 // pred_check_branch
      %29 = sbr.rel (0) target = $region21
    $region20: #{transformer_forward.1} parent=1 // pred_region
      _
    $region21: #{transformer_forward.1} parent=1 // pred_fallthru
      _
    // Predicated region
    $region22: #{transformer_forward.1} parent=1 // pred_check
      _
    $region23: #{transformer_forward.1} parent=1 // pred_check_branch
      %31 = sbr.rel (0) target = $region25
    $region24: #{transformer_forward.1} parent=1 // pred_region
      _
    $region25: #{transformer_forward.1} parent=1 // pred_fallthru
      _
    // Predicated region
    $region26: #{transformer_forward.1} parent=1 // pred_check
      _
    $region27: #{transformer_forward.1} parent=1 // pred_check_branch
      %33 = sbr.rel (0) target = $region29
    $region28: #{transformer_forward.1} parent=1 // pred_region
      _
    $region29: #{transformer_forward.1} parent=1 // pred_fallthru
      _
    // Predicated region
    $region30: #{transformer_forward.1} parent=1 // pred_check
      _
    $region31: #{transformer_forward.1} parent=1 // pred_check_branch
      %35 = sbr.rel (0) target = $region33
    $region32: #{transformer_forward.1} parent=1 // pred_region
      _
    $region33: #{transformer_forward.1} parent=1 // pred_fallthru
      _
    // Predicated region
    $region34: #{transformer_forward.1} parent=1 // pred_check
      _
    $region35: #{transformer_forward.1} parent=1 // pred_check_branch
      %37 = sbr.rel (0) target = $region37
    $region36: #{transformer_forward.1} parent=1 // pred_region
      _
    $region37: #{transformer_forward.1} parent=1 // pred_fallthru
      _
    // Predicated region
    $region38: #{transformer_forward.1} parent=1 // pred_check
      _
    $region39: #{transformer_forward.1} parent=1 // pred_check_branch
      %39 = sbr.rel (0) target = $region41
    $region40: #{transformer_forward.1} parent=1 // pred_region
      _
    $region41: #{transformer_forward.1} parent=1 // pred_fallthru
      _
    // Predicated region
    $region42: #{transformer_forward.1} parent=1 // pred_check
      _
    $region43: #{transformer_forward.1} parent=1 // pred_check_branch
      %41 = sbr.rel (0) target = $region45
    $region44: #{transformer_forward.1} parent=1 // pred_region
      _
    $region45: #{transformer_forward.1} parent=1 // pred_fallthru
      _
    // Predicated region
    $region46: #{transformer_forward.1} parent=1 // pred_check
      _
    $region47: #{transformer_forward.1} parent=1 // pred_check_branch
      %43 = sbr.rel (0) target = $region49
    $region48: #{transformer_forward.1} parent=1 // pred_region
      _
    $region49: #{transformer_forward.1} parent=1 // pred_fallthru
      _
    // Predicated region
    $region50: #{transformer_forward.1} parent=1 // pred_check
      _
    $region51: #{transformer_forward.1} parent=1 // pred_check_branch
      %45 = sbr.rel (0) target = $region53
    $region52: #{transformer_forward.1} parent=1 // pred_region
      _
    $region53: #{transformer_forward.1} parent=1 // pred_fallthru
      _
    // Predicated region
    $region54: #{transformer_forward.1} parent=1 // pred_check
      _
    $region55: #{transformer_forward.1} parent=1 // pred_check_branch
      %47 = sbr.rel (0) target = $region57
    $region56: #{transformer_forward.1} parent=1 // pred_region
      _
    $region57: #{transformer_forward.1} parent=1 // pred_fallthru
      _
    %v48 = vld [vmem:[%s0] sm:$0xff]
    %v49 = vld [vmem:[%s0 + $0x8] sm:$0xff]
    %v50 = vld [vmem:[%s1] sm:$0x1]
    %v51 = vld [vmem:[%s2] sm:$0x1]
    %vm52 = vcmask 261120
    %v53 = vsel %vm52, %v48, 0.0
    %54 = vadd.xlane.f32.xlu0 %v53
    %v55 = vpop.xlane.xlu0 %54
    %v56 = vsel %vm52, %v49, 0.0
    %57 = vadd.xlane.f32.xlu0 %v56
    %v58 = vpop.xlane.xlu0 %57
    %v59 = vrcp.pop 32.0
    %v60 = vmul.f32 %v55, %v59
    %v61 = vmul.f32 %v58, %v59
    %v62 = vsub.f32 %v48, %v60
    %v63 = vsub.f32 %v49, %v61
    %v64 = vmul.f32 %v62, %v62
    %v65 = vmul.f32 %v63, %v63
    %v66 = vsel %vm52, %v64, 0.0
    %67 = vadd.xlane.f32.xlu0 %v66
    %v68 = vpop.xlane.xlu0 %67
    %v69 = vsel %vm52, %v65, 0.0
    %70 = vadd.xlane.f32.xlu0 %v69
    %v71 = vpop.xlane.xlu0 %70
    %v72 = vmul.f32 %v68, %v59
    %v73 = vmul.f32 %v71, %v59
    %v74 = vadd.f32 %v72, 1e-05
    %v75 = vadd.f32 %v73, 1e-05
    %v76 = vrsqrt.pop %v74
    %v77 = vrsqrt.pop %v75
    %v78 = vmul.f32 %v62, %v76
    %v79 = vmul.f32 %v63, %v77
    %v81 = vlaneseq
    %v82 = vshrl.u32 %v81, 7
    %v83 = vsub.s32 0, %v82
    %v84 = vrot.slane %v50, %v83
    %v86 = vmul.f32 %v78, %v84
    %v87 = vmul.f32 %v79, %v84
    %v89 = vlaneseq
    %v90 = vshrl.u32 %v89, 7
    %v91 = vsub.s32 0, %v90
    %v92 = vrot.slane %v51, %v91
    %v94 = vadd.f32 %v86, %v92
    %v95 = vadd.f32 %v87, %v92
    %v96 = vld [vmem:[%s7] sm:$0x1]
    %v98 = vlaneseq
    %v99 = vshrl.u32 %v98, 7
    %v100 = vsub.s32 0, %v99
    %v101 = vrot.slane %v96, %v100
    %v103 = vadd.f32 %v48, %v101
    %v104 = vadd.f32 %v49, %v101
    %v105 = vld [vmem:[%s3] sm:$0xff]
    %v106 = vld [vmem:[%s3 + $0x8] sm:$0xff]
    %v107 = vld [vmem:[%s3 + $0x10] sm:$0xff]
    %v108 = vld [vmem:[%s3 + $0x18] sm:$0xff]
    %v110 = vsel %vm52, %v94, 0
    %v113 = vsel %vm52, %v95, 0
    %115 = vmatprep.subr.mxu0 0.0
    %116 = vmatpush1.msra.mxu0 %v105
    %117 = vmatprep.subr.mxu0 0.0
    %118 = vmatpush1.msra.mxu0 %v106
    %119 = vmatprep.subr.mxu0 0.0
    %120 = vmatpush1.msra.mxu0 %v107
    %121 = vmatprep.subr.mxu0 0.0
    %122 = vmatpush1.msra.mxu0 %v108
    %123 = vmatprep.subr.mxu0 0.0
    %124 = vmatpush1.msra.mxu0 0.0
    %125 = vmatprep.subr.mxu0 0.0
    %126 = vmatpush1.msra.mxu0 0.0
    %127 = vmatprep.subr.mxu0 0.0
    %128 = vmatpush1.msra.mxu0 0.0
    %129 = vmatprep.subr.mxu0 0.0
    %130 = vmatpush1.msra.mxu0 0.0
    %131 = vmatprep.subr.mxu0 0.0
    %132 = vmatpush1.msra.mxu0 0.0
    %133 = vmatprep.subr.mxu0 0.0
    %134 = vmatpush1.msra.mxu0 0.0
    %135 = vmatprep.subr.mxu0 0.0
    %136 = vmatpush1.msra.mxu0 0.0
    %137 = vmatprep.subr.mxu0 0.0
    %138 = vmatpush1.msra.mxu0 0.0
    %139 = vmatprep.subr.mxu0 0.0
    %140 = vmatpush1.msra.mxu0 0.0
    %141 = vmatprep.subr.mxu0 0.0
    %142 = vmatpush1.msra.mxu0 0.0
    %143 = vmatprep.subr.mxu0 0.0
    %144 = vmatpush1.msra.mxu0 0.0
    %145 = vmatprep.subr.mxu0 0.0
    %146 = vmatpush1.msra.mxu0 0.0
    %147 = vmatprep.subr.mxu0 0.0
    %148 = vmatpush1.msra.mxu0 0.0
    %149 = vmatprep.subr.mxu0 0.0
    %150 = vmatpush1.msra.mxu0 0.0
    %151 = vmatprep.subr.mxu0 0.0
    %152 = vmatpush1.msra.mxu0 0.0
    %153 = vmatprep.subr.mxu0 0.0
    %154 = vmatpush1.msra.mxu0 0.0
    %155 = vmatprep.subr.mxu0 0.0
    %156 = vmatpush1.msra.mxu0 0.0
    %157 = vmatprep.subr.mxu0 0.0
    %158 = vmatpush1.msra.mxu0 0.0
    %159 = vmatprep.subr.mxu0 0.0
    %160 = vmatpush1.msra.mxu0 0.0
    %161 = vmatprep.subr.mxu0 0.0
    %162 = vmatpush1.msra.mxu0 0.0
    %163 = vmatprep.subr.mxu0 0.0
    %164 = vmatpush1.msra.mxu0 0.0
    %165 = vmatprep.subr.mxu0 0.0
    %166 = vmatpush1.msra.mxu0 0.0
    %167 = vmatprep.subr.mxu0 0.0
    %168 = vmatpush1.msra.mxu0 0.0
    %169 = vmatprep.subr.mxu0 0.0
    %170 = vmatpush1.msra.mxu0 0.0
    %171 = vmatprep.subr.mxu0 0.0
    %172 = vmatpush1.msra.mxu0 0.0
    %173 = vmatprep.subr.mxu0 0.0
    %174 = vmatpush1.msra.mxu0 0.0
    %175 = vmatprep.subr.mxu0 0.0
    %176 = vmatpush1.msra.mxu0 0.0
    %177 = vmatprep.subr.mxu0 0.0
    %178 = vmatpush1.msra.mxu0 0.0
    %179 = vmatprep.mubr.f32.mxu0 0.0
    %180 = vmatmul.mubr.f32.gmra.mrb[0].mxu0 %v110
    %v181 = vpop.f32.mrb[0].mxu0
    %v182 = vadd.f32 0.0, %v181
    %v183 = vpop.f32.mrb[0].mxu0
    %184 = vmatprep.mubr.f32.mxu0 0.0
    %185 = vmatmul.mubr.f32.gmra.mrb[0].mxu0 %v113
    %v186 = vpop.f32.mrb[0].mxu0
    %v187 = vadd.f32 0.0, %v186
    %v188 = vpop.f32.mrb[0].mxu0
    %189 = vdwg.mxu0
    %v190 = vld [vmem:[%s4] sm:$0xff]
    %v191 = vld [vmem:[%s4 + $0x8] sm:$0xff]
    %v192 = vld [vmem:[%s4 + $0x10] sm:$0xff]
    %v193 = vld [vmem:[%s4 + $0x18] sm:$0xff]
    %194 = vmatprep.subr.mxu0 0.0
    %195 = vmatpush1.msra.mxu0 %v190
    %196 = vmatprep.subr.mxu0 0.0
    %197 = vmatpush1.msra.mxu0 %v191
    %198 = vmatprep.subr.mxu0 0.0
    %199 = vmatpush1.msra.mxu0 %v192
    %200 = vmatprep.subr.mxu0 0.0
    %201 = vmatpush1.msra.mxu0 %v193
    %202 = vmatprep.subr.mxu0 0.0
    %203 = vmatpush1.msra.mxu0 0.0
    %204 = vmatprep.subr.mxu0 0.0
    %205 = vmatpush1.msra.mxu0 0.0
    %206 = vmatprep.subr.mxu0 0.0
    %207 = vmatpush1.msra.mxu0 0.0
    %208 = vmatprep.subr.mxu0 0.0
    %209 = vmatpush1.msra.mxu0 0.0
    %210 = vmatprep.subr.mxu0 0.0
    %211 = vmatpush1.msra.mxu0 0.0
    %212 = vmatprep.subr.mxu0 0.0
    %213 = vmatpush1.msra.mxu0 0.0
    %214 = vmatprep.subr.mxu0 0.0
    %215 = vmatpush1.msra.mxu0 0.0
    %216 = vmatprep.subr.mxu0 0.0
    %217 = vmatpush1.msra.mxu0 0.0
    %218 = vmatprep.subr.mxu0 0.0
    %219 = vmatpush1.msra.mxu0 0.0
    %220 = vmatprep.subr.mxu0 0.0
    %221 = vmatpush1.msra.mxu0 0.0
    %222 = vmatprep.subr.mxu0 0.0
    %223 = vmatpush1.msra.mxu0 0.0
    %224 = vmatprep.subr.mxu0 0.0
    %225 = vmatpush1.msra.mxu0 0.0
    %226 = vmatprep.subr.mxu0 0.0
    %227 = vmatpush1.msra.mxu0 0.0
    %228 = vmatprep.subr.mxu0 0.0
    %229 = vmatpush1.msra.mxu0 0.0
    %230 = vmatprep.subr.mxu0 0.0
    %231 = vmatpush1.msra.mxu0 0.0
    %232 = vmatprep.subr.mxu0 0.0
    %233 = vmatpush1.msra.mxu0 0.0
    %234 = vmatprep.subr.mxu0 0.0
    %235 = vmatpush1.msra.mxu0 0.0
    %236 = vmatprep.subr.mxu0 0.0
    %237 = vmatpush1.msra.mxu0 0.0
    %238 = vmatprep.subr.mxu0 0.0
    %239 = vmatpush1.msra.mxu0 0.0
    %240 = vmatprep.subr.mxu0 0.0
    %241 = vmatpush1.msra.mxu0 0.0
    %242 = vmatprep.subr.mxu0 0.0
    %243 = vmatpush1.msra.mxu0 0.0
    %244 = vmatprep.subr.mxu0 0.0
    %245 = vmatpush1.msra.mxu0 0.0
    %246 = vmatprep.subr.mxu0 0.0
    %247 = vmatpush1.msra.mxu0 0.0
    %248 = vmatprep.subr.mxu0 0.0
    %249 = vmatpush1.msra.mxu0 0.0
    %250 = vmatprep.subr.mxu0 0.0
    %251 = vmatpush1.msra.mxu0 0.0
    %252 = vmatprep.subr.mxu0 0.0
    %253 = vmatpush1.msra.mxu0 0.0
    %254 = vmatprep.subr.mxu0 0.0
    %255 = vmatpush1.msra.mxu0 0.0
    %256 = vmatprep.subr.mxu0 0.0
    %257 = vmatpush1.msra.mxu0 0.0
    %258 = vmatprep.mubr.f32.mxu0 0.0
    %259 = vmatmul.mubr.f32.gmra.mrb[0].mxu0 %v110
    %v260 = vpop.f32.mrb[0].mxu0
    %v261 = vadd.f32 0.0, %v260
    %v262 = vpop.f32.mrb[0].mxu0
    %263 = vmatprep.mubr.f32.mxu0 0.0
    %264 = vmatmul.mubr.f32.gmra.mrb[0].mxu0 %v113
    %v265 = vpop.f32.mrb[0].mxu0
    %v266 = vadd.f32 0.0, %v265
    %v267 = vpop.f32.mrb[0].mxu0
    %268 = vdwg.mxu0
    %v269 = vld [vmem:[%s5] sm:$0xff]
    %v270 = vld [vmem:[%s5 + $0x8] sm:$0xff]
    %v271 = vld [vmem:[%s5 + $0x10] sm:$0xff]
    %v272 = vld [vmem:[%s5 + $0x18] sm:$0xff]
    %273 = vmatprep.subr.mxu0 0.0
    %274 = vmatpush1.msra.mxu0 %v269
    %275 = vmatprep.subr.mxu0 0.0
    %276 = vmatpush1.msra.mxu0 %v270
    %277 = vmatprep.subr.mxu0 0.0
    %278 = vmatpush1.msra.mxu0 %v271
    %279 = vmatprep.subr.mxu0 0.0
    %280 = vmatpush1.msra.mxu0 %v272
    %281 = vmatprep.subr.mxu0 0.0
    %282 = vmatpush1.msra.mxu0 0.0
    %283 = vmatprep.subr.mxu0 0.0
    %284 = vmatpush1.msra.mxu0 0.0
    %285 = vmatprep.subr.mxu0 0.0
    %286 = vmatpush1.msra.mxu0 0.0
    %287 = vmatprep.subr.mxu0 0.0
    %288 = vmatpush1.msra.mxu0 0.0
    %289 = vmatprep.subr.mxu0 0.0
    %290 = vmatpush1.msra.mxu0 0.0
    %291 = vmatprep.subr.mxu0 0.0
    %292 = vmatpush1.msra.mxu0 0.0
    %293 = vmatprep.subr.mxu0 0.0
    %294 = vmatpush1.msra.mxu0 0.0
    %295 = vmatprep.subr.mxu0 0.0
    %296 = vmatpush1.msra.mxu0 0.0
    %297 = vmatprep.subr.mxu0 0.0
    %298 = vmatpush1.msra.mxu0 0.0
    %299 = vmatprep.subr.mxu0 0.0
    %300 = vmatpush1.msra.mxu0 0.0
    %301 = vmatprep.subr.mxu0 0.0
    %302 = vmatpush1.msra.mxu0 0.0
    %303 = vmatprep.subr.mxu0 0.0
    %304 = vmatpush1.msra.mxu0 0.0
    %305 = vmatprep.subr.mxu0 0.0
    %306 = vmatpush1.msra.mxu0 0.0
    %307 = vmatprep.subr.mxu0 0.0
    %308 = vmatpush1.msra.mxu0 0.0
    %309 = vmatprep.subr.mxu0 0.0
    %310 = vmatpush1.msra.mxu0 0.0
    %311 = vmatprep.subr.mxu0 0.0
    %312 = vmatpush1.msra.mxu0 0.0
    %313 = vmatprep.subr.mxu0 0.0
    %314 = vmatpush1.msra.mxu0 0.0
    %315 = vmatprep.subr.mxu0 0.0
    %316 = vmatpush1.msra.mxu0 0.0
    %317 = vmatprep.subr.mxu0 0.0
    %318 = vmatpush1.msra.mxu0 0.0
    %319 = vmatprep.subr.mxu0 0.0
    %320 = vmatpush1.msra.mxu0 0.0
    %321 = vmatprep.subr.mxu0 0.0
    %322 = vmatpush1.msra.mxu0 0.0
    %323 = vmatprep.subr.mxu0 0.0
    %324 = vmatpush1.msra.mxu0 0.0
    %325 = vmatprep.subr.mxu0 0.0
    %326 = vmatpush1.msra.mxu0 0.0
    %327 = vmatprep.subr.mxu0 0.0
    %328 = vmatpush1.msra.mxu0 0.0
    %329 = vmatprep.subr.mxu0 0.0
    %330 = vmatpush1.msra.mxu0 0.0
    %331 = vmatprep.subr.mxu0 0.0
    %332 = vmatpush1.msra.mxu0 0.0
    %333 = vmatprep.subr.mxu0 0.0
    %334 = vmatpush1.msra.mxu0 0.0
    %335 = vmatprep.subr.mxu0 0.0
    %336 = vmatpush1.msra.mxu0 0.0
    %337 = vmatprep.mubr.f32.mxu0 0.0
    %338 = vmatmul.mubr.f32.gmra.mrb[0].mxu0 %v110
    %v339 = vpop.f32.mrb[0].mxu0
    %v340 = vadd.f32 0.0, %v339
    %v341 = vpop.f32.mrb[0].mxu0
    %342 = vmatprep.mubr.f32.mxu0 0.0
    %343 = vmatmul.mubr.f32.gmra.mrb[0].mxu0 %v113
    %v344 = vpop.f32.mrb[0].mxu0
    %v345 = vadd.f32 0.0, %v344
    %v346 = vpop.f32.mrb[0].mxu0
    %347 = vdwg.mxu0
    %vm348 = vcmask 130048
    %v350 = vsel %vm348, %v182, 0
    %v353 = vsel %vm348, %v261, 0
    %355 = vmatprep.subr.mxu0 0.0
    %356 = vmatpush1.xpose.msra.mxu0 %v353
    %357 = vmatprep.subr.mxu0 0.0
    %358 = vmatpush1.xpose.msra.mxu0 0.0
    %359 = vmatprep.subr.mxu0 0.0
    %360 = vmatpush1.xpose.msra.mxu0 0.0
    %361 = vmatprep.subr.mxu0 0.0
    %362 = vmatpush1.xpose.msra.mxu0 0.0
    %363 = vmatprep.subr.mxu0 0.0
    %364 = vmatpush1.xpose.msra.mxu0 0.0
    %365 = vmatprep.subr.mxu0 0.0
    %366 = vmatpush1.xpose.msra.mxu0 0.0
    %367 = vmatprep.subr.mxu0 0.0
    %368 = vmatpush1.xpose.msra.mxu0 0.0
    %369 = vmatprep.subr.mxu0 0.0
    %370 = vmatpush1.xpose.msra.mxu0 0.0
    %371 = vmatprep.subr.mxu0 0.0
    %372 = vmatpush1.xpose.msra.mxu0 0.0
    %373 = vmatprep.subr.mxu0 0.0
    %374 = vmatpush1.xpose.msra.mxu0 0.0
    %375 = vmatprep.subr.mxu0 0.0
    %376 = vmatpush1.xpose.msra.mxu0 0.0
    %377 = vmatprep.subr.mxu0 0.0
    %378 = vmatpush1.xpose.msra.mxu0 0.0
    %379 = vmatprep.subr.mxu0 0.0
    %380 = vmatpush1.xpose.msra.mxu0 0.0
    %381 = vmatprep.subr.mxu0 0.0
    %382 = vmatpush1.xpose.msra.mxu0 0.0
    %383 = vmatprep.subr.mxu0 0.0
    %384 = vmatpush1.xpose.msra.mxu0 0.0
    %385 = vmatprep.subr.mxu0 0.0
    %386 = vmatpush1.xpose.msra.mxu0 0.0
    %387 = vmatprep.subr.mxu0 0.0
    %388 = vmatpush1.xpose.msra.mxu0 0.0
    %389 = vmatprep.subr.mxu0 0.0
    %390 = vmatpush1.xpose.msra.mxu0 0.0
    %391 = vmatprep.subr.mxu0 0.0
    %392 = vmatpush1.xpose.msra.mxu0 0.0
    %393 = vmatprep.subr.mxu0 0.0
    %394 = vmatpush1.xpose.msra.mxu0 0.0
    %395 = vmatprep.subr.mxu0 0.0
    %396 = vmatpush1.xpose.msra.mxu0 0.0
    %397 = vmatprep.subr.mxu0 0.0
    %398 = vmatpush1.xpose.msra.mxu0 0.0
    %399 = vmatprep.subr.mxu0 0.0
    %400 = vmatpush1.xpose.msra.mxu0 0.0
    %401 = vmatprep.subr.mxu0 0.0
    %402 = vmatpush1.xpose.msra.mxu0 0.0
    %403 = vmatprep.subr.mxu0 0.0
    %404 = vmatpush1.xpose.msra.mxu0 0.0
    %405 = vmatprep.subr.mxu0 0.0
    %406 = vmatpush1.xpose.msra.mxu0 0.0
    %407 = vmatprep.subr.mxu0 0.0
    %408 = vmatpush1.xpose.msra.mxu0 0.0
    %409 = vmatprep.subr.mxu0 0.0
    %410 = vmatpush1.xpose.msra.mxu0 0.0
    %411 = vmatprep.subr.mxu0 0.0
    %412 = vmatpush1.xpose.msra.mxu0 0.0
    %413 = vmatprep.subr.mxu0 0.0
    %414 = vmatpush1.xpose.msra.mxu0 0.0
    %415 = vmatprep.subr.mxu0 0.0
    %416 = vmatpush1.xpose.msra.mxu0 0.0
    %417 = vmatprep.subr.mxu0 0.0
    %418 = vmatpush1.xpose.msra.mxu0 0.0
    %419 = vmatprep.mubr.f32.mxu0 0.0
    %420 = vmatmul.mubr.f32.gmra.mrb[0].mxu0 %v350
    %v421 = vpop.f32.mrb[0].mxu0
    %v422 = vadd.f32 0.0, %v421
    %v423 = vpop.f32.mrb[0].mxu0
    %424 = vdwg.mxu0
    %v426 = vsel %vm348, %v187, 0
    %v429 = vsel %vm348, %v266, 0
    %431 = vmatprep.subr.mxu0 0.0
    %432 = vmatpush1.xpose.msra.mxu0 %v429
    %433 = vmatprep.subr.mxu0 0.0
    %434 = vmatpush1.xpose.msra.mxu0 0.0
    %435 = vmatprep.subr.mxu0 0.0
    %436 = vmatpush1.xpose.msra.mxu0 0.0
    %437 = vmatprep.subr.mxu0 0.0
    %438 = vmatpush1.xpose.msra.mxu0 0.0
    %439 = vmatprep.subr.mxu0 0.0
    %440 = vmatpush1.xpose.msra.mxu0 0.0
    %441 = vmatprep.subr.mxu0 0.0
    %442 = vmatpush1.xpose.msra.mxu0 0.0
    %443 = vmatprep.subr.mxu0 0.0
    %444 = vmatpush1.xpose.msra.mxu0 0.0
    %445 = vmatprep.subr.mxu0 0.0
    %446 = vmatpush1.xpose.msra.mxu0 0.0
    %447 = vmatprep.subr.mxu0 0.0
    %448 = vmatpush1.xpose.msra.mxu0 0.0
    %449 = vmatprep.subr.mxu0 0.0
    %450 = vmatpush1.xpose.msra.mxu0 0.0
    %451 = vmatprep.subr.mxu0 0.0
    %452 = vmatpush1.xpose.msra.mxu0 0.0
    %453 = vmatprep.subr.mxu0 0.0
    %454 = vmatpush1.xpose.msra.mxu0 0.0
    %455 = vmatprep.subr.mxu0 0.0
    %456 = vmatpush1.xpose.msra.mxu0 0.0
    %457 = vmatprep.subr.mxu0 0.0
    %458 = vmatpush1.xpose.msra.mxu0 0.0
    %459 = vmatprep.subr.mxu0 0.0
    %460 = vmatpush1.xpose.msra.mxu0 0.0
    %461 = vmatprep.subr.mxu0 0.0
    %462 = vmatpush1.xpose.msra.mxu0 0.0
    %463 = vmatprep.subr.mxu0 0.0
    %464 = vmatpush1.xpose.msra.mxu0 0.0
    %465 = vmatprep.subr.mxu0 0.0
    %466 = vmatpush1.xpose.msra.mxu0 0.0
    %467 = vmatprep.subr.mxu0 0.0
    %468 = vmatpush1.xpose.msra.mxu0 0.0
    %469 = vmatprep.subr.mxu0 0.0
    %470 = vmatpush1.xpose.msra.mxu0 0.0
    %471 = vmatprep.subr.mxu0 0.0
    %472 = vmatpush1.xpose.msra.mxu0 0.0
    %473 = vmatprep.subr.mxu0 0.0
    %474 = vmatpush1.xpose.msra.mxu0 0.0
    %475 = vmatprep.subr.mxu0 0.0
    %476 = vmatpush1.xpose.msra.mxu0 0.0
    %477 = vmatprep.subr.mxu0 0.0
    %478 = vmatpush1.xpose.msra.mxu0 0.0
    %479 = vmatprep.subr.mxu0 0.0
    %480 = vmatpush1.xpose.msra.mxu0 0.0
    %481 = vmatprep.subr.mxu0 0.0
    %482 = vmatpush1.xpose.msra.mxu0 0.0
    %483 = vmatprep.subr.mxu0 0.0
    %484 = vmatpush1.xpose.msra.mxu0 0.0
    %485 = vmatprep.subr.mxu0 0.0
    %486 = vmatpush1.xpose.msra.mxu0 0.0
    %487 = vmatprep.subr.mxu0 0.0
    %488 = vmatpush1.xpose.msra.mxu0 0.0
    %489 = vmatprep.subr.mxu0 0.0
    %490 = vmatpush1.xpose.msra.mxu0 0.0
    %491 = vmatprep.subr.mxu0 0.0
    %492 = vmatpush1.xpose.msra.mxu0 0.0
    %493 = vmatprep.subr.mxu0 0.0
    %494 = vmatpush1.xpose.msra.mxu0 0.0
    %495 = vmatprep.mubr.f32.mxu0 0.0
    %496 = vmatmul.mubr.f32.gmra.mrb[0].mxu0 %v426
    %v497 = vpop.f32.mrb[0].mxu0
    %v498 = vadd.f32 0.0, %v497
    %v499 = vpop.f32.mrb[0].mxu0
    %500 = vdwg.mxu0
    %v501 = vmul.f32 %v422, 0.25
    %v502 = vmul.f32 %v498, 0.25
    %vm503 = vcmask 64512
    %v504 = vsel %vm503, %v501, -inf
    %505 = vmax.xlane.f32.xlu0 %v504
    %v506 = vpop.xlane.xlu0 %505
    %v507 = vsel %vm503, %v502, -inf
    %508 = vmax.xlane.f32.xlu0 %v507
    %v509 = vpop.xlane.xlu0 %508
    %v510 = vsub.f32 %v501, %v506
    %v511 = vsub.f32 %v502, %v509
    %v512 = vmul.f32 %v510, 1.442695
    %v513 = vpow.pop %v512
    %v514 = vmul.f32 %v511, 1.442695
    %v515 = vpow.pop %v514
    %v516 = vsel %vm503, %v513, 0.0
    %517 = vadd.xlane.f32.xlu0 %v516
    %v518 = vpop.xlane.xlu0 %517
    %v519 = vsel %vm503, %v515, 0.0
    %520 = vadd.xlane.f32.xlu0 %v519
    %v521 = vpop.xlane.xlu0 %520
    %v522 = vrcp.pop %v518
    %v523 = vrcp.pop %v521
    %v524 = vmul.f32 %v513, %v522
    %v525 = vmul.f32 %v515, %v523
    %v527 = vsel %vm503, %v524, 0
    %529 = vmatprep.subr.mxu0 0.0
    %530 = vmatpush1.msra.mxu0 %v340
    %531 = vmatprep.subr.mxu0 0.0
    %532 = vmatpush1.msra.mxu0 0.0
    %533 = vmatprep.subr.mxu0 0.0
    %534 = vmatpush1.msra.mxu0 0.0
    %535 = vmatprep.subr.mxu0 0.0
    %536 = vmatpush1.msra.mxu0 0.0
    %537 = vmatprep.subr.mxu0 0.0
    %538 = vmatpush1.msra.mxu0 0.0
    %539 = vmatprep.subr.mxu0 0.0
    %540 = vmatpush1.msra.mxu0 0.0
    %541 = vmatprep.subr.mxu0 0.0
    %542 = vmatpush1.msra.mxu0 0.0
    %543 = vmatprep.subr.mxu0 0.0
    %544 = vmatpush1.msra.mxu0 0.0
    %545 = vmatprep.subr.mxu0 0.0
    %546 = vmatpush1.msra.mxu0 0.0
    %547 = vmatprep.subr.mxu0 0.0
    %548 = vmatpush1.msra.mxu0 0.0
    %549 = vmatprep.subr.mxu0 0.0
    %550 = vmatpush1.msra.mxu0 0.0
    %551 = vmatprep.subr.mxu0 0.0
    %552 = vmatpush1.msra.mxu0 0.0
    %553 = vmatprep.subr.mxu0 0.0
    %554 = vmatpush1.msra.mxu0 0.0
    %555 = vmatprep.subr.mxu0 0.0
    %556 = vmatpush1.msra.mxu0 0.0
    %557 = vmatprep.subr.mxu0 0.0
    %558 = vmatpush1.msra.mxu0 0.0
    %559 = vmatprep.subr.mxu0 0.0
    %560 = vmatpush1.msra.mxu0 0.0
    %561 = vmatprep.subr.mxu0 0.0
    %562 = vmatpush1.msra.mxu0 0.0
    %563 = vmatprep.subr.mxu0 0.0
    %564 = vmatpush1.msra.mxu0 0.0
    %565 = vmatprep.subr.mxu0 0.0
    %566 = vmatpush1.msra.mxu0 0.0
    %567 = vmatprep.subr.mxu0 0.0
    %568 = vmatpush1.msra.mxu0 0.0
    %569 = vmatprep.subr.mxu0 0.0
    %570 = vmatpush1.msra.mxu0 0.0
    %571 = vmatprep.subr.mxu0 0.0
    %572 = vmatpush1.msra.mxu0 0.0
    %573 = vmatprep.subr.mxu0 0.0
    %574 = vmatpush1.msra.mxu0 0.0
    %575 = vmatprep.subr.mxu0 0.0
    %576 = vmatpush1.msra.mxu0 0.0
    %577 = vmatprep.subr.mxu0 0.0
    %578 = vmatpush1.msra.mxu0 0.0
    %579 = vmatprep.subr.mxu0 0.0
    %580 = vmatpush1.msra.mxu0 0.0
    %581 = vmatprep.subr.mxu0 0.0
    %582 = vmatpush1.msra.mxu0 0.0
    %583 = vmatprep.subr.mxu0 0.0
    %584 = vmatpush1.msra.mxu0 0.0
    %585 = vmatprep.subr.mxu0 0.0
    %586 = vmatpush1.msra.mxu0 0.0
    %587 = vmatprep.subr.mxu0 0.0
    %588 = vmatpush1.msra.mxu0 0.0
    %589 = vmatprep.subr.mxu0 0.0
    %590 = vmatpush1.msra.mxu0 0.0
    %591 = vmatprep.subr.mxu0 0.0
    %592 = vmatpush1.msra.mxu0 0.0
    %593 = vmatprep.mubr.f32.mxu0 0.0
    %594 = vmatmul.mubr.f32.gmra.mrb[0].mxu0 %v527
    %v595 = vpop.f32.mrb[0].mxu0
    %v596 = vadd.f32 0.0, %v595
    %v597 = vpop.f32.mrb[0].mxu0
    %598 = vdwg.mxu0
    %v600 = vsel %vm503, %v525, 0
    %602 = vmatprep.subr.mxu0 0.0
    %603 = vmatpush1.msra.mxu0 %v345
    %604 = vmatprep.subr.mxu0 0.0
    %605 = vmatpush1.msra.mxu0 0.0
    %606 = vmatprep.subr.mxu0 0.0
    %607 = vmatpush1.msra.mxu0 0.0
    %608 = vmatprep.subr.mxu0 0.0
    %609 = vmatpush1.msra.mxu0 0.0
    %610 = vmatprep.subr.mxu0 0.0
    %611 = vmatpush1.msra.mxu0 0.0
    %612 = vmatprep.subr.mxu0 0.0
    %613 = vmatpush1.msra.mxu0 0.0
    %614 = vmatprep.subr.mxu0 0.0
    %615 = vmatpush1.msra.mxu0 0.0
    %616 = vmatprep.subr.mxu0 0.0
    %617 = vmatpush1.msra.mxu0 0.0
    %618 = vmatprep.subr.mxu0 0.0
    %619 = vmatpush1.msra.mxu0 0.0
    %620 = vmatprep.subr.mxu0 0.0
    %621 = vmatpush1.msra.mxu0 0.0
    %622 = vmatprep.subr.mxu0 0.0
    %623 = vmatpush1.msra.mxu0 0.0
    %624 = vmatprep.subr.mxu0 0.0
    %625 = vmatpush1.msra.mxu0 0.0
    %626 = vmatprep.subr.mxu0 0.0
    %627 = vmatpush1.msra.mxu0 0.0
    %628 = vmatprep.subr.mxu0 0.0
    %629 = vmatpush1.msra.mxu0 0.0
    %630 = vmatprep.subr.mxu0 0.0
    %631 = vmatpush1.msra.mxu0 0.0
    %632 = vmatprep.subr.mxu0 0.0
    %633 = vmatpush1.msra.mxu0 0.0
    %634 = vmatprep.subr.mxu0 0.0
    %635 = vmatpush1.msra.mxu0 0.0
    %636 = vmatprep.subr.mxu0 0.0
    %637 = vmatpush1.msra.mxu0 0.0
    %638 = vmatprep.subr.mxu0 0.0
    %639 = vmatpush1.msra.mxu0 0.0
    %640 = vmatprep.subr.mxu0 0.0
    %641 = vmatpush1.msra.mxu0 0.0
    %642 = vmatprep.subr.mxu0 0.0
    %643 = vmatpush1.msra.mxu0 0.0
    %644 = vmatprep.subr.mxu0 0.0
    %645 = vmatpush1.msra.mxu0 0.0
    %646 = vmatprep.subr.mxu0 0.0
    %647 = vmatpush1.msra.mxu0 0.0
    %648 = vmatprep.subr.mxu0 0.0
    %649 = vmatpush1.msra.mxu0 0.0
    %650 = vmatprep.subr.mxu0 0.0
    %651 = vmatpush1.msra.mxu0 0.0
    %652 = vmatprep.subr.mxu0 0.0
    %653 = vmatpush1.msra.mxu0 0.0
    %654 = vmatprep.subr.mxu0 0.0
    %655 = vmatpush1.msra.mxu0 0.0
    %656 = vmatprep.subr.mxu0 0.0
    %657 = vmatpush1.msra.mxu0 0.0
    %658 = vmatprep.subr.mxu0 0.0
    %659 = vmatpush1.msra.mxu0 0.0
    %660 = vmatprep.subr.mxu0 0.0
    %661 = vmatpush1.msra.mxu0 0.0
    %662 = vmatprep.subr.mxu0 0.0
    %663 = vmatpush1.msra.mxu0 0.0
    %664 = vmatprep.subr.mxu0 0.0
    %665 = vmatpush1.msra.mxu0 0.0
    %666 = vmatprep.mubr.f32.mxu0 0.0
    %667 = vmatmul.mubr.f32.gmra.mrb[0].mxu0 %v600
    %v668 = vpop.f32.mrb[0].mxu0
    %v669 = vadd.f32 0.0, %v668
    %v670 = vpop.f32.mrb[0].mxu0
    %671 = vdwg.mxu0
    %v672 = vld [vmem:[%s6] sm:$0xff]
    %v673 = vld [vmem:[%s6 + $0x8] sm:$0xff]
    %v675 = vsel %vm348, %v596, 0
    %v678 = vsel %vm348, %v669, 0
    %680 = vmatprep.subr.mxu0 0.0
    %681 = vmatpush1.msra.mxu0 %v672
    %682 = vmatprep.subr.mxu0 0.0
    %683 = vmatpush1.msra.mxu0 %v673
    %684 = vmatprep.subr.mxu0 0.0
    %685 = vmatpush1.msra.mxu0 0.0
    %686 = vmatprep.subr.mxu0 0.0
    %687 = vmatpush1.msra.mxu0 0.0
    %688 = vmatprep.subr.mxu0 0.0
    %689 = vmatpush1.msra.mxu0 0.0
    %690 = vmatprep.subr.mxu0 0.0
    %691 = vmatpush1.msra.mxu0 0.0
    %692 = vmatprep.subr.mxu0 0.0
    %693 = vmatpush1.msra.mxu0 0.0
    %694 = vmatprep.subr.mxu0 0.0
    %695 = vmatpush1.msra.mxu0 0.0
    %696 = vmatprep.subr.mxu0 0.0
    %697 = vmatpush1.msra.mxu0 0.0
    %698 = vmatprep.subr.mxu0 0.0
    %699 = vmatpush1.msra.mxu0 0.0
    %700 = vmatprep.subr.mxu0 0.0
    %701 = vmatpush1.msra.mxu0 0.0
    %702 = vmatprep.subr.mxu0 0.0
    %703 = vmatpush1.msra.mxu0 0.0
    %704 = vmatprep.subr.mxu0 0.0
    %705 = vmatpush1.msra.mxu0 0.0
    %706 = vmatprep.subr.mxu0 0.0
    %707 = vmatpush1.msra.mxu0 0.0
    %708 = vmatprep.subr.mxu0 0.0
    %709 = vmatpush1.msra.mxu0 0.0
    %710 = vmatprep.subr.mxu0 0.0
    %711 = vmatpush1.msra.mxu0 0.0
    %712 = vmatprep.subr.mxu0 0.0
    %713 = vmatpush1.msra.mxu0 0.0
    %714 = vmatprep.subr.mxu0 0.0
    %715 = vmatpush1.msra.mxu0 0.0
    %716 = vmatprep.subr.mxu0 0.0
    %717 = vmatpush1.msra.mxu0 0.0
    %718 = vmatprep.subr.mxu0 0.0
    %719 = vmatpush1.msra.mxu0 0.0
    %720 = vmatprep.subr.mxu0 0.0
    %721 = vmatpush1.msra.mxu0 0.0
    %722 = vmatprep.subr.mxu0 0.0
    %723 = vmatpush1.msra.mxu0 0.0
    %724 = vmatprep.subr.mxu0 0.0
    %725 = vmatpush1.msra.mxu0 0.0
    %726 = vmatprep.subr.mxu0 0.0
    %727 = vmatpush1.msra.mxu0 0.0
    %728 = vmatprep.subr.mxu0 0.0
    %729 = vmatpush1.msra.mxu0 0.0
    %730 = vmatprep.subr.mxu0 0.0
    %731 = vmatpush1.msra.mxu0 0.0
    %732 = vmatprep.subr.mxu0 0.0
    %733 = vmatpush1.msra.mxu0 0.0
    %734 = vmatprep.subr.mxu0 0.0
    %735 = vmatpush1.msra.mxu0 0.0
    %736 = vmatprep.subr.mxu0 0.0
    %737 = vmatpush1.msra.mxu0 0.0
    %738 = vmatprep.subr.mxu0 0.0
    %739 = vmatpush1.msra.mxu0 0.0
    %740 = vmatprep.subr.mxu0 0.0
    %741 = vmatpush1.msra.mxu0 0.0
    %742 = vmatprep.subr.mxu0 0.0
    %743 = vmatpush1.msra.mxu0 0.0
    %744 = vmatprep.mubr.f32.mxu0 0.0
    %745 = vmatmul.mubr.f32.gmra.mrb[0].mxu0 %v675
    %v746 = vpop.f32.mrb[0].mxu0
    %v747 = vadd.f32 0.0, %v746
    %v748 = vpop.f32.mrb[0].mxu0
    %749 = vmatprep.mubr.f32.mxu0 0.0
    %750 = vmatmul.mubr.f32.gmra.mrb[0].mxu0 %v678
    %v751 = vpop.f32.mrb[0].mxu0
    %v752 = vadd.f32 0.0, %v751
    %v753 = vpop.f32.mrb[0].mxu0
    %754 = vdwg.mxu0
    %v755 = vadd.f32 %v103, %v747
    %v756 = vadd.f32 %v104, %v752
    %s757 = scalar_lea.vmem %s3, 32
    %v758 = vld [vmem:[%s757] sm:$0xff]
    %v759 = vld [vmem:[%s757 + $0x8] sm:$0xff]
    %v760 = vld [vmem:[%s757 + $0x10] sm:$0xff]
    %v761 = vld [vmem:[%s757 + $0x18] sm:$0xff]
    %762 = vmatprep.subr.mxu0 0.0
    %763 = vmatpush1.msra.mxu0 %v758
    %764 = vmatprep.subr.mxu0 0.0
    %765 = vmatpush1.msra.mxu0 %v759
    %766 = vmatprep.subr.mxu0 0.0
    %767 = vmatpush1.msra.mxu0 %v760
    %768 = vmatprep.subr.mxu0 0.0
    %769 = vmatpush1.msra.mxu0 %v761
    %770 = vmatprep.subr.mxu0 0.0
    %771 = vmatpush1.msra.mxu0 0.0
    %772 = vmatprep.subr.mxu0 0.0
    %773 = vmatpush1.msra.mxu0 0.0
    %774 = vmatprep.subr.mxu0 0.0
    %775 = vmatpush1.msra.mxu0 0.0
    %776 = vmatprep.subr.mxu0 0.0
    %777 = vmatpush1.msra.mxu0 0.0
    %778 = vmatprep.subr.mxu0 0.0
    %779 = vmatpush1.msra.mxu0 0.0
    %780 = vmatprep.subr.mxu0 0.0
    %781 = vmatpush1.msra.mxu0 0.0
    %782 = vmatprep.subr.mxu0 0.0
    %783 = vmatpush1.msra.mxu0 0.0
    %784 = vmatprep.subr.mxu0 0.0
    %785 = vmatpush1.msra.mxu0 0.0
    %786 = vmatprep.subr.mxu0 0.0
    %787 = vmatpush1.msra.mxu0 0.0
    %788 = vmatprep.subr.mxu0 0.0
    %789 = vmatpush1.msra.mxu0 0.0
    %790 = vmatprep.subr.mxu0 0.0
    %791 = vmatpush1.msra.mxu0 0.0
    %792 = vmatprep.subr.mxu0 0.0
    %793 = vmatpush1.msra.mxu0 0.0
    %794 = vmatprep.subr.mxu0 0.0
    %795 = vmatpush1.msra.mxu0 0.0
    %796 = vmatprep.subr.mxu0 0.0
    %797 = vmatpush1.msra.mxu0 0.0
    %798 = vmatprep.subr.mxu0 0.0
    %799 = vmatpush1.msra.mxu0 0.0
    %800 = vmatprep.subr.mxu0 0.0
    %801 = vmatpush1.msra.mxu0 0.0
    %802 = vmatprep.subr.mxu0 0.0
    %803 = vmatpush1.msra.mxu0 0.0
    %804 = vmatprep.subr.mxu0 0.0
    %805 = vmatpush1.msra.mxu0 0.0
    %806 = vmatprep.subr.mxu0 0.0
    %807 = vmatpush1.msra.mxu0 0.0
    %808 = vmatprep.subr.mxu0 0.0
    %809 = vmatpush1.msra.mxu0 0.0
    %810 = vmatprep.subr.mxu0 0.0
    %811 = vmatpush1.msra.mxu0 0.0
    %812 = vmatprep.subr.mxu0 0.0
    %813 = vmatpush1.msra.mxu0 0.0
    %814 = vmatprep.subr.mxu0 0.0
    %815 = vmatpush1.msra.mxu0 0.0
    %816 = vmatprep.subr.mxu0 0.0
    %817 = vmatpush1.msra.mxu0 0.0
    %818 = vmatprep.subr.mxu0 0.0
    %819 = vmatpush1.msra.mxu0 0.0
    %820 = vmatprep.subr.mxu0 0.0
    %821 = vmatpush1.msra.mxu0 0.0
    %822 = vmatprep.subr.mxu0 0.0
    %823 = vmatpush1.msra.mxu0 0.0
    %824 = vmatprep.subr.mxu0 0.0
    %825 = vmatpush1.msra.mxu0 0.0
    %826 = vmatprep.mubr.f32.mxu0 0.0
    %827 = vmatmul.mubr.f32.gmra.mrb[0].mxu0 %v110
    %v828 = vpop.f32.mrb[0].mxu0
    %v829 = vadd.f32 0.0, %v828
    %v830 = vpop.f32.mrb[0].mxu0
    %831 = vmatprep.mubr.f32.mxu0 0.0
    %832 = vmatmul.mubr.f32.gmra.mrb[0].mxu0 %v113
    %v833 = vpop.f32.mrb[0].mxu0
    %v834 = vadd.f32 0.0, %v833
    %v835 = vpop.f32.mrb[0].mxu0
    %836 = vdwg.mxu0
    %s837 = scalar_lea.vmem %s4, 32
    %v838 = vld [vmem:[%s837] sm:$0xff]
    %v839 = vld [vmem:[%s837 + $0x8] sm:$0xff]
    %v840 = vld [vmem:[%s837 + $0x10] sm:$0xff]
    %v841 = vld [vmem:[%s837 + $0x18] sm:$0xff]
    %842 = vmatprep.subr.mxu0 0.0
    %843 = vmatpush1.msra.mxu0 %v838
    %844 = vmatprep.subr.mxu0 0.0
    %845 = vmatpush1.msra.mxu0 %v839
    %846 = vmatprep.subr.mxu0 0.0
    %847 = vmatpush1.msra.mxu0 %v840
    %848 = vmatprep.subr.mxu0 0.0
    %849 = vmatpush1.msra.mxu0 %v841
    %850 = vmatprep.subr.mxu0 0.0
    %851 = vmatpush1.msra.mxu0 0.0
    %852 = vmatprep.subr.mxu0 0.0
    %853 = vmatpush1.msra.mxu0 0.0
    %854 = vmatprep.subr.mxu0 0.0
    %855 = vmatpush1.msra.mxu0 0.0
    %856 = vmatprep.subr.mxu0 0.0
    %857 = vmatpush1.msra.mxu0 0.0
    %858 = vmatprep.subr.mxu0 0.0
    %859 = vmatpush1.msra.mxu0 0.0
    %860 = vmatprep.subr.mxu0 0.0
    %861 = vmatpush1.msra.mxu0 0.0
    %862 = vmatprep.subr.mxu0 0.0
    %863 = vmatpush1.msra.mxu0 0.0
    %864 = vmatprep.subr.mxu0 0.0
    %865 = vmatpush1.msra.mxu0 0.0
    %866 = vmatprep.subr.mxu0 0.0
    %867 = vmatpush1.msra.mxu0 0.0
    %868 = vmatprep.subr.mxu0 0.0
    %869 = vmatpush1.msra.mxu0 0.0
    %870 = vmatprep.subr.mxu0 0.0
    %871 = vmatpush1.msra.mxu0 0.0
    %872 = vmatprep.subr.mxu0 0.0
    %873 = vmatpush1.msra.mxu0 0.0
    %874 = vmatprep.subr.mxu0 0.0
    %875 = vmatpush1.msra.mxu0 0.0
    %876 = vmatprep.subr.mxu0 0.0
    %877 = vmatpush1.msra.mxu0 0.0
    %878 = vmatprep.subr.mxu0 0.0
    %879 = vmatpush1.msra.mxu0 0.0
    %880 = vmatprep.subr.mxu0 0.0
    %881 = vmatpush1.msra.mxu0 0.0
    %882 = vmatprep.subr.mxu0 0.0
    %883 = vmatpush1.msra.mxu0 0.0
    %884 = vmatprep.subr.mxu0 0.0
    %885 = vmatpush1.msra.mxu0 0.0
    %886 = vmatprep.subr.mxu0 0.0
    %887 = vmatpush1.msra.mxu0 0.0
    %888 = vmatprep.subr.mxu0 0.0
    %889 = vmatpush1.msra.mxu0 0.0
    %890 = vmatprep.subr.mxu0 0.0
    %891 = vmatpush1.msra.mxu0 0.0
    %892 = vmatprep.subr.mxu0 0.0
    %893 = vmatpush1.msra.mxu0 0.0
    %894 = vmatprep.subr.mxu0 0.0
    %895 = vmatpush1.msra.mxu0 0.0
    %896 = vmatprep.subr.mxu0 0.0
    %897 = vmatpush1.msra.mxu0 0.0
    %898 = vmatprep.subr.mxu0 0.0
    %899 = vmatpush1.msra.mxu0 0.0
    %900 = vmatprep.subr.mxu0 0.0
    %901 = vmatpush1.msra.mxu0 0.0
    %902 = vmatprep.subr.mxu0 0.0
    %903 = vmatpush1.msra.mxu0 0.0
    %904 = vmatprep.subr.mxu0 0.0
    %905 = vmatpush1.msra.mxu0 0.0
    %906 = vmatprep.mubr.f32.mxu0 0.0
    %907 = vmatmul.mubr.f32.gmra.mrb[0].mxu0 %v110
    %v908 = vpop.f32.mrb[0].mxu0
    %v909 = vadd.f32 0.0, %v908
    %v910 = vpop.f32.mrb[0].mxu0
    %911 = vmatprep.mubr.f32.mxu0 0.0
    %912 = vmatmul.mubr.f32.gmra.mrb[0].mxu0 %v113
    %v913 = vpop.f32.mrb[0].mxu0
    %v914 = vadd.f32 0.0, %v913
    %v915 = vpop.f32.mrb[0].mxu0
    %916 = vdwg.mxu0
    %s917 = scalar_lea.vmem %s5, 32
    %v918 = vld [vmem:[%s917] sm:$0xff]
    %v919 = vld [vmem:[%s917 + $0x8] sm:$0xff]
    %v920 = vld [vmem:[%s917 + $0x10] sm:$0xff]
    %v921 = vld [vmem:[%s917 + $0x18] sm:$0xff]
    %922 = vmatprep.subr.mxu0 0.0
    %923 = vmatpush1.msra.mxu0 %v918
    %924 = vmatprep.subr.mxu0 0.0
    %925 = vmatpush1.msra.mxu0 %v919
    %926 = vmatprep.subr.mxu0 0.0
    %927 = vmatpush1.msra.mxu0 %v920
    %928 = vmatprep.subr.mxu0 0.0
    %929 = vmatpush1.msra.mxu0 %v921
    %930 = vmatprep.subr.mxu0 0.0
    %931 = vmatpush1.msra.mxu0 0.0
    %932 = vmatprep.subr.mxu0 0.0
    %933 = vmatpush1.msra.mxu0 0.0
    %934 = vmatprep.subr.mxu0 0.0
    %935 = vmatpush1.msra.mxu0 0.0
    %936 = vmatprep.subr.mxu0 0.0
    %937 = vmatpush1.msra.mxu0 0.0
    %938 = vmatprep.subr.mxu0 0.0
    %939 = vmatpush1.msra.mxu0 0.0
    %940 = vmatprep.subr.mxu0 0.0
    %941 = vmatpush1.msra.mxu0 0.0
    %942 = vmatprep.subr.mxu0 0.0
    %943 = vmatpush1.msra.mxu0 0.0
    %944 = vmatprep.subr.mxu0 0.0
    %945 = vmatpush1.msra.mxu0 0.0
    %946 = vmatprep.subr.mxu0 0.0
    %947 = vmatpush1.msra.mxu0 0.0
    %948 = vmatprep.subr.mxu0 0.0
    %949 = vmatpush1.msra.mxu0 0.0
    %950 = vmatprep.subr.mxu0 0.0
    %951 = vmatpush1.msra.mxu0 0.0
    %952 = vmatprep.subr.mxu0 0.0
    %953 = vmatpush1.msra.mxu0 0.0
    %954 = vmatprep.subr.mxu0 0.0
    %955 = vmatpush1.msra.mxu0 0.0
    %956 = vmatprep.subr.mxu0 0.0
    %957 = vmatpush1.msra.mxu0 0.0
    %958 = vmatprep.subr.mxu0 0.0
    %959 = vmatpush1.msra.mxu0 0.0
    %960 = vmatprep.subr.mxu0 0.0
    %961 = vmatpush1.msra.mxu0 0.0
    %962 = vmatprep.subr.mxu0 0.0
    %963 = vmatpush1.msra.mxu0 0.0
    %964 = vmatprep.subr.mxu0 0.0
    %965 = vmatpush1.msra.mxu0 0.0
    %966 = vmatprep.subr.mxu0 0.0
    %967 = vmatpush1.msra.mxu0 0.0
    %968 = vmatprep.subr.mxu0 0.0
    %969 = vmatpush1.msra.mxu0 0.0
    %970 = vmatprep.subr.mxu0 0.0
    %971 = vmatpush1.msra.mxu0 0.0
    %972 = vmatprep.subr.mxu0 0.0
    %973 = vmatpush1.msra.mxu0 0.0
    %974 = vmatprep.subr.mxu0 0.0
    %975 = vmatpush1.msra.mxu0 0.0
    %976 = vmatprep.subr.mxu0 0.0
    %977 = vmatpush1.msra.mxu0 0.0
    %978 = vmatprep.subr.mxu0 0.0
    %979 = vmatpush1.msra.mxu0 0.0
    %980 = vmatprep.subr.mxu0 0.0
    %981 = vmatpush1.msra.mxu0 0.0
    %982 = vmatprep.subr.mxu0 0.0
    %983 = vmatpush1.msra.mxu0 0.0
    %984 = vmatprep.subr.mxu0 0.0
    %985 = vmatpush1.msra.mxu0 0.0
    %986 = vmatprep.mubr.f32.mxu0 0.0
    %987 = vmatmul.mubr.f32.gmra.mrb[0].mxu0 %v110
    %v988 = vpop.f32.mrb[0].mxu0
    %v989 = vadd.f32 0.0, %v988
    %v990 = vpop.f32.mrb[0].mxu0
    %991 = vmatprep.mubr.f32.mxu0 0.0
    %992 = vmatmul.mubr.f32.gmra.mrb[0].mxu0 %v113
    %v993 = vpop.f32.mrb[0].mxu0
    %v994 = vadd.f32 0.0, %v993
    %v995 = vpop.f32.mrb[0].mxu0
    %996 = vdwg.mxu0
    %v998 = vsel %vm348, %v829, 0
    %v1001 = vsel %vm348, %v909, 0
    %1003 = vmatprep.subr.mxu0 0.0
    %1004 = vmatpush1.xpose.msra.mxu0 %v1001
    %1005 = vmatprep.subr.mxu0 0.0
    %1006 = vmatpush1.xpose.msra.mxu0 0.0
    %1007 = vmatprep.subr.mxu0 0.0
    %1008 = vmatpush1.xpose.msra.mxu0 0.0
    %1009 = vmatprep.subr.mxu0 0.0
    %1010 = vmatpush1.xpose.msra.mxu0 0.0
    %1011 = vmatprep.subr.mxu0 0.0
    %1012 = vmatpush1.xpose.msra.mxu0 0.0
    %1013 = vmatprep.subr.mxu0 0.0
    %1014 = vmatpush1.xpose.msra.mxu0 0.0
    %1015 = vmatprep.subr.mxu0 0.0
    %1016 = vmatpush1.xpose.msra.mxu0 0.0
    %1017 = vmatprep.subr.mxu0 0.0
    %1018 = vmatpush1.xpose.msra.mxu0 0.0
    %1019 = vmatprep.subr.mxu0 0.0
    %1020 = vmatpush1.xpose.msra.mxu0 0.0
    %1021 = vmatprep.subr.mxu0 0.0
    %1022 = vmatpush1.xpose.msra.mxu0 0.0
    %1023 = vmatprep.subr.mxu0 0.0
    %1024 = vmatpush1.xpose.msra.mxu0 0.0
    %1025 = vmatprep.subr.mxu0 0.0
    %1026 = vmatpush1.xpose.msra.mxu0 0.0
    %1027 = vmatprep.subr.mxu0 0.0
    %1028 = vmatpush1.xpose.msra.mxu0 0.0
    %1029 = vmatprep.subr.mxu0 0.0
    %1030 = vmatpush1.xpose.msra.mxu0 0.0
    %1031 = vmatprep.subr.mxu0 0.0
    %1032 = vmatpush1.xpose.msra.mxu0 0.0
    %1033 = vmatprep.subr.mxu0 0.0
    %1034 = vmatpush1.xpose.msra.mxu0 0.0
    %1035 = vmatprep.subr.mxu0 0.0
    %1036 = vmatpush1.xpose.msra.mxu0 0.0
    %1037 = vmatprep.subr.mxu0 0.0
    %1038 = vmatpush1.xpose.msra.mxu0 0.0
    %1039 = vmatprep.subr.mxu0 0.0
    %1040 = vmatpush1.xpose.msra.mxu0 0.0
    %1041 = vmatprep.subr.mxu0 0.0
    %1042 = vmatpush1.xpose.msra.mxu0 0.0
    %1043 = vmatprep.subr.mxu0 0.0
    %1044 = vmatpush1.xpose.msra.mxu0 0.0
    %1045 = vmatprep.subr.mxu0 0.0
    %1046 = vmatpush1.xpose.msra.mxu0 0.0
    %1047 = vmatprep.subr.mxu0 0.0
    %1048 = vmatpush1.xpose.msra.mxu0 0.0
    %1049 = vmatprep.subr.mxu0 0.0
    %1050 = vmatpush1.xpose.msra.mxu0 0.0
    %1051 = vmatprep.subr.mxu0 0.0
    %1052 = vmatpush1.xpose.msra.mxu0 0.0
    %1053 = vmatprep.subr.mxu0 0.0
    %1054 = vmatpush1.xpose.msra.mxu0 0.0
    %1055 = vmatprep.subr.mxu0 0.0
    %1056 = vmatpush1.xpose.msra.mxu0 0.0
    %1057 = vmatprep.subr.mxu0 0.0
    %1058 = vmatpush1.xpose.msra.mxu0 0.0
    %1059 = vmatprep.subr.mxu0 0.0
    %1060 = vmatpush1.xpose.msra.mxu0 0.0
    %1061 = vmatprep.subr.mxu0 0.0
    %1062 = vmatpush1.xpose.msra.mxu0 0.0
    %1063 = vmatprep.subr.mxu0 0.0
    %1064 = vmatpush1.xpose.msra.mxu0 0.0
    %1065 = vmatprep.subr.mxu0 0.0
    %1066 = vmatpush1.xpose.msra.mxu0 0.0
    %1067 = vmatprep.mubr.f32.mxu0 0.0
    %1068 = vmatmul.mubr.f32.gmra.mrb[0].mxu0 %v998
    %v1069 = vpop.f32.mrb[0].mxu0
    %v1070 = vadd.f32 0.0, %v1069
    %v1071 = vpop.f32.mrb[0].mxu0
    %1072 = vdwg.mxu0
    %v1074 = vsel %vm348, %v834, 0
    %v1077 = vsel %vm348, %v914, 0
    %1079 = vmatprep.subr.mxu0 0.0
    %1080 = vmatpush1.xpose.msra.mxu0 %v1077
    %1081 = vmatprep.subr.mxu0 0.0
    %1082 = vmatpush1.xpose.msra.mxu0 0.0
    %1083 = vmatprep.subr.mxu0 0.0
    %1084 = vmatpush1.xpose.msra.mxu0 0.0
    %1085 = vmatprep.subr.mxu0 0.0
    %1086 = vmatpush1.xpose.msra.mxu0 0.0
    %1087 = vmatprep.subr.mxu0 0.0
    %1088 = vmatpush1.xpose.msra.mxu0 0.0
    %1089 = vmatprep.subr.mxu0 0.0
    %1090 = vmatpush1.xpose.msra.mxu0 0.0
    %1091 = vmatprep.subr.mxu0 0.0
    %1092 = vmatpush1.xpose.msra.mxu0 0.0
    %1093 = vmatprep.subr.mxu0 0.0
    %1094 = vmatpush1.xpose.msra.mxu0 0.0
    %1095 = vmatprep.subr.mxu0 0.0
    %1096 = vmatpush1.xpose.msra.mxu0 0.0
    %1097 = vmatprep.subr.mxu0 0.0
    %1098 = vmatpush1.xpose.msra.mxu0 0.0
    %1099 = vmatprep.subr.mxu0 0.0
    %1100 = vmatpush1.xpose.msra.mxu0 0.0
    %1101 = vmatprep.subr.mxu0 0.0
    %1102 = vmatpush1.xpose.msra.mxu0 0.0
    %1103 = vmatprep.subr.mxu0 0.0
    %1104 = vmatpush1.xpose.msra.mxu0 0.0
    %1105 = vmatprep.subr.mxu0 0.0
    %1106 = vmatpush1.xpose.msra.mxu0 0.0
    %1107 = vmatprep.subr.mxu0 0.0
    %1108 = vmatpush1.xpose.msra.mxu0 0.0
    %1109 = vmatprep.subr.mxu0 0.0
    %1110 = vmatpush1.xpose.msra.mxu0 0.0
    %1111 = vmatprep.subr.mxu0 0.0
    %1112 = vmatpush1.xpose.msra.mxu0 0.0
    %1113 = vmatprep.subr.mxu0 0.0
    %1114 = vmatpush1.xpose.msra.mxu0 0.0
    %1115 = vmatprep.subr.mxu0 0.0
    %1116 = vmatpush1.xpose.msra.mxu0 0.0
    %1117 = vmatprep.subr.mxu0 0.0
    %1118 = vmatpush1.xpose.msra.mxu0 0.0
    %1119 = vmatprep.subr.mxu0 0.0
    %1120 = vmatpush1.xpose.msra.mxu0 0.0
    %1121 = vmatprep.subr.mxu0 0.0
    %1122 = vmatpush1.xpose.msra.mxu0 0.0
    %1123 = vmatprep.subr.mxu0 0.0
    %1124 = vmatpush1.xpose.msra.mxu0 0.0
    %1125 = vmatprep.subr.mxu0 0.0
    %1126 = vmatpush1.xpose.msra.mxu0 0.0
    %1127 = vmatprep.subr.mxu0 0.0
    %1128 = vmatpush1.xpose.msra.mxu0 0.0
    %1129 = vmatprep.subr.mxu0 0.0
    %1130 = vmatpush1.xpose.msra.mxu0 0.0
    %1131 = vmatprep.subr.mxu0 0.0
    %1132 = vmatpush1.xpose.msra.mxu0 0.0
    %1133 = vmatprep.subr.mxu0 0.0
    %1134 = vmatpush1.xpose.msra.mxu0 0.0
    %1135 = vmatprep.subr.mxu0 0.0
    %1136 = vmatpush1.xpose.msra.mxu0 0.0
    %1137 = vmatprep.subr.mxu0 0.0
    %1138 = vmatpush1.xpose.msra.mxu0 0.0
    %1139 = vmatprep.subr.mxu0 0.0
    %1140 = vmatpush1.xpose.msra.mxu0 0.0
    %1141 = vmatprep.subr.mxu0 0.0
    %1142 = vmatpush1.xpose.msra.mxu0 0.0
    %1143 = vmatprep.mubr.f32.mxu0 0.0
    %1144 = vmatmul.mubr.f32.gmra.mrb[0].mxu0 %v1074
    %v1145 = vpop.f32.mrb[0].mxu0
    %v1146 = vadd.f32 0.0, %v1145
    %v1147 = vpop.f32.mrb[0].mxu0
    %1148 = vdwg.mxu0
    %v1149 = vmul.f32 %v1070, 0.25
    %v1150 = vmul.f32 %v1146, 0.25
    %v1151 = vsel %vm503, %v1149, -inf
    %1152 = vmax.xlane.f32.xlu0 %v1151
    %v1153 = vpop.xlane.xlu0 %1152
    %v1154 = vsel %vm503, %v1150, -inf
    %1155 = vmax.xlane.f32.xlu0 %v1154
    %v1156 = vpop.xlane.xlu0 %1155
    %v1157 = vsub.f32 %v1149, %v1153
    %v1158 = vsub.f32 %v1150, %v1156
    %v1159 = vmul.f32 %v1157, 1.442695
    %v1160 = vpow.pop %v1159
    %v1161 = vmul.f32 %v1158, 1.442695
    %v1162 = vpow.pop %v1161
    %v1163 = vsel %vm503, %v1160, 0.0
    %1164 = vadd.xlane.f32.xlu0 %v1163
    %v1165 = vpop.xlane.xlu0 %1164
    %v1166 = vsel %vm503, %v1162, 0.0
    %1167 = vadd.xlane.f32.xlu0 %v1166
    %v1168 = vpop.xlane.xlu0 %1167
    %v1169 = vrcp.pop %v1165
    %v1170 = vrcp.pop %v1168
    %v1171 = vmul.f32 %v1160, %v1169
    %v1172 = vmul.f32 %v1162, %v1170
    %v1174 = vsel %vm503, %v1171, 0
    %1176 = vmatprep.subr.mxu0 0.0
    %1177 = vmatpush1.msra.mxu0 %v989
    %1178 = vmatprep.subr.mxu0 0.0
    %1179 = vmatpush1.msra.mxu0 0.0
    %1180 = vmatprep.subr.mxu0 0.0
    %1181 = vmatpush1.msra.mxu0 0.0
    %1182 = vmatprep.subr.mxu0 0.0
    %1183 = vmatpush1.msra.mxu0 0.0
    %1184 = vmatprep.subr.mxu0 0.0
    %1185 = vmatpush1.msra.mxu0 0.0
    %1186 = vmatprep.subr.mxu0 0.0
    %1187 = vmatpush1.msra.mxu0 0.0
    %1188 = vmatprep.subr.mxu0 0.0
    %1189 = vmatpush1.msra.mxu0 0.0
    %1190 = vmatprep.subr.mxu0 0.0
    %1191 = vmatpush1.msra.mxu0 0.0
    %1192 = vmatprep.subr.mxu0 0.0
    %1193 = vmatpush1.msra.mxu0 0.0
    %1194 = vmatprep.subr.mxu0 0.0
    %1195 = vmatpush1.msra.mxu0 0.0
    %1196 = vmatprep.subr.mxu0 0.0
    %1197 = vmatpush1.msra.mxu0 0.0
    %1198 = vmatprep.subr.mxu0 0.0
    %1199 = vmatpush1.msra.mxu0 0.0
    %1200 = vmatprep.subr.mxu0 0.0
    %1201 = vmatpush1.msra.mxu0 0.0
    %1202 = vmatprep.subr.mxu0 0.0
    %1203 = vmatpush1.msra.mxu0 0.0
    %1204 = vmatprep.subr.mxu0 0.0
    %1205 = vmatpush1.msra.mxu0 0.0
    %1206 = vmatprep.subr.mxu0 0.0
    %1207 = vmatpush1.msra.mxu0 0.0
    %1208 = vmatprep.subr.mxu0 0.0
    %1209 = vmatpush1.msra.mxu0 0.0
    %1210 = vmatprep.subr.mxu0 0.0
    %1211 = vmatpush1.msra.mxu0 0.0
    %1212 = vmatprep.subr.mxu0 0.0
    %1213 = vmatpush1.msra.mxu0 0.0
    %1214 = vmatprep.subr.mxu0 0.0
    %1215 = vmatpush1.msra.mxu0 0.0
    %1216 = vmatprep.subr.mxu0 0.0
    %1217 = vmatpush1.msra.mxu0 0.0
    %1218 = vmatprep.subr.mxu0 0.0
    %1219 = vmatpush1.msra.mxu0 0.0
    %1220 = vmatprep.subr.mxu0 0.0
    %1221 = vmatpush1.msra.mxu0 0.0
    %1222 = vmatprep.subr.mxu0 0.0
    %1223 = vmatpush1.msra.mxu0 0.0
    %1224 = vmatprep.subr.mxu0 0.0
    %1225 = vmatpush1.msra.mxu0 0.0
    %1226 = vmatprep.subr.mxu0 0.0
    %1227 = vmatpush1.msra.mxu0 0.0
    %1228 = vmatprep.subr.mxu0 0.0
    %1229 = vmatpush1.msra.mxu0 0.0
    %1230 = vmatprep.subr.mxu0 0.0
    %1231 = vmatpush1.msra.mxu0 0.0
    %1232 = vmatprep.subr.mxu0 0.0
    %1233 = vmatpush1.msra.mxu0 0.0
    %1234 = vmatprep.subr.mxu0 0.0
    %1235 = vmatpush1.msra.mxu0 0.0
    %1236 = vmatprep.subr.mxu0 0.0
    %1237 = vmatpush1.msra.mxu0 0.0
    %1238 = vmatprep.subr.mxu0 0.0
    %1239 = vmatpush1.msra.mxu0 0.0
    %1240 = vmatprep.mubr.f32.mxu0 0.0
    %1241 = vmatmul.mubr.f32.gmra.mrb[0].mxu0 %v1174
    %v1242 = vpop.f32.mrb[0].mxu0
    %v1243 = vadd.f32 0.0, %v1242
    %v1244 = vpop.f32.mrb[0].mxu0
    %1245 = vdwg.mxu0
    %v1247 = vsel %vm503, %v1172, 0
    %1249 = vmatprep.subr.mxu0 0.0
    %1250 = vmatpush1.msra.mxu0 %v994
    %1251 = vmatprep.subr.mxu0 0.0
    %1252 = vmatpush1.msra.mxu0 0.0
    %1253 = vmatprep.subr.mxu0 0.0
    %1254 = vmatpush1.msra.mxu0 0.0
    %1255 = vmatprep.subr.mxu0 0.0
    %1256 = vmatpush1.msra.mxu0 0.0
    %1257 = vmatprep.subr.mxu0 0.0
    %1258 = vmatpush1.msra.mxu0 0.0
    %1259 = vmatprep.subr.mxu0 0.0
    %1260 = vmatpush1.msra.mxu0 0.0
    %1261 = vmatprep.subr.mxu0 0.0
    %1262 = vmatpush1.msra.mxu0 0.0
    %1263 = vmatprep.subr.mxu0 0.0
    %1264 = vmatpush1.msra.mxu0 0.0
    %1265 = vmatprep.subr.mxu0 0.0
    %1266 = vmatpush1.msra.mxu0 0.0
    %1267 = vmatprep.subr.mxu0 0.0
    %1268 = vmatpush1.msra.mxu0 0.0
    %1269 = vmatprep.subr.mxu0 0.0
    %1270 = vmatpush1.msra.mxu0 0.0
    %1271 = vmatprep.subr.mxu0 0.0
    %1272 = vmatpush1.msra.mxu0 0.0
    %1273 = vmatprep.subr.mxu0 0.0
    %1274 = vmatpush1.msra.mxu0 0.0
    %1275 = vmatprep.subr.mxu0 0.0
    %1276 = vmatpush1.msra.mxu0 0.0
    %1277 = vmatprep.subr.mxu0 0.0
    %1278 = vmatpush1.msra.mxu0 0.0
    %1279 = vmatprep.subr.mxu0 0.0
    %1280 = vmatpush1.msra.mxu0 0.0
    %1281 = vmatprep.subr.mxu0 0.0
    %1282 = vmatpush1.msra.mxu0 0.0
    %1283 = vmatprep.subr.mxu0 0.0
    %1284 = vmatpush1.msra.mxu0 0.0
    %1285 = vmatprep.subr.mxu0 0.0
    %1286 = vmatpush1.msra.mxu0 0.0
    %1287 = vmatprep.subr.mxu0 0.0
    %1288 = vmatpush1.msra.mxu0 0.0
    %1289 = vmatprep.subr.mxu0 0.0
    %1290 = vmatpush1.msra.mxu0 0.0
    %1291 = vmatprep.subr.mxu0 0.0
    %1292 = vmatpush1.msra.mxu0 0.0
    %1293 = vmatprep.subr.mxu0 0.0
    %1294 = vmatpush1.msra.mxu0 0.0
    %1295 = vmatprep.subr.mxu0 0.0
    %1296 = vmatpush1.msra.mxu0 0.0
    %1297 = vmatprep.subr.mxu0 0.0
    %1298 = vmatpush1.msra.mxu0 0.0
    %1299 = vmatprep.subr.mxu0 0.0
    %1300 = vmatpush1.msra.mxu0 0.0
    %1301 = vmatprep.subr.mxu0 0.0
    %1302 = vmatpush1.msra.mxu0 0.0
    %1303 = vmatprep.subr.mxu0 0.0
    %1304 = vmatpush1.msra.mxu0 0.0
    %1305 = vmatprep.subr.mxu0 0.0
    %1306 = vmatpush1.msra.mxu0 0.0
    %1307 = vmatprep.subr.mxu0 0.0
    %1308 = vmatpush1.msra.mxu0 0.0
    %1309 = vmatprep.subr.mxu0 0.0
    %1310 = vmatpush1.msra.mxu0 0.0
    %1311 = vmatprep.subr.mxu0 0.0
    %1312 = vmatpush1.msra.mxu0 0.0
    %1313 = vmatprep.mubr.f32.mxu0 0.0
    %1314 = vmatmul.mubr.f32.gmra.mrb[0].mxu0 %v1247
    %v1315 = vpop.f32.mrb[0].mxu0
    %v1316 = vadd.f32 0.0, %v1315
    %v1317 = vpop.f32.mrb[0].mxu0
    %1318 = vdwg.mxu0
    %s1319 = scalar_lea.vmem %s6, 16
    %v1320 = vld [vmem:[%s1319] sm:$0xff]
    %v1321 = vld [vmem:[%s1319 + $0x8] sm:$0xff]
    %v1323 = vsel %vm348, %v1243, 0
    %v1326 = vsel %vm348, %v1316, 0
    %1328 = vmatprep.subr.mxu0 0.0
    %1329 = vmatpush1.msra.mxu0 %v1320
    %1330 = vmatprep.subr.mxu0 0.0
    %1331 = vmatpush1.msra.mxu0 %v1321
    %1332 = vmatprep.subr.mxu0 0.0
    %1333 = vmatpush1.msra.mxu0 0.0
    %1334 = vmatprep.subr.mxu0 0.0
    %1335 = vmatpush1.msra.mxu0 0.0
    %1336 = vmatprep.subr.mxu0 0.0
    %1337 = vmatpush1.msra.mxu0 0.0
    %1338 = vmatprep.subr.mxu0 0.0
    %1339 = vmatpush1.msra.mxu0 0.0
    %1340 = vmatprep.subr.mxu0 0.0
    %1341 = vmatpush1.msra.mxu0 0.0
    %1342 = vmatprep.subr.mxu0 0.0
    %1343 = vmatpush1.msra.mxu0 0.0
    %1344 = vmatprep.subr.mxu0 0.0
    %1345 = vmatpush1.msra.mxu0 0.0
    %1346 = vmatprep.subr.mxu0 0.0
    %1347 = vmatpush1.msra.mxu0 0.0
    %1348 = vmatprep.subr.mxu0 0.0
    %1349 = vmatpush1.msra.mxu0 0.0
    %1350 = vmatprep.subr.mxu0 0.0
    %1351 = vmatpush1.msra.mxu0 0.0
    %1352 = vmatprep.subr.mxu0 0.0
    %1353 = vmatpush1.msra.mxu0 0.0
    %1354 = vmatprep.subr.mxu0 0.0
    %1355 = vmatpush1.msra.mxu0 0.0
    %1356 = vmatprep.subr.mxu0 0.0
    %1357 = vmatpush1.msra.mxu0 0.0
    %1358 = vmatprep.subr.mxu0 0.0
    %1359 = vmatpush1.msra.mxu0 0.0
    %1360 = vmatprep.subr.mxu0 0.0
    %1361 = vmatpush1.msra.mxu0 0.0
    %1362 = vmatprep.subr.mxu0 0.0
    %1363 = vmatpush1.msra.mxu0 0.0
    %1364 = vmatprep.subr.mxu0 0.0
    %1365 = vmatpush1.msra.mxu0 0.0
    %1366 = vmatprep.subr.mxu0 0.0
    %1367 = vmatpush1.msra.mxu0 0.0
    %1368 = vmatprep.subr.mxu0 0.0
    %1369 = vmatpush1.msra.mxu0 0.0
    %1370 = vmatprep.subr.mxu0 0.0
    %1371 = vmatpush1.msra.mxu0 0.0
    %1372 = vmatprep.subr.mxu0 0.0
    %1373 = vmatpush1.msra.mxu0 0.0
    %1374 = vmatprep.subr.mxu0 0.0
    %1375 = vmatpush1.msra.mxu0 0.0
    %1376 = vmatprep.subr.mxu0 0.0
    %1377 = vmatpush1.msra.mxu0 0.0
    %1378 = vmatprep.subr.mxu0 0.0
    %1379 = vmatpush1.msra.mxu0 0.0
    %1380 = vmatprep.subr.mxu0 0.0
    %1381 = vmatpush1.msra.mxu0 0.0
    %1382 = vmatprep.subr.mxu0 0.0
    %1383 = vmatpush1.msra.mxu0 0.0
    %1384 = vmatprep.subr.mxu0 0.0
    %1385 = vmatpush1.msra.mxu0 0.0
    %1386 = vmatprep.subr.mxu0 0.0
    %1387 = vmatpush1.msra.mxu0 0.0
    %1388 = vmatprep.subr.mxu0 0.0
    %1389 = vmatpush1.msra.mxu0 0.0
    %1390 = vmatprep.subr.mxu0 0.0
    %1391 = vmatpush1.msra.mxu0 0.0
    %1392 = vmatprep.mubr.f32.mxu0 0.0
    %1393 = vmatmul.mubr.f32.gmra.mrb[0].mxu0 %v1323
    %v1394 = vpop.f32.mrb[0].mxu0
    %v1395 = vadd.f32 0.0, %v1394
    %v1396 = vpop.f32.mrb[0].mxu0
    %1397 = vmatprep.mubr.f32.mxu0 0.0
    %1398 = vmatmul.mubr.f32.gmra.mrb[0].mxu0 %v1326
    %v1399 = vpop.f32.mrb[0].mxu0
    %v1400 = vadd.f32 0.0, %v1399
    %v1401 = vpop.f32.mrb[0].mxu0
    %1402 = vdwg.mxu0
    %v1403 = vadd.f32 %v755, %v1395
    %v1404 = vadd.f32 %v756, %v1400
    %s1405 = scalar_lea.vmem %s3, 64
    %v1406 = vld [vmem:[%s1405] sm:$0xff]
    %v1407 = vld [vmem:[%s1405 + $0x8] sm:$0xff]
    %v1408 = vld [vmem:[%s1405 + $0x10] sm:$0xff]
    %v1409 = vld [vmem:[%s1405 + $0x18] sm:$0xff]
    %1410 = vmatprep.subr.mxu0 0.0
    %1411 = vmatpush1.msra.mxu0 %v1406
    %1412 = vmatprep.subr.mxu0 0.0
    %1413 = vmatpush1.msra.mxu0 %v1407
    %1414 = vmatprep.subr.mxu0 0.0
    %1415 = vmatpush1.msra.mxu0 %v1408
    %1416 = vmatprep.subr.mxu0 0.0
    %1417 = vmatpush1.msra.mxu0 %v1409
    %1418 = vmatprep.subr.mxu0 0.0
    %1419 = vmatpush1.msra.mxu0 0.0
    %1420 = vmatprep.subr.mxu0 0.0
    %1421 = vmatpush1.msra.mxu0 0.0
    %1422 = vmatprep.subr.mxu0 0.0
    %1423 = vmatpush1.msra.mxu0 0.0
    %1424 = vmatprep.subr.mxu0 0.0
    %1425 = vmatpush1.msra.mxu0 0.0
    %1426 = vmatprep.subr.mxu0 0.0
    %1427 = vmatpush1.msra.mxu0 0.0
    %1428 = vmatprep.subr.mxu0 0.0
    %1429 = vmatpush1.msra.mxu0 0.0
    %1430 = vmatprep.subr.mxu0 0.0
    %1431 = vmatpush1.msra.mxu0 0.0
    %1432 = vmatprep.subr.mxu0 0.0
    %1433 = vmatpush1.msra.mxu0 0.0
    %1434 = vmatprep.subr.mxu0 0.0
    %1435 = vmatpush1.msra.mxu0 0.0
    %1436 = vmatprep.subr.mxu0 0.0
    %1437 = vmatpush1.msra.mxu0 0.0
    %1438 = vmatprep.subr.mxu0 0.0
    %1439 = vmatpush1.msra.mxu0 0.0
    %1440 = vmatprep.subr.mxu0 0.0
    %1441 = vmatpush1.msra.mxu0 0.0
    %1442 = vmatprep.subr.mxu0 0.0
    %1443 = vmatpush1.msra.mxu0 0.0
    %1444 = vmatprep.subr.mxu0 0.0
    %1445 = vmatpush1.msra.mxu0 0.0
    %1446 = vmatprep.subr.mxu0 0.0
    %1447 = vmatpush1.msra.mxu0 0.0
    %1448 = vmatprep.subr.mxu0 0.0
    %1449 = vmatpush1.msra.mxu0 0.0
    %1450 = vmatprep.subr.mxu0 0.0
    %1451 = vmatpush1.msra.mxu0 0.0
    %1452 = vmatprep.subr.mxu0 0.0
    %1453 = vmatpush1.msra.mxu0 0.0
    %1454 = vmatprep.subr.mxu0 0.0
    %1455 = vmatpush1.msra.mxu0 0.0
    %1456 = vmatprep.subr.mxu0 0.0
    %1457 = vmatpush1.msra.mxu0 0.0
    %1458 = vmatprep.subr.mxu0 0.0
    %1459 = vmatpush1.msra.mxu0 0.0
    %1460 = vmatprep.subr.mxu0 0.0
    %1461 = vmatpush1.msra.mxu0 0.0
    %1462 = vmatprep.subr.mxu0 0.0
    %1463 = vmatpush1.msra.mxu0 0.0
    %1464 = vmatprep.subr.mxu0 0.0
    %1465 = vmatpush1.msra.mxu0 0.0
    %1466 = vmatprep.subr.mxu0 0.0
    %1467 = vmatpush1.msra.mxu0 0.0
    %1468 = vmatprep.subr.mxu0 0.0
    %1469 = vmatpush1.msra.mxu0 0.0
    %1470 = vmatprep.subr.mxu0 0.0
    %1471 = vmatpush1.msra.mxu0 0.0
    %1472 = vmatprep.subr.mxu0 0.0
    %1473 = vmatpush1.msra.mxu0 0.0
    %1474 = vmatprep.mubr.f32.mxu0 0.0
    %1475 = vmatmul.mubr.f32.gmra.mrb[0].mxu0 %v110
    %v1476 = vpop.f32.mrb[0].mxu0
    %v1477 = vadd.f32 0.0, %v1476
    %v1478 = vpop.f32.mrb[0].mxu0
    %1479 = vmatprep.mubr.f32.mxu0 0.0
    %1480 = vmatmul.mubr.f32.gmra.mrb[0].mxu0 %v113
    %v1481 = vpop.f32.mrb[0].mxu0
    %v1482 = vadd.f32 0.0, %v1481
    %v1483 = vpop.f32.mrb[0].mxu0
    %1484 = vdwg.mxu0
    %s1485 = scalar_lea.vmem %s4, 64
    %v1486 = vld [vmem:[%s1485] sm:$0xff]
    %v1487 = vld [vmem:[%s1485 + $0x8] sm:$0xff]
    %v1488 = vld [vmem:[%s1485 + $0x10] sm:$0xff]
    %v1489 = vld [vmem:[%s1485 + $0x18] sm:$0xff]
    %1490 = vmatprep.subr.mxu0 0.0
    %1491 = vmatpush1.msra.mxu0 %v1486
    %1492 = vmatprep.subr.mxu0 0.0
    %1493 = vmatpush1.msra.mxu0 %v1487
    %1494 = vmatprep.subr.mxu0 0.0
    %1495 = vmatpush1.msra.mxu0 %v1488
    %1496 = vmatprep.subr.mxu0 0.0
    %1497 = vmatpush1.msra.mxu0 %v1489
    %1498 = vmatprep.subr.mxu0 0.0
    %1499 = vmatpush1.msra.mxu0 0.0
    %1500 = vmatprep.subr.mxu0 0.0
    %1501 = vmatpush1.msra.mxu0 0.0
    %1502 = vmatprep.subr.mxu0 0.0
    %1503 = vmatpush1.msra.mxu0 0.0
    %1504 = vmatprep.subr.mxu0 0.0
    %1505 = vmatpush1.msra.mxu0 0.0
    %1506 = vmatprep.subr.mxu0 0.0
    %1507 = vmatpush1.msra.mxu0 0.0
    %1508 = vmatprep.subr.mxu0 0.0
    %1509 = vmatpush1.msra.mxu0 0.0
    %1510 = vmatprep.subr.mxu0 0.0
    %1511 = vmatpush1.msra.mxu0 0.0
    %1512 = vmatprep.subr.mxu0 0.0
    %1513 = vmatpush1.msra.mxu0 0.0
    %1514 = vmatprep.subr.mxu0 0.0
    %1515 = vmatpush1.msra.mxu0 0.0
    %1516 = vmatprep.subr.mxu0 0.0
    %1517 = vmatpush1.msra.mxu0 0.0
    %1518 = vmatprep.subr.mxu0 0.0
    %1519 = vmatpush1.msra.mxu0 0.0
    %1520 = vmatprep.subr.mxu0 0.0
    %1521 = vmatpush1.msra.mxu0 0.0
    %1522 = vmatprep.subr.mxu0 0.0
    %1523 = vmatpush1.msra.mxu0 0.0
    %1524 = vmatprep.subr.mxu0 0.0
    %1525 = vmatpush1.msra.mxu0 0.0
    %1526 = vmatprep.subr.mxu0 0.0
    %1527 = vmatpush1.msra.mxu0 0.0
    %1528 = vmatprep.subr.mxu0 0.0
    %1529 = vmatpush1.msra.mxu0 0.0
    %1530 = vmatprep.subr.mxu0 0.0
    %1531 = vmatpush1.msra.mxu0 0.0
    %1532 = vmatprep.subr.mxu0 0.0
    %1533 = vmatpush1.msra.mxu0 0.0
    %1534 = vmatprep.subr.mxu0 0.0
    %1535 = vmatpush1.msra.mxu0 0.0
    %1536 = vmatprep.subr.mxu0 0.0
    %1537 = vmatpush1.msra.mxu0 0.0
    %1538 = vmatprep.subr.mxu0 0.0
    %1539 = vmatpush1.msra.mxu0 0.0
    %1540 = vmatprep.subr.mxu0 0.0
    %1541 = vmatpush1.msra.mxu0 0.0
    %1542 = vmatprep.subr.mxu0 0.0
    %1543 = vmatpush1.msra.mxu0 0.0
    %1544 = vmatprep.subr.mxu0 0.0
    %1545 = vmatpush1.msra.mxu0 0.0
    %1546 = vmatprep.subr.mxu0 0.0
    %1547 = vmatpush1.msra.mxu0 0.0
    %1548 = vmatprep.subr.mxu0 0.0
    %1549 = vmatpush1.msra.mxu0 0.0
    %1550 = vmatprep.subr.mxu0 0.0
    %1551 = vmatpush1.msra.mxu0 0.0
    %1552 = vmatprep.subr.mxu0 0.0
    %1553 = vmatpush1.msra.mxu0 0.0
    %1554 = vmatprep.mubr.f32.mxu0 0.0
    %1555 = vmatmul.mubr.f32.gmra.mrb[0].mxu0 %v110
    %v1556 = vpop.f32.mrb[0].mxu0
    %v1557 = vadd.f32 0.0, %v1556
    %v1558 = vpop.f32.mrb[0].mxu0
    %1559 = vmatprep.mubr.f32.mxu0 0.0
    %1560 = vmatmul.mubr.f32.gmra.mrb[0].mxu0 %v113
    %v1561 = vpop.f32.mrb[0].mxu0
    %v1562 = vadd.f32 0.0, %v1561
    %v1563 = vpop.f32.mrb[0].mxu0
    %1564 = vdwg.mxu0
    %s1565 = scalar_lea.vmem %s5, 64
    %v1566 = vld [vmem:[%s1565] sm:$0xff]
    %v1567 = vld [vmem:[%s1565 + $0x8] sm:$0xff]
    %v1568 = vld [vmem:[%s1565 + $0x10] sm:$0xff]
    %v1569 = vld [vmem:[%s1565 + $0x18] sm:$0xff]
    %1570 = vmatprep.subr.mxu0 0.0
    %1571 = vmatpush1.msra.mxu0 %v1566
    %1572 = vmatprep.subr.mxu0 0.0
    %1573 = vmatpush1.msra.mxu0 %v1567
    %1574 = vmatprep.subr.mxu0 0.0
    %1575 = vmatpush1.msra.mxu0 %v1568
    %1576 = vmatprep.subr.mxu0 0.0
    %1577 = vmatpush1.msra.mxu0 %v1569
    %1578 = vmatprep.subr.mxu0 0.0
    %1579 = vmatpush1.msra.mxu0 0.0
    %1580 = vmatprep.subr.mxu0 0.0
    %1581 = vmatpush1.msra.mxu0 0.0
    %1582 = vmatprep.subr.mxu0 0.0
    %1583 = vmatpush1.msra.mxu0 0.0
    %1584 = vmatprep.subr.mxu0 0.0
    %1585 = vmatpush1.msra.mxu0 0.0
    %1586 = vmatprep.subr.mxu0 0.0
    %1587 = vmatpush1.msra.mxu0 0.0
    %1588 = vmatprep.subr.mxu0 0.0
    %1589 = vmatpush1.msra.mxu0 0.0
    %1590 = vmatprep.subr.mxu0 0.0
    %1591 = vmatpush1.msra.mxu0 0.0
    %1592 = vmatprep.subr.mxu0 0.0
    %1593 = vmatpush1.msra.mxu0 0.0
    %1594 = vmatprep.subr.mxu0 0.0
    %1595 = vmatpush1.msra.mxu0 0.0
    %1596 = vmatprep.subr.mxu0 0.0
    %1597 = vmatpush1.msra.mxu0 0.0
    %1598 = vmatprep.subr.mxu0 0.0
    %1599 = vmatpush1.msra.mxu0 0.0
    %1600 = vmatprep.subr.mxu0 0.0
    %1601 = vmatpush1.msra.mxu0 0.0
    %1602 = vmatprep.subr.mxu0 0.0
    %1603 = vmatpush1.msra.mxu0 0.0
    %1604 = vmatprep.subr.mxu0 0.0
    %1605 = vmatpush1.msra.mxu0 0.0
    %1606 = vmatprep.subr.mxu0 0.0
    %1607 = vmatpush1.msra.mxu0 0.0
    %1608 = vmatprep.subr.mxu0 0.0
    %1609 = vmatpush1.msra.mxu0 0.0
    %1610 = vmatprep.subr.mxu0 0.0
    %1611 = vmatpush1.msra.mxu0 0.0
    %1612 = vmatprep.subr.mxu0 0.0
    %1613 = vmatpush1.msra.mxu0 0.0
    %1614 = vmatprep.subr.mxu0 0.0
    %1615 = vmatpush1.msra.mxu0 0.0
    %1616 = vmatprep.subr.mxu0 0.0
    %1617 = vmatpush1.msra.mxu0 0.0
    %1618 = vmatprep.subr.mxu0 0.0
    %1619 = vmatpush1.msra.mxu0 0.0
    %1620 = vmatprep.subr.mxu0 0.0
    %1621 = vmatpush1.msra.mxu0 0.0
    %1622 = vmatprep.subr.mxu0 0.0
    %1623 = vmatpush1.msra.mxu0 0.0
    %1624 = vmatprep.subr.mxu0 0.0
    %1625 = vmatpush1.msra.mxu0 0.0
    %1626 = vmatprep.subr.mxu0 0.0
    %1627 = vmatpush1.msra.mxu0 0.0
    %1628 = vmatprep.subr.mxu0 0.0
    %1629 = vmatpush1.msra.mxu0 0.0
    %1630 = vmatprep.subr.mxu0 0.0
    %1631 = vmatpush1.msra.mxu0 0.0
    %1632 = vmatprep.subr.mxu0 0.0
    %1633 = vmatpush1.msra.mxu0 0.0
    %1634 = vmatprep.mubr.f32.mxu0 0.0
    %1635 = vmatmul.mubr.f32.gmra.mrb[0].mxu0 %v110
    %v1636 = vpop.f32.mrb[0].mxu0
    %v1637 = vadd.f32 0.0, %v1636
    %v1638 = vpop.f32.mrb[0].mxu0
    %1639 = vmatprep.mubr.f32.mxu0 0.0
    %1640 = vmatmul.mubr.f32.gmra.mrb[0].mxu0 %v113
    %v1641 = vpop.f32.mrb[0].mxu0
    %v1642 = vadd.f32 0.0, %v1641
    %v1643 = vpop.f32.mrb[0].mxu0
    %1644 = vdwg.mxu0
    %v1646 = vsel %vm348, %v1477, 0
    %v1649 = vsel %vm348, %v1557, 0
    %1651 = vmatprep.subr.mxu0 0.0
    %1652 = vmatpush1.xpose.msra.mxu0 %v1649
    %1653 = vmatprep.subr.mxu0 0.0
    %1654 = vmatpush1.xpose.msra.mxu0 0.0
    %1655 = vmatprep.subr.mxu0 0.0
    %1656 = vmatpush1.xpose.msra.mxu0 0.0
    %1657 = vmatprep.subr.mxu0 0.0
    %1658 = vmatpush1.xpose.msra.mxu0 0.0
    %1659 = vmatprep.subr.mxu0 0.0
    %1660 = vmatpush1.xpose.msra.mxu0 0.0
    %1661 = vmatprep.subr.mxu0 0.0
    %1662 = vmatpush1.xpose.msra.mxu0 0.0
    %1663 = vmatprep.subr.mxu0 0.0
    %1664 = vmatpush1.xpose.msra.mxu0 0.0
    %1665 = vmatprep.subr.mxu0 0.0
    %1666 = vmatpush1.xpose.msra.mxu0 0.0
    %1667 = vmatprep.subr.mxu0 0.0
    %1668 = vmatpush1.xpose.msra.mxu0 0.0
    %1669 = vmatprep.subr.mxu0 0.0
    %1670 = vmatpush1.xpose.msra.mxu0 0.0
    %1671 = vmatprep.subr.mxu0 0.0
    %1672 = vmatpush1.xpose.msra.mxu0 0.0
    %1673 = vmatprep.subr.mxu0 0.0
    %1674 = vmatpush1.xpose.msra.mxu0 0.0
    %1675 = vmatprep.subr.mxu0 0.0
    %1676 = vmatpush1.xpose.msra.mxu0 0.0
    %1677 = vmatprep.subr.mxu0 0.0
    %1678 = vmatpush1.xpose.msra.mxu0 0.0
    %1679 = vmatprep.subr.mxu0 0.0
    %1680 = vmatpush1.xpose.msra.mxu0 0.0
    %1681 = vmatprep.subr.mxu0 0.0
    %1682 = vmatpush1.xpose.msra.mxu0 0.0
    %1683 = vmatprep.subr.mxu0 0.0
    %1684 = vmatpush1.xpose.msra.mxu0 0.0
    %1685 = vmatprep.subr.mxu0 0.0
    %1686 = vmatpush1.xpose.msra.mxu0 0.0
    %1687 = vmatprep.subr.mxu0 0.0
    %1688 = vmatpush1.xpose.msra.mxu0 0.0
    %1689 = vmatprep.subr.mxu0 0.0
    %1690 = vmatpush1.xpose.msra.mxu0 0.0
    %1691 = vmatprep.subr.mxu0 0.0
    %1692 = vmatpush1.xpose.msra.mxu0 0.0
    %1693 = vmatprep.subr.mxu0 0.0
    %1694 = vmatpush1.xpose.msra.mxu0 0.0
    %1695 = vmatprep.subr.mxu0 0.0
    %1696 = vmatpush1.xpose.msra.mxu0 0.0
    %1697 = vmatprep.subr.mxu0 0.0
    %1698 = vmatpush1.xpose.msra.mxu0 0.0
    %1699 = vmatprep.subr.mxu0 0.0
    %1700 = vmatpush1.xpose.msra.mxu0 0.0
    %1701 = vmatprep.subr.mxu0 0.0
    %1702 = vmatpush1.xpose.msra.mxu0 0.0
    %1703 = vmatprep.subr.mxu0 0.0
    %1704 = vmatpush1.xpose.msra.mxu0 0.0
    %1705 = vmatprep.subr.mxu0 0.0
    %1706 = vmatpush1.xpose.msra.mxu0 0.0
    %1707 = vmatprep.subr.mxu0 0.0
    %1708 = vmatpush1.xpose.msra.mxu0 0.0
    %1709 = vmatprep.subr.mxu0 0.0
    %1710 = vmatpush1.xpose.msra.mxu0 0.0
    %1711 = vmatprep.subr.mxu0 0.0
    %1712 = vmatpush1.xpose.msra.mxu0 0.0
    %1713 = vmatprep.subr.mxu0 0.0
    %1714 = vmatpush1.xpose.msra.mxu0 0.0
    %1715 = vmatprep.mubr.f32.mxu0 0.0
    %1716 = vmatmul.mubr.f32.gmra.mrb[0].mxu0 %v1646
    %v1717 = vpop.f32.mrb[0].mxu0
    %v1718 = vadd.f32 0.0, %v1717
    %v1719 = vpop.f32.mrb[0].mxu0
    %1720 = vdwg.mxu0
    %v1722 = vsel %vm348, %v1482, 0
    %v1725 = vsel %vm348, %v1562, 0
    %1727 = vmatprep.subr.mxu0 0.0
    %1728 = vmatpush1.xpose.msra.mxu0 %v1725
    %1729 = vmatprep.subr.mxu0 0.0
    %1730 = vmatpush1.xpose.msra.mxu0 0.0
    %1731 = vmatprep.subr.mxu0 0.0
    %1732 = vmatpush1.xpose.msra.mxu0 0.0
    %1733 = vmatprep.subr.mxu0 0.0
    %1734 = vmatpush1.xpose.msra.mxu0 0.0
    %1735 = vmatprep.subr.mxu0 0.0
    %1736 = vmatpush1.xpose.msra.mxu0 0.0
    %1737 = vmatprep.subr.mxu0 0.0
    %1738 = vmatpush1.xpose.msra.mxu0 0.0
    %1739 = vmatprep.subr.mxu0 0.0
    %1740 = vmatpush1.xpose.msra.mxu0 0.0
    %1741 = vmatprep.subr.mxu0 0.0
    %1742 = vmatpush1.xpose.msra.mxu0 0.0
    %1743 = vmatprep.subr.mxu0 0.0
    %1744 = vmatpush1.xpose.msra.mxu0 0.0
    %1745 = vmatprep.subr.mxu0 0.0
    %1746 = vmatpush1.xpose.msra.mxu0 0.0
    %1747 = vmatprep.subr.mxu0 0.0
    %1748 = vmatpush1.xpose.msra.mxu0 0.0
    %1749 = vmatprep.subr.mxu0 0.0
    %1750 = vmatpush1.xpose.msra.mxu0 0.0
    %1751 = vmatprep.subr.mxu0 0.0
    %1752 = vmatpush1.xpose.msra.mxu0 0.0
    %1753 = vmatprep.subr.mxu0 0.0
    %1754 = vmatpush1.xpose.msra.mxu0 0.0
    %1755 = vmatprep.subr.mxu0 0.0
    %1756 = vmatpush1.xpose.msra.mxu0 0.0
    %1757 = vmatprep.subr.mxu0 0.0
    %1758 = vmatpush1.xpose.msra.mxu0 0.0
    %1759 = vmatprep.subr.mxu0 0.0
    %1760 = vmatpush1.xpose.msra.mxu0 0.0
    %1761 = vmatprep.subr.mxu0 0.0
    %1762 = vmatpush1.xpose.msra.mxu0 0.0
    %1763 = vmatprep.subr.mxu0 0.0
    %1764 = vmatpush1.xpose.msra.mxu0 0.0
    %1765 = vmatprep.subr.mxu0 0.0
    %1766 = vmatpush1.xpose.msra.mxu0 0.0
    %1767 = vmatprep.subr.mxu0 0.0
    %1768 = vmatpush1.xpose.msra.mxu0 0.0
    %1769 = vmatprep.subr.mxu0 0.0
    %1770 = vmatpush1.xpose.msra.mxu0 0.0
    %1771 = vmatprep.subr.mxu0 0.0
    %1772 = vmatpush1.xpose.msra.mxu0 0.0
    %1773 = vmatprep.subr.mxu0 0.0
    %1774 = vmatpush1.xpose.msra.mxu0 0.0
    %1775 = vmatprep.subr.mxu0 0.0
    %1776 = vmatpush1.xpose.msra.mxu0 0.0
    %1777 = vmatprep.subr.mxu0 0.0
    %1778 = vmatpush1.xpose.msra.mxu0 0.0
    %1779 = vmatprep.subr.mxu0 0.0
    %1780 = vmatpush1.xpose.msra.mxu0 0.0
    %1781 = vmatprep.subr.mxu0 0.0
    %1782 = vmatpush1.xpose.msra.mxu0 0.0
    %1783 = vmatprep.subr.mxu0 0.0
    %1784 = vmatpush1.xpose.msra.mxu0 0.0
    %1785 = vmatprep.subr.mxu0 0.0
    %1786 = vmatpush1.xpose.msra.mxu0 0.0
    %1787 = vmatprep.subr.mxu0 0.0
    %1788 = vmatpush1.xpose.msra.mxu0 0.0
    %1789 = vmatprep.subr.mxu0 0.0
    %1790 = vmatpush1.xpose.msra.mxu0 0.0
    %1791 = vmatprep.mubr.f32.mxu0 0.0
    %1792 = vmatmul.mubr.f32.gmra.mrb[0].mxu0 %v1722
    %v1793 = vpop.f32.mrb[0].mxu0
    %v1794 = vadd.f32 0.0, %v1793
    %v1795 = vpop.f32.mrb[0].mxu0
    %1796 = vdwg.mxu0
    %v1797 = vmul.f32 %v1718, 0.25
    %v1798 = vmul.f32 %v1794, 0.25
    %v1799 = vsel %vm503, %v1797, -inf
    %1800 = vmax.xlane.f32.xlu0 %v1799
    %v1801 = vpop.xlane.xlu0 %1800
    %v1802 = vsel %vm503, %v1798, -inf
    %1803 = vmax.xlane.f32.xlu0 %v1802
    %v1804 = vpop.xlane.xlu0 %1803
    %v1805 = vsub.f32 %v1797, %v1801
    %v1806 = vsub.f32 %v1798, %v1804
    %v1807 = vmul.f32 %v1805, 1.442695
    %v1808 = vpow.pop %v1807
    %v1809 = vmul.f32 %v1806, 1.442695
    %v1810 = vpow.pop %v1809
    %v1811 = vsel %vm503, %v1808, 0.0
    %1812 = vadd.xlane.f32.xlu0 %v1811
    %v1813 = vpop.xlane.xlu0 %1812
    %v1814 = vsel %vm503, %v1810, 0.0
    %1815 = vadd.xlane.f32.xlu0 %v1814
    %v1816 = vpop.xlane.xlu0 %1815
    %v1817 = vrcp.pop %v1813
    %v1818 = vrcp.pop %v1816
    %v1819 = vmul.f32 %v1808, %v1817
    %v1820 = vmul.f32 %v1810, %v1818
    %v1822 = vsel %vm503, %v1819, 0
    %1824 = vmatprep.subr.mxu0 0.0
    %1825 = vmatpush1.msra.mxu0 %v1637
    %1826 = vmatprep.subr.mxu0 0.0
    %1827 = vmatpush1.msra.mxu0 0.0
    %1828 = vmatprep.subr.mxu0 0.0
    %1829 = vmatpush1.msra.mxu0 0.0
    %1830 = vmatprep.subr.mxu0 0.0
    %1831 = vmatpush1.msra.mxu0 0.0
    %1832 = vmatprep.subr.mxu0 0.0
    %1833 = vmatpush1.msra.mxu0 0.0
    %1834 = vmatprep.subr.mxu0 0.0
    %1835 = vmatpush1.msra.mxu0 0.0
    %1836 = vmatprep.subr.mxu0 0.0
    %1837 = vmatpush1.msra.mxu0 0.0
    %1838 = vmatprep.subr.mxu0 0.0
    %1839 = vmatpush1.msra.mxu0 0.0
    %1840 = vmatprep.subr.mxu0 0.0
    %1841 = vmatpush1.msra.mxu0 0.0
    %1842 = vmatprep.subr.mxu0 0.0
    %1843 = vmatpush1.msra.mxu0 0.0
    %1844 = vmatprep.subr.mxu0 0.0
    %1845 = vmatpush1.msra.mxu0 0.0
    %1846 = vmatprep.subr.mxu0 0.0
    %1847 = vmatpush1.msra.mxu0 0.0
    %1848 = vmatprep.subr.mxu0 0.0
    %1849 = vmatpush1.msra.mxu0 0.0
    %1850 = vmatprep.subr.mxu0 0.0
    %1851 = vmatpush1.msra.mxu0 0.0
    %1852 = vmatprep.subr.mxu0 0.0
    %1853 = vmatpush1.msra.mxu0 0.0
    %1854 = vmatprep.subr.mxu0 0.0
    %1855 = vmatpush1.msra.mxu0 0.0
    %1856 = vmatprep.subr.mxu0 0.0
    %1857 = vmatpush1.msra.mxu0 0.0
    %1858 = vmatprep.subr.mxu0 0.0
    %1859 = vmatpush1.msra.mxu0 0.0
    %1860 = vmatprep.subr.mxu0 0.0
    %1861 = vmatpush1.msra.mxu0 0.0
    %1862 = vmatprep.subr.mxu0 0.0
    %1863 = vmatpush1.msra.mxu0 0.0
    %1864 = vmatprep.subr.mxu0 0.0
    %1865 = vmatpush1.msra.mxu0 0.0
    %1866 = vmatprep.subr.mxu0 0.0
    %1867 = vmatpush1.msra.mxu0 0.0
    %1868 = vmatprep.subr.mxu0 0.0
    %1869 = vmatpush1.msra.mxu0 0.0
    %1870 = vmatprep.subr.mxu0 0.0
    %1871 = vmatpush1.msra.mxu0 0.0
    %1872 = vmatprep.subr.mxu0 0.0
    %1873 = vmatpush1.msra.mxu0 0.0
    %1874 = vmatprep.subr.mxu0 0.0
    %1875 = vmatpush1.msra.mxu0 0.0
    %1876 = vmatprep.subr.mxu0 0.0
    %1877 = vmatpush1.msra.mxu0 0.0
    %1878 = vmatprep.subr.mxu0 0.0
    %1879 = vmatpush1.msra.mxu0 0.0
    %1880 = vmatprep.subr.mxu0 0.0
    %1881 = vmatpush1.msra.mxu0 0.0
    %1882 = vmatprep.subr.mxu0 0.0
    %1883 = vmatpush1.msra.mxu0 0.0
    %1884 = vmatprep.subr.mxu0 0.0
    %1885 = vmatpush1.msra.mxu0 0.0
    %1886 = vmatprep.subr.mxu0 0.0
    %1887 = vmatpush1.msra.mxu0 0.0
    %1888 = vmatprep.mubr.f32.mxu0 0.0
    %1889 = vmatmul.mubr.f32.gmra.mrb[0].mxu0 %v1822
    %v1890 = vpop.f32.mrb[0].mxu0
    %v1891 = vadd.f32 0.0, %v1890
    %v1892 = vpop.f32.mrb[0].mxu0
    %1893 = vdwg.mxu0
    %v1895 = vsel %vm503, %v1820, 0
    %1897 = vmatprep.subr.mxu0 0.0
    %1898 = vmatpush1.msra.mxu0 %v1642
    %1899 = vmatprep.subr.mxu0 0.0
    %1900 = vmatpush1.msra.mxu0 0.0
    %1901 = vmatprep.subr.mxu0 0.0
    %1902 = vmatpush1.msra.mxu0 0.0
    %1903 = vmatprep.subr.mxu0 0.0
    %1904 = vmatpush1.msra.mxu0 0.0
    %1905 = vmatprep.subr.mxu0 0.0
    %1906 = vmatpush1.msra.mxu0 0.0
    %1907 = vmatprep.subr.mxu0 0.0
    %1908 = vmatpush1.msra.mxu0 0.0
    %1909 = vmatprep.subr.mxu0 0.0
    %1910 = vmatpush1.msra.mxu0 0.0
    %1911 = vmatprep.subr.mxu0 0.0
    %1912 = vmatpush1.msra.mxu0 0.0
    %1913 = vmatprep.subr.mxu0 0.0
    %1914 = vmatpush1.msra.mxu0 0.0
    %1915 = vmatprep.subr.mxu0 0.0
    %1916 = vmatpush1.msra.mxu0 0.0
    %1917 = vmatprep.subr.mxu0 0.0
    %1918 = vmatpush1.msra.mxu0 0.0
    %1919 = vmatprep.subr.mxu0 0.0
    %1920 = vmatpush1.msra.mxu0 0.0
    %1921 = vmatprep.subr.mxu0 0.0
    %1922 = vmatpush1.msra.mxu0 0.0
    %1923 = vmatprep.subr.mxu0 0.0
    %1924 = vmatpush1.msra.mxu0 0.0
    %1925 = vmatprep.subr.mxu0 0.0
    %1926 = vmatpush1.msra.mxu0 0.0
    %1927 = vmatprep.subr.mxu0 0.0
    %1928 = vmatpush1.msra.mxu0 0.0
    %1929 = vmatprep.subr.mxu0 0.0
    %1930 = vmatpush1.msra.mxu0 0.0
    %1931 = vmatprep.subr.mxu0 0.0
    %1932 = vmatpush1.msra.mxu0 0.0
    %1933 = vmatprep.subr.mxu0 0.0
    %1934 = vmatpush1.msra.mxu0 0.0
    %1935 = vmatprep.subr.mxu0 0.0
    %1936 = vmatpush1.msra.mxu0 0.0
    %1937 = vmatprep.subr.mxu0 0.0
    %1938 = vmatpush1.msra.mxu0 0.0
    %1939 = vmatprep.subr.mxu0 0.0
    %1940 = vmatpush1.msra.mxu0 0.0
    %1941 = vmatprep.subr.mxu0 0.0
    %1942 = vmatpush1.msra.mxu0 0.0
    %1943 = vmatprep.subr.mxu0 0.0
    %1944 = vmatpush1.msra.mxu0 0.0
    %1945 = vmatprep.subr.mxu0 0.0
    %1946 = vmatpush1.msra.mxu0 0.0
    %1947 = vmatprep.subr.mxu0 0.0
    %1948 = vmatpush1.msra.mxu0 0.0
    %1949 = vmatprep.subr.mxu0 0.0
    %1950 = vmatpush1.msra.mxu0 0.0
    %1951 = vmatprep.subr.mxu0 0.0
    %1952 = vmatpush1.msra.mxu0 0.0
    %1953 = vmatprep.subr.mxu0 0.0
    %1954 = vmatpush1.msra.mxu0 0.0
    %1955 = vmatprep.subr.mxu0 0.0
    %1956 = vmatpush1.msra.mxu0 0.0
    %1957 = vmatprep.subr.mxu0 0.0
    %1958 = vmatpush1.msra.mxu0 0.0
    %1959 = vmatprep.subr.mxu0 0.0
    %1960 = vmatpush1.msra.mxu0 0.0
    %1961 = vmatprep.mubr.f32.mxu0 0.0
    %1962 = vmatmul.mubr.f32.gmra.mrb[0].mxu0 %v1895
    %v1963 = vpop.f32.mrb[0].mxu0
    %v1964 = vadd.f32 0.0, %v1963
    %v1965 = vpop.f32.mrb[0].mxu0
    %1966 = vdwg.mxu0
    %s1967 = scalar_lea.vmem %s6, 32
    %v1968 = vld [vmem:[%s1967] sm:$0xff]
    %v1969 = vld [vmem:[%s1967 + $0x8] sm:$0xff]
    %v1971 = vsel %vm348, %v1891, 0
    %v1974 = vsel %vm348, %v1964, 0
    %1976 = vmatprep.subr.mxu0 0.0
    %1977 = vmatpush1.msra.mxu0 %v1968
    %1978 = vmatprep.subr.mxu0 0.0
    %1979 = vmatpush1.msra.mxu0 %v1969
    %1980 = vmatprep.subr.mxu0 0.0
    %1981 = vmatpush1.msra.mxu0 0.0
    %1982 = vmatprep.subr.mxu0 0.0
    %1983 = vmatpush1.msra.mxu0 0.0
    %1984 = vmatprep.subr.mxu0 0.0
    %1985 = vmatpush1.msra.mxu0 0.0
    %1986 = vmatprep.subr.mxu0 0.0
    %1987 = vmatpush1.msra.mxu0 0.0
    %1988 = vmatprep.subr.mxu0 0.0
    %1989 = vmatpush1.msra.mxu0 0.0
    %1990 = vmatprep.subr.mxu0 0.0
    %1991 = vmatpush1.msra.mxu0 0.0
    %1992 = vmatprep.subr.mxu0 0.0
    %1993 = vmatpush1.msra.mxu0 0.0
    %1994 = vmatprep.subr.mxu0 0.0
    %1995 = vmatpush1.msra.mxu0 0.0
    %1996 = vmatprep.subr.mxu0 0.0
    %1997 = vmatpush1.msra.mxu0 0.0
    %1998 = vmatprep.subr.mxu0 0.0
    %1999 = vmatpush1.msra.mxu0 0.0
    %2000 = vmatprep.subr.mxu0 0.0
    %2001 = vmatpush1.msra.mxu0 0.0
    %2002 = vmatprep.subr.mxu0 0.0
    %2003 = vmatpush1.msra.mxu0 0.0
    %2004 = vmatprep.subr.mxu0 0.0
    %2005 = vmatpush1.msra.mxu0 0.0
    %2006 = vmatprep.subr.mxu0 0.0
    %2007 = vmatpush1.msra.mxu0 0.0
    %2008 = vmatprep.subr.mxu0 0.0
    %2009 = vmatpush1.msra.mxu0 0.0
    %2010 = vmatprep.subr.mxu0 0.0
    %2011 = vmatpush1.msra.mxu0 0.0
    %2012 = vmatprep.subr.mxu0 0.0
    %2013 = vmatpush1.msra.mxu0 0.0
    %2014 = vmatprep.subr.mxu0 0.0
    %2015 = vmatpush1.msra.mxu0 0.0
    %2016 = vmatprep.subr.mxu0 0.0
    %2017 = vmatpush1.msra.mxu0 0.0
    %2018 = vmatprep.subr.mxu0 0.0
    %2019 = vmatpush1.msra.mxu0 0.0
    %2020 = vmatprep.subr.mxu0 0.0
    %2021 = vmatpush1.msra.mxu0 0.0
    %2022 = vmatprep.subr.mxu0 0.0
    %2023 = vmatpush1.msra.mxu0 0.0
    %2024 = vmatprep.subr.mxu0 0.0
    %2025 = vmatpush1.msra.mxu0 0.0
    %2026 = vmatprep.subr.mxu0 0.0
    %2027 = vmatpush1.msra.mxu0 0.0
    %2028 = vmatprep.subr.mxu0 0.0
    %2029 = vmatpush1.msra.mxu0 0.0
    %2030 = vmatprep.subr.mxu0 0.0
    %2031 = vmatpush1.msra.mxu0 0.0
    %2032 = vmatprep.subr.mxu0 0.0
    %2033 = vmatpush1.msra.mxu0 0.0
    %2034 = vmatprep.subr.mxu0 0.0
    %2035 = vmatpush1.msra.mxu0 0.0
    %2036 = vmatprep.subr.mxu0 0.0
    %2037 = vmatpush1.msra.mxu0 0.0
    %2038 = vmatprep.subr.mxu0 0.0
    %2039 = vmatpush1.msra.mxu0 0.0
    %2040 = vmatprep.mubr.f32.mxu0 0.0
    %2041 = vmatmul.mubr.f32.gmra.mrb[0].mxu0 %v1971
    %v2042 = vpop.f32.mrb[0].mxu0
    %v2043 = vadd.f32 0.0, %v2042
    %v2044 = vpop.f32.mrb[0].mxu0
    %2045 = vmatprep.mubr.f32.mxu0 0.0
    %2046 = vmatmul.mubr.f32.gmra.mrb[0].mxu0 %v1974
    %v2047 = vpop.f32.mrb[0].mxu0
    %v2048 = vadd.f32 0.0, %v2047
    %v2049 = vpop.f32.mrb[0].mxu0
    %2050 = vdwg.mxu0
    %v2051 = vadd.f32 %v1403, %v2043
    %v2052 = vadd.f32 %v1404, %v2048
    %s2053 = scalar_lea.vmem %s3, 96
    %v2054 = vld [vmem:[%s2053] sm:$0xff]
    %v2055 = vld [vmem:[%s2053 + $0x8] sm:$0xff]
    %v2056 = vld [vmem:[%s2053 + $0x10] sm:$0xff]
    %v2057 = vld [vmem:[%s2053 + $0x18] sm:$0xff]
    %2058 = vmatprep.subr.mxu0 0.0
    %2059 = vmatpush1.msra.mxu0 %v2054
    %2060 = vmatprep.subr.mxu0 0.0
    %2061 = vmatpush1.msra.mxu0 %v2055
    %2062 = vmatprep.subr.mxu0 0.0
    %2063 = vmatpush1.msra.mxu0 %v2056
    %2064 = vmatprep.subr.mxu0 0.0
    %2065 = vmatpush1.msra.mxu0 %v2057
    %2066 = vmatprep.subr.mxu0 0.0
    %2067 = vmatpush1.msra.mxu0 0.0
    %2068 = vmatprep.subr.mxu0 0.0
    %2069 = vmatpush1.msra.mxu0 0.0
    %2070 = vmatprep.subr.mxu0 0.0
    %2071 = vmatpush1.msra.mxu0 0.0
    %2072 = vmatprep.subr.mxu0 0.0
    %2073 = vmatpush1.msra.mxu0 0.0
    %2074 = vmatprep.subr.mxu0 0.0
    %2075 = vmatpush1.msra.mxu0 0.0
    %2076 = vmatprep.subr.mxu0 0.0
    %2077 = vmatpush1.msra.mxu0 0.0
    %2078 = vmatprep.subr.mxu0 0.0
    %2079 = vmatpush1.msra.mxu0 0.0
    %2080 = vmatprep.subr.mxu0 0.0
    %2081 = vmatpush1.msra.mxu0 0.0
    %2082 = vmatprep.subr.mxu0 0.0
    %2083 = vmatpush1.msra.mxu0 0.0
    %2084 = vmatprep.subr.mxu0 0.0
    %2085 = vmatpush1.msra.mxu0 0.0
    %2086 = vmatprep.subr.mxu0 0.0
    %2087 = vmatpush1.msra.mxu0 0.0
    %2088 = vmatprep.subr.mxu0 0.0
    %2089 = vmatpush1.msra.mxu0 0.0
    %2090 = vmatprep.subr.mxu0 0.0
    %2091 = vmatpush1.msra.mxu0 0.0
    %2092 = vmatprep.subr.mxu0 0.0
    %2093 = vmatpush1.msra.mxu0 0.0
    %2094 = vmatprep.subr.mxu0 0.0
    %2095 = vmatpush1.msra.mxu0 0.0
    %2096 = vmatprep.subr.mxu0 0.0
    %2097 = vmatpush1.msra.mxu0 0.0
    %2098 = vmatprep.subr.mxu0 0.0
    %2099 = vmatpush1.msra.mxu0 0.0
    %2100 = vmatprep.subr.mxu0 0.0
    %2101 = vmatpush1.msra.mxu0 0.0
    %2102 = vmatprep.subr.mxu0 0.0
    %2103 = vmatpush1.msra.mxu0 0.0
    %2104 = vmatprep.subr.mxu0 0.0
    %2105 = vmatpush1.msra.mxu0 0.0
    %2106 = vmatprep.subr.mxu0 0.0
    %2107 = vmatpush1.msra.mxu0 0.0
    %2108 = vmatprep.subr.mxu0 0.0
    %2109 = vmatpush1.msra.mxu0 0.0
    %2110 = vmatprep.subr.mxu0 0.0
    %2111 = vmatpush1.msra.mxu0 0.0
    %2112 = vmatprep.subr.mxu0 0.0
    %2113 = vmatpush1.msra.mxu0 0.0
    %2114 = vmatprep.subr.mxu0 0.0
    %2115 = vmatpush1.msra.mxu0 0.0
    %2116 = vmatprep.subr.mxu0 0.0
    %2117 = vmatpush1.msra.mxu0 0.0
    %2118 = vmatprep.subr.mxu0 0.0
    %2119 = vmatpush1.msra.mxu0 0.0
    %2120 = vmatprep.subr.mxu0 0.0
    %2121 = vmatpush1.msra.mxu0 0.0
    %2122 = vmatprep.mubr.f32.mxu0 0.0
    %2123 = vmatmul.mubr.f32.gmra.mrb[0].mxu0 %v110
    %v2124 = vpop.f32.mrb[0].mxu0
    %v2125 = vadd.f32 0.0, %v2124
    %v2126 = vpop.f32.mrb[0].mxu0
    %2127 = vmatprep.mubr.f32.mxu0 0.0
    %2128 = vmatmul.mubr.f32.gmra.mrb[0].mxu0 %v113
    %v2129 = vpop.f32.mrb[0].mxu0
    %v2130 = vadd.f32 0.0, %v2129
    %v2131 = vpop.f32.mrb[0].mxu0
    %2132 = vdwg.mxu0
    %s2133 = scalar_lea.vmem %s4, 96
    %v2134 = vld [vmem:[%s2133] sm:$0xff]
    %v2135 = vld [vmem:[%s2133 + $0x8] sm:$0xff]
    %v2136 = vld [vmem:[%s2133 + $0x10] sm:$0xff]
    %v2137 = vld [vmem:[%s2133 + $0x18] sm:$0xff]
    %2138 = vmatprep.subr.mxu0 0.0
    %2139 = vmatpush1.msra.mxu0 %v2134
    %2140 = vmatprep.subr.mxu0 0.0
    %2141 = vmatpush1.msra.mxu0 %v2135
    %2142 = vmatprep.subr.mxu0 0.0
    %2143 = vmatpush1.msra.mxu0 %v2136
    %2144 = vmatprep.subr.mxu0 0.0
    %2145 = vmatpush1.msra.mxu0 %v2137
    %2146 = vmatprep.subr.mxu0 0.0
    %2147 = vmatpush1.msra.mxu0 0.0
    %2148 = vmatprep.subr.mxu0 0.0
    %2149 = vmatpush1.msra.mxu0 0.0
    %2150 = vmatprep.subr.mxu0 0.0
    %2151 = vmatpush1.msra.mxu0 0.0
    %2152 = vmatprep.subr.mxu0 0.0
    %2153 = vmatpush1.msra.mxu0 0.0
    %2154 = vmatprep.subr.mxu0 0.0
    %2155 = vmatpush1.msra.mxu0 0.0
    %2156 = vmatprep.subr.mxu0 0.0
    %2157 = vmatpush1.msra.mxu0 0.0
    %2158 = vmatprep.subr.mxu0 0.0
    %2159 = vmatpush1.msra.mxu0 0.0
    %2160 = vmatprep.subr.mxu0 0.0
    %2161 = vmatpush1.msra.mxu0 0.0
    %2162 = vmatprep.subr.mxu0 0.0
    %2163 = vmatpush1.msra.mxu0 0.0
    %2164 = vmatprep.subr.mxu0 0.0
    %2165 = vmatpush1.msra.mxu0 0.0
    %2166 = vmatprep.subr.mxu0 0.0
    %2167 = vmatpush1.msra.mxu0 0.0
    %2168 = vmatprep.subr.mxu0 0.0
    %2169 = vmatpush1.msra.mxu0 0.0
    %2170 = vmatprep.subr.mxu0 0.0
    %2171 = vmatpush1.msra.mxu0 0.0
    %2172 = vmatprep.subr.mxu0 0.0
    %2173 = vmatpush1.msra.mxu0 0.0
    %2174 = vmatprep.subr.mxu0 0.0
    %2175 = vmatpush1.msra.mxu0 0.0
    %2176 = vmatprep.subr.mxu0 0.0
    %2177 = vmatpush1.msra.mxu0 0.0
    %2178 = vmatprep.subr.mxu0 0.0
    %2179 = vmatpush1.msra.mxu0 0.0
    %2180 = vmatprep.subr.mxu0 0.0
    %2181 = vmatpush1.msra.mxu0 0.0
    %2182 = vmatprep.subr.mxu0 0.0
    %2183 = vmatpush1.msra.mxu0 0.0
    %2184 = vmatprep.subr.mxu0 0.0
    %2185 = vmatpush1.msra.mxu0 0.0
    %2186 = vmatprep.subr.mxu0 0.0
    %2187 = vmatpush1.msra.mxu0 0.0
    %2188 = vmatprep.subr.mxu0 0.0
    %2189 = vmatpush1.msra.mxu0 0.0
    %2190 = vmatprep.subr.mxu0 0.0
    %2191 = vmatpush1.msra.mxu0 0.0
    %2192 = vmatprep.subr.mxu0 0.0
    %2193 = vmatpush1.msra.mxu0 0.0
    %2194 = vmatprep.subr.mxu0 0.0
    %2195 = vmatpush1.msra.mxu0 0.0
    %2196 = vmatprep.subr.mxu0 0.0
    %2197 = vmatpush1.msra.mxu0 0.0
    %2198 = vmatprep.subr.mxu0 0.0
    %2199 = vmatpush1.msra.mxu0 0.0
    %2200 = vmatprep.subr.mxu0 0.0
    %2201 = vmatpush1.msra.mxu0 0.0
    %2202 = vmatprep.mubr.f32.mxu0 0.0
    %2203 = vmatmul.mubr.f32.gmra.mrb[0].mxu0 %v110
    %v2204 = vpop.f32.mrb[0].mxu0
    %v2205 = vadd.f32 0.0, %v2204
    %v2206 = vpop.f32.mrb[0].mxu0
    %2207 = vmatprep.mubr.f32.mxu0 0.0
    %2208 = vmatmul.mubr.f32.gmra.mrb[0].mxu0 %v113
    %v2209 = vpop.f32.mrb[0].mxu0
    %v2210 = vadd.f32 0.0, %v2209
    %v2211 = vpop.f32.mrb[0].mxu0
    %2212 = vdwg.mxu0
    %s2213 = scalar_lea.vmem %s5, 96
    %v2214 = vld [vmem:[%s2213] sm:$0xff]
    %v2215 = vld [vmem:[%s2213 + $0x8] sm:$0xff]
    %v2216 = vld [vmem:[%s2213 + $0x10] sm:$0xff]
    %v2217 = vld [vmem:[%s2213 + $0x18] sm:$0xff]
    %2218 = vmatprep.subr.mxu0 0.0
    %2219 = vmatpush1.msra.mxu0 %v2214
    %2220 = vmatprep.subr.mxu0 0.0
    %2221 = vmatpush1.msra.mxu0 %v2215
    %2222 = vmatprep.subr.mxu0 0.0
    %2223 = vmatpush1.msra.mxu0 %v2216
    %2224 = vmatprep.subr.mxu0 0.0
    %2225 = vmatpush1.msra.mxu0 %v2217
    %2226 = vmatprep.subr.mxu0 0.0
    %2227 = vmatpush1.msra.mxu0 0.0
    %2228 = vmatprep.subr.mxu0 0.0
    %2229 = vmatpush1.msra.mxu0 0.0
    %2230 = vmatprep.subr.mxu0 0.0
    %2231 = vmatpush1.msra.mxu0 0.0
    %2232 = vmatprep.subr.mxu0 0.0
    %2233 = vmatpush1.msra.mxu0 0.0
    %2234 = vmatprep.subr.mxu0 0.0
    %2235 = vmatpush1.msra.mxu0 0.0
    %2236 = vmatprep.subr.mxu0 0.0
    %2237 = vmatpush1.msra.mxu0 0.0
    %2238 = vmatprep.subr.mxu0 0.0
    %2239 = vmatpush1.msra.mxu0 0.0
    %2240 = vmatprep.subr.mxu0 0.0
    %2241 = vmatpush1.msra.mxu0 0.0
    %2242 = vmatprep.subr.mxu0 0.0
    %2243 = vmatpush1.msra.mxu0 0.0
    %2244 = vmatprep.subr.mxu0 0.0
    %2245 = vmatpush1.msra.mxu0 0.0
    %2246 = vmatprep.subr.mxu0 0.0
    %2247 = vmatpush1.msra.mxu0 0.0
    %2248 = vmatprep.subr.mxu0 0.0
    %2249 = vmatpush1.msra.mxu0 0.0
    %2250 = vmatprep.subr.mxu0 0.0
    %2251 = vmatpush1.msra.mxu0 0.0
    %2252 = vmatprep.subr.mxu0 0.0
    %2253 = vmatpush1.msra.mxu0 0.0
    %2254 = vmatprep.subr.mxu0 0.0
    %2255 = vmatpush1.msra.mxu0 0.0
    %2256 = vmatprep.subr.mxu0 0.0
    %2257 = vmatpush1.msra.mxu0 0.0
    %2258 = vmatprep.subr.mxu0 0.0
    %2259 = vmatpush1.msra.mxu0 0.0
    %2260 = vmatprep.subr.mxu0 0.0
    %2261 = vmatpush1.msra.mxu0 0.0
    %2262 = vmatprep.subr.mxu0 0.0
    %2263 = vmatpush1.msra.mxu0 0.0
    %2264 = vmatprep.subr.mxu0 0.0
    %2265 = vmatpush1.msra.mxu0 0.0
    %2266 = vmatprep.subr.mxu0 0.0
    %2267 = vmatpush1.msra.mxu0 0.0
    %2268 = vmatprep.subr.mxu0 0.0
    %2269 = vmatpush1.msra.mxu0 0.0
    %2270 = vmatprep.subr.mxu0 0.0
    %2271 = vmatpush1.msra.mxu0 0.0
    %2272 = vmatprep.subr.mxu0 0.0
    %2273 = vmatpush1.msra.mxu0 0.0
    %2274 = vmatprep.subr.mxu0 0.0
    %2275 = vmatpush1.msra.mxu0 0.0
    %2276 = vmatprep.subr.mxu0 0.0
    %2277 = vmatpush1.msra.mxu0 0.0
    %2278 = vmatprep.subr.mxu0 0.0
    %2279 = vmatpush1.msra.mxu0 0.0
    %2280 = vmatprep.subr.mxu0 0.0
    %2281 = vmatpush1.msra.mxu0 0.0
    %2282 = vmatprep.mubr.f32.mxu0 0.0
    %2283 = vmatmul.mubr.f32.gmra.mrb[0].mxu0 %v110
    %v2284 = vpop.f32.mrb[0].mxu0
    %v2285 = vadd.f32 0.0, %v2284
    %v2286 = vpop.f32.mrb[0].mxu0
    %2287 = vmatprep.mubr.f32.mxu0 0.0
    %2288 = vmatmul.mubr.f32.gmra.mrb[0].mxu0 %v113
    %v2289 = vpop.f32.mrb[0].mxu0
    %v2290 = vadd.f32 0.0, %v2289
    %v2291 = vpop.f32.mrb[0].mxu0
    %2292 = vdwg.mxu0
    %v2294 = vsel %vm348, %v2125, 0
    %v2297 = vsel %vm348, %v2205, 0
    %2299 = vmatprep.subr.mxu0 0.0
    %2300 = vmatpush1.xpose.msra.mxu0 %v2297
    %2301 = vmatprep.subr.mxu0 0.0
    %2302 = vmatpush1.xpose.msra.mxu0 0.0
    %2303 = vmatprep.subr.mxu0 0.0
    %2304 = vmatpush1.xpose.msra.mxu0 0.0
    %2305 = vmatprep.subr.mxu0 0.0
    %2306 = vmatpush1.xpose.msra.mxu0 0.0
    %2307 = vmatprep.subr.mxu0 0.0
    %2308 = vmatpush1.xpose.msra.mxu0 0.0
    %2309 = vmatprep.subr.mxu0 0.0
    %2310 = vmatpush1.xpose.msra.mxu0 0.0
    %2311 = vmatprep.subr.mxu0 0.0
    %2312 = vmatpush1.xpose.msra.mxu0 0.0
    %2313 = vmatprep.subr.mxu0 0.0
    %2314 = vmatpush1.xpose.msra.mxu0 0.0
    %2315 = vmatprep.subr.mxu0 0.0
    %2316 = vmatpush1.xpose.msra.mxu0 0.0
    %2317 = vmatprep.subr.mxu0 0.0
    %2318 = vmatpush1.xpose.msra.mxu0 0.0
    %2319 = vmatprep.subr.mxu0 0.0
    %2320 = vmatpush1.xpose.msra.mxu0 0.0
    %2321 = vmatprep.subr.mxu0 0.0
    %2322 = vmatpush1.xpose.msra.mxu0 0.0
    %2323 = vmatprep.subr.mxu0 0.0
    %2324 = vmatpush1.xpose.msra.mxu0 0.0
    %2325 = vmatprep.subr.mxu0 0.0
    %2326 = vmatpush1.xpose.msra.mxu0 0.0
    %2327 = vmatprep.subr.mxu0 0.0
    %2328 = vmatpush1.xpose.msra.mxu0 0.0
    %2329 = vmatprep.subr.mxu0 0.0
    %2330 = vmatpush1.xpose.msra.mxu0 0.0
    %2331 = vmatprep.subr.mxu0 0.0
    %2332 = vmatpush1.xpose.msra.mxu0 0.0
    %2333 = vmatprep.subr.mxu0 0.0
    %2334 = vmatpush1.xpose.msra.mxu0 0.0
    %2335 = vmatprep.subr.mxu0 0.0
    %2336 = vmatpush1.xpose.msra.mxu0 0.0
    %2337 = vmatprep.subr.mxu0 0.0
    %2338 = vmatpush1.xpose.msra.mxu0 0.0
    %2339 = vmatprep.subr.mxu0 0.0
    %2340 = vmatpush1.xpose.msra.mxu0 0.0
    %2341 = vmatprep.subr.mxu0 0.0
    %2342 = vmatpush1.xpose.msra.mxu0 0.0
    %2343 = vmatprep.subr.mxu0 0.0
    %2344 = vmatpush1.xpose.msra.mxu0 0.0
    %2345 = vmatprep.subr.mxu0 0.0
    %2346 = vmatpush1.xpose.msra.mxu0 0.0
    %2347 = vmatprep.subr.mxu0 0.0
    %2348 = vmatpush1.xpose.msra.mxu0 0.0
    %2349 = vmatprep.subr.mxu0 0.0
    %2350 = vmatpush1.xpose.msra.mxu0 0.0
    %2351 = vmatprep.subr.mxu0 0.0
    %2352 = vmatpush1.xpose.msra.mxu0 0.0
    %2353 = vmatprep.subr.mxu0 0.0
    %2354 = vmatpush1.xpose.msra.mxu0 0.0
    %2355 = vmatprep.subr.mxu0 0.0
    %2356 = vmatpush1.xpose.msra.mxu0 0.0
    %2357 = vmatprep.subr.mxu0 0.0
    %2358 = vmatpush1.xpose.msra.mxu0 0.0
    %2359 = vmatprep.subr.mxu0 0.0
    %2360 = vmatpush1.xpose.msra.mxu0 0.0
    %2361 = vmatprep.subr.mxu0 0.0
    %2362 = vmatpush1.xpose.msra.mxu0 0.0
    %2363 = vmatprep.mubr.f32.mxu0 0.0
    %2364 = vmatmul.mubr.f32.gmra.mrb[0].mxu0 %v2294
    %v2365 = vpop.f32.mrb[0].mxu0
    %v2366 = vadd.f32 0.0, %v2365
    %v2367 = vpop.f32.mrb[0].mxu0
    %2368 = vdwg.mxu0
    %v2370 = vsel %vm348, %v2130, 0
    %v2373 = vsel %vm348, %v2210, 0
    %2375 = vmatprep.subr.mxu0 0.0
    %2376 = vmatpush1.xpose.msra.mxu0 %v2373
    %2377 = vmatprep.subr.mxu0 0.0
    %2378 = vmatpush1.xpose.msra.mxu0 0.0
    %2379 = vmatprep.subr.mxu0 0.0
    %2380 = vmatpush1.xpose.msra.mxu0 0.0
    %2381 = vmatprep.subr.mxu0 0.0
    %2382 = vmatpush1.xpose.msra.mxu0 0.0
    %2383 = vmatprep.subr.mxu0 0.0
    %2384 = vmatpush1.xpose.msra.mxu0 0.0
    %2385 = vmatprep.subr.mxu0 0.0
    %2386 = vmatpush1.xpose.msra.mxu0 0.0
    %2387 = vmatprep.subr.mxu0 0.0
    %2388 = vmatpush1.xpose.msra.mxu0 0.0
    %2389 = vmatprep.subr.mxu0 0.0
    %2390 = vmatpush1.xpose.msra.mxu0 0.0
    %2391 = vmatprep.subr.mxu0 0.0
    %2392 = vmatpush1.xpose.msra.mxu0 0.0
    %2393 = vmatprep.subr.mxu0 0.0
    %2394 = vmatpush1.xpose.msra.mxu0 0.0
    %2395 = vmatprep.subr.mxu0 0.0
    %2396 = vmatpush1.xpose.msra.mxu0 0.0
    %2397 = vmatprep.subr.mxu0 0.0
    %2398 = vmatpush1.xpose.msra.mxu0 0.0
    %2399 = vmatprep.subr.mxu0 0.0
    %2400 = vmatpush1.xpose.msra.mxu0 0.0
    %2401 = vmatprep.subr.mxu0 0.0
    %2402 = vmatpush1.xpose.msra.mxu0 0.0
    %2403 = vmatprep.subr.mxu0 0.0
    %2404 = vmatpush1.xpose.msra.mxu0 0.0
    %2405 = vmatprep.subr.mxu0 0.0
    %2406 = vmatpush1.xpose.msra.mxu0 0.0
    %2407 = vmatprep.subr.mxu0 0.0
    %2408 = vmatpush1.xpose.msra.mxu0 0.0
    %2409 = vmatprep.subr.mxu0 0.0
    %2410 = vmatpush1.xpose.msra.mxu0 0.0
    %2411 = vmatprep.subr.mxu0 0.0
    %2412 = vmatpush1.xpose.msra.mxu0 0.0
    %2413 = vmatprep.subr.mxu0 0.0
    %2414 = vmatpush1.xpose.msra.mxu0 0.0
    %2415 = vmatprep.subr.mxu0 0.0
    %2416 = vmatpush1.xpose.msra.mxu0 0.0
    %2417 = vmatprep.subr.mxu0 0.0
    %2418 = vmatpush1.xpose.msra.mxu0 0.0
    %2419 = vmatprep.subr.mxu0 0.0
    %2420 = vmatpush1.xpose.msra.mxu0 0.0
    %2421 = vmatprep.subr.mxu0 0.0
    %2422 = vmatpush1.xpose.msra.mxu0 0.0
    %2423 = vmatprep.subr.mxu0 0.0
    %2424 = vmatpush1.xpose.msra.mxu0 0.0
    %2425 = vmatprep.subr.mxu0 0.0
    %2426 = vmatpush1.xpose.msra.mxu0 0.0
    %2427 = vmatprep.subr.mxu0 0.0
    %2428 = vmatpush1.xpose.msra.mxu0 0.0
    %2429 = vmatprep.subr.mxu0 0.0
    %2430 = vmatpush1.xpose.msra.mxu0 0.0
    %2431 = vmatprep.subr.mxu0 0.0
    %2432 = vmatpush1.xpose.msra.mxu0 0.0
    %2433 = vmatprep.subr.mxu0 0.0
    %2434 = vmatpush1.xpose.msra.mxu0 0.0
    %2435 = vmatprep.subr.mxu0 0.0
    %2436 = vmatpush1.xpose.msra.mxu0 0.0
    %2437 = vmatprep.subr.mxu0 0.0
    %2438 = vmatpush1.xpose.msra.mxu0 0.0
    %2439 = vmatprep.mubr.f32.mxu0 0.0
    %2440 = vmatmul.mubr.f32.gmra.mrb[0].mxu0 %v2370
    %v2441 = vpop.f32.mrb[0].mxu0
    %v2442 = vadd.f32 0.0, %v2441
    %v2443 = vpop.f32.mrb[0].mxu0
    %2444 = vdwg.mxu0
    %v2445 = vmul.f32 %v2366, 0.25
    %v2446 = vmul.f32 %v2442, 0.25
    %v2447 = vsel %vm503, %v2445, -inf
    %2448 = vmax.xlane.f32.xlu0 %v2447
    %v2449 = vpop.xlane.xlu0 %2448
    %v2450 = vsel %vm503, %v2446, -inf
    %2451 = vmax.xlane.f32.xlu0 %v2450
    %v2452 = vpop.xlane.xlu0 %2451
    %v2453 = vsub.f32 %v2445, %v2449
    %v2454 = vsub.f32 %v2446, %v2452
    %v2455 = vmul.f32 %v2453, 1.442695
    %v2456 = vpow.pop %v2455
    %v2457 = vmul.f32 %v2454, 1.442695
    %v2458 = vpow.pop %v2457
    %v2459 = vsel %vm503, %v2456, 0.0
    %2460 = vadd.xlane.f32.xlu0 %v2459
    %v2461 = vpop.xlane.xlu0 %2460
    %v2462 = vsel %vm503, %v2458, 0.0
    %2463 = vadd.xlane.f32.xlu0 %v2462
    %v2464 = vpop.xlane.xlu0 %2463
    %v2465 = vrcp.pop %v2461
    %v2466 = vrcp.pop %v2464
    %v2467 = vmul.f32 %v2456, %v2465
    %v2468 = vmul.f32 %v2458, %v2466
    %v2470 = vsel %vm503, %v2467, 0
    %2472 = vmatprep.subr.mxu0 0.0
    %2473 = vmatpush1.msra.mxu0 %v2285
    %2474 = vmatprep.subr.mxu0 0.0
    %2475 = vmatpush1.msra.mxu0 0.0
    %2476 = vmatprep.subr.mxu0 0.0
    %2477 = vmatpush1.msra.mxu0 0.0
    %2478 = vmatprep.subr.mxu0 0.0
    %2479 = vmatpush1.msra.mxu0 0.0
    %2480 = vmatprep.subr.mxu0 0.0
    %2481 = vmatpush1.msra.mxu0 0.0
    %2482 = vmatprep.subr.mxu0 0.0
    %2483 = vmatpush1.msra.mxu0 0.0
    %2484 = vmatprep.subr.mxu0 0.0
    %2485 = vmatpush1.msra.mxu0 0.0
    %2486 = vmatprep.subr.mxu0 0.0
    %2487 = vmatpush1.msra.mxu0 0.0
    %2488 = vmatprep.subr.mxu0 0.0
    %2489 = vmatpush1.msra.mxu0 0.0
    %2490 = vmatprep.subr.mxu0 0.0
    %2491 = vmatpush1.msra.mxu0 0.0
    %2492 = vmatprep.subr.mxu0 0.0
    %2493 = vmatpush1.msra.mxu0 0.0
    %2494 = vmatprep.subr.mxu0 0.0
    %2495 = vmatpush1.msra.mxu0 0.0
    %2496 = vmatprep.subr.mxu0 0.0
    %2497 = vmatpush1.msra.mxu0 0.0
    %2498 = vmatprep.subr.mxu0 0.0
    %2499 = vmatpush1.msra.mxu0 0.0
    %2500 = vmatprep.subr.mxu0 0.0
    %2501 = vmatpush1.msra.mxu0 0.0
    %2502 = vmatprep.subr.mxu0 0.0
    %2503 = vmatpush1.msra.mxu0 0.0
    %2504 = vmatprep.subr.mxu0 0.0
    %2505 = vmatpush1.msra.mxu0 0.0
    %2506 = vmatprep.subr.mxu0 0.0
    %2507 = vmatpush1.msra.mxu0 0.0
    %2508 = vmatprep.subr.mxu0 0.0
    %2509 = vmatpush1.msra.mxu0 0.0
    %2510 = vmatprep.subr.mxu0 0.0
    %2511 = vmatpush1.msra.mxu0 0.0
    %2512 = vmatprep.subr.mxu0 0.0
    %2513 = vmatpush1.msra.mxu0 0.0
    %2514 = vmatprep.subr.mxu0 0.0
    %2515 = vmatpush1.msra.mxu0 0.0
    %2516 = vmatprep.subr.mxu0 0.0
    %2517 = vmatpush1.msra.mxu0 0.0
    %2518 = vmatprep.subr.mxu0 0.0
    %2519 = vmatpush1.msra.mxu0 0.0
    %2520 = vmatprep.subr.mxu0 0.0
    %2521 = vmatpush1.msra.mxu0 0.0
    %2522 = vmatprep.subr.mxu0 0.0
    %2523 = vmatpush1.msra.mxu0 0.0
    %2524 = vmatprep.subr.mxu0 0.0
    %2525 = vmatpush1.msra.mxu0 0.0
    %2526 = vmatprep.subr.mxu0 0.0
    %2527 = vmatpush1.msra.mxu0 0.0
    %2528 = vmatprep.subr.mxu0 0.0
    %2529 = vmatpush1.msra.mxu0 0.0
    %2530 = vmatprep.subr.mxu0 0.0
    %2531 = vmatpush1.msra.mxu0 0.0
    %2532 = vmatprep.subr.mxu0 0.0
    %2533 = vmatpush1.msra.mxu0 0.0
    %2534 = vmatprep.subr.mxu0 0.0
    %2535 = vmatpush1.msra.mxu0 0.0
    %2536 = vmatprep.mubr.f32.mxu0 0.0
    %2537 = vmatmul.mubr.f32.gmra.mrb[0].mxu0 %v2470
    %v2538 = vpop.f32.mrb[0].mxu0
    %v2539 = vadd.f32 0.0, %v2538
    %v2540 = vpop.f32.mrb[0].mxu0
    %2541 = vdwg.mxu0
    %v2543 = vsel %vm503, %v2468, 0
    %2545 = vmatprep.subr.mxu0 0.0
    %2546 = vmatpush1.msra.mxu0 %v2290
    %2547 = vmatprep.subr.mxu0 0.0
    %2548 = vmatpush1.msra.mxu0 0.0
    %2549 = vmatprep.subr.mxu0 0.0
    %2550 = vmatpush1.msra.mxu0 0.0
    %2551 = vmatprep.subr.mxu0 0.0
    %2552 = vmatpush1.msra.mxu0 0.0
    %2553 = vmatprep.subr.mxu0 0.0
    %2554 = vmatpush1.msra.mxu0 0.0
    %2555 = vmatprep.subr.mxu0 0.0
    %2556 = vmatpush1.msra.mxu0 0.0
    %2557 = vmatprep.subr.mxu0 0.0
    %2558 = vmatpush1.msra.mxu0 0.0
    %2559 = vmatprep.subr.mxu0 0.0
    %2560 = vmatpush1.msra.mxu0 0.0
    %2561 = vmatprep.subr.mxu0 0.0
    %2562 = vmatpush1.msra.mxu0 0.0
    %2563 = vmatprep.subr.mxu0 0.0
    %2564 = vmatpush1.msra.mxu0 0.0
    %2565 = vmatprep.subr.mxu0 0.0
    %2566 = vmatpush1.msra.mxu0 0.0
    %2567 = vmatprep.subr.mxu0 0.0
    %2568 = vmatpush1.msra.mxu0 0.0
    %2569 = vmatprep.subr.mxu0 0.0
    %2570 = vmatpush1.msra.mxu0 0.0
    %2571 = vmatprep.subr.mxu0 0.0
    %2572 = vmatpush1.msra.mxu0 0.0
    %2573 = vmatprep.subr.mxu0 0.0
    %2574 = vmatpush1.msra.mxu0 0.0
    %2575 = vmatprep.subr.mxu0 0.0
    %2576 = vmatpush1.msra.mxu0 0.0
    %2577 = vmatprep.subr.mxu0 0.0
    %2578 = vmatpush1.msra.mxu0 0.0
    %2579 = vmatprep.subr.mxu0 0.0
    %2580 = vmatpush1.msra.mxu0 0.0
    %2581 = vmatprep.subr.mxu0 0.0
    %2582 = vmatpush1.msra.mxu0 0.0
    %2583 = vmatprep.subr.mxu0 0.0
    %2584 = vmatpush1.msra.mxu0 0.0
    %2585 = vmatprep.subr.mxu0 0.0
    %2586 = vmatpush1.msra.mxu0 0.0
    %2587 = vmatprep.subr.mxu0 0.0
    %2588 = vmatpush1.msra.mxu0 0.0
    %2589 = vmatprep.subr.mxu0 0.0
    %2590 = vmatpush1.msra.mxu0 0.0
    %2591 = vmatprep.subr.mxu0 0.0
    %2592 = vmatpush1.msra.mxu0 0.0
    %2593 = vmatprep.subr.mxu0 0.0
    %2594 = vmatpush1.msra.mxu0 0.0
    %2595 = vmatprep.subr.mxu0 0.0
    %2596 = vmatpush1.msra.mxu0 0.0
    %2597 = vmatprep.subr.mxu0 0.0
    %2598 = vmatpush1.msra.mxu0 0.0
    %2599 = vmatprep.subr.mxu0 0.0
    %2600 = vmatpush1.msra.mxu0 0.0
    %2601 = vmatprep.subr.mxu0 0.0
    %2602 = vmatpush1.msra.mxu0 0.0
    %2603 = vmatprep.subr.mxu0 0.0
    %2604 = vmatpush1.msra.mxu0 0.0
    %2605 = vmatprep.subr.mxu0 0.0
    %2606 = vmatpush1.msra.mxu0 0.0
    %2607 = vmatprep.subr.mxu0 0.0
    %2608 = vmatpush1.msra.mxu0 0.0
    %2609 = vmatprep.mubr.f32.mxu0 0.0
    %2610 = vmatmul.mubr.f32.gmra.mrb[0].mxu0 %v2543
    %v2611 = vpop.f32.mrb[0].mxu0
    %v2612 = vadd.f32 0.0, %v2611
    %v2613 = vpop.f32.mrb[0].mxu0
    %2614 = vdwg.mxu0
    %s2615 = scalar_lea.vmem %s6, 48
    %v2616 = vld [vmem:[%s2615] sm:$0xff]
    %v2617 = vld [vmem:[%s2615 + $0x8] sm:$0xff]
    %v2619 = vsel %vm348, %v2539, 0
    %v2622 = vsel %vm348, %v2612, 0
    %2624 = vmatprep.subr.mxu0 0.0
    %2625 = vmatpush1.msra.mxu0 %v2616
    %2626 = vmatprep.subr.mxu0 0.0
    %2627 = vmatpush1.msra.mxu0 %v2617
    %2628 = vmatprep.subr.mxu0 0.0
    %2629 = vmatpush1.msra.mxu0 0.0
    %2630 = vmatprep.subr.mxu0 0.0
    %2631 = vmatpush1.msra.mxu0 0.0
    %2632 = vmatprep.subr.mxu0 0.0
    %2633 = vmatpush1.msra.mxu0 0.0
    %2634 = vmatprep.subr.mxu0 0.0
    %2635 = vmatpush1.msra.mxu0 0.0
    %2636 = vmatprep.subr.mxu0 0.0
    %2637 = vmatpush1.msra.mxu0 0.0
    %2638 = vmatprep.subr.mxu0 0.0
    %2639 = vmatpush1.msra.mxu0 0.0
    %2640 = vmatprep.subr.mxu0 0.0
    %2641 = vmatpush1.msra.mxu0 0.0
    %2642 = vmatprep.subr.mxu0 0.0
    %2643 = vmatpush1.msra.mxu0 0.0
    %2644 = vmatprep.subr.mxu0 0.0
    %2645 = vmatpush1.msra.mxu0 0.0
    %2646 = vmatprep.subr.mxu0 0.0
    %2647 = vmatpush1.msra.mxu0 0.0
    %2648 = vmatprep.subr.mxu0 0.0
    %2649 = vmatpush1.msra.mxu0 0.0
    %2650 = vmatprep.subr.mxu0 0.0
    %2651 = vmatpush1.msra.mxu0 0.0
    %2652 = vmatprep.subr.mxu0 0.0
    %2653 = vmatpush1.msra.mxu0 0.0
    %2654 = vmatprep.subr.mxu0 0.0
    %2655 = vmatpush1.msra.mxu0 0.0
    %2656 = vmatprep.subr.mxu0 0.0
    %2657 = vmatpush1.msra.mxu0 0.0
    %2658 = vmatprep.subr.mxu0 0.0
    %2659 = vmatpush1.msra.mxu0 0.0
    %2660 = vmatprep.subr.mxu0 0.0
    %2661 = vmatpush1.msra.mxu0 0.0
    %2662 = vmatprep.subr.mxu0 0.0
    %2663 = vmatpush1.msra.mxu0 0.0
    %2664 = vmatprep.subr.mxu0 0.0
    %2665 = vmatpush1.msra.mxu0 0.0
    %2666 = vmatprep.subr.mxu0 0.0
    %2667 = vmatpush1.msra.mxu0 0.0
    %2668 = vmatprep.subr.mxu0 0.0
    %2669 = vmatpush1.msra.mxu0 0.0
    %2670 = vmatprep.subr.mxu0 0.0
    %2671 = vmatpush1.msra.mxu0 0.0
    %2672 = vmatprep.subr.mxu0 0.0
    %2673 = vmatpush1.msra.mxu0 0.0
    %2674 = vmatprep.subr.mxu0 0.0
    %2675 = vmatpush1.msra.mxu0 0.0
    %2676 = vmatprep.subr.mxu0 0.0
    %2677 = vmatpush1.msra.mxu0 0.0
    %2678 = vmatprep.subr.mxu0 0.0
    %2679 = vmatpush1.msra.mxu0 0.0
    %2680 = vmatprep.subr.mxu0 0.0
    %2681 = vmatpush1.msra.mxu0 0.0
    %2682 = vmatprep.subr.mxu0 0.0
    %2683 = vmatpush1.msra.mxu0 0.0
    %2684 = vmatprep.subr.mxu0 0.0
    %2685 = vmatpush1.msra.mxu0 0.0
    %2686 = vmatprep.subr.mxu0 0.0
    %2687 = vmatpush1.msra.mxu0 0.0
    %2688 = vmatprep.mubr.f32.mxu0 0.0
    %2689 = vmatmul.mubr.f32.gmra.mrb[0].mxu0 %v2619
    %v2690 = vpop.f32.mrb[0].mxu0
    %v2691 = vadd.f32 0.0, %v2690
    %v2692 = vpop.f32.mrb[0].mxu0
    %2693 = vmatprep.mubr.f32.mxu0 0.0
    %2694 = vmatmul.mubr.f32.gmra.mrb[0].mxu0 %v2622
    %v2695 = vpop.f32.mrb[0].mxu0
    %v2696 = vadd.f32 0.0, %v2695
    %v2697 = vpop.f32.mrb[0].mxu0
    %2698 = vdwg.mxu0
    %v2699 = vadd.f32 %v2051, %v2691
    %v2700 = vadd.f32 %v2052, %v2696
    %v2701 = vld [vmem:[%s8] sm:$0x1]
    %v2702 = vld [vmem:[%s9] sm:$0x1]
    %v2703 = vsel %vm52, %v2699, 0.0
    %2704 = vadd.xlane.f32.xlu0 %v2703
    %v2705 = vpop.xlane.xlu0 %2704
    %v2706 = vsel %vm52, %v2700, 0.0
    %2707 = vadd.xlane.f32.xlu0 %v2706
    %v2708 = vpop.xlane.xlu0 %2707
    %v2709 = vmul.f32 %v2705, %v59
    %v2710 = vmul.f32 %v2708, %v59
    %v2711 = vsub.f32 %v2699, %v2709
    %v2712 = vsub.f32 %v2700, %v2710
    %v2713 = vmul.f32 %v2711, %v2711
    %v2714 = vmul.f32 %v2712, %v2712
    %v2715 = vsel %vm52, %v2713, 0.0
    %2716 = vadd.xlane.f32.xlu0 %v2715
    %v2717 = vpop.xlane.xlu0 %2716
    %v2718 = vsel %vm52, %v2714, 0.0
    %2719 = vadd.xlane.f32.xlu0 %v2718
    %v2720 = vpop.xlane.xlu0 %2719
    %v2721 = vmul.f32 %v2717, %v59
    %v2722 = vmul.f32 %v2720, %v59
    %v2723 = vadd.f32 %v2721, 1e-05
    %v2724 = vadd.f32 %v2722, 1e-05
    %v2725 = vrsqrt.pop %v2723
    %v2726 = vrsqrt.pop %v2724
    %v2727 = vmul.f32 %v2711, %v2725
    %v2728 = vmul.f32 %v2712, %v2726
    %v2730 = vlaneseq
    %v2731 = vshrl.u32 %v2730, 7
    %v2732 = vsub.s32 0, %v2731
    %v2733 = vrot.slane %v2701, %v2732
    %v2735 = vmul.f32 %v2727, %v2733
    %v2736 = vmul.f32 %v2728, %v2733
    %v2738 = vlaneseq
    %v2739 = vshrl.u32 %v2738, 7
    %v2740 = vsub.s32 0, %v2739
    %v2741 = vrot.slane %v2702, %v2740
    %v2743 = vadd.f32 %v2735, %v2741
    %v2744 = vadd.f32 %v2736, %v2741
    %v2745 = vld [vmem:[%s10] sm:$0xff]
    %v2746 = vld [vmem:[%s10 + $0x8] sm:$0xff]
    %v2747 = vld [vmem:[%s10 + $0x10] sm:$0xff]
    %v2748 = vld [vmem:[%s10 + $0x18] sm:$0xff]
    %v2749 = vld [vmem:[%s11] sm:$0x1]
    %v2751 = vlaneseq
    %v2752 = vshrl.u32 %v2751, 7
    %v2753 = vsub.s32 0, %v2752
    %v2754 = vrot.slane %v2749, %v2753
    %v2757 = vsel %vm52, %v2743, 0
    %v2760 = vsel %vm52, %v2744, 0
    %2762 = vmatprep.subr.mxu0 0.0
    %2763 = vmatpush1.msra.mxu0 %v2745
    %2764 = vmatprep.subr.mxu0 0.0
    %2765 = vmatpush1.msra.mxu0 %v2746
    %2766 = vmatprep.subr.mxu0 0.0
    %2767 = vmatpush1.msra.mxu0 %v2747
    %2768 = vmatprep.subr.mxu0 0.0
    %2769 = vmatpush1.msra.mxu0 %v2748
    %2770 = vmatprep.subr.mxu0 0.0
    %2771 = vmatpush1.msra.mxu0 0.0
    %2772 = vmatprep.subr.mxu0 0.0
    %2773 = vmatpush1.msra.mxu0 0.0
    %2774 = vmatprep.subr.mxu0 0.0
    %2775 = vmatpush1.msra.mxu0 0.0
    %2776 = vmatprep.subr.mxu0 0.0
    %2777 = vmatpush1.msra.mxu0 0.0
    %2778 = vmatprep.subr.mxu0 0.0
    %2779 = vmatpush1.msra.mxu0 0.0
    %2780 = vmatprep.subr.mxu0 0.0
    %2781 = vmatpush1.msra.mxu0 0.0
    %2782 = vmatprep.subr.mxu0 0.0
    %2783 = vmatpush1.msra.mxu0 0.0
    %2784 = vmatprep.subr.mxu0 0.0
    %2785 = vmatpush1.msra.mxu0 0.0
    %2786 = vmatprep.subr.mxu0 0.0
    %2787 = vmatpush1.msra.mxu0 0.0
    %2788 = vmatprep.subr.mxu0 0.0
    %2789 = vmatpush1.msra.mxu0 0.0
    %2790 = vmatprep.subr.mxu0 0.0
    %2791 = vmatpush1.msra.mxu0 0.0
    %2792 = vmatprep.subr.mxu0 0.0
    %2793 = vmatpush1.msra.mxu0 0.0
    %2794 = vmatprep.subr.mxu0 0.0
    %2795 = vmatpush1.msra.mxu0 0.0
    %2796 = vmatprep.subr.mxu0 0.0
    %2797 = vmatpush1.msra.mxu0 0.0
    %2798 = vmatprep.subr.mxu0 0.0
    %2799 = vmatpush1.msra.mxu0 0.0
    %2800 = vmatprep.subr.mxu0 0.0
    %2801 = vmatpush1.msra.mxu0 0.0
    %2802 = vmatprep.subr.mxu0 0.0
    %2803 = vmatpush1.msra.mxu0 0.0
    %2804 = vmatprep.subr.mxu0 0.0
    %2805 = vmatpush1.msra.mxu0 0.0
    %2806 = vmatprep.subr.mxu0 0.0
    %2807 = vmatpush1.msra.mxu0 0.0
    %2808 = vmatprep.subr.mxu0 0.0
    %2809 = vmatpush1.msra.mxu0 0.0
    %2810 = vmatprep.subr.mxu0 0.0
    %2811 = vmatpush1.msra.mxu0 0.0
    %2812 = vmatprep.subr.mxu0 0.0
    %2813 = vmatpush1.msra.mxu0 0.0
    %2814 = vmatprep.subr.mxu0 0.0
    %2815 = vmatpush1.msra.mxu0 0.0
    %2816 = vmatprep.subr.mxu0 0.0
    %2817 = vmatpush1.msra.mxu0 0.0
    %2818 = vmatprep.subr.mxu0 0.0
    %2819 = vmatpush1.msra.mxu0 0.0
    %2820 = vmatprep.subr.mxu0 0.0
    %2821 = vmatpush1.msra.mxu0 0.0
    %2822 = vmatprep.subr.mxu0 0.0
    %2823 = vmatpush1.msra.mxu0 0.0
    %2824 = vmatprep.subr.mxu0 0.0
    %2825 = vmatpush1.msra.mxu0 0.0
    %2826 = vmatprep.mubr.f32.mxu0 0.0
    %2827 = vmatmul.mubr.f32.gmra.mrb[0].mxu0 %v2757
    %v2828 = vpop.f32.mrb[0].mxu0
    %v2829 = vadd.f32 %v2754, %v2828
    %v2830 = vpop.f32.mrb[0].mxu0
    %2831 = vmatprep.mubr.f32.mxu0 0.0
    %2832 = vmatmul.mubr.f32.gmra.mrb[0].mxu0 %v2760
    %v2833 = vpop.f32.mrb[0].mxu0
    %v2834 = vadd.f32 %v2754, %v2833
    %v2835 = vpop.f32.mrb[0].mxu0
    %2836 = vdwg.mxu0
    %v2837 = vmul.f32 %v2829, 0.5
    %v2838 = vmul.f32 %v2834, 0.5
    %v2839 = vmul.f32 %v2829, 0.70710677
    %v2840 = vmul.f32 %v2834, 0.70710677
    %v2841 = verf.f32.pop %v2839
    %v2842 = verf.f32.pop %v2840
    %v2843 = vadd.f32 %v2841, 1.0
    %v2844 = vadd.f32 %v2842, 1.0
    %v2845 = vmul.f32 %v2837, %v2843
    %v2846 = vmul.f32 %v2838, %v2844
    %v2847 = vld [vmem:[%s12] sm:$0xff]
    %v2848 = vld [vmem:[%s12 + $0x8] sm:$0xff]
    %v2849 = vld [vmem:[%s12 + $0x10] sm:$0xff]
    %v2850 = vld [vmem:[%s12 + $0x18] sm:$0xff]
    %v2851 = vld [vmem:[%s12 + $0x20] sm:$0xff]
    %v2852 = vld [vmem:[%s12 + $0x28] sm:$0xff]
    %v2853 = vld [vmem:[%s12 + $0x30] sm:$0xff]
    %v2854 = vld [vmem:[%s12 + $0x38] sm:$0xff]
    %vm2855 = vcmask 523264
    %v2857 = vsel %vm2855, %v2845, 0
    %v2860 = vsel %vm2855, %v2846, 0
    %2862 = vmatprep.subr.mxu0 0.0
    %2863 = vmatpush1.msra.mxu0 %v2847
    %2864 = vmatprep.subr.mxu0 0.0
    %2865 = vmatpush1.msra.mxu0 %v2848
    %2866 = vmatprep.subr.mxu0 0.0
    %2867 = vmatpush1.msra.mxu0 %v2849
    %2868 = vmatprep.subr.mxu0 0.0
    %2869 = vmatpush1.msra.mxu0 %v2850
    %2870 = vmatprep.subr.mxu0 0.0
    %2871 = vmatpush1.msra.mxu0 %v2851
    %2872 = vmatprep.subr.mxu0 0.0
    %2873 = vmatpush1.msra.mxu0 %v2852
    %2874 = vmatprep.subr.mxu0 0.0
    %2875 = vmatpush1.msra.mxu0 %v2853
    %2876 = vmatprep.subr.mxu0 0.0
    %2877 = vmatpush1.msra.mxu0 %v2854
    %2878 = vmatprep.subr.mxu0 0.0
    %2879 = vmatpush1.msra.mxu0 0.0
    %2880 = vmatprep.subr.mxu0 0.0
    %2881 = vmatpush1.msra.mxu0 0.0
    %2882 = vmatprep.subr.mxu0 0.0
    %2883 = vmatpush1.msra.mxu0 0.0
    %2884 = vmatprep.subr.mxu0 0.0
    %2885 = vmatpush1.msra.mxu0 0.0
    %2886 = vmatprep.subr.mxu0 0.0
    %2887 = vmatpush1.msra.mxu0 0.0
    %2888 = vmatprep.subr.mxu0 0.0
    %2889 = vmatpush1.msra.mxu0 0.0
    %2890 = vmatprep.subr.mxu0 0.0
    %2891 = vmatpush1.msra.mxu0 0.0
    %2892 = vmatprep.subr.mxu0 0.0
    %2893 = vmatpush1.msra.mxu0 0.0
    %2894 = vmatprep.subr.mxu0 0.0
    %2895 = vmatpush1.msra.mxu0 0.0
    %2896 = vmatprep.subr.mxu0 0.0
    %2897 = vmatpush1.msra.mxu0 0.0
    %2898 = vmatprep.subr.mxu0 0.0
    %2899 = vmatpush1.msra.mxu0 0.0
    %2900 = vmatprep.subr.mxu0 0.0
    %2901 = vmatpush1.msra.mxu0 0.0
    %2902 = vmatprep.subr.mxu0 0.0
    %2903 = vmatpush1.msra.mxu0 0.0
    %2904 = vmatprep.subr.mxu0 0.0
    %2905 = vmatpush1.msra.mxu0 0.0
    %2906 = vmatprep.subr.mxu0 0.0
    %2907 = vmatpush1.msra.mxu0 0.0
    %2908 = vmatprep.subr.mxu0 0.0
    %2909 = vmatpush1.msra.mxu0 0.0
    %2910 = vmatprep.subr.mxu0 0.0
    %2911 = vmatpush1.msra.mxu0 0.0
    %2912 = vmatprep.subr.mxu0 0.0
    %2913 = vmatpush1.msra.mxu0 0.0
    %2914 = vmatprep.subr.mxu0 0.0
    %2915 = vmatpush1.msra.mxu0 0.0
    %2916 = vmatprep.subr.mxu0 0.0
    %2917 = vmatpush1.msra.mxu0 0.0
    %2918 = vmatprep.subr.mxu0 0.0
    %2919 = vmatpush1.msra.mxu0 0.0
    %2920 = vmatprep.subr.mxu0 0.0
    %2921 = vmatpush1.msra.mxu0 0.0
    %2922 = vmatprep.subr.mxu0 0.0
    %2923 = vmatpush1.msra.mxu0 0.0
    %2924 = vmatprep.subr.mxu0 0.0
    %2925 = vmatpush1.msra.mxu0 0.0
    %2926 = vmatprep.mubr.f32.mxu0 0.0
    %2927 = vmatmul.mubr.f32.gmra.mrb[0].mxu0 %v2857
    %v2928 = vpop.f32.mrb[0].mxu0
    %v2929 = vadd.f32 0.0, %v2928
    %v2930 = vpop.f32.mrb[0].mxu0
    %2931 = vmatprep.mubr.f32.mxu0 0.0
    %2932 = vmatmul.mubr.f32.gmra.mrb[0].mxu0 %v2860
    %v2933 = vpop.f32.mrb[0].mxu0
    %v2934 = vadd.f32 0.0, %v2933
    %v2935 = vpop.f32.mrb[0].mxu0
    %2936 = vdwg.mxu0
    %v2937 = vadd.f32 %v2699, %v2929
    %v2938 = vadd.f32 %v2700, %v2934
    %v2939 = vld [vmem:[%s13] sm:$0x1]
    %v2941 = vlaneseq
    %v2942 = vshrl.u32 %v2941, 7
    %v2943 = vsub.s32 0, %v2942
    %v2944 = vrot.slane %v2939, %v2943
    %v2946 = vadd.f32 %v2937, %v2944
    %v2947 = vadd.f32 %v2938, %v2944
    %s2948 = scalar_lea.vmem %s1, 1
    %v2949 = vld [vmem:[%s2948] sm:$0x1]
    %s2950 = scalar_lea.vmem %s2, 1
    %v2951 = vld [vmem:[%s2950] sm:$0x1]
    %v2952 = vsel %vm52, %v2946, 0.0
    %2953 = vadd.xlane.f32.xlu0 %v2952
    %v2954 = vpop.xlane.xlu0 %2953
    %v2955 = vsel %vm52, %v2947, 0.0
    %2956 = vadd.xlane.f32.xlu0 %v2955
    %v2957 = vpop.xlane.xlu0 %2956
    %v2958 = vmul.f32 %v2954, %v59
    %v2959 = vmul.f32 %v2957, %v59
    %v2960 = vsub.f32 %v2946, %v2958
    %v2961 = vsub.f32 %v2947, %v2959
    %v2962 = vmul.f32 %v2960, %v2960
    %v2963 = vmul.f32 %v2961, %v2961
    %v2964 = vsel %vm52, %v2962, 0.0
    %2965 = vadd.xlane.f32.xlu0 %v2964
    %v2966 = vpop.xlane.xlu0 %2965
    %v2967 = vsel %vm52, %v2963, 0.0
    %2968 = vadd.xlane.f32.xlu0 %v2967
    %v2969 = vpop.xlane.xlu0 %2968
    %v2970 = vmul.f32 %v2966, %v59
    %v2971 = vmul.f32 %v2969, %v59
    %v2972 = vadd.f32 %v2970, 1e-05
    %v2973 = vadd.f32 %v2971, 1e-05
    %v2974 = vrsqrt.pop %v2972
    %v2975 = vrsqrt.pop %v2973
    %v2976 = vmul.f32 %v2960, %v2974
    %v2977 = vmul.f32 %v2961, %v2975
    %v2979 = vlaneseq
    %v2980 = vshrl.u32 %v2979, 7
    %v2981 = vsub.s32 0, %v2980
    %v2982 = vrot.slane %v2949, %v2981
    %v2984 = vmul.f32 %v2976, %v2982
    %v2985 = vmul.f32 %v2977, %v2982
    %v2987 = vlaneseq
    %v2988 = vshrl.u32 %v2987, 7
    %v2989 = vsub.s32 0, %v2988
    %v2990 = vrot.slane %v2951, %v2989
    %v2992 = vadd.f32 %v2984, %v2990
    %v2993 = vadd.f32 %v2985, %v2990
    %s2994 = scalar_lea.vmem %s7, 1
    %v2995 = vld [vmem:[%s2994] sm:$0x1]
    %v2997 = vlaneseq
    %v2998 = vshrl.u32 %v2997, 7
    %v2999 = vsub.s32 0, %v2998
    %v3000 = vrot.slane %v2995, %v2999
    %v3002 = vadd.f32 %v2946, %v3000
    %v3003 = vadd.f32 %v2947, %v3000
    %s3004 = scalar_lea.vmem %s3, 128
    %v3005 = vld [vmem:[%s3004] sm:$0xff]
    %v3006 = vld [vmem:[%s3004 + $0x8] sm:$0xff]
    %v3007 = vld [vmem:[%s3004 + $0x10] sm:$0xff]
    %v3008 = vld [vmem:[%s3004 + $0x18] sm:$0xff]
    %v3010 = vsel %vm52, %v2992, 0
    %v3013 = vsel %vm52, %v2993, 0
    %3015 = vmatprep.subr.mxu0 0.0
    %3016 = vmatpush1.msra.mxu0 %v3005
    %3017 = vmatprep.subr.mxu0 0.0
    %3018 = vmatpush1.msra.mxu0 %v3006
    %3019 = vmatprep.subr.mxu0 0.0
    %3020 = vmatpush1.msra.mxu0 %v3007
    %3021 = vmatprep.subr.mxu0 0.0
    %3022 = vmatpush1.msra.mxu0 %v3008
    %3023 = vmatprep.subr.mxu0 0.0
    %3024 = vmatpush1.msra.mxu0 0.0
    %3025 = vmatprep.subr.mxu0 0.0
    %3026 = vmatpush1.msra.mxu0 0.0
    %3027 = vmatprep.subr.mxu0 0.0
    %3028 = vmatpush1.msra.mxu0 0.0
    %3029 = vmatprep.subr.mxu0 0.0
    %3030 = vmatpush1.msra.mxu0 0.0
    %3031 = vmatprep.subr.mxu0 0.0
    %3032 = vmatpush1.msra.mxu0 0.0
    %3033 = vmatprep.subr.mxu0 0.0
    %3034 = vmatpush1.msra.mxu0 0.0
    %3035 = vmatprep.subr.mxu0 0.0
    %3036 = vmatpush1.msra.mxu0 0.0
    %3037 = vmatprep.subr.mxu0 0.0
    %3038 = vmatpush1.msra.mxu0 0.0
    %3039 = vmatprep.subr.mxu0 0.0
    %3040 = vmatpush1.msra.mxu0 0.0
    %3041 = vmatprep.subr.mxu0 0.0
    %3042 = vmatpush1.msra.mxu0 0.0
    %3043 = vmatprep.subr.mxu0 0.0
    %3044 = vmatpush1.msra.mxu0 0.0
    %3045 = vmatprep.subr.mxu0 0.0
    %3046 = vmatpush1.msra.mxu0 0.0
    %3047 = vmatprep.subr.mxu0 0.0
    %3048 = vmatpush1.msra.mxu0 0.0
    %3049 = vmatprep.subr.mxu0 0.0
    %3050 = vmatpush1.msra.mxu0 0.0
    %3051 = vmatprep.subr.mxu0 0.0
    %3052 = vmatpush1.msra.mxu0 0.0
    %3053 = vmatprep.subr.mxu0 0.0
    %3054 = vmatpush1.msra.mxu0 0.0
    %3055 = vmatprep.subr.mxu0 0.0
    %3056 = vmatpush1.msra.mxu0 0.0
    %3057 = vmatprep.subr.mxu0 0.0
    %3058 = vmatpush1.msra.mxu0 0.0
    %3059 = vmatprep.subr.mxu0 0.0
    %3060 = vmatpush1.msra.mxu0 0.0
    %3061 = vmatprep.subr.mxu0 0.0
    %3062 = vmatpush1.msra.mxu0 0.0
    %3063 = vmatprep.subr.mxu0 0.0
    %3064 = vmatpush1.msra.mxu0 0.0
    %3065 = vmatprep.subr.mxu0 0.0
    %3066 = vmatpush1.msra.mxu0 0.0
    %3067 = vmatprep.subr.mxu0 0.0
    %3068 = vmatpush1.msra.mxu0 0.0
    %3069 = vmatprep.subr.mxu0 0.0
    %3070 = vmatpush1.msra.mxu0 0.0
    %3071 = vmatprep.subr.mxu0 0.0
    %3072 = vmatpush1.msra.mxu0 0.0
    %3073 = vmatprep.subr.mxu0 0.0
    %3074 = vmatpush1.msra.mxu0 0.0
    %3075 = vmatprep.subr.mxu0 0.0
    %3076 = vmatpush1.msra.mxu0 0.0
    %3077 = vmatprep.subr.mxu0 0.0
    %3078 = vmatpush1.msra.mxu0 0.0
    %3079 = vmatprep.mubr.f32.mxu0 0.0
    %3080 = vmatmul.mubr.f32.gmra.mrb[0].mxu0 %v3010
    %v3081 = vpop.f32.mrb[0].mxu0
    %v3082 = vadd.f32 0.0, %v3081
    %v3083 = vpop.f32.mrb[0].mxu0
    %3084 = vmatprep.mubr.f32.mxu0 0.0
    %3085 = vmatmul.mubr.f32.gmra.mrb[0].mxu0 %v3013
    %v3086 = vpop.f32.mrb[0].mxu0
    %v3087 = vadd.f32 0.0, %v3086
    %v3088 = vpop.f32.mrb[0].mxu0
    %3089 = vdwg.mxu0
    %s3090 = scalar_lea.vmem %s4, 128
    %v3091 = vld [vmem:[%s3090] sm:$0xff]
    %v3092 = vld [vmem:[%s3090 + $0x8] sm:$0xff]
    %v3093 = vld [vmem:[%s3090 + $0x10] sm:$0xff]
    %v3094 = vld [vmem:[%s3090 + $0x18] sm:$0xff]
    %3095 = vmatprep.subr.mxu0 0.0
    %3096 = vmatpush1.msra.mxu0 %v3091
    %3097 = vmatprep.subr.mxu0 0.0
    %3098 = vmatpush1.msra.mxu0 %v3092
    %3099 = vmatprep.subr.mxu0 0.0
    %3100 = vmatpush1.msra.mxu0 %v3093
    %3101 = vmatprep.subr.mxu0 0.0
    %3102 = vmatpush1.msra.mxu0 %v3094
    %3103 = vmatprep.subr.mxu0 0.0
    %3104 = vmatpush1.msra.mxu0 0.0
    %3105 = vmatprep.subr.mxu0 0.0
    %3106 = vmatpush1.msra.mxu0 0.0
    %3107 = vmatprep.subr.mxu0 0.0
    %3108 = vmatpush1.msra.mxu0 0.0
    %3109 = vmatprep.subr.mxu0 0.0
    %3110 = vmatpush1.msra.mxu0 0.0
    %3111 = vmatprep.subr.mxu0 0.0
    %3112 = vmatpush1.msra.mxu0 0.0
    %3113 = vmatprep.subr.mxu0 0.0
    %3114 = vmatpush1.msra.mxu0 0.0
    %3115 = vmatprep.subr.mxu0 0.0
    %3116 = vmatpush1.msra.mxu0 0.0
    %3117 = vmatprep.subr.mxu0 0.0
    %3118 = vmatpush1.msra.mxu0 0.0
    %3119 = vmatprep.subr.mxu0 0.0
    %3120 = vmatpush1.msra.mxu0 0.0
    %3121 = vmatprep.subr.mxu0 0.0
    %3122 = vmatpush1.msra.mxu0 0.0
    %3123 = vmatprep.subr.mxu0 0.0
    %3124 = vmatpush1.msra.mxu0 0.0
    %3125 = vmatprep.subr.mxu0 0.0
    %3126 = vmatpush1.msra.mxu0 0.0
    %3127 = vmatprep.subr.mxu0 0.0
    %3128 = vmatpush1.msra.mxu0 0.0
    %3129 = vmatprep.subr.mxu0 0.0
    %3130 = vmatpush1.msra.mxu0 0.0
    %3131 = vmatprep.subr.mxu0 0.0
    %3132 = vmatpush1.msra.mxu0 0.0
    %3133 = vmatprep.subr.mxu0 0.0
    %3134 = vmatpush1.msra.mxu0 0.0
    %3135 = vmatprep.subr.mxu0 0.0
    %3136 = vmatpush1.msra.mxu0 0.0
    %3137 = vmatprep.subr.mxu0 0.0
    %3138 = vmatpush1.msra.mxu0 0.0
    %3139 = vmatprep.subr.mxu0 0.0
    %3140 = vmatpush1.msra.mxu0 0.0
    %3141 = vmatprep.subr.mxu0 0.0
    %3142 = vmatpush1.msra.mxu0 0.0
    %3143 = vmatprep.subr.mxu0 0.0
    %3144 = vmatpush1.msra.mxu0 0.0
    %3145 = vmatprep.subr.mxu0 0.0
    %3146 = vmatpush1.msra.mxu0 0.0
    %3147 = vmatprep.subr.mxu0 0.0
    %3148 = vmatpush1.msra.mxu0 0.0
    %3149 = vmatprep.subr.mxu0 0.0
    %3150 = vmatpush1.msra.mxu0 0.0
    %3151 = vmatprep.subr.mxu0 0.0
    %3152 = vmatpush1.msra.mxu0 0.0
    %3153 = vmatprep.subr.mxu0 0.0
    %3154 = vmatpush1.msra.mxu0 0.0
    %3155 = vmatprep.subr.mxu0 0.0
    %3156 = vmatpush1.msra.mxu0 0.0
    %3157 = vmatprep.subr.mxu0 0.0
    %3158 = vmatpush1.msra.mxu0 0.0
    %3159 = vmatprep.mubr.f32.mxu0 0.0
    %3160 = vmatmul.mubr.f32.gmra.mrb[0].mxu0 %v3010
    %v3161 = vpop.f32.mrb[0].mxu0
    %v3162 = vadd.f32 0.0, %v3161
    %v3163 = vpop.f32.mrb[0].mxu0
    %3164 = vmatprep.mubr.f32.mxu0 0.0
    %3165 = vmatmul.mubr.f32.gmra.mrb[0].mxu0 %v3013
    %v3166 = vpop.f32.mrb[0].mxu0
    %v3167 = vadd.f32 0.0, %v3166
    %v3168 = vpop.f32.mrb[0].mxu0
    %3169 = vdwg.mxu0
    %s3170 = scalar_lea.vmem %s5, 128
    %v3171 = vld [vmem:[%s3170] sm:$0xff]
    %v3172 = vld [vmem:[%s3170 + $0x8] sm:$0xff]
    %v3173 = vld [vmem:[%s3170 + $0x10] sm:$0xff]
    %v3174 = vld [vmem:[%s3170 + $0x18] sm:$0xff]
    %3175 = vmatprep.subr.mxu0 0.0
    %3176 = vmatpush1.msra.mxu0 %v3171
    %3177 = vmatprep.subr.mxu0 0.0
    %3178 = vmatpush1.msra.mxu0 %v3172
    %3179 = vmatprep.subr.mxu0 0.0
    %3180 = vmatpush1.msra.mxu0 %v3173
    %3181 = vmatprep.subr.mxu0 0.0
    %3182 = vmatpush1.msra.mxu0 %v3174
    %3183 = vmatprep.subr.mxu0 0.0
    %3184 = vmatpush1.msra.mxu0 0.0
    %3185 = vmatprep.subr.mxu0 0.0
    %3186 = vmatpush1.msra.mxu0 0.0
    %3187 = vmatprep.subr.mxu0 0.0
    %3188 = vmatpush1.msra.mxu0 0.0
    %3189 = vmatprep.subr.mxu0 0.0
    %3190 = vmatpush1.msra.mxu0 0.0
    %3191 = vmatprep.subr.mxu0 0.0
    %3192 = vmatpush1.msra.mxu0 0.0
    %3193 = vmatprep.subr.mxu0 0.0
    %3194 = vmatpush1.msra.mxu0 0.0
    %3195 = vmatprep.subr.mxu0 0.0
    %3196 = vmatpush1.msra.mxu0 0.0
    %3197 = vmatprep.subr.mxu0 0.0
    %3198 = vmatpush1.msra.mxu0 0.0
    %3199 = vmatprep.subr.mxu0 0.0
    %3200 = vmatpush1.msra.mxu0 0.0
    %3201 = vmatprep.subr.mxu0 0.0
    %3202 = vmatpush1.msra.mxu0 0.0
    %3203 = vmatprep.subr.mxu0 0.0
    %3204 = vmatpush1.msra.mxu0 0.0
    %3205 = vmatprep.subr.mxu0 0.0
    %3206 = vmatpush1.msra.mxu0 0.0
    %3207 = vmatprep.subr.mxu0 0.0
    %3208 = vmatpush1.msra.mxu0 0.0
    %3209 = vmatprep.subr.mxu0 0.0
    %3210 = vmatpush1.msra.mxu0 0.0
    %3211 = vmatprep.subr.mxu0 0.0
    %3212 = vmatpush1.msra.mxu0 0.0
    %3213 = vmatprep.subr.mxu0 0.0
    %3214 = vmatpush1.msra.mxu0 0.0
    %3215 = vmatprep.subr.mxu0 0.0
    %3216 = vmatpush1.msra.mxu0 0.0
    %3217 = vmatprep.subr.mxu0 0.0
    %3218 = vmatpush1.msra.mxu0 0.0
    %3219 = vmatprep.subr.mxu0 0.0
    %3220 = vmatpush1.msra.mxu0 0.0
    %3221 = vmatprep.subr.mxu0 0.0
    %3222 = vmatpush1.msra.mxu0 0.0
    %3223 = vmatprep.subr.mxu0 0.0
    %3224 = vmatpush1.msra.mxu0 0.0
    %3225 = vmatprep.subr.mxu0 0.0
    %3226 = vmatpush1.msra.mxu0 0.0
    %3227 = vmatprep.subr.mxu0 0.0
    %3228 = vmatpush1.msra.mxu0 0.0
    %3229 = vmatprep.subr.mxu0 0.0
    %3230 = vmatpush1.msra.mxu0 0.0
    %3231 = vmatprep.subr.mxu0 0.0
    %3232 = vmatpush1.msra.mxu0 0.0
    %3233 = vmatprep.subr.mxu0 0.0
    %3234 = vmatpush1.msra.mxu0 0.0
    %3235 = vmatprep.subr.mxu0 0.0
    %3236 = vmatpush1.msra.mxu0 0.0
    %3237 = vmatprep.subr.mxu0 0.0
    %3238 = vmatpush1.msra.mxu0 0.0
    %3239 = vmatprep.mubr.f32.mxu0 0.0
    %3240 = vmatmul.mubr.f32.gmra.mrb[0].mxu0 %v3010
    %v3241 = vpop.f32.mrb[0].mxu0
    %v3242 = vadd.f32 0.0, %v3241
    %v3243 = vpop.f32.mrb[0].mxu0
    %3244 = vmatprep.mubr.f32.mxu0 0.0
    %3245 = vmatmul.mubr.f32.gmra.mrb[0].mxu0 %v3013
    %v3246 = vpop.f32.mrb[0].mxu0
    %v3247 = vadd.f32 0.0, %v3246
    %v3248 = vpop.f32.mrb[0].mxu0
    %3249 = vdwg.mxu0
    %v3251 = vsel %vm348, %v3082, 0
    %v3254 = vsel %vm348, %v3162, 0
    %3256 = vmatprep.subr.mxu0 0.0
    %3257 = vmatpush1.xpose.msra.mxu0 %v3254
    %3258 = vmatprep.subr.mxu0 0.0
    %3259 = vmatpush1.xpose.msra.mxu0 0.0
    %3260 = vmatprep.subr.mxu0 0.0
    %3261 = vmatpush1.xpose.msra.mxu0 0.0
    %3262 = vmatprep.subr.mxu0 0.0
    %3263 = vmatpush1.xpose.msra.mxu0 0.0
    %3264 = vmatprep.subr.mxu0 0.0
    %3265 = vmatpush1.xpose.msra.mxu0 0.0
    %3266 = vmatprep.subr.mxu0 0.0
    %3267 = vmatpush1.xpose.msra.mxu0 0.0
    %3268 = vmatprep.subr.mxu0 0.0
    %3269 = vmatpush1.xpose.msra.mxu0 0.0
    %3270 = vmatprep.subr.mxu0 0.0
    %3271 = vmatpush1.xpose.msra.mxu0 0.0
    %3272 = vmatprep.subr.mxu0 0.0
    %3273 = vmatpush1.xpose.msra.mxu0 0.0
    %3274 = vmatprep.subr.mxu0 0.0
    %3275 = vmatpush1.xpose.msra.mxu0 0.0
    %3276 = vmatprep.subr.mxu0 0.0
    %3277 = vmatpush1.xpose.msra.mxu0 0.0
    %3278 = vmatprep.subr.mxu0 0.0
    %3279 = vmatpush1.xpose.msra.mxu0 0.0
    %3280 = vmatprep.subr.mxu0 0.0
    %3281 = vmatpush1.xpose.msra.mxu0 0.0
    %3282 = vmatprep.subr.mxu0 0.0
    %3283 = vmatpush1.xpose.msra.mxu0 0.0
    %3284 = vmatprep.subr.mxu0 0.0
    %3285 = vmatpush1.xpose.msra.mxu0 0.0
    %3286 = vmatprep.subr.mxu0 0.0
    %3287 = vmatpush1.xpose.msra.mxu0 0.0
    %3288 = vmatprep.subr.mxu0 0.0
    %3289 = vmatpush1.xpose.msra.mxu0 0.0
    %3290 = vmatprep.subr.mxu0 0.0
    %3291 = vmatpush1.xpose.msra.mxu0 0.0
    %3292 = vmatprep.subr.mxu0 0.0
    %3293 = vmatpush1.xpose.msra.mxu0 0.0
    %3294 = vmatprep.subr.mxu0 0.0
    %3295 = vmatpush1.xpose.msra.mxu0 0.0
    %3296 = vmatprep.subr.mxu0 0.0
    %3297 = vmatpush1.xpose.msra.mxu0 0.0
    %3298 = vmatprep.subr.mxu0 0.0
    %3299 = vmatpush1.xpose.msra.mxu0 0.0
    %3300 = vmatprep.subr.mxu0 0.0
    %3301 = vmatpush1.xpose.msra.mxu0 0.0
    %3302 = vmatprep.subr.mxu0 0.0
    %3303 = vmatpush1.xpose.msra.mxu0 0.0
    %3304 = vmatprep.subr.mxu0 0.0
    %3305 = vmatpush1.xpose.msra.mxu0 0.0
    %3306 = vmatprep.subr.mxu0 0.0
    %3307 = vmatpush1.xpose.msra.mxu0 0.0
    %3308 = vmatprep.subr.mxu0 0.0
    %3309 = vmatpush1.xpose.msra.mxu0 0.0
    %3310 = vmatprep.subr.mxu0 0.0
    %3311 = vmatpush1.xpose.msra.mxu0 0.0
    %3312 = vmatprep.subr.mxu0 0.0
    %3313 = vmatpush1.xpose.msra.mxu0 0.0
    %3314 = vmatprep.subr.mxu0 0.0
    %3315 = vmatpush1.xpose.msra.mxu0 0.0
    %3316 = vmatprep.subr.mxu0 0.0
    %3317 = vmatpush1.xpose.msra.mxu0 0.0
    %3318 = vmatprep.subr.mxu0 0.0
    %3319 = vmatpush1.xpose.msra.mxu0 0.0
    %3320 = vmatprep.mubr.f32.mxu0 0.0
    %3321 = vmatmul.mubr.f32.gmra.mrb[0].mxu0 %v3251
    %v3322 = vpop.f32.mrb[0].mxu0
    %v3323 = vadd.f32 0.0, %v3322
    %v3324 = vpop.f32.mrb[0].mxu0
    %3325 = vdwg.mxu0
    %v3327 = vsel %vm348, %v3087, 0
    %v3330 = vsel %vm348, %v3167, 0
    %3332 = vmatprep.subr.mxu0 0.0
    %3333 = vmatpush1.xpose.msra.mxu0 %v3330
    %3334 = vmatprep.subr.mxu0 0.0
    %3335 = vmatpush1.xpose.msra.mxu0 0.0
    %3336 = vmatprep.subr.mxu0 0.0
    %3337 = vmatpush1.xpose.msra.mxu0 0.0
    %3338 = vmatprep.subr.mxu0 0.0
    %3339 = vmatpush1.xpose.msra.mxu0 0.0
    %3340 = vmatprep.subr.mxu0 0.0
    %3341 = vmatpush1.xpose.msra.mxu0 0.0
    %3342 = vmatprep.subr.mxu0 0.0
    %3343 = vmatpush1.xpose.msra.mxu0 0.0
    %3344 = vmatprep.subr.mxu0 0.0
    %3345 = vmatpush1.xpose.msra.mxu0 0.0
    %3346 = vmatprep.subr.mxu0 0.0
    %3347 = vmatpush1.xpose.msra.mxu0 0.0
    %3348 = vmatprep.subr.mxu0 0.0
    %3349 = vmatpush1.xpose.msra.mxu0 0.0
    %3350 = vmatprep.subr.mxu0 0.0
    %3351 = vmatpush1.xpose.msra.mxu0 0.0
    %3352 = vmatprep.subr.mxu0 0.0
    %3353 = vmatpush1.xpose.msra.mxu0 0.0
    %3354 = vmatprep.subr.mxu0 0.0
    %3355 = vmatpush1.xpose.msra.mxu0 0.0
    %3356 = vmatprep.subr.mxu0 0.0
    %3357 = vmatpush1.xpose.msra.mxu0 0.0
    %3358 = vmatprep.subr.mxu0 0.0
    %3359 = vmatpush1.xpose.msra.mxu0 0.0
    %3360 = vmatprep.subr.mxu0 0.0
    %3361 = vmatpush1.xpose.msra.mxu0 0.0
    %3362 = vmatprep.subr.mxu0 0.0
    %3363 = vmatpush1.xpose.msra.mxu0 0.0
    %3364 = vmatprep.subr.mxu0 0.0
    %3365 = vmatpush1.xpose.msra.mxu0 0.0
    %3366 = vmatprep.subr.mxu0 0.0
    %3367 = vmatpush1.xpose.msra.mxu0 0.0
    %3368 = vmatprep.subr.mxu0 0.0
    %3369 = vmatpush1.xpose.msra.mxu0 0.0
    %3370 = vmatprep.subr.mxu0 0.0
    %3371 = vmatpush1.xpose.msra.mxu0 0.0
    %3372 = vmatprep.subr.mxu0 0.0
    %3373 = vmatpush1.xpose.msra.mxu0 0.0
    %3374 = vmatprep.subr.mxu0 0.0
    %3375 = vmatpush1.xpose.msra.mxu0 0.0
    %3376 = vmatprep.subr.mxu0 0.0
    %3377 = vmatpush1.xpose.msra.mxu0 0.0
    %3378 = vmatprep.subr.mxu0 0.0
    %3379 = vmatpush1.xpose.msra.mxu0 0.0
    %3380 = vmatprep.subr.mxu0 0.0
    %3381 = vmatpush1.xpose.msra.mxu0 0.0
    %3382 = vmatprep.subr.mxu0 0.0
    %3383 = vmatpush1.xpose.msra.mxu0 0.0
    %3384 = vmatprep.subr.mxu0 0.0
    %3385 = vmatpush1.xpose.msra.mxu0 0.0
    %3386 = vmatprep.subr.mxu0 0.0
    %3387 = vmatpush1.xpose.msra.mxu0 0.0
    %3388 = vmatprep.subr.mxu0 0.0
    %3389 = vmatpush1.xpose.msra.mxu0 0.0
    %3390 = vmatprep.subr.mxu0 0.0
    %3391 = vmatpush1.xpose.msra.mxu0 0.0
    %3392 = vmatprep.subr.mxu0 0.0
    %3393 = vmatpush1.xpose.msra.mxu0 0.0
    %3394 = vmatprep.subr.mxu0 0.0
    %3395 = vmatpush1.xpose.msra.mxu0 0.0
    %3396 = vmatprep.mubr.f32.mxu0 0.0
    %3397 = vmatmul.mubr.f32.gmra.mrb[0].mxu0 %v3327
    %v3398 = vpop.f32.mrb[0].mxu0
    %v3399 = vadd.f32 0.0, %v3398
    %v3400 = vpop.f32.mrb[0].mxu0
    %3401 = vdwg.mxu0
    %v3402 = vmul.f32 %v3323, 0.25
    %v3403 = vmul.f32 %v3399, 0.25
    %v3404 = vsel %vm503, %v3402, -inf
    %3405 = vmax.xlane.f32.xlu0 %v3404
    %v3406 = vpop.xlane.xlu0 %3405
    %v3407 = vsel %vm503, %v3403, -inf
    %3408 = vmax.xlane.f32.xlu0 %v3407
    %v3409 = vpop.xlane.xlu0 %3408
    %v3410 = vsub.f32 %v3402, %v3406
    %v3411 = vsub.f32 %v3403, %v3409
    %v3412 = vmul.f32 %v3410, 1.442695
    %v3413 = vpow.pop %v3412
    %v3414 = vmul.f32 %v3411, 1.442695
    %v3415 = vpow.pop %v3414
    %v3416 = vsel %vm503, %v3413, 0.0
    %3417 = vadd.xlane.f32.xlu0 %v3416
    %v3418 = vpop.xlane.xlu0 %3417
    %v3419 = vsel %vm503, %v3415, 0.0
    %3420 = vadd.xlane.f32.xlu0 %v3419
    %v3421 = vpop.xlane.xlu0 %3420
    %v3422 = vrcp.pop %v3418
    %v3423 = vrcp.pop %v3421
    %v3424 = vmul.f32 %v3413, %v3422
    %v3425 = vmul.f32 %v3415, %v3423
    %v3427 = vsel %vm503, %v3424, 0
    %3429 = vmatprep.subr.mxu0 0.0
    %3430 = vmatpush1.msra.mxu0 %v3242
    %3431 = vmatprep.subr.mxu0 0.0
    %3432 = vmatpush1.msra.mxu0 0.0
    %3433 = vmatprep.subr.mxu0 0.0
    %3434 = vmatpush1.msra.mxu0 0.0
    %3435 = vmatprep.subr.mxu0 0.0
    %3436 = vmatpush1.msra.mxu0 0.0
    %3437 = vmatprep.subr.mxu0 0.0
    %3438 = vmatpush1.msra.mxu0 0.0
    %3439 = vmatprep.subr.mxu0 0.0
    %3440 = vmatpush1.msra.mxu0 0.0
    %3441 = vmatprep.subr.mxu0 0.0
    %3442 = vmatpush1.msra.mxu0 0.0
    %3443 = vmatprep.subr.mxu0 0.0
    %3444 = vmatpush1.msra.mxu0 0.0
    %3445 = vmatprep.subr.mxu0 0.0
    %3446 = vmatpush1.msra.mxu0 0.0
    %3447 = vmatprep.subr.mxu0 0.0
    %3448 = vmatpush1.msra.mxu0 0.0
    %3449 = vmatprep.subr.mxu0 0.0
    %3450 = vmatpush1.msra.mxu0 0.0
    %3451 = vmatprep.subr.mxu0 0.0
    %3452 = vmatpush1.msra.mxu0 0.0
    %3453 = vmatprep.subr.mxu0 0.0
    %3454 = vmatpush1.msra.mxu0 0.0
    %3455 = vmatprep.subr.mxu0 0.0
    %3456 = vmatpush1.msra.mxu0 0.0
    %3457 = vmatprep.subr.mxu0 0.0
    %3458 = vmatpush1.msra.mxu0 0.0
    %3459 = vmatprep.subr.mxu0 0.0
    %3460 = vmatpush1.msra.mxu0 0.0
    %3461 = vmatprep.subr.mxu0 0.0
    %3462 = vmatpush1.msra.mxu0 0.0
    %3463 = vmatprep.subr.mxu0 0.0
    %3464 = vmatpush1.msra.mxu0 0.0
    %3465 = vmatprep.subr.mxu0 0.0
    %3466 = vmatpush1.msra.mxu0 0.0
    %3467 = vmatprep.subr.mxu0 0.0
    %3468 = vmatpush1.msra.mxu0 0.0
    %3469 = vmatprep.subr.mxu0 0.0
    %3470 = vmatpush1.msra.mxu0 0.0
    %3471 = vmatprep.subr.mxu0 0.0
    %3472 = vmatpush1.msra.mxu0 0.0
    %3473 = vmatprep.subr.mxu0 0.0
    %3474 = vmatpush1.msra.mxu0 0.0
    %3475 = vmatprep.subr.mxu0 0.0
    %3476 = vmatpush1.msra.mxu0 0.0
    %3477 = vmatprep.subr.mxu0 0.0
    %3478 = vmatpush1.msra.mxu0 0.0
    %3479 = vmatprep.subr.mxu0 0.0
    %3480 = vmatpush1.msra.mxu0 0.0
    %3481 = vmatprep.subr.mxu0 0.0
    %3482 = vmatpush1.msra.mxu0 0.0
    %3483 = vmatprep.subr.mxu0 0.0
    %3484 = vmatpush1.msra.mxu0 0.0
    %3485 = vmatprep.subr.mxu0 0.0
    %3486 = vmatpush1.msra.mxu0 0.0
    %3487 = vmatprep.subr.mxu0 0.0
    %3488 = vmatpush1.msra.mxu0 0.0
    %3489 = vmatprep.subr.mxu0 0.0
    %3490 = vmatpush1.msra.mxu0 0.0
    %3491 = vmatprep.subr.mxu0 0.0
    %3492 = vmatpush1.msra.mxu0 0.0
    %3493 = vmatprep.mubr.f32.mxu0 0.0
    %3494 = vmatmul.mubr.f32.gmra.mrb[0].mxu0 %v3427
    %v3495 = vpop.f32.mrb[0].mxu0
    %v3496 = vadd.f32 0.0, %v3495
    %v3497 = vpop.f32.mrb[0].mxu0
    %3498 = vdwg.mxu0
    %v3500 = vsel %vm503, %v3425, 0
    %3502 = vmatprep.subr.mxu0 0.0
    %3503 = vmatpush1.msra.mxu0 %v3247
    %3504 = vmatprep.subr.mxu0 0.0
    %3505 = vmatpush1.msra.mxu0 0.0
    %3506 = vmatprep.subr.mxu0 0.0
    %3507 = vmatpush1.msra.mxu0 0.0
    %3508 = vmatprep.subr.mxu0 0.0
    %3509 = vmatpush1.msra.mxu0 0.0
    %3510 = vmatprep.subr.mxu0 0.0
    %3511 = vmatpush1.msra.mxu0 0.0
    %3512 = vmatprep.subr.mxu0 0.0
    %3513 = vmatpush1.msra.mxu0 0.0
    %3514 = vmatprep.subr.mxu0 0.0
    %3515 = vmatpush1.msra.mxu0 0.0
    %3516 = vmatprep.subr.mxu0 0.0
    %3517 = vmatpush1.msra.mxu0 0.0
    %3518 = vmatprep.subr.mxu0 0.0
    %3519 = vmatpush1.msra.mxu0 0.0
    %3520 = vmatprep.subr.mxu0 0.0
    %3521 = vmatpush1.msra.mxu0 0.0
    %3522 = vmatprep.subr.mxu0 0.0
    %3523 = vmatpush1.msra.mxu0 0.0
    %3524 = vmatprep.subr.mxu0 0.0
    %3525 = vmatpush1.msra.mxu0 0.0
    %3526 = vmatprep.subr.mxu0 0.0
    %3527 = vmatpush1.msra.mxu0 0.0
    %3528 = vmatprep.subr.mxu0 0.0
    %3529 = vmatpush1.msra.mxu0 0.0
    %3530 = vmatprep.subr.mxu0 0.0
    %3531 = vmatpush1.msra.mxu0 0.0
    %3532 = vmatprep.subr.mxu0 0.0
    %3533 = vmatpush1.msra.mxu0 0.0
    %3534 = vmatprep.subr.mxu0 0.0
    %3535 = vmatpush1.msra.mxu0 0.0
    %3536 = vmatprep.subr.mxu0 0.0
    %3537 = vmatpush1.msra.mxu0 0.0
    %3538 = vmatprep.subr.mxu0 0.0
    %3539 = vmatpush1.msra.mxu0 0.0
    %3540 = vmatprep.subr.mxu0 0.0
    %3541 = vmatpush1.msra.mxu0 0.0
    %3542 = vmatprep.subr.mxu0 0.0
    %3543 = vmatpush1.msra.mxu0 0.0
    %3544 = vmatprep.subr.mxu0 0.0
    %3545 = vmatpush1.msra.mxu0 0.0
    %3546 = vmatprep.subr.mxu0 0.0
    %3547 = vmatpush1.msra.mxu0 0.0
    %3548 = vmatprep.subr.mxu0 0.0
    %3549 = vmatpush1.msra.mxu0 0.0
    %3550 = vmatprep.subr.mxu0 0.0
    %3551 = vmatpush1.msra.mxu0 0.0
    %3552 = vmatprep.subr.mxu0 0.0
    %3553 = vmatpush1.msra.mxu0 0.0
    %3554 = vmatprep.subr.mxu0 0.0
    %3555 = vmatpush1.msra.mxu0 0.0
    %3556 = vmatprep.subr.mxu0 0.0
    %3557 = vmatpush1.msra.mxu0 0.0
    %3558 = vmatprep.subr.mxu0 0.0
    %3559 = vmatpush1.msra.mxu0 0.0
    %3560 = vmatprep.subr.mxu0 0.0
    %3561 = vmatpush1.msra.mxu0 0.0
    %3562 = vmatprep.subr.mxu0 0.0
    %3563 = vmatpush1.msra.mxu0 0.0
    %3564 = vmatprep.subr.mxu0 0.0
    %3565 = vmatpush1.msra.mxu0 0.0
    %3566 = vmatprep.mubr.f32.mxu0 0.0
    %3567 = vmatmul.mubr.f32.gmra.mrb[0].mxu0 %v3500
    %v3568 = vpop.f32.mrb[0].mxu0
    %v3569 = vadd.f32 0.0, %v3568
    %v3570 = vpop.f32.mrb[0].mxu0
    %3571 = vdwg.mxu0
    %s3572 = scalar_lea.vmem %s6, 64
    %v3573 = vld [vmem:[%s3572] sm:$0xff]
    %v3574 = vld [vmem:[%s3572 + $0x8] sm:$0xff]
    %v3576 = vsel %vm348, %v3496, 0
    %v3579 = vsel %vm348, %v3569, 0
    %3581 = vmatprep.subr.mxu0 0.0
    %3582 = vmatpush1.msra.mxu0 %v3573
    %3583 = vmatprep.subr.mxu0 0.0
    %3584 = vmatpush1.msra.mxu0 %v3574
    %3585 = vmatprep.subr.mxu0 0.0
    %3586 = vmatpush1.msra.mxu0 0.0
    %3587 = vmatprep.subr.mxu0 0.0
    %3588 = vmatpush1.msra.mxu0 0.0
    %3589 = vmatprep.subr.mxu0 0.0
    %3590 = vmatpush1.msra.mxu0 0.0
    %3591 = vmatprep.subr.mxu0 0.0
    %3592 = vmatpush1.msra.mxu0 0.0
    %3593 = vmatprep.subr.mxu0 0.0
    %3594 = vmatpush1.msra.mxu0 0.0
    %3595 = vmatprep.subr.mxu0 0.0
    %3596 = vmatpush1.msra.mxu0 0.0
    %3597 = vmatprep.subr.mxu0 0.0
    %3598 = vmatpush1.msra.mxu0 0.0
    %3599 = vmatprep.subr.mxu0 0.0
    %3600 = vmatpush1.msra.mxu0 0.0
    %3601 = vmatprep.subr.mxu0 0.0
    %3602 = vmatpush1.msra.mxu0 0.0
    %3603 = vmatprep.subr.mxu0 0.0
    %3604 = vmatpush1.msra.mxu0 0.0
    %3605 = vmatprep.subr.mxu0 0.0
    %3606 = vmatpush1.msra.mxu0 0.0
    %3607 = vmatprep.subr.mxu0 0.0
    %3608 = vmatpush1.msra.mxu0 0.0
    %3609 = vmatprep.subr.mxu0 0.0
    %3610 = vmatpush1.msra.mxu0 0.0
    %3611 = vmatprep.subr.mxu0 0.0
    %3612 = vmatpush1.msra.mxu0 0.0
    %3613 = vmatprep.subr.mxu0 0.0
    %3614 = vmatpush1.msra.mxu0 0.0
    %3615 = vmatprep.subr.mxu0 0.0
    %3616 = vmatpush1.msra.mxu0 0.0
    %3617 = vmatprep.subr.mxu0 0.0
    %3618 = vmatpush1.msra.mxu0 0.0
    %3619 = vmatprep.subr.mxu0 0.0
    %3620 = vmatpush1.msra.mxu0 0.0
    %3621 = vmatprep.subr.mxu0 0.0
    %3622 = vmatpush1.msra.mxu0 0.0
    %3623 = vmatprep.subr.mxu0 0.0
    %3624 = vmatpush1.msra.mxu0 0.0
    %3625 = vmatprep.subr.mxu0 0.0
    %3626 = vmatpush1.msra.mxu0 0.0
    %3627 = vmatprep.subr.mxu0 0.0
    %3628 = vmatpush1.msra.mxu0 0.0
    %3629 = vmatprep.subr.mxu0 0.0
    %3630 = vmatpush1.msra.mxu0 0.0
    %3631 = vmatprep.subr.mxu0 0.0
    %3632 = vmatpush1.msra.mxu0 0.0
    %3633 = vmatprep.subr.mxu0 0.0
    %3634 = vmatpush1.msra.mxu0 0.0
    %3635 = vmatprep.subr.mxu0 0.0
    %3636 = vmatpush1.msra.mxu0 0.0
    %3637 = vmatprep.subr.mxu0 0.0
    %3638 = vmatpush1.msra.mxu0 0.0
    %3639 = vmatprep.subr.mxu0 0.0
    %3640 = vmatpush1.msra.mxu0 0.0
    %3641 = vmatprep.subr.mxu0 0.0
    %3642 = vmatpush1.msra.mxu0 0.0
    %3643 = vmatprep.subr.mxu0 0.0
    %3644 = vmatpush1.msra.mxu0 0.0
    %3645 = vmatprep.mubr.f32.mxu0 0.0
    %3646 = vmatmul.mubr.f32.gmra.mrb[0].mxu0 %v3576
    %v3647 = vpop.f32.mrb[0].mxu0
    %v3648 = vadd.f32 0.0, %v3647
    %v3649 = vpop.f32.mrb[0].mxu0
    %3650 = vmatprep.mubr.f32.mxu0 0.0
    %3651 = vmatmul.mubr.f32.gmra.mrb[0].mxu0 %v3579
    %v3652 = vpop.f32.mrb[0].mxu0
    %v3653 = vadd.f32 0.0, %v3652
    %v3654 = vpop.f32.mrb[0].mxu0
    %3655 = vdwg.mxu0
    %v3656 = vadd.f32 %v3002, %v3648
    %v3657 = vadd.f32 %v3003, %v3653
    %s3658 = scalar_lea.vmem %s3, 160
    %v3659 = vld [vmem:[%s3658] sm:$0xff]
    %v3660 = vld [vmem:[%s3658 + $0x8] sm:$0xff]
    %v3661 = vld [vmem:[%s3658 + $0x10] sm:$0xff]
    %v3662 = vld [vmem:[%s3658 + $0x18] sm:$0xff]
    %3663 = vmatprep.subr.mxu0 0.0
    %3664 = vmatpush1.msra.mxu0 %v3659
    %3665 = vmatprep.subr.mxu0 0.0
    %3666 = vmatpush1.msra.mxu0 %v3660
    %3667 = vmatprep.subr.mxu0 0.0
    %3668 = vmatpush1.msra.mxu0 %v3661
    %3669 = vmatprep.subr.mxu0 0.0
    %3670 = vmatpush1.msra.mxu0 %v3662
    %3671 = vmatprep.subr.mxu0 0.0
    %3672 = vmatpush1.msra.mxu0 0.0
    %3673 = vmatprep.subr.mxu0 0.0
    %3674 = vmatpush1.msra.mxu0 0.0
    %3675 = vmatprep.subr.mxu0 0.0
    %3676 = vmatpush1.msra.mxu0 0.0
    %3677 = vmatprep.subr.mxu0 0.0
    %3678 = vmatpush1.msra.mxu0 0.0
    %3679 = vmatprep.subr.mxu0 0.0
    %3680 = vmatpush1.msra.mxu0 0.0
    %3681 = vmatprep.subr.mxu0 0.0
    %3682 = vmatpush1.msra.mxu0 0.0
    %3683 = vmatprep.subr.mxu0 0.0
    %3684 = vmatpush1.msra.mxu0 0.0
    %3685 = vmatprep.subr.mxu0 0.0
    %3686 = vmatpush1.msra.mxu0 0.0
    %3687 = vmatprep.subr.mxu0 0.0
    %3688 = vmatpush1.msra.mxu0 0.0
    %3689 = vmatprep.subr.mxu0 0.0
    %3690 = vmatpush1.msra.mxu0 0.0
    %3691 = vmatprep.subr.mxu0 0.0
    %3692 = vmatpush1.msra.mxu0 0.0
    %3693 = vmatprep.subr.mxu0 0.0
    %3694 = vmatpush1.msra.mxu0 0.0
    %3695 = vmatprep.subr.mxu0 0.0
    %3696 = vmatpush1.msra.mxu0 0.0
    %3697 = vmatprep.subr.mxu0 0.0
    %3698 = vmatpush1.msra.mxu0 0.0
    %3699 = vmatprep.subr.mxu0 0.0
    %3700 = vmatpush1.msra.mxu0 0.0
    %3701 = vmatprep.subr.mxu0 0.0
    %3702 = vmatpush1.msra.mxu0 0.0
    %3703 = vmatprep.subr.mxu0 0.0
    %3704 = vmatpush1.msra.mxu0 0.0
    %3705 = vmatprep.subr.mxu0 0.0
    %3706 = vmatpush1.msra.mxu0 0.0
    %3707 = vmatprep.subr.mxu0 0.0
    %3708 = vmatpush1.msra.mxu0 0.0
    %3709 = vmatprep.subr.mxu0 0.0
    %3710 = vmatpush1.msra.mxu0 0.0
    %3711 = vmatprep.subr.mxu0 0.0
    %3712 = vmatpush1.msra.mxu0 0.0
    %3713 = vmatprep.subr.mxu0 0.0
    %3714 = vmatpush1.msra.mxu0 0.0
    %3715 = vmatprep.subr.mxu0 0.0
    %3716 = vmatpush1.msra.mxu0 0.0
    %3717 = vmatprep.subr.mxu0 0.0
    %3718 = vmatpush1.msra.mxu0 0.0
    %3719 = vmatprep.subr.mxu0 0.0
    %3720 = vmatpush1.msra.mxu0 0.0
    %3721 = vmatprep.subr.mxu0 0.0
    %3722 = vmatpush1.msra.mxu0 0.0
    %3723 = vmatprep.subr.mxu0 0.0
    %3724 = vmatpush1.msra.mxu0 0.0
    %3725 = vmatprep.subr.mxu0 0.0
    %3726 = vmatpush1.msra.mxu0 0.0
    %3727 = vmatprep.mubr.f32.mxu0 0.0
    %3728 = vmatmul.mubr.f32.gmra.mrb[0].mxu0 %v3010
    %v3729 = vpop.f32.mrb[0].mxu0
    %v3730 = vadd.f32 0.0, %v3729
    %v3731 = vpop.f32.mrb[0].mxu0
    %3732 = vmatprep.mubr.f32.mxu0 0.0
    %3733 = vmatmul.mubr.f32.gmra.mrb[0].mxu0 %v3013
    %v3734 = vpop.f32.mrb[0].mxu0
    %v3735 = vadd.f32 0.0, %v3734
    %v3736 = vpop.f32.mrb[0].mxu0
    %3737 = vdwg.mxu0
    %s3738 = scalar_lea.vmem %s4, 160
    %v3739 = vld [vmem:[%s3738] sm:$0xff]
    %v3740 = vld [vmem:[%s3738 + $0x8] sm:$0xff]
    %v3741 = vld [vmem:[%s3738 + $0x10] sm:$0xff]
    %v3742 = vld [vmem:[%s3738 + $0x18] sm:$0xff]
    %3743 = vmatprep.subr.mxu0 0.0
    %3744 = vmatpush1.msra.mxu0 %v3739
    %3745 = vmatprep.subr.mxu0 0.0
    %3746 = vmatpush1.msra.mxu0 %v3740
    %3747 = vmatprep.subr.mxu0 0.0
    %3748 = vmatpush1.msra.mxu0 %v3741
    %3749 = vmatprep.subr.mxu0 0.0
    %3750 = vmatpush1.msra.mxu0 %v3742
    %3751 = vmatprep.subr.mxu0 0.0
    %3752 = vmatpush1.msra.mxu0 0.0
    %3753 = vmatprep.subr.mxu0 0.0
    %3754 = vmatpush1.msra.mxu0 0.0
    %3755 = vmatprep.subr.mxu0 0.0
    %3756 = vmatpush1.msra.mxu0 0.0
    %3757 = vmatprep.subr.mxu0 0.0
    %3758 = vmatpush1.msra.mxu0 0.0
    %3759 = vmatprep.subr.mxu0 0.0
    %3760 = vmatpush1.msra.mxu0 0.0
    %3761 = vmatprep.subr.mxu0 0.0
    %3762 = vmatpush1.msra.mxu0 0.0
    %3763 = vmatprep.subr.mxu0 0.0
    %3764 = vmatpush1.msra.mxu0 0.0
    %3765 = vmatprep.subr.mxu0 0.0
    %3766 = vmatpush1.msra.mxu0 0.0
    %3767 = vmatprep.subr.mxu0 0.0
    %3768 = vmatpush1.msra.mxu0 0.0
    %3769 = vmatprep.subr.mxu0 0.0
    %3770 = vmatpush1.msra.mxu0 0.0
    %3771 = vmatprep.subr.mxu0 0.0
    %3772 = vmatpush1.msra.mxu0 0.0
    %3773 = vmatprep.subr.mxu0 0.0
    %3774 = vmatpush1.msra.mxu0 0.0
    %3775 = vmatprep.subr.mxu0 0.0
    %3776 = vmatpush1.msra.mxu0 0.0
    %3777 = vmatprep.subr.mxu0 0.0
    %3778 = vmatpush1.msra.mxu0 0.0
    %3779 = vmatprep.subr.mxu0 0.0
    %3780 = vmatpush1.msra.mxu0 0.0
    %3781 = vmatprep.subr.mxu0 0.0
    %3782 = vmatpush1.msra.mxu0 0.0
    %3783 = vmatprep.subr.mxu0 0.0
    %3784 = vmatpush1.msra.mxu0 0.0
    %3785 = vmatprep.subr.mxu0 0.0
    %3786 = vmatpush1.msra.mxu0 0.0
    %3787 = vmatprep.subr.mxu0 0.0
    %3788 = vmatpush1.msra.mxu0 0.0
    %3789 = vmatprep.subr.mxu0 0.0
    %3790 = vmatpush1.msra.mxu0 0.0
    %3791 = vmatprep.subr.mxu0 0.0
    %3792 = vmatpush1.msra.mxu0 0.0
    %3793 = vmatprep.subr.mxu0 0.0
    %3794 = vmatpush1.msra.mxu0 0.0
    %3795 = vmatprep.subr.mxu0 0.0
    %3796 = vmatpush1.msra.mxu0 0.0
    %3797 = vmatprep.subr.mxu0 0.0
    %3798 = vmatpush1.msra.mxu0 0.0
    %3799 = vmatprep.subr.mxu0 0.0
    %3800 = vmatpush1.msra.mxu0 0.0
    %3801 = vmatprep.subr.mxu0 0.0
    %3802 = vmatpush1.msra.mxu0 0.0
    %3803 = vmatprep.subr.mxu0 0.0
    %3804 = vmatpush1.msra.mxu0 0.0
    %3805 = vmatprep.subr.mxu0 0.0
    %3806 = vmatpush1.msra.mxu0 0.0
    %3807 = vmatprep.mubr.f32.mxu0 0.0
    %3808 = vmatmul.mubr.f32.gmra.mrb[0].mxu0 %v3010
    %v3809 = vpop.f32.mrb[0].mxu0
    %v3810 = vadd.f32 0.0, %v3809
    %v3811 = vpop.f32.mrb[0].mxu0
    %3812 = vmatprep.mubr.f32.mxu0 0.0
    %3813 = vmatmul.mubr.f32.gmra.mrb[0].mxu0 %v3013
    %v3814 = vpop.f32.mrb[0].mxu0
    %v3815 = vadd.f32 0.0, %v3814
    %v3816 = vpop.f32.mrb[0].mxu0
    %3817 = vdwg.mxu0
    %s3818 = scalar_lea.vmem %s5, 160
    %v3819 = vld [vmem:[%s3818] sm:$0xff]
    %v3820 = vld [vmem:[%s3818 + $0x8] sm:$0xff]
    %v3821 = vld [vmem:[%s3818 + $0x10] sm:$0xff]
    %v3822 = vld [vmem:[%s3818 + $0x18] sm:$0xff]
    %3823 = vmatprep.subr.mxu0 0.0
    %3824 = vmatpush1.msra.mxu0 %v3819
    %3825 = vmatprep.subr.mxu0 0.0
    %3826 = vmatpush1.msra.mxu0 %v3820
    %3827 = vmatprep.subr.mxu0 0.0
    %3828 = vmatpush1.msra.mxu0 %v3821
    %3829 = vmatprep.subr.mxu0 0.0
    %3830 = vmatpush1.msra.mxu0 %v3822
    %3831 = vmatprep.subr.mxu0 0.0
    %3832 = vmatpush1.msra.mxu0 0.0
    %3833 = vmatprep.subr.mxu0 0.0
    %3834 = vmatpush1.msra.mxu0 0.0
    %3835 = vmatprep.subr.mxu0 0.0
    %3836 = vmatpush1.msra.mxu0 0.0
    %3837 = vmatprep.subr.mxu0 0.0
    %3838 = vmatpush1.msra.mxu0 0.0
    %3839 = vmatprep.subr.mxu0 0.0
    %3840 = vmatpush1.msra.mxu0 0.0
    %3841 = vmatprep.subr.mxu0 0.0
    %3842 = vmatpush1.msra.mxu0 0.0
    %3843 = vmatprep.subr.mxu0 0.0
    %3844 = vmatpush1.msra.mxu0 0.0
    %3845 = vmatprep.subr.mxu0 0.0
    %3846 = vmatpush1.msra.mxu0 0.0
    %3847 = vmatprep.subr.mxu0 0.0
    %3848 = vmatpush1.msra.mxu0 0.0
    %3849 = vmatprep.subr.mxu0 0.0
    %3850 = vmatpush1.msra.mxu0 0.0
    %3851 = vmatprep.subr.mxu0 0.0
    %3852 = vmatpush1.msra.mxu0 0.0
    %3853 = vmatprep.subr.mxu0 0.0
    %3854 = vmatpush1.msra.mxu0 0.0
    %3855 = vmatprep.subr.mxu0 0.0
    %3856 = vmatpush1.msra.mxu0 0.0
    %3857 = vmatprep.subr.mxu0 0.0
    %3858 = vmatpush1.msra.mxu0 0.0
    %3859 = vmatprep.subr.mxu0 0.0
    %3860 = vmatpush1.msra.mxu0 0.0
    %3861 = vmatprep.subr.mxu0 0.0
    %3862 = vmatpush1.msra.mxu0 0.0
    %3863 = vmatprep.subr.mxu0 0.0
    %3864 = vmatpush1.msra.mxu0 0.0
    %3865 = vmatprep.subr.mxu0 0.0
    %3866 = vmatpush1.msra.mxu0 0.0
    %3867 = vmatprep.subr.mxu0 0.0
    %3868 = vmatpush1.msra.mxu0 0.0
    %3869 = vmatprep.subr.mxu0 0.0
    %3870 = vmatpush1.msra.mxu0 0.0
    %3871 = vmatprep.subr.mxu0 0.0
    %3872 = vmatpush1.msra.mxu0 0.0
    %3873 = vmatprep.subr.mxu0 0.0
    %3874 = vmatpush1.msra.mxu0 0.0
    %3875 = vmatprep.subr.mxu0 0.0
    %3876 = vmatpush1.msra.mxu0 0.0
    %3877 = vmatprep.subr.mxu0 0.0
    %3878 = vmatpush1.msra.mxu0 0.0
    %3879 = vmatprep.subr.mxu0 0.0
    %3880 = vmatpush1.msra.mxu0 0.0
    %3881 = vmatprep.subr.mxu0 0.0
    %3882 = vmatpush1.msra.mxu0 0.0
    %3883 = vmatprep.subr.mxu0 0.0
    %3884 = vmatpush1.msra.mxu0 0.0
    %3885 = vmatprep.subr.mxu0 0.0
    %3886 = vmatpush1.msra.mxu0 0.0
    %3887 = vmatprep.mubr.f32.mxu0 0.0
    %3888 = vmatmul.mubr.f32.gmra.mrb[0].mxu0 %v3010
    %v3889 = vpop.f32.mrb[0].mxu0
    %v3890 = vadd.f32 0.0, %v3889
    %v3891 = vpop.f32.mrb[0].mxu0
    %3892 = vmatprep.mubr.f32.mxu0 0.0
    %3893 = vmatmul.mubr.f32.gmra.mrb[0].mxu0 %v3013
    %v3894 = vpop.f32.mrb[0].mxu0
    %v3895 = vadd.f32 0.0, %v3894
    %v3896 = vpop.f32.mrb[0].mxu0
    %3897 = vdwg.mxu0
    %v3899 = vsel %vm348, %v3730, 0
    %v3902 = vsel %vm348, %v3810, 0
    %3904 = vmatprep.subr.mxu0 0.0
    %3905 = vmatpush1.xpose.msra.mxu0 %v3902
    %3906 = vmatprep.subr.mxu0 0.0
    %3907 = vmatpush1.xpose.msra.mxu0 0.0
    %3908 = vmatprep.subr.mxu0 0.0
    %3909 = vmatpush1.xpose.msra.mxu0 0.0
    %3910 = vmatprep.subr.mxu0 0.0
    %3911 = vmatpush1.xpose.msra.mxu0 0.0
    %3912 = vmatprep.subr.mxu0 0.0
    %3913 = vmatpush1.xpose.msra.mxu0 0.0
    %3914 = vmatprep.subr.mxu0 0.0
    %3915 = vmatpush1.xpose.msra.mxu0 0.0
    %3916 = vmatprep.subr.mxu0 0.0
    %3917 = vmatpush1.xpose.msra.mxu0 0.0
    %3918 = vmatprep.subr.mxu0 0.0
    %3919 = vmatpush1.xpose.msra.mxu0 0.0
    %3920 = vmatprep.subr.mxu0 0.0
    %3921 = vmatpush1.xpose.msra.mxu0 0.0
    %3922 = vmatprep.subr.mxu0 0.0
    %3923 = vmatpush1.xpose.msra.mxu0 0.0
    %3924 = vmatprep.subr.mxu0 0.0
    %3925 = vmatpush1.xpose.msra.mxu0 0.0
    %3926 = vmatprep.subr.mxu0 0.0
    %3927 = vmatpush1.xpose.msra.mxu0 0.0
    %3928 = vmatprep.subr.mxu0 0.0
    %3929 = vmatpush1.xpose.msra.mxu0 0.0
    %3930 = vmatprep.subr.mxu0 0.0
    %3931 = vmatpush1.xpose.msra.mxu0 0.0
    %3932 = vmatprep.subr.mxu0 0.0
    %3933 = vmatpush1.xpose.msra.mxu0 0.0
    %3934 = vmatprep.subr.mxu0 0.0
    %3935 = vmatpush1.xpose.msra.mxu0 0.0
    %3936 = vmatprep.subr.mxu0 0.0
    %3937 = vmatpush1.xpose.msra.mxu0 0.0
    %3938 = vmatprep.subr.mxu0 0.0
    %3939 = vmatpush1.xpose.msra.mxu0 0.0
    %3940 = vmatprep.subr.mxu0 0.0
    %3941 = vmatpush1.xpose.msra.mxu0 0.0
    %3942 = vmatprep.subr.mxu0 0.0
    %3943 = vmatpush1.xpose.msra.mxu0 0.0
    %3944 = vmatprep.subr.mxu0 0.0
    %3945 = vmatpush1.xpose.msra.mxu0 0.0
    %3946 = vmatprep.subr.mxu0 0.0
    %3947 = vmatpush1.xpose.msra.mxu0 0.0
    %3948 = vmatprep.subr.mxu0 0.0
    %3949 = vmatpush1.xpose.msra.mxu0 0.0
    %3950 = vmatprep.subr.mxu0 0.0
    %3951 = vmatpush1.xpose.msra.mxu0 0.0
    %3952 = vmatprep.subr.mxu0 0.0
    %3953 = vmatpush1.xpose.msra.mxu0 0.0
    %3954 = vmatprep.subr.mxu0 0.0
    %3955 = vmatpush1.xpose.msra.mxu0 0.0
    %3956 = vmatprep.subr.mxu0 0.0
    %3957 = vmatpush1.xpose.msra.mxu0 0.0
    %3958 = vmatprep.subr.mxu0 0.0
    %3959 = vmatpush1.xpose.msra.mxu0 0.0
    %3960 = vmatprep.subr.mxu0 0.0
    %3961 = vmatpush1.xpose.msra.mxu0 0.0
    %3962 = vmatprep.subr.mxu0 0.0
    %3963 = vmatpush1.xpose.msra.mxu0 0.0
    %3964 = vmatprep.subr.mxu0 0.0
    %3965 = vmatpush1.xpose.msra.mxu0 0.0
    %3966 = vmatprep.subr.mxu0 0.0
    %3967 = vmatpush1.xpose.msra.mxu0 0.0
    %3968 = vmatprep.mubr.f32.mxu0 0.0
    %3969 = vmatmul.mubr.f32.gmra.mrb[0].mxu0 %v3899
    %v3970 = vpop.f32.mrb[0].mxu0
    %v3971 = vadd.f32 0.0, %v3970
    %v3972 = vpop.f32.mrb[0].mxu0
    %3973 = vdwg.mxu0
    %v3975 = vsel %vm348, %v3735, 0
    %v3978 = vsel %vm348, %v3815, 0
    %3980 = vmatprep.subr.mxu0 0.0
    %3981 = vmatpush1.xpose.msra.mxu0 %v3978
    %3982 = vmatprep.subr.mxu0 0.0
    %3983 = vmatpush1.xpose.msra.mxu0 0.0
    %3984 = vmatprep.subr.mxu0 0.0
    %3985 = vmatpush1.xpose.msra.mxu0 0.0
    %3986 = vmatprep.subr.mxu0 0.0
    %3987 = vmatpush1.xpose.msra.mxu0 0.0
    %3988 = vmatprep.subr.mxu0 0.0
    %3989 = vmatpush1.xpose.msra.mxu0 0.0
    %3990 = vmatprep.subr.mxu0 0.0
    %3991 = vmatpush1.xpose.msra.mxu0 0.0
    %3992 = vmatprep.subr.mxu0 0.0
    %3993 = vmatpush1.xpose.msra.mxu0 0.0
    %3994 = vmatprep.subr.mxu0 0.0
    %3995 = vmatpush1.xpose.msra.mxu0 0.0
    %3996 = vmatprep.subr.mxu0 0.0
    %3997 = vmatpush1.xpose.msra.mxu0 0.0
    %3998 = vmatprep.subr.mxu0 0.0
    %3999 = vmatpush1.xpose.msra.mxu0 0.0
    %4000 = vmatprep.subr.mxu0 0.0
    %4001 = vmatpush1.xpose.msra.mxu0 0.0
    %4002 = vmatprep.subr.mxu0 0.0
    %4003 = vmatpush1.xpose.msra.mxu0 0.0
    %4004 = vmatprep.subr.mxu0 0.0
    %4005 = vmatpush1.xpose.msra.mxu0 0.0
    %4006 = vmatprep.subr.mxu0 0.0
    %4007 = vmatpush1.xpose.msra.mxu0 0.0
    %4008 = vmatprep.subr.mxu0 0.0
    %4009 = vmatpush1.xpose.msra.mxu0 0.0
    %4010 = vmatprep.subr.mxu0 0.0
    %4011 = vmatpush1.xpose.msra.mxu0 0.0
    %4012 = vmatprep.subr.mxu0 0.0
    %4013 = vmatpush1.xpose.msra.mxu0 0.0
    %4014 = vmatprep.subr.mxu0 0.0
    %4015 = vmatpush1.xpose.msra.mxu0 0.0
    %4016 = vmatprep.subr.mxu0 0.0
    %4017 = vmatpush1.xpose.msra.mxu0 0.0
    %4018 = vmatprep.subr.mxu0 0.0
    %4019 = vmatpush1.xpose.msra.mxu0 0.0
    %4020 = vmatprep.subr.mxu0 0.0
    %4021 = vmatpush1.xpose.msra.mxu0 0.0
    %4022 = vmatprep.subr.mxu0 0.0
    %4023 = vmatpush1.xpose.msra.mxu0 0.0
    %4024 = vmatprep.subr.mxu0 0.0
    %4025 = vmatpush1.xpose.msra.mxu0 0.0
    %4026 = vmatprep.subr.mxu0 0.0
    %4027 = vmatpush1.xpose.msra.mxu0 0.0
    %4028 = vmatprep.subr.mxu0 0.0
    %4029 = vmatpush1.xpose.msra.mxu0 0.0
    %4030 = vmatprep.subr.mxu0 0.0
    %4031 = vmatpush1.xpose.msra.mxu0 0.0
    %4032 = vmatprep.subr.mxu0 0.0
    %4033 = vmatpush1.xpose.msra.mxu0 0.0
    %4034 = vmatprep.subr.mxu0 0.0
    %4035 = vmatpush1.xpose.msra.mxu0 0.0
    %4036 = vmatprep.subr.mxu0 0.0
    %4037 = vmatpush1.xpose.msra.mxu0 0.0
    %4038 = vmatprep.subr.mxu0 0.0
    %4039 = vmatpush1.xpose.msra.mxu0 0.0
    %4040 = vmatprep.subr.mxu0 0.0
    %4041 = vmatpush1.xpose.msra.mxu0 0.0
    %4042 = vmatprep.subr.mxu0 0.0
    %4043 = vmatpush1.xpose.msra.mxu0 0.0
    %4044 = vmatprep.mubr.f32.mxu0 0.0
    %4045 = vmatmul.mubr.f32.gmra.mrb[0].mxu0 %v3975
    %v4046 = vpop.f32.mrb[0].mxu0
    %v4047 = vadd.f32 0.0, %v4046
    %v4048 = vpop.f32.mrb[0].mxu0
    %4049 = vdwg.mxu0
    %v4050 = vmul.f32 %v3971, 0.25
    %v4051 = vmul.f32 %v4047, 0.25
    %v4052 = vsel %vm503, %v4050, -inf
    %4053 = vmax.xlane.f32.xlu0 %v4052
    %v4054 = vpop.xlane.xlu0 %4053
    %v4055 = vsel %vm503, %v4051, -inf
    %4056 = vmax.xlane.f32.xlu0 %v4055
    %v4057 = vpop.xlane.xlu0 %4056
    %v4058 = vsub.f32 %v4050, %v4054
    %v4059 = vsub.f32 %v4051, %v4057
    %v4060 = vmul.f32 %v4058, 1.442695
    %v4061 = vpow.pop %v4060
    %v4062 = vmul.f32 %v4059, 1.442695
    %v4063 = vpow.pop %v4062
    %v4064 = vsel %vm503, %v4061, 0.0
    %4065 = vadd.xlane.f32.xlu0 %v4064
    %v4066 = vpop.xlane.xlu0 %4065
    %v4067 = vsel %vm503, %v4063, 0.0
    %4068 = vadd.xlane.f32.xlu0 %v4067
    %v4069 = vpop.xlane.xlu0 %4068
    %v4070 = vrcp.pop %v4066
    %v4071 = vrcp.pop %v4069
    %v4072 = vmul.f32 %v4061, %v4070
    %v4073 = vmul.f32 %v4063, %v4071
    %v4075 = vsel %vm503, %v4072, 0
    %4077 = vmatprep.subr.mxu0 0.0
    %4078 = vmatpush1.msra.mxu0 %v3890
    %4079 = vmatprep.subr.mxu0 0.0
    %4080 = vmatpush1.msra.mxu0 0.0
    %4081 = vmatprep.subr.mxu0 0.0
    %4082 = vmatpush1.msra.mxu0 0.0
    %4083 = vmatprep.subr.mxu0 0.0
    %4084 = vmatpush1.msra.mxu0 0.0
    %4085 = vmatprep.subr.mxu0 0.0
    %4086 = vmatpush1.msra.mxu0 0.0
    %4087 = vmatprep.subr.mxu0 0.0
    %4088 = vmatpush1.msra.mxu0 0.0
    %4089 = vmatprep.subr.mxu0 0.0
    %4090 = vmatpush1.msra.mxu0 0.0
    %4091 = vmatprep.subr.mxu0 0.0
    %4092 = vmatpush1.msra.mxu0 0.0
    %4093 = vmatprep.subr.mxu0 0.0
    %4094 = vmatpush1.msra.mxu0 0.0
    %4095 = vmatprep.subr.mxu0 0.0
    %4096 = vmatpush1.msra.mxu0 0.0
    %4097 = vmatprep.subr.mxu0 0.0
    %4098 = vmatpush1.msra.mxu0 0.0
    %4099 = vmatprep.subr.mxu0 0.0
    %4100 = vmatpush1.msra.mxu0 0.0
    %4101 = vmatprep.subr.mxu0 0.0
    %4102 = vmatpush1.msra.mxu0 0.0
    %4103 = vmatprep.subr.mxu0 0.0
    %4104 = vmatpush1.msra.mxu0 0.0
    %4105 = vmatprep.subr.mxu0 0.0
    %4106 = vmatpush1.msra.mxu0 0.0
    %4107 = vmatprep.subr.mxu0 0.0
    %4108 = vmatpush1.msra.mxu0 0.0
    %4109 = vmatprep.subr.mxu0 0.0
    %4110 = vmatpush1.msra.mxu0 0.0
    %4111 = vmatprep.subr.mxu0 0.0
    %4112 = vmatpush1.msra.mxu0 0.0
    %4113 = vmatprep.subr.mxu0 0.0
    %4114 = vmatpush1.msra.mxu0 0.0
    %4115 = vmatprep.subr.mxu0 0.0
    %4116 = vmatpush1.msra.mxu0 0.0
    %4117 = vmatprep.subr.mxu0 0.0
    %4118 = vmatpush1.msra.mxu0 0.0
    %4119 = vmatprep.subr.mxu0 0.0
    %4120 = vmatpush1.msra.mxu0 0.0
    %4121 = vmatprep.subr.mxu0 0.0
    %4122 = vmatpush1.msra.mxu0 0.0
    %4123 = vmatprep.subr.mxu0 0.0
    %4124 = vmatpush1.msra.mxu0 0.0
    %4125 = vmatprep.subr.mxu0 0.0
    %4126 = vmatpush1.msra.mxu0 0.0
    %4127 = vmatprep.subr.mxu0 0.0
    %4128 = vmatpush1.msra.mxu0 0.0
    %4129 = vmatprep.subr.mxu0 0.0
    %4130 = vmatpush1.msra.mxu0 0.0
    %4131 = vmatprep.subr.mxu0 0.0
    %4132 = vmatpush1.msra.mxu0 0.0
    %4133 = vmatprep.subr.mxu0 0.0
    %4134 = vmatpush1.msra.mxu0 0.0
    %4135 = vmatprep.subr.mxu0 0.0
    %4136 = vmatpush1.msra.mxu0 0.0
    %4137 = vmatprep.subr.mxu0 0.0
    %4138 = vmatpush1.msra.mxu0 0.0
    %4139 = vmatprep.subr.mxu0 0.0
    %4140 = vmatpush1.msra.mxu0 0.0
    %4141 = vmatprep.mubr.f32.mxu0 0.0
    %4142 = vmatmul.mubr.f32.gmra.mrb[0].mxu0 %v4075
    %v4143 = vpop.f32.mrb[0].mxu0
    %v4144 = vadd.f32 0.0, %v4143
    %v4145 = vpop.f32.mrb[0].mxu0
    %4146 = vdwg.mxu0
    %v4148 = vsel %vm503, %v4073, 0
    %4150 = vmatprep.subr.mxu0 0.0
    %4151 = vmatpush1.msra.mxu0 %v3895
    %4152 = vmatprep.subr.mxu0 0.0
    %4153 = vmatpush1.msra.mxu0 0.0
    %4154 = vmatprep.subr.mxu0 0.0
    %4155 = vmatpush1.msra.mxu0 0.0
    %4156 = vmatprep.subr.mxu0 0.0
    %4157 = vmatpush1.msra.mxu0 0.0
    %4158 = vmatprep.subr.mxu0 0.0
    %4159 = vmatpush1.msra.mxu0 0.0
    %4160 = vmatprep.subr.mxu0 0.0
    %4161 = vmatpush1.msra.mxu0 0.0
    %4162 = vmatprep.subr.mxu0 0.0
    %4163 = vmatpush1.msra.mxu0 0.0
    %4164 = vmatprep.subr.mxu0 0.0
    %4165 = vmatpush1.msra.mxu0 0.0
    %4166 = vmatprep.subr.mxu0 0.0
    %4167 = vmatpush1.msra.mxu0 0.0
    %4168 = vmatprep.subr.mxu0 0.0
    %4169 = vmatpush1.msra.mxu0 0.0
    %4170 = vmatprep.subr.mxu0 0.0
    %4171 = vmatpush1.msra.mxu0 0.0
    %4172 = vmatprep.subr.mxu0 0.0
    %4173 = vmatpush1.msra.mxu0 0.0
    %4174 = vmatprep.subr.mxu0 0.0
    %4175 = vmatpush1.msra.mxu0 0.0
    %4176 = vmatprep.subr.mxu0 0.0
    %4177 = vmatpush1.msra.mxu0 0.0
    %4178 = vmatprep.subr.mxu0 0.0
    %4179 = vmatpush1.msra.mxu0 0.0
    %4180 = vmatprep.subr.mxu0 0.0
    %4181 = vmatpush1.msra.mxu0 0.0
    %4182 = vmatprep.subr.mxu0 0.0
    %4183 = vmatpush1.msra.mxu0 0.0
    %4184 = vmatprep.subr.mxu0 0.0
    %4185 = vmatpush1.msra.mxu0 0.0
    %4186 = vmatprep.subr.mxu0 0.0
    %4187 = vmatpush1.msra.mxu0 0.0
    %4188 = vmatprep.subr.mxu0 0.0
    %4189 = vmatpush1.msra.mxu0 0.0
    %4190 = vmatprep.subr.mxu0 0.0
    %4191 = vmatpush1.msra.mxu0 0.0
    %4192 = vmatprep.subr.mxu0 0.0
    %4193 = vmatpush1.msra.mxu0 0.0
    %4194 = vmatprep.subr.mxu0 0.0
    %4195 = vmatpush1.msra.mxu0 0.0
    %4196 = vmatprep.subr.mxu0 0.0
    %4197 = vmatpush1.msra.mxu0 0.0
    %4198 = vmatprep.subr.mxu0 0.0
    %4199 = vmatpush1.msra.mxu0 0.0
    %4200 = vmatprep.subr.mxu0 0.0
    %4201 = vmatpush1.msra.mxu0 0.0
    %4202 = vmatprep.subr.mxu0 0.0
    %4203 = vmatpush1.msra.mxu0 0.0
    %4204 = vmatprep.subr.mxu0 0.0
    %4205 = vmatpush1.msra.mxu0 0.0
    %4206 = vmatprep.subr.mxu0 0.0
    %4207 = vmatpush1.msra.mxu0 0.0
    %4208 = vmatprep.subr.mxu0 0.0
    %4209 = vmatpush1.msra.mxu0 0.0
    %4210 = vmatprep.subr.mxu0 0.0
    %4211 = vmatpush1.msra.mxu0 0.0
    %4212 = vmatprep.subr.mxu0 0.0
    %4213 = vmatpush1.msra.mxu0 0.0
    %4214 = vmatprep.mubr.f32.mxu0 0.0
    %4215 = vmatmul.mubr.f32.gmra.mrb[0].mxu0 %v4148
    %v4216 = vpop.f32.mrb[0].mxu0
    %v4217 = vadd.f32 0.0, %v4216
    %v4218 = vpop.f32.mrb[0].mxu0
    %4219 = vdwg.mxu0
    %s4220 = scalar_lea.vmem %s6, 80
    %v4221 = vld [vmem:[%s4220] sm:$0xff]
    %v4222 = vld [vmem:[%s4220 + $0x8] sm:$0xff]
    %v4224 = vsel %vm348, %v4144, 0
    %v4227 = vsel %vm348, %v4217, 0
    %4229 = vmatprep.subr.mxu0 0.0
    %4230 = vmatpush1.msra.mxu0 %v4221
    %4231 = vmatprep.subr.mxu0 0.0
    %4232 = vmatpush1.msra.mxu0 %v4222
    %4233 = vmatprep.subr.mxu0 0.0
    %4234 = vmatpush1.msra.mxu0 0.0
    %4235 = vmatprep.subr.mxu0 0.0
    %4236 = vmatpush1.msra.mxu0 0.0
    %4237 = vmatprep.subr.mxu0 0.0
    %4238 = vmatpush1.msra.mxu0 0.0
    %4239 = vmatprep.subr.mxu0 0.0
    %4240 = vmatpush1.msra.mxu0 0.0
    %4241 = vmatprep.subr.mxu0 0.0
    %4242 = vmatpush1.msra.mxu0 0.0
    %4243 = vmatprep.subr.mxu0 0.0
    %4244 = vmatpush1.msra.mxu0 0.0
    %4245 = vmatprep.subr.mxu0 0.0
    %4246 = vmatpush1.msra.mxu0 0.0
    %4247 = vmatprep.subr.mxu0 0.0
    %4248 = vmatpush1.msra.mxu0 0.0
    %4249 = vmatprep.subr.mxu0 0.0
    %4250 = vmatpush1.msra.mxu0 0.0
    %4251 = vmatprep.subr.mxu0 0.0
    %4252 = vmatpush1.msra.mxu0 0.0
    %4253 = vmatprep.subr.mxu0 0.0
    %4254 = vmatpush1.msra.mxu0 0.0
    %4255 = vmatprep.subr.mxu0 0.0
    %4256 = vmatpush1.msra.mxu0 0.0
    %4257 = vmatprep.subr.mxu0 0.0
    %4258 = vmatpush1.msra.mxu0 0.0
    %4259 = vmatprep.subr.mxu0 0.0
    %4260 = vmatpush1.msra.mxu0 0.0
    %4261 = vmatprep.subr.mxu0 0.0
    %4262 = vmatpush1.msra.mxu0 0.0
    %4263 = vmatprep.subr.mxu0 0.0
    %4264 = vmatpush1.msra.mxu0 0.0
    %4265 = vmatprep.subr.mxu0 0.0
    %4266 = vmatpush1.msra.mxu0 0.0
    %4267 = vmatprep.subr.mxu0 0.0
    %4268 = vmatpush1.msra.mxu0 0.0
    %4269 = vmatprep.subr.mxu0 0.0
    %4270 = vmatpush1.msra.mxu0 0.0
    %4271 = vmatprep.subr.mxu0 0.0
    %4272 = vmatpush1.msra.mxu0 0.0
    %4273 = vmatprep.subr.mxu0 0.0
    %4274 = vmatpush1.msra.mxu0 0.0
    %4275 = vmatprep.subr.mxu0 0.0
    %4276 = vmatpush1.msra.mxu0 0.0
    %4277 = vmatprep.subr.mxu0 0.0
    %4278 = vmatpush1.msra.mxu0 0.0
    %4279 = vmatprep.subr.mxu0 0.0
    %4280 = vmatpush1.msra.mxu0 0.0
    %4281 = vmatprep.subr.mxu0 0.0
    %4282 = vmatpush1.msra.mxu0 0.0
    %4283 = vmatprep.subr.mxu0 0.0
    %4284 = vmatpush1.msra.mxu0 0.0
    %4285 = vmatprep.subr.mxu0 0.0
    %4286 = vmatpush1.msra.mxu0 0.0
    %4287 = vmatprep.subr.mxu0 0.0
    %4288 = vmatpush1.msra.mxu0 0.0
    %4289 = vmatprep.subr.mxu0 0.0
    %4290 = vmatpush1.msra.mxu0 0.0
    %4291 = vmatprep.subr.mxu0 0.0
    %4292 = vmatpush1.msra.mxu0 0.0
    %4293 = vmatprep.mubr.f32.mxu0 0.0
    %4294 = vmatmul.mubr.f32.gmra.mrb[0].mxu0 %v4224
    %v4295 = vpop.f32.mrb[0].mxu0
    %v4296 = vadd.f32 0.0, %v4295
    %v4297 = vpop.f32.mrb[0].mxu0
    %4298 = vmatprep.mubr.f32.mxu0 0.0
    %4299 = vmatmul.mubr.f32.gmra.mrb[0].mxu0 %v4227
    %v4300 = vpop.f32.mrb[0].mxu0
    %v4301 = vadd.f32 0.0, %v4300
    %v4302 = vpop.f32.mrb[0].mxu0
    %4303 = vdwg.mxu0
    %v4304 = vadd.f32 %v3656, %v4296
    %v4305 = vadd.f32 %v3657, %v4301
    %s4306 = scalar_lea.vmem %s3, 192
    %v4307 = vld [vmem:[%s4306] sm:$0xff]
    %v4308 = vld [vmem:[%s4306 + $0x8] sm:$0xff]
    %v4309 = vld [vmem:[%s4306 + $0x10] sm:$0xff]
    %v4310 = vld [vmem:[%s4306 + $0x18] sm:$0xff]
    %4311 = vmatprep.subr.mxu0 0.0
    %4312 = vmatpush1.msra.mxu0 %v4307
    %4313 = vmatprep.subr.mxu0 0.0
    %4314 = vmatpush1.msra.mxu0 %v4308
    %4315 = vmatprep.subr.mxu0 0.0
    %4316 = vmatpush1.msra.mxu0 %v4309
    %4317 = vmatprep.subr.mxu0 0.0
    %4318 = vmatpush1.msra.mxu0 %v4310
    %4319 = vmatprep.subr.mxu0 0.0
    %4320 = vmatpush1.msra.mxu0 0.0
    %4321 = vmatprep.subr.mxu0 0.0
    %4322 = vmatpush1.msra.mxu0 0.0
    %4323 = vmatprep.subr.mxu0 0.0
    %4324 = vmatpush1.msra.mxu0 0.0
    %4325 = vmatprep.subr.mxu0 0.0
    %4326 = vmatpush1.msra.mxu0 0.0
    %4327 = vmatprep.subr.mxu0 0.0
    %4328 = vmatpush1.msra.mxu0 0.0
    %4329 = vmatprep.subr.mxu0 0.0
    %4330 = vmatpush1.msra.mxu0 0.0
    %4331 = vmatprep.subr.mxu0 0.0
    %4332 = vmatpush1.msra.mxu0 0.0
    %4333 = vmatprep.subr.mxu0 0.0
    %4334 = vmatpush1.msra.mxu0 0.0
    %4335 = vmatprep.subr.mxu0 0.0
    %4336 = vmatpush1.msra.mxu0 0.0
    %4337 = vmatprep.subr.mxu0 0.0
    %4338 = vmatpush1.msra.mxu0 0.0
    %4339 = vmatprep.subr.mxu0 0.0
    %4340 = vmatpush1.msra.mxu0 0.0
    %4341 = vmatprep.subr.mxu0 0.0
    %4342 = vmatpush1.msra.mxu0 0.0
    %4343 = vmatprep.subr.mxu0 0.0
    %4344 = vmatpush1.msra.mxu0 0.0
    %4345 = vmatprep.subr.mxu0 0.0
    %4346 = vmatpush1.msra.mxu0 0.0
    %4347 = vmatprep.subr.mxu0 0.0
    %4348 = vmatpush1.msra.mxu0 0.0
    %4349 = vmatprep.subr.mxu0 0.0
    %4350 = vmatpush1.msra.mxu0 0.0
    %4351 = vmatprep.subr.mxu0 0.0
    %4352 = vmatpush1.msra.mxu0 0.0
    %4353 = vmatprep.subr.mxu0 0.0
    %4354 = vmatpush1.msra.mxu0 0.0
    %4355 = vmatprep.subr.mxu0 0.0
    %4356 = vmatpush1.msra.mxu0 0.0
    %4357 = vmatprep.subr.mxu0 0.0
    %4358 = vmatpush1.msra.mxu0 0.0
    %4359 = vmatprep.subr.mxu0 0.0
    %4360 = vmatpush1.msra.mxu0 0.0
    %4361 = vmatprep.subr.mxu0 0.0
    %4362 = vmatpush1.msra.mxu0 0.0
    %4363 = vmatprep.subr.mxu0 0.0
    %4364 = vmatpush1.msra.mxu0 0.0
    %4365 = vmatprep.subr.mxu0 0.0
    %4366 = vmatpush1.msra.mxu0 0.0
    %4367 = vmatprep.subr.mxu0 0.0
    %4368 = vmatpush1.msra.mxu0 0.0
    %4369 = vmatprep.subr.mxu0 0.0
    %4370 = vmatpush1.msra.mxu0 0.0
    %4371 = vmatprep.subr.mxu0 0.0
    %4372 = vmatpush1.msra.mxu0 0.0
    %4373 = vmatprep.subr.mxu0 0.0
    %4374 = vmatpush1.msra.mxu0 0.0
    %4375 = vmatprep.mubr.f32.mxu0 0.0
    %4376 = vmatmul.mubr.f32.gmra.mrb[0].mxu0 %v3010
    %v4377 = vpop.f32.mrb[0].mxu0
    %v4378 = vadd.f32 0.0, %v4377
    %v4379 = vpop.f32.mrb[0].mxu0
    %4380 = vmatprep.mubr.f32.mxu0 0.0
    %4381 = vmatmul.mubr.f32.gmra.mrb[0].mxu0 %v3013
    %v4382 = vpop.f32.mrb[0].mxu0
    %v4383 = vadd.f32 0.0, %v4382
    %v4384 = vpop.f32.mrb[0].mxu0
    %4385 = vdwg.mxu0
    %s4386 = scalar_lea.vmem %s4, 192
    %v4387 = vld [vmem:[%s4386] sm:$0xff]
    %v4388 = vld [vmem:[%s4386 + $0x8] sm:$0xff]
    %v4389 = vld [vmem:[%s4386 + $0x10] sm:$0xff]
    %v4390 = vld [vmem:[%s4386 + $0x18] sm:$0xff]
    %4391 = vmatprep.subr.mxu0 0.0
    %4392 = vmatpush1.msra.mxu0 %v4387
    %4393 = vmatprep.subr.mxu0 0.0
    %4394 = vmatpush1.msra.mxu0 %v4388
    %4395 = vmatprep.subr.mxu0 0.0
    %4396 = vmatpush1.msra.mxu0 %v4389
    %4397 = vmatprep.subr.mxu0 0.0
    %4398 = vmatpush1.msra.mxu0 %v4390
    %4399 = vmatprep.subr.mxu0 0.0
    %4400 = vmatpush1.msra.mxu0 0.0
    %4401 = vmatprep.subr.mxu0 0.0
    %4402 = vmatpush1.msra.mxu0 0.0
    %4403 = vmatprep.subr.mxu0 0.0
    %4404 = vmatpush1.msra.mxu0 0.0
    %4405 = vmatprep.subr.mxu0 0.0
    %4406 = vmatpush1.msra.mxu0 0.0
    %4407 = vmatprep.subr.mxu0 0.0
    %4408 = vmatpush1.msra.mxu0 0.0
    %4409 = vmatprep.subr.mxu0 0.0
    %4410 = vmatpush1.msra.mxu0 0.0
    %4411 = vmatprep.subr.mxu0 0.0
    %4412 = vmatpush1.msra.mxu0 0.0
    %4413 = vmatprep.subr.mxu0 0.0
    %4414 = vmatpush1.msra.mxu0 0.0
    %4415 = vmatprep.subr.mxu0 0.0
    %4416 = vmatpush1.msra.mxu0 0.0
    %4417 = vmatprep.subr.mxu0 0.0
    %4418 = vmatpush1.msra.mxu0 0.0
    %4419 = vmatprep.subr.mxu0 0.0
    %4420 = vmatpush1.msra.mxu0 0.0
    %4421 = vmatprep.subr.mxu0 0.0
    %4422 = vmatpush1.msra.mxu0 0.0
    %4423 = vmatprep.subr.mxu0 0.0
    %4424 = vmatpush1.msra.mxu0 0.0
    %4425 = vmatprep.subr.mxu0 0.0
    %4426 = vmatpush1.msra.mxu0 0.0
    %4427 = vmatprep.subr.mxu0 0.0
    %4428 = vmatpush1.msra.mxu0 0.0
    %4429 = vmatprep.subr.mxu0 0.0
    %4430 = vmatpush1.msra.mxu0 0.0
    %4431 = vmatprep.subr.mxu0 0.0
    %4432 = vmatpush1.msra.mxu0 0.0
    %4433 = vmatprep.subr.mxu0 0.0
    %4434 = vmatpush1.msra.mxu0 0.0
    %4435 = vmatprep.subr.mxu0 0.0
    %4436 = vmatpush1.msra.mxu0 0.0
    %4437 = vmatprep.subr.mxu0 0.0
    %4438 = vmatpush1.msra.mxu0 0.0
    %4439 = vmatprep.subr.mxu0 0.0
    %4440 = vmatpush1.msra.mxu0 0.0
    %4441 = vmatprep.subr.mxu0 0.0
    %4442 = vmatpush1.msra.mxu0 0.0
    %4443 = vmatprep.subr.mxu0 0.0
    %4444 = vmatpush1.msra.mxu0 0.0
    %4445 = vmatprep.subr.mxu0 0.0
    %4446 = vmatpush1.msra.mxu0 0.0
    %4447 = vmatprep.subr.mxu0 0.0
    %4448 = vmatpush1.msra.mxu0 0.0
    %4449 = vmatprep.subr.mxu0 0.0
    %4450 = vmatpush1.msra.mxu0 0.0
    %4451 = vmatprep.subr.mxu0 0.0
    %4452 = vmatpush1.msra.mxu0 0.0
    %4453 = vmatprep.subr.mxu0 0.0
    %4454 = vmatpush1.msra.mxu0 0.0
    %4455 = vmatprep.mubr.f32.mxu0 0.0
    %4456 = vmatmul.mubr.f32.gmra.mrb[0].mxu0 %v3010
    %v4457 = vpop.f32.mrb[0].mxu0
    %v4458 = vadd.f32 0.0, %v4457
    %v4459 = vpop.f32.mrb[0].mxu0
    %4460 = vmatprep.mubr.f32.mxu0 0.0
    %4461 = vmatmul.mubr.f32.gmra.mrb[0].mxu0 %v3013
    %v4462 = vpop.f32.mrb[0].mxu0
    %v4463 = vadd.f32 0.0, %v4462
    %v4464 = vpop.f32.mrb[0].mxu0
    %4465 = vdwg.mxu0
    %s4466 = scalar_lea.vmem %s5, 192
    %v4467 = vld [vmem:[%s4466] sm:$0xff]
    %v4468 = vld [vmem:[%s4466 + $0x8] sm:$0xff]
    %v4469 = vld [vmem:[%s4466 + $0x10] sm:$0xff]
    %v4470 = vld [vmem:[%s4466 + $0x18] sm:$0xff]
    %4471 = vmatprep.subr.mxu0 0.0
    %4472 = vmatpush1.msra.mxu0 %v4467
    %4473 = vmatprep.subr.mxu0 0.0
    %4474 = vmatpush1.msra.mxu0 %v4468
    %4475 = vmatprep.subr.mxu0 0.0
    %4476 = vmatpush1.msra.mxu0 %v4469
    %4477 = vmatprep.subr.mxu0 0.0
    %4478 = vmatpush1.msra.mxu0 %v4470
    %4479 = vmatprep.subr.mxu0 0.0
    %4480 = vmatpush1.msra.mxu0 0.0
    %4481 = vmatprep.subr.mxu0 0.0
    %4482 = vmatpush1.msra.mxu0 0.0
    %4483 = vmatprep.subr.mxu0 0.0
    %4484 = vmatpush1.msra.mxu0 0.0
    %4485 = vmatprep.subr.mxu0 0.0
    %4486 = vmatpush1.msra.mxu0 0.0
    %4487 = vmatprep.subr.mxu0 0.0
    %4488 = vmatpush1.msra.mxu0 0.0
    %4489 = vmatprep.subr.mxu0 0.0
    %4490 = vmatpush1.msra.mxu0 0.0
    %4491 = vmatprep.subr.mxu0 0.0
    %4492 = vmatpush1.msra.mxu0 0.0
    %4493 = vmatprep.subr.mxu0 0.0
    %4494 = vmatpush1.msra.mxu0 0.0
    %4495 = vmatprep.subr.mxu0 0.0
    %4496 = vmatpush1.msra.mxu0 0.0
    %4497 = vmatprep.subr.mxu0 0.0
    %4498 = vmatpush1.msra.mxu0 0.0
    %4499 = vmatprep.subr.mxu0 0.0
    %4500 = vmatpush1.msra.mxu0 0.0
    %4501 = vmatprep.subr.mxu0 0.0
    %4502 = vmatpush1.msra.mxu0 0.0
    %4503 = vmatprep.subr.mxu0 0.0
    %4504 = vmatpush1.msra.mxu0 0.0
    %4505 = vmatprep.subr.mxu0 0.0
    %4506 = vmatpush1.msra.mxu0 0.0
    %4507 = vmatprep.subr.mxu0 0.0
    %4508 = vmatpush1.msra.mxu0 0.0
    %4509 = vmatprep.subr.mxu0 0.0
    %4510 = vmatpush1.msra.mxu0 0.0
    %4511 = vmatprep.subr.mxu0 0.0
    %4512 = vmatpush1.msra.mxu0 0.0
    %4513 = vmatprep.subr.mxu0 0.0
    %4514 = vmatpush1.msra.mxu0 0.0
    %4515 = vmatprep.subr.mxu0 0.0
    %4516 = vmatpush1.msra.mxu0 0.0
    %4517 = vmatprep.subr.mxu0 0.0
    %4518 = vmatpush1.msra.mxu0 0.0
    %4519 = vmatprep.subr.mxu0 0.0
    %4520 = vmatpush1.msra.mxu0 0.0
    %4521 = vmatprep.subr.mxu0 0.0
    %4522 = vmatpush1.msra.mxu0 0.0
    %4523 = vmatprep.subr.mxu0 0.0
    %4524 = vmatpush1.msra.mxu0 0.0
    %4525 = vmatprep.subr.mxu0 0.0
    %4526 = vmatpush1.msra.mxu0 0.0
    %4527 = vmatprep.subr.mxu0 0.0
    %4528 = vmatpush1.msra.mxu0 0.0
    %4529 = vmatprep.subr.mxu0 0.0
    %4530 = vmatpush1.msra.mxu0 0.0
    %4531 = vmatprep.subr.mxu0 0.0
    %4532 = vmatpush1.msra.mxu0 0.0
    %4533 = vmatprep.subr.mxu0 0.0
    %4534 = vmatpush1.msra.mxu0 0.0
    %4535 = vmatprep.mubr.f32.mxu0 0.0
    %4536 = vmatmul.mubr.f32.gmra.mrb[0].mxu0 %v3010
    %v4537 = vpop.f32.mrb[0].mxu0
    %v4538 = vadd.f32 0.0, %v4537
    %v4539 = vpop.f32.mrb[0].mxu0
    %4540 = vmatprep.mubr.f32.mxu0 0.0
    %4541 = vmatmul.mubr.f32.gmra.mrb[0].mxu0 %v3013
    %v4542 = vpop.f32.mrb[0].mxu0
    %v4543 = vadd.f32 0.0, %v4542
    %v4544 = vpop.f32.mrb[0].mxu0
    %4545 = vdwg.mxu0
    %v4547 = vsel %vm348, %v4378, 0
    %v4550 = vsel %vm348, %v4458, 0
    %4552 = vmatprep.subr.mxu0 0.0
    %4553 = vmatpush1.xpose.msra.mxu0 %v4550
    %4554 = vmatprep.subr.mxu0 0.0
    %4555 = vmatpush1.xpose.msra.mxu0 0.0
    %4556 = vmatprep.subr.mxu0 0.0
    %4557 = vmatpush1.xpose.msra.mxu0 0.0
    %4558 = vmatprep.subr.mxu0 0.0
    %4559 = vmatpush1.xpose.msra.mxu0 0.0
    %4560 = vmatprep.subr.mxu0 0.0
    %4561 = vmatpush1.xpose.msra.mxu0 0.0
    %4562 = vmatprep.subr.mxu0 0.0
    %4563 = vmatpush1.xpose.msra.mxu0 0.0
    %4564 = vmatprep.subr.mxu0 0.0
    %4565 = vmatpush1.xpose.msra.mxu0 0.0
    %4566 = vmatprep.subr.mxu0 0.0
    %4567 = vmatpush1.xpose.msra.mxu0 0.0
    %4568 = vmatprep.subr.mxu0 0.0
    %4569 = vmatpush1.xpose.msra.mxu0 0.0
    %4570 = vmatprep.subr.mxu0 0.0
    %4571 = vmatpush1.xpose.msra.mxu0 0.0
    %4572 = vmatprep.subr.mxu0 0.0
    %4573 = vmatpush1.xpose.msra.mxu0 0.0
    %4574 = vmatprep.subr.mxu0 0.0
    %4575 = vmatpush1.xpose.msra.mxu0 0.0
    %4576 = vmatprep.subr.mxu0 0.0
    %4577 = vmatpush1.xpose.msra.mxu0 0.0
    %4578 = vmatprep.subr.mxu0 0.0
    %4579 = vmatpush1.xpose.msra.mxu0 0.0
    %4580 = vmatprep.subr.mxu0 0.0
    %4581 = vmatpush1.xpose.msra.mxu0 0.0
    %4582 = vmatprep.subr.mxu0 0.0
    %4583 = vmatpush1.xpose.msra.mxu0 0.0
    %4584 = vmatprep.subr.mxu0 0.0
    %4585 = vmatpush1.xpose.msra.mxu0 0.0
    %4586 = vmatprep.subr.mxu0 0.0
    %4587 = vmatpush1.xpose.msra.mxu0 0.0
    %4588 = vmatprep.subr.mxu0 0.0
    %4589 = vmatpush1.xpose.msra.mxu0 0.0
    %4590 = vmatprep.subr.mxu0 0.0
    %4591 = vmatpush1.xpose.msra.mxu0 0.0
    %4592 = vmatprep.subr.mxu0 0.0
    %4593 = vmatpush1.xpose.msra.mxu0 0.0
    %4594 = vmatprep.subr.mxu0 0.0
    %4595 = vmatpush1.xpose.msra.mxu0 0.0
    %4596 = vmatprep.subr.mxu0 0.0
    %4597 = vmatpush1.xpose.msra.mxu0 0.0
    %4598 = vmatprep.subr.mxu0 0.0
    %4599 = vmatpush1.xpose.msra.mxu0 0.0
    %4600 = vmatprep.subr.mxu0 0.0
    %4601 = vmatpush1.xpose.msra.mxu0 0.0
    %4602 = vmatprep.subr.mxu0 0.0
    %4603 = vmatpush1.xpose.msra.mxu0 0.0
    %4604 = vmatprep.subr.mxu0 0.0
    %4605 = vmatpush1.xpose.msra.mxu0 0.0
    %4606 = vmatprep.subr.mxu0 0.0
    %4607 = vmatpush1.xpose.msra.mxu0 0.0
    %4608 = vmatprep.subr.mxu0 0.0
    %4609 = vmatpush1.xpose.msra.mxu0 0.0
    %4610 = vmatprep.subr.mxu0 0.0
    %4611 = vmatpush1.xpose.msra.mxu0 0.0
    %4612 = vmatprep.subr.mxu0 0.0
    %4613 = vmatpush1.xpose.msra.mxu0 0.0
    %4614 = vmatprep.subr.mxu0 0.0
    %4615 = vmatpush1.xpose.msra.mxu0 0.0
    %4616 = vmatprep.mubr.f32.mxu0 0.0
    %4617 = vmatmul.mubr.f32.gmra.mrb[0].mxu0 %v4547
    %v4618 = vpop.f32.mrb[0].mxu0
    %v4619 = vadd.f32 0.0, %v4618
    %v4620 = vpop.f32.mrb[0].mxu0
    %4621 = vdwg.mxu0
    %v4623 = vsel %vm348, %v4383, 0
    %v4626 = vsel %vm348, %v4463, 0
    %4628 = vmatprep.subr.mxu0 0.0
    %4629 = vmatpush1.xpose.msra.mxu0 %v4626
    %4630 = vmatprep.subr.mxu0 0.0
    %4631 = vmatpush1.xpose.msra.mxu0 0.0
    %4632 = vmatprep.subr.mxu0 0.0
    %4633 = vmatpush1.xpose.msra.mxu0 0.0
    %4634 = vmatprep.subr.mxu0 0.0
    %4635 = vmatpush1.xpose.msra.mxu0 0.0
    %4636 = vmatprep.subr.mxu0 0.0
    %4637 = vmatpush1.xpose.msra.mxu0 0.0
    %4638 = vmatprep.subr.mxu0 0.0
    %4639 = vmatpush1.xpose.msra.mxu0 0.0
    %4640 = vmatprep.subr.mxu0 0.0
    %4641 = vmatpush1.xpose.msra.mxu0 0.0
    %4642 = vmatprep.subr.mxu0 0.0
    %4643 = vmatpush1.xpose.msra.mxu0 0.0
    %4644 = vmatprep.subr.mxu0 0.0
    %4645 = vmatpush1.xpose.msra.mxu0 0.0
    %4646 = vmatprep.subr.mxu0 0.0
    %4647 = vmatpush1.xpose.msra.mxu0 0.0
    %4648 = vmatprep.subr.mxu0 0.0
    %4649 = vmatpush1.xpose.msra.mxu0 0.0
    %4650 = vmatprep.subr.mxu0 0.0
    %4651 = vmatpush1.xpose.msra.mxu0 0.0
    %4652 = vmatprep.subr.mxu0 0.0
    %4653 = vmatpush1.xpose.msra.mxu0 0.0
    %4654 = vmatprep.subr.mxu0 0.0
    %4655 = vmatpush1.xpose.msra.mxu0 0.0
    %4656 = vmatprep.subr.mxu0 0.0
    %4657 = vmatpush1.xpose.msra.mxu0 0.0
    %4658 = vmatprep.subr.mxu0 0.0
    %4659 = vmatpush1.xpose.msra.mxu0 0.0
    %4660 = vmatprep.subr.mxu0 0.0
    %4661 = vmatpush1.xpose.msra.mxu0 0.0
    %4662 = vmatprep.subr.mxu0 0.0
    %4663 = vmatpush1.xpose.msra.mxu0 0.0
    %4664 = vmatprep.subr.mxu0 0.0
    %4665 = vmatpush1.xpose.msra.mxu0 0.0
    %4666 = vmatprep.subr.mxu0 0.0
    %4667 = vmatpush1.xpose.msra.mxu0 0.0
    %4668 = vmatprep.subr.mxu0 0.0
    %4669 = vmatpush1.xpose.msra.mxu0 0.0
    %4670 = vmatprep.subr.mxu0 0.0
    %4671 = vmatpush1.xpose.msra.mxu0 0.0
    %4672 = vmatprep.subr.mxu0 0.0
    %4673 = vmatpush1.xpose.msra.mxu0 0.0
    %4674 = vmatprep.subr.mxu0 0.0
    %4675 = vmatpush1.xpose.msra.mxu0 0.0
    %4676 = vmatprep.subr.mxu0 0.0
    %4677 = vmatpush1.xpose.msra.mxu0 0.0
    %4678 = vmatprep.subr.mxu0 0.0
    %4679 = vmatpush1.xpose.msra.mxu0 0.0
    %4680 = vmatprep.subr.mxu0 0.0
    %4681 = vmatpush1.xpose.msra.mxu0 0.0
    %4682 = vmatprep.subr.mxu0 0.0
    %4683 = vmatpush1.xpose.msra.mxu0 0.0
    %4684 = vmatprep.subr.mxu0 0.0
    %4685 = vmatpush1.xpose.msra.mxu0 0.0
    %4686 = vmatprep.subr.mxu0 0.0
    %4687 = vmatpush1.xpose.msra.mxu0 0.0
    %4688 = vmatprep.subr.mxu0 0.0
    %4689 = vmatpush1.xpose.msra.mxu0 0.0
    %4690 = vmatprep.subr.mxu0 0.0
    %4691 = vmatpush1.xpose.msra.mxu0 0.0
    %4692 = vmatprep.mubr.f32.mxu0 0.0
    %4693 = vmatmul.mubr.f32.gmra.mrb[0].mxu0 %v4623
    %v4694 = vpop.f32.mrb[0].mxu0
    %v4695 = vadd.f32 0.0, %v4694
    %v4696 = vpop.f32.mrb[0].mxu0
    %4697 = vdwg.mxu0
    %v4698 = vmul.f32 %v4619, 0.25
    %v4699 = vmul.f32 %v4695, 0.25
    %v4700 = vsel %vm503, %v4698, -inf
    %4701 = vmax.xlane.f32.xlu0 %v4700
    %v4702 = vpop.xlane.xlu0 %4701
    %v4703 = vsel %vm503, %v4699, -inf
    %4704 = vmax.xlane.f32.xlu0 %v4703
    %v4705 = vpop.xlane.xlu0 %4704
    %v4706 = vsub.f32 %v4698, %v4702
    %v4707 = vsub.f32 %v4699, %v4705
    %v4708 = vmul.f32 %v4706, 1.442695
    %v4709 = vpow.pop %v4708
    %v4710 = vmul.f32 %v4707, 1.442695
    %v4711 = vpow.pop %v4710
    %v4712 = vsel %vm503, %v4709, 0.0
    %4713 = vadd.xlane.f32.xlu0 %v4712
    %v4714 = vpop.xlane.xlu0 %4713
    %v4715 = vsel %vm503, %v4711, 0.0
    %4716 = vadd.xlane.f32.xlu0 %v4715
    %v4717 = vpop.xlane.xlu0 %4716
    %v4718 = vrcp.pop %v4714
    %v4719 = vrcp.pop %v4717
    %v4720 = vmul.f32 %v4709, %v4718
    %v4721 = vmul.f32 %v4711, %v4719
    %v4723 = vsel %vm503, %v4720, 0
    %4725 = vmatprep.subr.mxu0 0.0
    %4726 = vmatpush1.msra.mxu0 %v4538
    %4727 = vmatprep.subr.mxu0 0.0
    %4728 = vmatpush1.msra.mxu0 0.0
    %4729 = vmatprep.subr.mxu0 0.0
    %4730 = vmatpush1.msra.mxu0 0.0
    %4731 = vmatprep.subr.mxu0 0.0
    %4732 = vmatpush1.msra.mxu0 0.0
    %4733 = vmatprep.subr.mxu0 0.0
    %4734 = vmatpush1.msra.mxu0 0.0
    %4735 = vmatprep.subr.mxu0 0.0
    %4736 = vmatpush1.msra.mxu0 0.0
    %4737 = vmatprep.subr.mxu0 0.0
    %4738 = vmatpush1.msra.mxu0 0.0
    %4739 = vmatprep.subr.mxu0 0.0
    %4740 = vmatpush1.msra.mxu0 0.0
    %4741 = vmatprep.subr.mxu0 0.0
    %4742 = vmatpush1.msra.mxu0 0.0
    %4743 = vmatprep.subr.mxu0 0.0
    %4744 = vmatpush1.msra.mxu0 0.0
    %4745 = vmatprep.subr.mxu0 0.0
    %4746 = vmatpush1.msra.mxu0 0.0
    %4747 = vmatprep.subr.mxu0 0.0
    %4748 = vmatpush1.msra.mxu0 0.0
    %4749 = vmatprep.subr.mxu0 0.0
    %4750 = vmatpush1.msra.mxu0 0.0
    %4751 = vmatprep.subr.mxu0 0.0
    %4752 = vmatpush1.msra.mxu0 0.0
    %4753 = vmatprep.subr.mxu0 0.0
    %4754 = vmatpush1.msra.mxu0 0.0
    %4755 = vmatprep.subr.mxu0 0.0
    %4756 = vmatpush1.msra.mxu0 0.0
    %4757 = vmatprep.subr.mxu0 0.0
    %4758 = vmatpush1.msra.mxu0 0.0
    %4759 = vmatprep.subr.mxu0 0.0
    %4760 = vmatpush1.msra.mxu0 0.0
    %4761 = vmatprep.subr.mxu0 0.0
    %4762 = vmatpush1.msra.mxu0 0.0
    %4763 = vmatprep.subr.mxu0 0.0
    %4764 = vmatpush1.msra.mxu0 0.0
    %4765 = vmatprep.subr.mxu0 0.0
    %4766 = vmatpush1.msra.mxu0 0.0
    %4767 = vmatprep.subr.mxu0 0.0
    %4768 = vmatpush1.msra.mxu0 0.0
    %4769 = vmatprep.subr.mxu0 0.0
    %4770 = vmatpush1.msra.mxu0 0.0
    %4771 = vmatprep.subr.mxu0 0.0
    %4772 = vmatpush1.msra.mxu0 0.0
    %4773 = vmatprep.subr.mxu0 0.0
    %4774 = vmatpush1.msra.mxu0 0.0
    %4775 = vmatprep.subr.mxu0 0.0
    %4776 = vmatpush1.msra.mxu0 0.0
    %4777 = vmatprep.subr.mxu0 0.0
    %4778 = vmatpush1.msra.mxu0 0.0
    %4779 = vmatprep.subr.mxu0 0.0
    %4780 = vmatpush1.msra.mxu0 0.0
    %4781 = vmatprep.subr.mxu0 0.0
    %4782 = vmatpush1.msra.mxu0 0.0
    %4783 = vmatprep.subr.mxu0 0.0
    %4784 = vmatpush1.msra.mxu0 0.0
    %4785 = vmatprep.subr.mxu0 0.0
    %4786 = vmatpush1.msra.mxu0 0.0
    %4787 = vmatprep.subr.mxu0 0.0
    %4788 = vmatpush1.msra.mxu0 0.0
    %4789 = vmatprep.mubr.f32.mxu0 0.0
    %4790 = vmatmul.mubr.f32.gmra.mrb[0].mxu0 %v4723
    %v4791 = vpop.f32.mrb[0].mxu0
    %v4792 = vadd.f32 0.0, %v4791
    %v4793 = vpop.f32.mrb[0].mxu0
    %4794 = vdwg.mxu0
    %v4796 = vsel %vm503, %v4721, 0
    %4798 = vmatprep.subr.mxu0 0.0
    %4799 = vmatpush1.msra.mxu0 %v4543
    %4800 = vmatprep.subr.mxu0 0.0
    %4801 = vmatpush1.msra.mxu0 0.0
    %4802 = vmatprep.subr.mxu0 0.0
    %4803 = vmatpush1.msra.mxu0 0.0
    %4804 = vmatprep.subr.mxu0 0.0
    %4805 = vmatpush1.msra.mxu0 0.0
    %4806 = vmatprep.subr.mxu0 0.0
    %4807 = vmatpush1.msra.mxu0 0.0
    %4808 = vmatprep.subr.mxu0 0.0
    %4809 = vmatpush1.msra.mxu0 0.0
    %4810 = vmatprep.subr.mxu0 0.0
    %4811 = vmatpush1.msra.mxu0 0.0
    %4812 = vmatprep.subr.mxu0 0.0
    %4813 = vmatpush1.msra.mxu0 0.0
    %4814 = vmatprep.subr.mxu0 0.0
    %4815 = vmatpush1.msra.mxu0 0.0
    %4816 = vmatprep.subr.mxu0 0.0
    %4817 = vmatpush1.msra.mxu0 0.0
    %4818 = vmatprep.subr.mxu0 0.0
    %4819 = vmatpush1.msra.mxu0 0.0
    %4820 = vmatprep.subr.mxu0 0.0
    %4821 = vmatpush1.msra.mxu0 0.0
    %4822 = vmatprep.subr.mxu0 0.0
    %4823 = vmatpush1.msra.mxu0 0.0
    %4824 = vmatprep.subr.mxu0 0.0
    %4825 = vmatpush1.msra.mxu0 0.0
    %4826 = vmatprep.subr.mxu0 0.0
    %4827 = vmatpush1.msra.mxu0 0.0
    %4828 = vmatprep.subr.mxu0 0.0
    %4829 = vmatpush1.msra.mxu0 0.0
    %4830 = vmatprep.subr.mxu0 0.0
    %4831 = vmatpush1.msra.mxu0 0.0
    %4832 = vmatprep.subr.mxu0 0.0
    %4833 = vmatpush1.msra.mxu0 0.0
    %4834 = vmatprep.subr.mxu0 0.0
    %4835 = vmatpush1.msra.mxu0 0.0
    %4836 = vmatprep.subr.mxu0 0.0
    %4837 = vmatpush1.msra.mxu0 0.0
    %4838 = vmatprep.subr.mxu0 0.0
    %4839 = vmatpush1.msra.mxu0 0.0
    %4840 = vmatprep.subr.mxu0 0.0
    %4841 = vmatpush1.msra.mxu0 0.0
    %4842 = vmatprep.subr.mxu0 0.0
    %4843 = vmatpush1.msra.mxu0 0.0
    %4844 = vmatprep.subr.mxu0 0.0
    %4845 = vmatpush1.msra.mxu0 0.0
    %4846 = vmatprep.subr.mxu0 0.0
    %4847 = vmatpush1.msra.mxu0 0.0
    %4848 = vmatprep.subr.mxu0 0.0
    %4849 = vmatpush1.msra.mxu0 0.0
    %4850 = vmatprep.subr.mxu0 0.0
    %4851 = vmatpush1.msra.mxu0 0.0
    %4852 = vmatprep.subr.mxu0 0.0
    %4853 = vmatpush1.msra.mxu0 0.0
    %4854 = vmatprep.subr.mxu0 0.0
    %4855 = vmatpush1.msra.mxu0 0.0
    %4856 = vmatprep.subr.mxu0 0.0
    %4857 = vmatpush1.msra.mxu0 0.0
    %4858 = vmatprep.subr.mxu0 0.0
    %4859 = vmatpush1.msra.mxu0 0.0
    %4860 = vmatprep.subr.mxu0 0.0
    %4861 = vmatpush1.msra.mxu0 0.0
    %4862 = vmatprep.mubr.f32.mxu0 0.0
    %4863 = vmatmul.mubr.f32.gmra.mrb[0].mxu0 %v4796
    %v4864 = vpop.f32.mrb[0].mxu0
    %v4865 = vadd.f32 0.0, %v4864
    %v4866 = vpop.f32.mrb[0].mxu0
    %4867 = vdwg.mxu0
    %s4868 = scalar_lea.vmem %s6, 96
    %v4869 = vld [vmem:[%s4868] sm:$0xff]
    %v4870 = vld [vmem:[%s4868 + $0x8] sm:$0xff]
    %v4872 = vsel %vm348, %v4792, 0
    %v4875 = vsel %vm348, %v4865, 0
    %4877 = vmatprep.subr.mxu0 0.0
    %4878 = vmatpush1.msra.mxu0 %v4869
    %4879 = vmatprep.subr.mxu0 0.0
    %4880 = vmatpush1.msra.mxu0 %v4870
    %4881 = vmatprep.subr.mxu0 0.0
    %4882 = vmatpush1.msra.mxu0 0.0
    %4883 = vmatprep.subr.mxu0 0.0
    %4884 = vmatpush1.msra.mxu0 0.0
    %4885 = vmatprep.subr.mxu0 0.0
    %4886 = vmatpush1.msra.mxu0 0.0
    %4887 = vmatprep.subr.mxu0 0.0
    %4888 = vmatpush1.msra.mxu0 0.0
    %4889 = vmatprep.subr.mxu0 0.0
    %4890 = vmatpush1.msra.mxu0 0.0
    %4891 = vmatprep.subr.mxu0 0.0
    %4892 = vmatpush1.msra.mxu0 0.0
    %4893 = vmatprep.subr.mxu0 0.0
    %4894 = vmatpush1.msra.mxu0 0.0
    %4895 = vmatprep.subr.mxu0 0.0
    %4896 = vmatpush1.msra.mxu0 0.0
    %4897 = vmatprep.subr.mxu0 0.0
    %4898 = vmatpush1.msra.mxu0 0.0
    %4899 = vmatprep.subr.mxu0 0.0
    %4900 = vmatpush1.msra.mxu0 0.0
    %4901 = vmatprep.subr.mxu0 0.0
    %4902 = vmatpush1.msra.mxu0 0.0
    %4903 = vmatprep.subr.mxu0 0.0
    %4904 = vmatpush1.msra.mxu0 0.0
    %4905 = vmatprep.subr.mxu0 0.0
    %4906 = vmatpush1.msra.mxu0 0.0
    %4907 = vmatprep.subr.mxu0 0.0
    %4908 = vmatpush1.msra.mxu0 0.0
    %4909 = vmatprep.subr.mxu0 0.0
    %4910 = vmatpush1.msra.mxu0 0.0
    %4911 = vmatprep.subr.mxu0 0.0
    %4912 = vmatpush1.msra.mxu0 0.0
    %4913 = vmatprep.subr.mxu0 0.0
    %4914 = vmatpush1.msra.mxu0 0.0
    %4915 = vmatprep.subr.mxu0 0.0
    %4916 = vmatpush1.msra.mxu0 0.0
    %4917 = vmatprep.subr.mxu0 0.0
    %4918 = vmatpush1.msra.mxu0 0.0
    %4919 = vmatprep.subr.mxu0 0.0
    %4920 = vmatpush1.msra.mxu0 0.0
    %4921 = vmatprep.subr.mxu0 0.0
    %4922 = vmatpush1.msra.mxu0 0.0
    %4923 = vmatprep.subr.mxu0 0.0
    %4924 = vmatpush1.msra.mxu0 0.0
    %4925 = vmatprep.subr.mxu0 0.0
    %4926 = vmatpush1.msra.mxu0 0.0
    %4927 = vmatprep.subr.mxu0 0.0
    %4928 = vmatpush1.msra.mxu0 0.0
    %4929 = vmatprep.subr.mxu0 0.0
    %4930 = vmatpush1.msra.mxu0 0.0
    %4931 = vmatprep.subr.mxu0 0.0
    %4932 = vmatpush1.msra.mxu0 0.0
    %4933 = vmatprep.subr.mxu0 0.0
    %4934 = vmatpush1.msra.mxu0 0.0
    %4935 = vmatprep.subr.mxu0 0.0
    %4936 = vmatpush1.msra.mxu0 0.0
    %4937 = vmatprep.subr.mxu0 0.0
    %4938 = vmatpush1.msra.mxu0 0.0
    %4939 = vmatprep.subr.mxu0 0.0
    %4940 = vmatpush1.msra.mxu0 0.0
    %4941 = vmatprep.mubr.f32.mxu0 0.0
    %4942 = vmatmul.mubr.f32.gmra.mrb[0].mxu0 %v4872
    %v4943 = vpop.f32.mrb[0].mxu0
    %v4944 = vadd.f32 0.0, %v4943
    %v4945 = vpop.f32.mrb[0].mxu0
    %4946 = vmatprep.mubr.f32.mxu0 0.0
    %4947 = vmatmul.mubr.f32.gmra.mrb[0].mxu0 %v4875
    %v4948 = vpop.f32.mrb[0].mxu0
    %v4949 = vadd.f32 0.0, %v4948
    %v4950 = vpop.f32.mrb[0].mxu0
    %4951 = vdwg.mxu0
    %v4952 = vadd.f32 %v4304, %v4944
    %v4953 = vadd.f32 %v4305, %v4949
    %s4954 = scalar_lea.vmem %s3, 224
    %v4955 = vld [vmem:[%s4954] sm:$0xff]
    %v4956 = vld [vmem:[%s4954 + $0x8] sm:$0xff]
    %v4957 = vld [vmem:[%s4954 + $0x10] sm:$0xff]
    %v4958 = vld [vmem:[%s4954 + $0x18] sm:$0xff]
    %4959 = vmatprep.subr.mxu0 0.0
    %4960 = vmatpush1.msra.mxu0 %v4955
    %4961 = vmatprep.subr.mxu0 0.0
    %4962 = vmatpush1.msra.mxu0 %v4956
    %4963 = vmatprep.subr.mxu0 0.0
    %4964 = vmatpush1.msra.mxu0 %v4957
    %4965 = vmatprep.subr.mxu0 0.0
    %4966 = vmatpush1.msra.mxu0 %v4958
    %4967 = vmatprep.subr.mxu0 0.0
    %4968 = vmatpush1.msra.mxu0 0.0
    %4969 = vmatprep.subr.mxu0 0.0
    %4970 = vmatpush1.msra.mxu0 0.0
    %4971 = vmatprep.subr.mxu0 0.0
    %4972 = vmatpush1.msra.mxu0 0.0
    %4973 = vmatprep.subr.mxu0 0.0
    %4974 = vmatpush1.msra.mxu0 0.0
    %4975 = vmatprep.subr.mxu0 0.0
    %4976 = vmatpush1.msra.mxu0 0.0
    %4977 = vmatprep.subr.mxu0 0.0
    %4978 = vmatpush1.msra.mxu0 0.0
    %4979 = vmatprep.subr.mxu0 0.0
    %4980 = vmatpush1.msra.mxu0 0.0
    %4981 = vmatprep.subr.mxu0 0.0
    %4982 = vmatpush1.msra.mxu0 0.0
    %4983 = vmatprep.subr.mxu0 0.0
    %4984 = vmatpush1.msra.mxu0 0.0
    %4985 = vmatprep.subr.mxu0 0.0
    %4986 = vmatpush1.msra.mxu0 0.0
    %4987 = vmatprep.subr.mxu0 0.0
    %4988 = vmatpush1.msra.mxu0 0.0
    %4989 = vmatprep.subr.mxu0 0.0
    %4990 = vmatpush1.msra.mxu0 0.0
    %4991 = vmatprep.subr.mxu0 0.0
    %4992 = vmatpush1.msra.mxu0 0.0
    %4993 = vmatprep.subr.mxu0 0.0
    %4994 = vmatpush1.msra.mxu0 0.0
    %4995 = vmatprep.subr.mxu0 0.0
    %4996 = vmatpush1.msra.mxu0 0.0
    %4997 = vmatprep.subr.mxu0 0.0
    %4998 = vmatpush1.msra.mxu0 0.0
    %4999 = vmatprep.subr.mxu0 0.0
    %5000 = vmatpush1.msra.mxu0 0.0
    %5001 = vmatprep.subr.mxu0 0.0
    %5002 = vmatpush1.msra.mxu0 0.0
    %5003 = vmatprep.subr.mxu0 0.0
    %5004 = vmatpush1.msra.mxu0 0.0
    %5005 = vmatprep.subr.mxu0 0.0
    %5006 = vmatpush1.msra.mxu0 0.0
    %5007 = vmatprep.subr.mxu0 0.0
    %5008 = vmatpush1.msra.mxu0 0.0
    %5009 = vmatprep.subr.mxu0 0.0
    %5010 = vmatpush1.msra.mxu0 0.0
    %5011 = vmatprep.subr.mxu0 0.0
    %5012 = vmatpush1.msra.mxu0 0.0
    %5013 = vmatprep.subr.mxu0 0.0
    %5014 = vmatpush1.msra.mxu0 0.0
    %5015 = vmatprep.subr.mxu0 0.0
    %5016 = vmatpush1.msra.mxu0 0.0
    %5017 = vmatprep.subr.mxu0 0.0
    %5018 = vmatpush1.msra.mxu0 0.0
    %5019 = vmatprep.subr.mxu0 0.0
    %5020 = vmatpush1.msra.mxu0 0.0
    %5021 = vmatprep.subr.mxu0 0.0
    %5022 = vmatpush1.msra.mxu0 0.0
    %5023 = vmatprep.mubr.f32.mxu0 0.0
    %5024 = vmatmul.mubr.f32.gmra.mrb[0].mxu0 %v3010
    %v5025 = vpop.f32.mrb[0].mxu0
    %v5026 = vadd.f32 0.0, %v5025
    %v5027 = vpop.f32.mrb[0].mxu0
    %5028 = vmatprep.mubr.f32.mxu0 0.0
    %5029 = vmatmul.mubr.f32.gmra.mrb[0].mxu0 %v3013
    %v5030 = vpop.f32.mrb[0].mxu0
    %v5031 = vadd.f32 0.0, %v5030
    %v5032 = vpop.f32.mrb[0].mxu0
    %5033 = vdwg.mxu0
    %s5034 = scalar_lea.vmem %s4, 224
    %v5035 = vld [vmem:[%s5034] sm:$0xff]
    %v5036 = vld [vmem:[%s5034 + $0x8] sm:$0xff]
    %v5037 = vld [vmem:[%s5034 + $0x10] sm:$0xff]
    %v5038 = vld [vmem:[%s5034 + $0x18] sm:$0xff]
    %5039 = vmatprep.subr.mxu0 0.0
    %5040 = vmatpush1.msra.mxu0 %v5035
    %5041 = vmatprep.subr.mxu0 0.0
    %5042 = vmatpush1.msra.mxu0 %v5036
    %5043 = vmatprep.subr.mxu0 0.0
    %5044 = vmatpush1.msra.mxu0 %v5037
    %5045 = vmatprep.subr.mxu0 0.0
    %5046 = vmatpush1.msra.mxu0 %v5038
    %5047 = vmatprep.subr.mxu0 0.0
    %5048 = vmatpush1.msra.mxu0 0.0
    %5049 = vmatprep.subr.mxu0 0.0
    %5050 = vmatpush1.msra.mxu0 0.0
    %5051 = vmatprep.subr.mxu0 0.0
    %5052 = vmatpush1.msra.mxu0 0.0
    %5053 = vmatprep.subr.mxu0 0.0
    %5054 = vmatpush1.msra.mxu0 0.0
    %5055 = vmatprep.subr.mxu0 0.0
    %5056 = vmatpush1.msra.mxu0 0.0
    %5057 = vmatprep.subr.mxu0 0.0
    %5058 = vmatpush1.msra.mxu0 0.0
    %5059 = vmatprep.subr.mxu0 0.0
    %5060 = vmatpush1.msra.mxu0 0.0
    %5061 = vmatprep.subr.mxu0 0.0
    %5062 = vmatpush1.msra.mxu0 0.0
    %5063 = vmatprep.subr.mxu0 0.0
    %5064 = vmatpush1.msra.mxu0 0.0
    %5065 = vmatprep.subr.mxu0 0.0
    %5066 = vmatpush1.msra.mxu0 0.0
    %5067 = vmatprep.subr.mxu0 0.0
    %5068 = vmatpush1.msra.mxu0 0.0
    %5069 = vmatprep.subr.mxu0 0.0
    %5070 = vmatpush1.msra.mxu0 0.0
    %5071 = vmatprep.subr.mxu0 0.0
    %5072 = vmatpush1.msra.mxu0 0.0
    %5073 = vmatprep.subr.mxu0 0.0
    %5074 = vmatpush1.msra.mxu0 0.0
    %5075 = vmatprep.subr.mxu0 0.0
    %5076 = vmatpush1.msra.mxu0 0.0
    %5077 = vmatprep.subr.mxu0 0.0
    %5078 = vmatpush1.msra.mxu0 0.0
    %5079 = vmatprep.subr.mxu0 0.0
    %5080 = vmatpush1.msra.mxu0 0.0
    %5081 = vmatprep.subr.mxu0 0.0
    %5082 = vmatpush1.msra.mxu0 0.0
    %5083 = vmatprep.subr.mxu0 0.0
    %5084 = vmatpush1.msra.mxu0 0.0
    %5085 = vmatprep.subr.mxu0 0.0
    %5086 = vmatpush1.msra.mxu0 0.0
    %5087 = vmatprep.subr.mxu0 0.0
    %5088 = vmatpush1.msra.mxu0 0.0
    %5089 = vmatprep.subr.mxu0 0.0
    %5090 = vmatpush1.msra.mxu0 0.0
    %5091 = vmatprep.subr.mxu0 0.0
    %5092 = vmatpush1.msra.mxu0 0.0
    %5093 = vmatprep.subr.mxu0 0.0
    %5094 = vmatpush1.msra.mxu0 0.0
    %5095 = vmatprep.subr.mxu0 0.0
    %5096 = vmatpush1.msra.mxu0 0.0
    %5097 = vmatprep.subr.mxu0 0.0
    %5098 = vmatpush1.msra.mxu0 0.0
    %5099 = vmatprep.subr.mxu0 0.0
    %5100 = vmatpush1.msra.mxu0 0.0
    %5101 = vmatprep.subr.mxu0 0.0
    %5102 = vmatpush1.msra.mxu0 0.0
    %5103 = vmatprep.mubr.f32.mxu0 0.0
    %5104 = vmatmul.mubr.f32.gmra.mrb[0].mxu0 %v3010
    %v5105 = vpop.f32.mrb[0].mxu0
    %v5106 = vadd.f32 0.0, %v5105
    %v5107 = vpop.f32.mrb[0].mxu0
    %5108 = vmatprep.mubr.f32.mxu0 0.0
    %5109 = vmatmul.mubr.f32.gmra.mrb[0].mxu0 %v3013
    %v5110 = vpop.f32.mrb[0].mxu0
    %v5111 = vadd.f32 0.0, %v5110
    %v5112 = vpop.f32.mrb[0].mxu0
    %5113 = vdwg.mxu0
    %s5114 = scalar_lea.vmem %s5, 224
    %v5115 = vld [vmem:[%s5114] sm:$0xff]
    %v5116 = vld [vmem:[%s5114 + $0x8] sm:$0xff]
    %v5117 = vld [vmem:[%s5114 + $0x10] sm:$0xff]
    %v5118 = vld [vmem:[%s5114 + $0x18] sm:$0xff]
    %5119 = vmatprep.subr.mxu0 0.0
    %5120 = vmatpush1.msra.mxu0 %v5115
    %5121 = vmatprep.subr.mxu0 0.0
    %5122 = vmatpush1.msra.mxu0 %v5116
    %5123 = vmatprep.subr.mxu0 0.0
    %5124 = vmatpush1.msra.mxu0 %v5117
    %5125 = vmatprep.subr.mxu0 0.0
    %5126 = vmatpush1.msra.mxu0 %v5118
    %5127 = vmatprep.subr.mxu0 0.0
    %5128 = vmatpush1.msra.mxu0 0.0
    %5129 = vmatprep.subr.mxu0 0.0
    %5130 = vmatpush1.msra.mxu0 0.0
    %5131 = vmatprep.subr.mxu0 0.0
    %5132 = vmatpush1.msra.mxu0 0.0
    %5133 = vmatprep.subr.mxu0 0.0
    %5134 = vmatpush1.msra.mxu0 0.0
    %5135 = vmatprep.subr.mxu0 0.0
    %5136 = vmatpush1.msra.mxu0 0.0
    %5137 = vmatprep.subr.mxu0 0.0
    %5138 = vmatpush1.msra.mxu0 0.0
    %5139 = vmatprep.subr.mxu0 0.0
    %5140 = vmatpush1.msra.mxu0 0.0
    %5141 = vmatprep.subr.mxu0 0.0
    %5142 = vmatpush1.msra.mxu0 0.0
    %5143 = vmatprep.subr.mxu0 0.0
    %5144 = vmatpush1.msra.mxu0 0.0
    %5145 = vmatprep.subr.mxu0 0.0
    %5146 = vmatpush1.msra.mxu0 0.0
    %5147 = vmatprep.subr.mxu0 0.0
    %5148 = vmatpush1.msra.mxu0 0.0
    %5149 = vmatprep.subr.mxu0 0.0
    %5150 = vmatpush1.msra.mxu0 0.0
    %5151 = vmatprep.subr.mxu0 0.0
    %5152 = vmatpush1.msra.mxu0 0.0
    %5153 = vmatprep.subr.mxu0 0.0
    %5154 = vmatpush1.msra.mxu0 0.0
    %5155 = vmatprep.subr.mxu0 0.0
    %5156 = vmatpush1.msra.mxu0 0.0
    %5157 = vmatprep.subr.mxu0 0.0
    %5158 = vmatpush1.msra.mxu0 0.0
    %5159 = vmatprep.subr.mxu0 0.0
    %5160 = vmatpush1.msra.mxu0 0.0
    %5161 = vmatprep.subr.mxu0 0.0
    %5162 = vmatpush1.msra.mxu0 0.0
    %5163 = vmatprep.subr.mxu0 0.0
    %5164 = vmatpush1.msra.mxu0 0.0
    %5165 = vmatprep.subr.mxu0 0.0
    %5166 = vmatpush1.msra.mxu0 0.0
    %5167 = vmatprep.subr.mxu0 0.0
    %5168 = vmatpush1.msra.mxu0 0.0
    %5169 = vmatprep.subr.mxu0 0.0
    %5170 = vmatpush1.msra.mxu0 0.0
    %5171 = vmatprep.subr.mxu0 0.0
    %5172 = vmatpush1.msra.mxu0 0.0
    %5173 = vmatprep.subr.mxu0 0.0
    %5174 = vmatpush1.msra.mxu0 0.0
    %5175 = vmatprep.subr.mxu0 0.0
    %5176 = vmatpush1.msra.mxu0 0.0
    %5177 = vmatprep.subr.mxu0 0.0
    %5178 = vmatpush1.msra.mxu0 0.0
    %5179 = vmatprep.subr.mxu0 0.0
    %5180 = vmatpush1.msra.mxu0 0.0
    %5181 = vmatprep.subr.mxu0 0.0
    %5182 = vmatpush1.msra.mxu0 0.0
    %5183 = vmatprep.mubr.f32.mxu0 0.0
    %5184 = vmatmul.mubr.f32.gmra.mrb[0].mxu0 %v3010
    %v5185 = vpop.f32.mrb[0].mxu0
    %v5186 = vadd.f32 0.0, %v5185
    %v5187 = vpop.f32.mrb[0].mxu0
    %5188 = vmatprep.mubr.f32.mxu0 0.0
    %5189 = vmatmul.mubr.f32.gmra.mrb[0].mxu0 %v3013
    %v5190 = vpop.f32.mrb[0].mxu0
    %v5191 = vadd.f32 0.0, %v5190
    %v5192 = vpop.f32.mrb[0].mxu0
    %5193 = vdwg.mxu0
    %v5195 = vsel %vm348, %v5026, 0
    %v5198 = vsel %vm348, %v5106, 0
    %5200 = vmatprep.subr.mxu0 0.0
    %5201 = vmatpush1.xpose.msra.mxu0 %v5198
    %5202 = vmatprep.subr.mxu0 0.0
    %5203 = vmatpush1.xpose.msra.mxu0 0.0
    %5204 = vmatprep.subr.mxu0 0.0
    %5205 = vmatpush1.xpose.msra.mxu0 0.0
    %5206 = vmatprep.subr.mxu0 0.0
    %5207 = vmatpush1.xpose.msra.mxu0 0.0
    %5208 = vmatprep.subr.mxu0 0.0
    %5209 = vmatpush1.xpose.msra.mxu0 0.0
    %5210 = vmatprep.subr.mxu0 0.0
    %5211 = vmatpush1.xpose.msra.mxu0 0.0
    %5212 = vmatprep.subr.mxu0 0.0
    %5213 = vmatpush1.xpose.msra.mxu0 0.0
    %5214 = vmatprep.subr.mxu0 0.0
    %5215 = vmatpush1.xpose.msra.mxu0 0.0
    %5216 = vmatprep.subr.mxu0 0.0
    %5217 = vmatpush1.xpose.msra.mxu0 0.0
    %5218 = vmatprep.subr.mxu0 0.0
    %5219 = vmatpush1.xpose.msra.mxu0 0.0
    %5220 = vmatprep.subr.mxu0 0.0
    %5221 = vmatpush1.xpose.msra.mxu0 0.0
    %5222 = vmatprep.subr.mxu0 0.0
    %5223 = vmatpush1.xpose.msra.mxu0 0.0
    %5224 = vmatprep.subr.mxu0 0.0
    %5225 = vmatpush1.xpose.msra.mxu0 0.0
    %5226 = vmatprep.subr.mxu0 0.0
    %5227 = vmatpush1.xpose.msra.mxu0 0.0
    %5228 = vmatprep.subr.mxu0 0.0
    %5229 = vmatpush1.xpose.msra.mxu0 0.0
    %5230 = vmatprep.subr.mxu0 0.0
    %5231 = vmatpush1.xpose.msra.mxu0 0.0
    %5232 = vmatprep.subr.mxu0 0.0
    %5233 = vmatpush1.xpose.msra.mxu0 0.0
    %5234 = vmatprep.subr.mxu0 0.0
    %5235 = vmatpush1.xpose.msra.mxu0 0.0
    %5236 = vmatprep.subr.mxu0 0.0
    %5237 = vmatpush1.xpose.msra.mxu0 0.0
    %5238 = vmatprep.subr.mxu0 0.0
    %5239 = vmatpush1.xpose.msra.mxu0 0.0
    %5240 = vmatprep.subr.mxu0 0.0
    %5241 = vmatpush1.xpose.msra.mxu0 0.0
    %5242 = vmatprep.subr.mxu0 0.0
    %5243 = vmatpush1.xpose.msra.mxu0 0.0
    %5244 = vmatprep.subr.mxu0 0.0
    %5245 = vmatpush1.xpose.msra.mxu0 0.0
    %5246 = vmatprep.subr.mxu0 0.0
    %5247 = vmatpush1.xpose.msra.mxu0 0.0
    %5248 = vmatprep.subr.mxu0 0.0
    %5249 = vmatpush1.xpose.msra.mxu0 0.0
    %5250 = vmatprep.subr.mxu0 0.0
    %5251 = vmatpush1.xpose.msra.mxu0 0.0
    %5252 = vmatprep.subr.mxu0 0.0
    %5253 = vmatpush1.xpose.msra.mxu0 0.0
    %5254 = vmatprep.subr.mxu0 0.0
    %5255 = vmatpush1.xpose.msra.mxu0 0.0
    %5256 = vmatprep.subr.mxu0 0.0
    %5257 = vmatpush1.xpose.msra.mxu0 0.0
    %5258 = vmatprep.subr.mxu0 0.0
    %5259 = vmatpush1.xpose.msra.mxu0 0.0
    %5260 = vmatprep.subr.mxu0 0.0
    %5261 = vmatpush1.xpose.msra.mxu0 0.0
    %5262 = vmatprep.subr.mxu0 0.0
    %5263 = vmatpush1.xpose.msra.mxu0 0.0
    %5264 = vmatprep.mubr.f32.mxu0 0.0
    %5265 = vmatmul.mubr.f32.gmra.mrb[0].mxu0 %v5195
    %v5266 = vpop.f32.mrb[0].mxu0
    %v5267 = vadd.f32 0.0, %v5266
    %v5268 = vpop.f32.mrb[0].mxu0
    %5269 = vdwg.mxu0
    %v5271 = vsel %vm348, %v5031, 0
    %v5274 = vsel %vm348, %v5111, 0
    %5276 = vmatprep.subr.mxu0 0.0
    %5277 = vmatpush1.xpose.msra.mxu0 %v5274
    %5278 = vmatprep.subr.mxu0 0.0
    %5279 = vmatpush1.xpose.msra.mxu0 0.0
    %5280 = vmatprep.subr.mxu0 0.0
    %5281 = vmatpush1.xpose.msra.mxu0 0.0
    %5282 = vmatprep.subr.mxu0 0.0
    %5283 = vmatpush1.xpose.msra.mxu0 0.0
    %5284 = vmatprep.subr.mxu0 0.0
    %5285 = vmatpush1.xpose.msra.mxu0 0.0
    %5286 = vmatprep.subr.mxu0 0.0
    %5287 = vmatpush1.xpose.msra.mxu0 0.0
    %5288 = vmatprep.subr.mxu0 0.0
    %5289 = vmatpush1.xpose.msra.mxu0 0.0
    %5290 = vmatprep.subr.mxu0 0.0
    %5291 = vmatpush1.xpose.msra.mxu0 0.0
    %5292 = vmatprep.subr.mxu0 0.0
    %5293 = vmatpush1.xpose.msra.mxu0 0.0
    %5294 = vmatprep.subr.mxu0 0.0
    %5295 = vmatpush1.xpose.msra.mxu0 0.0
    %5296 = vmatprep.subr.mxu0 0.0
    %5297 = vmatpush1.xpose.msra.mxu0 0.0
    %5298 = vmatprep.subr.mxu0 0.0
    %5299 = vmatpush1.xpose.msra.mxu0 0.0
    %5300 = vmatprep.subr.mxu0 0.0
    %5301 = vmatpush1.xpose.msra.mxu0 0.0
    %5302 = vmatprep.subr.mxu0 0.0
    %5303 = vmatpush1.xpose.msra.mxu0 0.0
    %5304 = vmatprep.subr.mxu0 0.0
    %5305 = vmatpush1.xpose.msra.mxu0 0.0
    %5306 = vmatprep.subr.mxu0 0.0
    %5307 = vmatpush1.xpose.msra.mxu0 0.0
    %5308 = vmatprep.subr.mxu0 0.0
    %5309 = vmatpush1.xpose.msra.mxu0 0.0
    %5310 = vmatprep.subr.mxu0 0.0
    %5311 = vmatpush1.xpose.msra.mxu0 0.0
    %5312 = vmatprep.subr.mxu0 0.0
    %5313 = vmatpush1.xpose.msra.mxu0 0.0
    %5314 = vmatprep.subr.mxu0 0.0
    %5315 = vmatpush1.xpose.msra.mxu0 0.0
    %5316 = vmatprep.subr.mxu0 0.0
    %5317 = vmatpush1.xpose.msra.mxu0 0.0
    %5318 = vmatprep.subr.mxu0 0.0
    %5319 = vmatpush1.xpose.msra.mxu0 0.0
    %5320 = vmatprep.subr.mxu0 0.0
    %5321 = vmatpush1.xpose.msra.mxu0 0.0
    %5322 = vmatprep.subr.mxu0 0.0
    %5323 = vmatpush1.xpose.msra.mxu0 0.0
    %5324 = vmatprep.subr.mxu0 0.0
    %5325 = vmatpush1.xpose.msra.mxu0 0.0
    %5326 = vmatprep.subr.mxu0 0.0
    %5327 = vmatpush1.xpose.msra.mxu0 0.0
    %5328 = vmatprep.subr.mxu0 0.0
    %5329 = vmatpush1.xpose.msra.mxu0 0.0
    %5330 = vmatprep.subr.mxu0 0.0
    %5331 = vmatpush1.xpose.msra.mxu0 0.0
    %5332 = vmatprep.subr.mxu0 0.0
    %5333 = vmatpush1.xpose.msra.mxu0 0.0
    %5334 = vmatprep.subr.mxu0 0.0
    %5335 = vmatpush1.xpose.msra.mxu0 0.0
    %5336 = vmatprep.subr.mxu0 0.0
    %5337 = vmatpush1.xpose.msra.mxu0 0.0
    %5338 = vmatprep.subr.mxu0 0.0
    %5339 = vmatpush1.xpose.msra.mxu0 0.0
    %5340 = vmatprep.mubr.f32.mxu0 0.0
    %5341 = vmatmul.mubr.f32.gmra.mrb[0].mxu0 %v5271
    %v5342 = vpop.f32.mrb[0].mxu0
    %v5343 = vadd.f32 0.0, %v5342
    %v5344 = vpop.f32.mrb[0].mxu0
    %5345 = vdwg.mxu0
    %v5346 = vmul.f32 %v5267, 0.25
    %v5347 = vmul.f32 %v5343, 0.25
    %v5348 = vsel %vm503, %v5346, -inf
    %5349 = vmax.xlane.f32.xlu0 %v5348
    %v5350 = vpop.xlane.xlu0 %5349
    %v5351 = vsel %vm503, %v5347, -inf
    %5352 = vmax.xlane.f32.xlu0 %v5351
    %v5353 = vpop.xlane.xlu0 %5352
    %v5354 = vsub.f32 %v5346, %v5350
    %v5355 = vsub.f32 %v5347, %v5353
    %v5356 = vmul.f32 %v5354, 1.442695
    %v5357 = vpow.pop %v5356
    %v5358 = vmul.f32 %v5355, 1.442695
    %v5359 = vpow.pop %v5358
    %v5360 = vsel %vm503, %v5357, 0.0
    %5361 = vadd.xlane.f32.xlu0 %v5360
    %v5362 = vpop.xlane.xlu0 %5361
    %v5363 = vsel %vm503, %v5359, 0.0
    %5364 = vadd.xlane.f32.xlu0 %v5363
    %v5365 = vpop.xlane.xlu0 %5364
    %v5366 = vrcp.pop %v5362
    %v5367 = vrcp.pop %v5365
    %v5368 = vmul.f32 %v5357, %v5366
    %v5369 = vmul.f32 %v5359, %v5367
    %v5371 = vsel %vm503, %v5368, 0
    %5373 = vmatprep.subr.mxu0 0.0
    %5374 = vmatpush1.msra.mxu0 %v5186
    %5375 = vmatprep.subr.mxu0 0.0
    %5376 = vmatpush1.msra.mxu0 0.0
    %5377 = vmatprep.subr.mxu0 0.0
    %5378 = vmatpush1.msra.mxu0 0.0
    %5379 = vmatprep.subr.mxu0 0.0
    %5380 = vmatpush1.msra.mxu0 0.0
    %5381 = vmatprep.subr.mxu0 0.0
    %5382 = vmatpush1.msra.mxu0 0.0
    %5383 = vmatprep.subr.mxu0 0.0
    %5384 = vmatpush1.msra.mxu0 0.0
    %5385 = vmatprep.subr.mxu0 0.0
    %5386 = vmatpush1.msra.mxu0 0.0
    %5387 = vmatprep.subr.mxu0 0.0
    %5388 = vmatpush1.msra.mxu0 0.0
    %5389 = vmatprep.subr.mxu0 0.0
    %5390 = vmatpush1.msra.mxu0 0.0
    %5391 = vmatprep.subr.mxu0 0.0
    %5392 = vmatpush1.msra.mxu0 0.0
    %5393 = vmatprep.subr.mxu0 0.0
    %5394 = vmatpush1.msra.mxu0 0.0
    %5395 = vmatprep.subr.mxu0 0.0
    %5396 = vmatpush1.msra.mxu0 0.0
    %5397 = vmatprep.subr.mxu0 0.0
    %5398 = vmatpush1.msra.mxu0 0.0
    %5399 = vmatprep.subr.mxu0 0.0
    %5400 = vmatpush1.msra.mxu0 0.0
    %5401 = vmatprep.subr.mxu0 0.0
    %5402 = vmatpush1.msra.mxu0 0.0
    %5403 = vmatprep.subr.mxu0 0.0
    %5404 = vmatpush1.msra.mxu0 0.0
    %5405 = vmatprep.subr.mxu0 0.0
    %5406 = vmatpush1.msra.mxu0 0.0
    %5407 = vmatprep.subr.mxu0 0.0
    %5408 = vmatpush1.msra.mxu0 0.0
    %5409 = vmatprep.subr.mxu0 0.0
    %5410 = vmatpush1.msra.mxu0 0.0
    %5411 = vmatprep.subr.mxu0 0.0
    %5412 = vmatpush1.msra.mxu0 0.0
    %5413 = vmatprep.subr.mxu0 0.0
    %5414 = vmatpush1.msra.mxu0 0.0
    %5415 = vmatprep.subr.mxu0 0.0
    %5416 = vmatpush1.msra.mxu0 0.0
    %5417 = vmatprep.subr.mxu0 0.0
    %5418 = vmatpush1.msra.mxu0 0.0
    %5419 = vmatprep.subr.mxu0 0.0
    %5420 = vmatpush1.msra.mxu0 0.0
    %5421 = vmatprep.subr.mxu0 0.0
    %5422 = vmatpush1.msra.mxu0 0.0
    %5423 = vmatprep.subr.mxu0 0.0
    %5424 = vmatpush1.msra.mxu0 0.0
    %5425 = vmatprep.subr.mxu0 0.0
    %5426 = vmatpush1.msra.mxu0 0.0
    %5427 = vmatprep.subr.mxu0 0.0
    %5428 = vmatpush1.msra.mxu0 0.0
    %5429 = vmatprep.subr.mxu0 0.0
    %5430 = vmatpush1.msra.mxu0 0.0
    %5431 = vmatprep.subr.mxu0 0.0
    %5432 = vmatpush1.msra.mxu0 0.0
    %5433 = vmatprep.subr.mxu0 0.0
    %5434 = vmatpush1.msra.mxu0 0.0
    %5435 = vmatprep.subr.mxu0 0.0
    %5436 = vmatpush1.msra.mxu0 0.0
    %5437 = vmatprep.mubr.f32.mxu0 0.0
    %5438 = vmatmul.mubr.f32.gmra.mrb[0].mxu0 %v5371
    %v5439 = vpop.f32.mrb[0].mxu0
    %v5440 = vadd.f32 0.0, %v5439
    %v5441 = vpop.f32.mrb[0].mxu0
    %5442 = vdwg.mxu0
    %v5444 = vsel %vm503, %v5369, 0
    %5446 = vmatprep.subr.mxu0 0.0
    %5447 = vmatpush1.msra.mxu0 %v5191
    %5448 = vmatprep.subr.mxu0 0.0
    %5449 = vmatpush1.msra.mxu0 0.0
    %5450 = vmatprep.subr.mxu0 0.0
    %5451 = vmatpush1.msra.mxu0 0.0
    %5452 = vmatprep.subr.mxu0 0.0
    %5453 = vmatpush1.msra.mxu0 0.0
    %5454 = vmatprep.subr.mxu0 0.0
    %5455 = vmatpush1.msra.mxu0 0.0
    %5456 = vmatprep.subr.mxu0 0.0
    %5457 = vmatpush1.msra.mxu0 0.0
    %5458 = vmatprep.subr.mxu0 0.0
    %5459 = vmatpush1.msra.mxu0 0.0
    %5460 = vmatprep.subr.mxu0 0.0
    %5461 = vmatpush1.msra.mxu0 0.0
    %5462 = vmatprep.subr.mxu0 0.0
    %5463 = vmatpush1.msra.mxu0 0.0
    %5464 = vmatprep.subr.mxu0 0.0
    %5465 = vmatpush1.msra.mxu0 0.0
    %5466 = vmatprep.subr.mxu0 0.0
    %5467 = vmatpush1.msra.mxu0 0.0
    %5468 = vmatprep.subr.mxu0 0.0
    %5469 = vmatpush1.msra.mxu0 0.0
    %5470 = vmatprep.subr.mxu0 0.0
    %5471 = vmatpush1.msra.mxu0 0.0
    %5472 = vmatprep.subr.mxu0 0.0
    %5473 = vmatpush1.msra.mxu0 0.0
    %5474 = vmatprep.subr.mxu0 0.0
    %5475 = vmatpush1.msra.mxu0 0.0
    %5476 = vmatprep.subr.mxu0 0.0
    %5477 = vmatpush1.msra.mxu0 0.0
    %5478 = vmatprep.subr.mxu0 0.0
    %5479 = vmatpush1.msra.mxu0 0.0
    %5480 = vmatprep.subr.mxu0 0.0
    %5481 = vmatpush1.msra.mxu0 0.0
    %5482 = vmatprep.subr.mxu0 0.0
    %5483 = vmatpush1.msra.mxu0 0.0
    %5484 = vmatprep.subr.mxu0 0.0
    %5485 = vmatpush1.msra.mxu0 0.0
    %5486 = vmatprep.subr.mxu0 0.0
    %5487 = vmatpush1.msra.mxu0 0.0
    %5488 = vmatprep.subr.mxu0 0.0
    %5489 = vmatpush1.msra.mxu0 0.0
    %5490 = vmatprep.subr.mxu0 0.0
    %5491 = vmatpush1.msra.mxu0 0.0
    %5492 = vmatprep.subr.mxu0 0.0
    %5493 = vmatpush1.msra.mxu0 0.0
    %5494 = vmatprep.subr.mxu0 0.0
    %5495 = vmatpush1.msra.mxu0 0.0
    %5496 = vmatprep.subr.mxu0 0.0
    %5497 = vmatpush1.msra.mxu0 0.0
    %5498 = vmatprep.subr.mxu0 0.0
    %5499 = vmatpush1.msra.mxu0 0.0
    %5500 = vmatprep.subr.mxu0 0.0
    %5501 = vmatpush1.msra.mxu0 0.0
    %5502 = vmatprep.subr.mxu0 0.0
    %5503 = vmatpush1.msra.mxu0 0.0
    %5504 = vmatprep.subr.mxu0 0.0
    %5505 = vmatpush1.msra.mxu0 0.0
    %5506 = vmatprep.subr.mxu0 0.0
    %5507 = vmatpush1.msra.mxu0 0.0
    %5508 = vmatprep.subr.mxu0 0.0
    %5509 = vmatpush1.msra.mxu0 0.0
    %5510 = vmatprep.mubr.f32.mxu0 0.0
    %5511 = vmatmul.mubr.f32.gmra.mrb[0].mxu0 %v5444
    %v5512 = vpop.f32.mrb[0].mxu0
    %v5513 = vadd.f32 0.0, %v5512
    %v5514 = vpop.f32.mrb[0].mxu0
    %5515 = vdwg.mxu0
    %s5516 = scalar_lea.vmem %s6, 112
    %v5517 = vld [vmem:[%s5516] sm:$0xff]
    %v5518 = vld [vmem:[%s5516 + $0x8] sm:$0xff]
    %v5520 = vsel %vm348, %v5440, 0
    %v5523 = vsel %vm348, %v5513, 0
    %5525 = vmatprep.subr.mxu0 0.0
    %5526 = vmatpush1.msra.mxu0 %v5517
    %5527 = vmatprep.subr.mxu0 0.0
    %5528 = vmatpush1.msra.mxu0 %v5518
    %5529 = vmatprep.subr.mxu0 0.0
    %5530 = vmatpush1.msra.mxu0 0.0
    %5531 = vmatprep.subr.mxu0 0.0
    %5532 = vmatpush1.msra.mxu0 0.0
    %5533 = vmatprep.subr.mxu0 0.0
    %5534 = vmatpush1.msra.mxu0 0.0
    %5535 = vmatprep.subr.mxu0 0.0
    %5536 = vmatpush1.msra.mxu0 0.0
    %5537 = vmatprep.subr.mxu0 0.0
    %5538 = vmatpush1.msra.mxu0 0.0
    %5539 = vmatprep.subr.mxu0 0.0
    %5540 = vmatpush1.msra.mxu0 0.0
    %5541 = vmatprep.subr.mxu0 0.0
    %5542 = vmatpush1.msra.mxu0 0.0
    %5543 = vmatprep.subr.mxu0 0.0
    %5544 = vmatpush1.msra.mxu0 0.0
    %5545 = vmatprep.subr.mxu0 0.0
    %5546 = vmatpush1.msra.mxu0 0.0
    %5547 = vmatprep.subr.mxu0 0.0
    %5548 = vmatpush1.msra.mxu0 0.0
    %5549 = vmatprep.subr.mxu0 0.0
    %5550 = vmatpush1.msra.mxu0 0.0
    %5551 = vmatprep.subr.mxu0 0.0
    %5552 = vmatpush1.msra.mxu0 0.0
    %5553 = vmatprep.subr.mxu0 0.0
    %5554 = vmatpush1.msra.mxu0 0.0
    %5555 = vmatprep.subr.mxu0 0.0
    %5556 = vmatpush1.msra.mxu0 0.0
    %5557 = vmatprep.subr.mxu0 0.0
    %5558 = vmatpush1.msra.mxu0 0.0
    %5559 = vmatprep.subr.mxu0 0.0
    %5560 = vmatpush1.msra.mxu0 0.0
    %5561 = vmatprep.subr.mxu0 0.0
    %5562 = vmatpush1.msra.mxu0 0.0
    %5563 = vmatprep.subr.mxu0 0.0
    %5564 = vmatpush1.msra.mxu0 0.0
    %5565 = vmatprep.subr.mxu0 0.0
    %5566 = vmatpush1.msra.mxu0 0.0
    %5567 = vmatprep.subr.mxu0 0.0
    %5568 = vmatpush1.msra.mxu0 0.0
    %5569 = vmatprep.subr.mxu0 0.0
    %5570 = vmatpush1.msra.mxu0 0.0
    %5571 = vmatprep.subr.mxu0 0.0
    %5572 = vmatpush1.msra.mxu0 0.0
    %5573 = vmatprep.subr.mxu0 0.0
    %5574 = vmatpush1.msra.mxu0 0.0
    %5575 = vmatprep.subr.mxu0 0.0
    %5576 = vmatpush1.msra.mxu0 0.0
    %5577 = vmatprep.subr.mxu0 0.0
    %5578 = vmatpush1.msra.mxu0 0.0
    %5579 = vmatprep.subr.mxu0 0.0
    %5580 = vmatpush1.msra.mxu0 0.0
    %5581 = vmatprep.subr.mxu0 0.0
    %5582 = vmatpush1.msra.mxu0 0.0
    %5583 = vmatprep.subr.mxu0 0.0
    %5584 = vmatpush1.msra.mxu0 0.0
    %5585 = vmatprep.subr.mxu0 0.0
    %5586 = vmatpush1.msra.mxu0 0.0
    %5587 = vmatprep.subr.mxu0 0.0
    %5588 = vmatpush1.msra.mxu0 0.0
    %5589 = vmatprep.mubr.f32.mxu0 0.0
    %5590 = vmatmul.mubr.f32.gmra.mrb[0].mxu0 %v5520
    %v5591 = vpop.f32.mrb[0].mxu0
    %v5592 = vadd.f32 0.0, %v5591
    %v5593 = vpop.f32.mrb[0].mxu0
    %5594 = vmatprep.mubr.f32.mxu0 0.0
    %5595 = vmatmul.mubr.f32.gmra.mrb[0].mxu0 %v5523
    %v5596 = vpop.f32.mrb[0].mxu0
    %v5597 = vadd.f32 0.0, %v5596
    %v5598 = vpop.f32.mrb[0].mxu0
    %5599 = vdwg.mxu0
    %v5600 = vadd.f32 %v4952, %v5592
    %v5601 = vadd.f32 %v4953, %v5597
    %s5602 = scalar_lea.vmem %s8, 1
    %v5603 = vld [vmem:[%s5602] sm:$0x1]
    %s5604 = scalar_lea.vmem %s9, 1
    %v5605 = vld [vmem:[%s5604] sm:$0x1]
    %v5606 = vsel %vm52, %v5600, 0.0
    %5607 = vadd.xlane.f32.xlu0 %v5606
    %v5608 = vpop.xlane.xlu0 %5607
    %v5609 = vsel %vm52, %v5601, 0.0
    %5610 = vadd.xlane.f32.xlu0 %v5609
    %v5611 = vpop.xlane.xlu0 %5610
    %v5612 = vmul.f32 %v5608, %v59
    %v5613 = vmul.f32 %v5611, %v59
    %v5614 = vsub.f32 %v5600, %v5612
    %v5615 = vsub.f32 %v5601, %v5613
    %v5616 = vmul.f32 %v5614, %v5614
    %v5617 = vmul.f32 %v5615, %v5615
    %v5618 = vsel %vm52, %v5616, 0.0
    %5619 = vadd.xlane.f32.xlu0 %v5618
    %v5620 = vpop.xlane.xlu0 %5619
    %v5621 = vsel %vm52, %v5617, 0.0
    %5622 = vadd.xlane.f32.xlu0 %v5621
    %v5623 = vpop.xlane.xlu0 %5622
    %v5624 = vmul.f32 %v5620, %v59
    %v5625 = vmul.f32 %v5623, %v59
    %v5626 = vadd.f32 %v5624, 1e-05
    %v5627 = vadd.f32 %v5625, 1e-05
    %v5628 = vrsqrt.pop %v5626
    %v5629 = vrsqrt.pop %v5627
    %v5630 = vmul.f32 %v5614, %v5628
    %v5631 = vmul.f32 %v5615, %v5629
    %v5633 = vlaneseq
    %v5634 = vshrl.u32 %v5633, 7
    %v5635 = vsub.s32 0, %v5634
    %v5636 = vrot.slane %v5603, %v5635
    %v5638 = vmul.f32 %v5630, %v5636
    %v5639 = vmul.f32 %v5631, %v5636
    %v5641 = vlaneseq
    %v5642 = vshrl.u32 %v5641, 7
    %v5643 = vsub.s32 0, %v5642
    %v5644 = vrot.slane %v5605, %v5643
    %v5646 = vadd.f32 %v5638, %v5644
    %v5647 = vadd.f32 %v5639, %v5644
    %s5648 = scalar_lea.vmem %s10, 32
    %v5649 = vld [vmem:[%s5648] sm:$0xff]
    %v5650 = vld [vmem:[%s5648 + $0x8] sm:$0xff]
    %v5651 = vld [vmem:[%s5648 + $0x10] sm:$0xff]
    %v5652 = vld [vmem:[%s5648 + $0x18] sm:$0xff]
    %s5653 = scalar_lea.vmem %s11, 1
    %v5654 = vld [vmem:[%s5653] sm:$0x1]
    %v5656 = vlaneseq
    %v5657 = vshrl.u32 %v5656, 7
    %v5658 = vsub.s32 0, %v5657
    %v5659 = vrot.slane %v5654, %v5658
    %v5662 = vsel %vm52, %v5646, 0
    %v5665 = vsel %vm52, %v5647, 0
    %5667 = vmatprep.subr.mxu0 0.0
    %5668 = vmatpush1.msra.mxu0 %v5649
    %5669 = vmatprep.subr.mxu0 0.0
    %5670 = vmatpush1.msra.mxu0 %v5650
    %5671 = vmatprep.subr.mxu0 0.0
    %5672 = vmatpush1.msra.mxu0 %v5651
    %5673 = vmatprep.subr.mxu0 0.0
    %5674 = vmatpush1.msra.mxu0 %v5652
    %5675 = vmatprep.subr.mxu0 0.0
    %5676 = vmatpush1.msra.mxu0 0.0
    %5677 = vmatprep.subr.mxu0 0.0
    %5678 = vmatpush1.msra.mxu0 0.0
    %5679 = vmatprep.subr.mxu0 0.0
    %5680 = vmatpush1.msra.mxu0 0.0
    %5681 = vmatprep.subr.mxu0 0.0
    %5682 = vmatpush1.msra.mxu0 0.0
    %5683 = vmatprep.subr.mxu0 0.0
    %5684 = vmatpush1.msra.mxu0 0.0
    %5685 = vmatprep.subr.mxu0 0.0
    %5686 = vmatpush1.msra.mxu0 0.0
    %5687 = vmatprep.subr.mxu0 0.0
    %5688 = vmatpush1.msra.mxu0 0.0
    %5689 = vmatprep.subr.mxu0 0.0
    %5690 = vmatpush1.msra.mxu0 0.0
    %5691 = vmatprep.subr.mxu0 0.0
    %5692 = vmatpush1.msra.mxu0 0.0
    %5693 = vmatprep.subr.mxu0 0.0
    %5694 = vmatpush1.msra.mxu0 0.0
    %5695 = vmatprep.subr.mxu0 0.0
    %5696 = vmatpush1.msra.mxu0 0.0
    %5697 = vmatprep.subr.mxu0 0.0
    %5698 = vmatpush1.msra.mxu0 0.0
    %5699 = vmatprep.subr.mxu0 0.0
    %5700 = vmatpush1.msra.mxu0 0.0
    %5701 = vmatprep.subr.mxu0 0.0
    %5702 = vmatpush1.msra.mxu0 0.0
    %5703 = vmatprep.subr.mxu0 0.0
    %5704 = vmatpush1.msra.mxu0 0.0
    %5705 = vmatprep.subr.mxu0 0.0
    %5706 = vmatpush1.msra.mxu0 0.0
    %5707 = vmatprep.subr.mxu0 0.0
    %5708 = vmatpush1.msra.mxu0 0.0
    %5709 = vmatprep.subr.mxu0 0.0
    %5710 = vmatpush1.msra.mxu0 0.0
    %5711 = vmatprep.subr.mxu0 0.0
    %5712 = vmatpush1.msra.mxu0 0.0
    %5713 = vmatprep.subr.mxu0 0.0
    %5714 = vmatpush1.msra.mxu0 0.0
    %5715 = vmatprep.subr.mxu0 0.0
    %5716 = vmatpush1.msra.mxu0 0.0
    %5717 = vmatprep.subr.mxu0 0.0
    %5718 = vmatpush1.msra.mxu0 0.0
    %5719 = vmatprep.subr.mxu0 0.0
    %5720 = vmatpush1.msra.mxu0 0.0
    %5721 = vmatprep.subr.mxu0 0.0
    %5722 = vmatpush1.msra.mxu0 0.0
    %5723 = vmatprep.subr.mxu0 0.0
    %5724 = vmatpush1.msra.mxu0 0.0
    %5725 = vmatprep.subr.mxu0 0.0
    %5726 = vmatpush1.msra.mxu0 0.0
    %5727 = vmatprep.subr.mxu0 0.0
    %5728 = vmatpush1.msra.mxu0 0.0
    %5729 = vmatprep.subr.mxu0 0.0
    %5730 = vmatpush1.msra.mxu0 0.0
    %5731 = vmatprep.mubr.f32.mxu0 0.0
    %5732 = vmatmul.mubr.f32.gmra.mrb[0].mxu0 %v5662
    %v5733 = vpop.f32.mrb[0].mxu0
    %v5734 = vadd.f32 %v5659, %v5733
    %v5735 = vpop.f32.mrb[0].mxu0
    %5736 = vmatprep.mubr.f32.mxu0 0.0
    %5737 = vmatmul.mubr.f32.gmra.mrb[0].mxu0 %v5665
    %v5738 = vpop.f32.mrb[0].mxu0
    %v5739 = vadd.f32 %v5659, %v5738
    %v5740 = vpop.f32.mrb[0].mxu0
    %5741 = vdwg.mxu0
    %v5742 = vmul.f32 %v5734, 0.5
    %v5743 = vmul.f32 %v5739, 0.5
    %v5744 = vmul.f32 %v5734, 0.70710677
    %v5745 = vmul.f32 %v5739, 0.70710677
    %v5746 = verf.f32.pop %v5744
    %v5747 = verf.f32.pop %v5745
    %v5748 = vadd.f32 %v5746, 1.0
    %v5749 = vadd.f32 %v5747, 1.0
    %v5750 = vmul.f32 %v5742, %v5748
    %v5751 = vmul.f32 %v5743, %v5749
    %s5752 = scalar_lea.vmem %s12, 64
    %v5753 = vld [vmem:[%s5752] sm:$0xff]
    %v5754 = vld [vmem:[%s5752 + $0x8] sm:$0xff]
    %v5755 = vld [vmem:[%s5752 + $0x10] sm:$0xff]
    %v5756 = vld [vmem:[%s5752 + $0x18] sm:$0xff]
    %v5757 = vld [vmem:[%s5752 + $0x20] sm:$0xff]
    %v5758 = vld [vmem:[%s5752 + $0x28] sm:$0xff]
    %v5759 = vld [vmem:[%s5752 + $0x30] sm:$0xff]
    %v5760 = vld [vmem:[%s5752 + $0x38] sm:$0xff]
    %v5762 = vsel %vm2855, %v5750, 0
    %v5765 = vsel %vm2855, %v5751, 0
    %5767 = vmatprep.subr.mxu0 0.0
    %5768 = vmatpush1.msra.mxu0 %v5753
    %5769 = vmatprep.subr.mxu0 0.0
    %5770 = vmatpush1.msra.mxu0 %v5754
    %5771 = vmatprep.subr.mxu0 0.0
    %5772 = vmatpush1.msra.mxu0 %v5755
    %5773 = vmatprep.subr.mxu0 0.0
    %5774 = vmatpush1.msra.mxu0 %v5756
    %5775 = vmatprep.subr.mxu0 0.0
    %5776 = vmatpush1.msra.mxu0 %v5757
    %5777 = vmatprep.subr.mxu0 0.0
    %5778 = vmatpush1.msra.mxu0 %v5758
    %5779 = vmatprep.subr.mxu0 0.0
    %5780 = vmatpush1.msra.mxu0 %v5759
    %5781 = vmatprep.subr.mxu0 0.0
    %5782 = vmatpush1.msra.mxu0 %v5760
    %5783 = vmatprep.subr.mxu0 0.0
    %5784 = vmatpush1.msra.mxu0 0.0
    %5785 = vmatprep.subr.mxu0 0.0
    %5786 = vmatpush1.msra.mxu0 0.0
    %5787 = vmatprep.subr.mxu0 0.0
    %5788 = vmatpush1.msra.mxu0 0.0
    %5789 = vmatprep.subr.mxu0 0.0
    %5790 = vmatpush1.msra.mxu0 0.0
    %5791 = vmatprep.subr.mxu0 0.0
    %5792 = vmatpush1.msra.mxu0 0.0
    %5793 = vmatprep.subr.mxu0 0.0
    %5794 = vmatpush1.msra.mxu0 0.0
    %5795 = vmatprep.subr.mxu0 0.0
    %5796 = vmatpush1.msra.mxu0 0.0
    %5797 = vmatprep.subr.mxu0 0.0
    %5798 = vmatpush1.msra.mxu0 0.0
    %5799 = vmatprep.subr.mxu0 0.0
    %5800 = vmatpush1.msra.mxu0 0.0
    %5801 = vmatprep.subr.mxu0 0.0
    %5802 = vmatpush1.msra.mxu0 0.0
    %5803 = vmatprep.subr.mxu0 0.0
    %5804 = vmatpush1.msra.mxu0 0.0
    %5805 = vmatprep.subr.mxu0 0.0
    %5806 = vmatpush1.msra.mxu0 0.0
    %5807 = vmatprep.subr.mxu0 0.0
    %5808 = vmatpush1.msra.mxu0 0.0
    %5809 = vmatprep.subr.mxu0 0.0
    %5810 = vmatpush1.msra.mxu0 0.0
    %5811 = vmatprep.subr.mxu0 0.0
    %5812 = vmatpush1.msra.mxu0 0.0
    %5813 = vmatprep.subr.mxu0 0.0
    %5814 = vmatpush1.msra.mxu0 0.0
    %5815 = vmatprep.subr.mxu0 0.0
    %5816 = vmatpush1.msra.mxu0 0.0
    %5817 = vmatprep.subr.mxu0 0.0
    %5818 = vmatpush1.msra.mxu0 0.0
    %5819 = vmatprep.subr.mxu0 0.0
    %5820 = vmatpush1.msra.mxu0 0.0
    %5821 = vmatprep.subr.mxu0 0.0
    %5822 = vmatpush1.msra.mxu0 0.0
    %5823 = vmatprep.subr.mxu0 0.0
    %5824 = vmatpush1.msra.mxu0 0.0
    %5825 = vmatprep.subr.mxu0 0.0
    %5826 = vmatpush1.msra.mxu0 0.0
    %5827 = vmatprep.subr.mxu0 0.0
    %5828 = vmatpush1.msra.mxu0 0.0
    %5829 = vmatprep.subr.mxu0 0.0
    %5830 = vmatpush1.msra.mxu0 0.0
    %5831 = vmatprep.mubr.f32.mxu0 0.0
    %5832 = vmatmul.mubr.f32.gmra.mrb[0].mxu0 %v5762
    %v5833 = vpop.f32.mrb[0].mxu0
    %v5834 = vadd.f32 0.0, %v5833
    %v5835 = vpop.f32.mrb[0].mxu0
    %5836 = vmatprep.mubr.f32.mxu0 0.0
    %5837 = vmatmul.mubr.f32.gmra.mrb[0].mxu0 %v5765
    %v5838 = vpop.f32.mrb[0].mxu0
    %v5839 = vadd.f32 0.0, %v5838
    %v5840 = vpop.f32.mrb[0].mxu0
    %5841 = vdwg.mxu0
    %v5842 = vadd.f32 %v5600, %v5834
    %v5843 = vadd.f32 %v5601, %v5839
    %s5844 = scalar_lea.vmem %s13, 1
    %v5845 = vld [vmem:[%s5844] sm:$0x1]
    %v5847 = vlaneseq
    %v5848 = vshrl.u32 %v5847, 7
    %v5849 = vsub.s32 0, %v5848
    %v5850 = vrot.slane %v5845, %v5849
    %v5852 = vadd.f32 %v5842, %v5850
    %v5853 = vadd.f32 %v5843, %v5850
    %5854 = vst.msk [vmem:[#allocation2] sm:$0xff] %vm52, %v5852
    %5855 = vst.msk [vmem:[#allocation2 + $0x8] sm:$0xff] %vm52, %v5853
    // Predicated region
    $region58: #{transformer_forward.1} parent=1 // pred_check
      _
    $region59: #{transformer_forward.1} parent=1 // pred_check_branch
      %5857 = sbr.rel (0) target = $region61
    $region60: #{transformer_forward.1} parent=1 // pred_region
      %s5859 = ssub.s32 256, 256
      %5860 = vsyncadd [#allocation3], %s5859
      %s5861 = sshll.u32 [#allocation2], 4
      %s5862 = int_to_ptr.vmem [resolvable:$true] %s5861
      %5867 = dma.vmem_to_hbm [thread:$0]  %s5862, 256, %s14, [#allocation3], 128, 128, 8
    $region61: #{transformer_forward.1} parent=1 // pred_fallthru
      _
    // Predicated region
    $region62: #{transformer_forward.1} parent=1 // pred_check
      _
    $region63: #{transformer_forward.1} parent=1 // pred_check_branch
      %5869 = sbr.rel (0) target = $region65
    $region64: #{transformer_forward.1} parent=1 // pred_region
      %5870 = dma.done [#allocation3], 256
    $region65: #{transformer_forward.1} parent=1 // pred_fallthru
      _
    %5871 = vsyncpa [#allocation3], 1

</llo_original>
